<compile_context>
chip_gen: v7x
topology: tpu7x:2x2x1
jax: 0.10.0
libtpu: 0.0.40
codegen_flags: <defaults>
</compile_context>

<pallas_src>
import functools

import jax
import jax.numpy as jnp
from jax.experimental import pallas as pl
from jax.experimental.pallas import tpu as pltpu

NEG_INF = -1e9        # large-negative additive mask (no NaNs for masked rows)
LN_EPS = 1e-5         # PyTorch nn.LayerNorm default
ACT_DTYPE = jnp.bfloat16   # inter-kernel activation storage dtype
_TM_TARGET = 256      # M-tile (rows of B*S) for the pipelined token-major kernels


def _choose_tm(m):
    """Pick an M-tile: bounded by _TM_TARGET, but always >=2 grid steps when
    m > 8 so both v7x TensorCores get work (megacore)."""
    if m <= 8:
        return m
    if m >= 2 * _TM_TARGET:
        return _TM_TARGET
    half = -(-((m + 1) // 2) // 8) * 8   # ~m/2 rounded up to a multiple of 8
    return min(_TM_TARGET, max(8, half))


def _parallel(n_axes=1):
    return pltpu.CompilerParams(dimension_semantics=("parallel",) * n_axes)


def _layer_norm(x, gamma, beta):
    mean = jnp.mean(x, axis=-1, keepdims=True)
    var = jnp.mean(jnp.square(x - mean), axis=-1, keepdims=True)
    return (x - mean) * jax.lax.rsqrt(var + LN_EPS) * gamma + beta


# --------------------------------------------------------------------------
# Pallas kernel bodies
# --------------------------------------------------------------------------

def _stacked_proj_kernel(x_ref, w_ref, b_ref, o_ref):
    """Reads x once, emits n projections (QKV fusion / cross-KV fusion)."""
    x = x_ref[...]                                  # bf16 [TM, H]
    for i in range(w_ref.shape[0]):
        o_ref[i] = (jnp.dot(x, w_ref[i], preferred_element_type=jnp.float32)
                    + b_ref[i]).astype(o_ref.dtype)


def _ffn_res_ln_kernel(x_ref, w1_ref, b1_ref, w2_ref, b2_ref, g_ref, beta_ref,
                       o_ref):
    """linear1 + ReLU + linear2 + residual + LayerNorm; 4H stays in VMEM."""
    x = x_ref[...]                                  # bf16 [TM, D]
    h = jnp.dot(x, w1_ref[...], preferred_element_type=jnp.float32) + b1_ref[...]
    h = jnp.maximum(h, 0.0)
    y = jnp.dot(h.astype(jnp.bfloat16), w2_ref[...],
                preferred_element_type=jnp.float32) + b2_ref[...]
    y = y + x.astype(jnp.float32)
    o_ref[...] = _layer_norm(y, g_ref[...], beta_ref[...]).astype(o_ref.dtype)


def _embed_proj_kernel(tok_ref, num_ref, wne_ref, bne_ref, wt_ref, bt_ref,
                       wn_ref, bn_ref, o_ref):
    """NumberEmbedding + token->common + num->common + add, fused."""
    num_emb = (jnp.dot(num_ref[...].astype(jnp.bfloat16), wne_ref[...],
                       preferred_element_type=jnp.float32) + bne_ref[...])
    y_tok = (jnp.dot(tok_ref[...], wt_ref[...],
                     preferred_element_type=jnp.float32) + bt_ref[...])
    y_num = (jnp.dot(num_emb.astype(jnp.bfloat16), wn_ref[...],
                     preferred_element_type=jnp.float32) + bn_ref[...])
    o_ref[...] = (y_tok + y_num).astype(o_ref.dtype)


def _dual_head_kernel(x_ref, wt_ref, bt_ref, wn_ref, bn_ref, tok_ref, num_ref):
    """Both output heads in one kernel; x read from HBM once (outputs f32)."""
    x = x_ref[...]                                  # bf16 [TM, H]
    tok_ref[...] = jnp.dot(x, wt_ref[...],
                           preferred_element_type=jnp.float32) + bt_ref[...]
    num_ref[...] = jnp.tanh(jnp.dot(x, wn_ref[...],
                                    preferred_element_type=jnp.float32)
                            + bn_ref[...])


def _mh_attention(q_f32, k_bf16, v_bf16, bias_f32, nheads):
    """Masked-head multi-head attention core.  q already scaled (f32),
    bias broadcastable to [Sq, Sk].  Returns f32 [Sq, H] context."""
    Sq, H = q_f32.shape
    hd = H // nheads
    qb = q_f32.astype(jnp.bfloat16)                 # cast hoisted out of loop
    col = jax.lax.broadcasted_iota(jnp.int32, (1, H), 1)
    acc = jnp.zeros((Sq, H), jnp.float32)
    for h in range(nheads):
        head_cols = (col >= h * hd) & (col < (h + 1) * hd)
        qh = jnp.where(head_cols, qb, 0.0)
        vh = jnp.where(head_cols, v_bf16, 0.0)
        # QK^T without materializing a transpose (contract dim 1 of both).
        s = jax.lax.dot_general(qh, k_bf16, (((1,), (1,)), ((), ())),
                                preferred_element_type=jnp.float32)
        s = s + bias_f32
        m = jnp.max(s, axis=-1, keepdims=True)
        p = jnp.exp(s - m)
        inv = pl.reciprocal(jnp.sum(p, axis=-1, keepdims=True), approx=True)
        ctx = jnp.dot(p.astype(jnp.bfloat16), vh,
                      preferred_element_type=jnp.float32)
        acc = acc + ctx * inv                       # lands only in head-h cols
    return acc


def _self_attn_block_kernel(q_ref, k_ref, v_ref, pad_ref, res_ref,
                            wo_ref, bo_ref, g_ref, beta_ref, o_ref,
                            *, scale, nheads, causal):
    """Self-attention (all heads of one batch element) fused with
    out-projection + residual + LayerNorm.  Mask built in-kernel."""
    q = q_ref[...].astype(jnp.float32) * scale      # scale folded into q
    k = k_ref[...]                                  # bf16 [Sk, H]
    v = v_ref[...]                                  # bf16 [Sk, H]
    bias = pad_ref[...].astype(jnp.float32)         # [1, Sk] padding row
    Sq = q.shape[0]
    Sk = k.shape[0]
    if causal:
        ri = jax.lax.broadcasted_iota(jnp.int32, (Sq, Sk), 0)
        ci = jax.lax.broadcasted_iota(jnp.int32, (Sq, Sk), 1)
        bias = bias + jnp.where(ci > ri, NEG_INF, 0.0)
    acc = _mh_attention(q, k, v, bias, nheads)
    # Epilogue: out-projection + residual + LayerNorm.
    y = (jnp.dot(acc.astype(jnp.bfloat16), wo_ref[...],
                 preferred_element_type=jnp.float32) + bo_ref[...])
    y = y + res_ref[...].astype(jnp.float32)
    o_ref[...] = _layer_norm(y, g_ref[...], beta_ref[...]).astype(o_ref.dtype)


def _cross_attn_block_kernel(x_ref, wq_ref, bq_ref, k_ref, v_ref, pad_ref,
                             wo_ref, bo_ref, g_ref, beta_ref, o_ref,
                             *, scale, nheads):
    """Fused cross-attention: q-projection + attention + out-projection +
    residual + LayerNorm for one batch element."""
    x = x_ref[...]                                  # bf16 [Sq, H] (residual)
    q = (jnp.dot(x, wq_ref[...], preferred_element_type=jnp.float32)
         + bq_ref[...]) * scale
    k = k_ref[...]                                  # bf16 [Sk, H]
    v = v_ref[...]                                  # bf16 [Sk, H]
    bias = pad_ref[...].astype(jnp.float32)         # [1, Sk]
    acc = _mh_attention(q, k, v, bias, nheads)
    y = (jnp.dot(acc.astype(jnp.bfloat16), wo_ref[...],
                 preferred_element_type=jnp.float32) + bo_ref[...])
    y = y + x.astype(jnp.float32)
    o_ref[...] = _layer_norm(y, g_ref[...], beta_ref[...]).astype(o_ref.dtype)


# --------------------------------------------------------------------------
# pallas_call wrappers (M-tiled, pipelined)
# --------------------------------------------------------------------------

def stacked_proj3d(x, w_stack, b_stack):
    """x: [B,S,H] bf16, w_stack: [n,H,H] bf16, b_stack: [n,H] f32 -> [n,B,S,H] bf16."""
    B, S, H = x.shape
    n = w_stack.shape[0]
    M = B * S
    TM = _choose_tm(M)
    out = pl.pallas_call(
        _stacked_proj_kernel,
        out_shape=jax.ShapeDtypeStruct((n, M, H), ACT_DTYPE),
        grid=(pl.cdiv(M, TM),),
        in_specs=[
            pl.BlockSpec((TM, H), lambda i: (i, 0)),
            pl.BlockSpec((n, H, H), lambda i: (0, 0, 0)),
            pl.BlockSpec((n, 1, H), lambda i: (0, 0, 0)),
        ],
        out_specs=pl.BlockSpec((n, TM, H), lambda i: (0, i, 0)),
        compiler_params=_parallel(),
    )(x.reshape(M, H), w_stack, b_stack.reshape(n, 1, H))
    return out.reshape(n, B, S, H)


def ffn_res_ln3d(x, w1, b1, w2, b2, gamma, beta):
    B, S, D = x.shape
    DH = w1.shape[1]
    M = B * S
    TM = _choose_tm(M)
    out = pl.pallas_call(
        _ffn_res_ln_kernel,
        out_shape=jax.ShapeDtypeStruct((M, D), ACT_DTYPE),
        grid=(pl.cdiv(M, TM),),
        in_specs=[
            pl.BlockSpec((TM, D), lambda i: (i, 0)),
            pl.BlockSpec((D, DH), lambda i: (0, 0)),
            pl.BlockSpec((1, DH), lambda i: (0, 0)),
            pl.BlockSpec((DH, D), lambda i: (0, 0)),
            pl.BlockSpec((1, D), lambda i: (0, 0)),
            pl.BlockSpec((1, D), lambda i: (0, 0)),
            pl.BlockSpec((1, D), lambda i: (0, 0)),
        ],
        out_specs=pl.BlockSpec((TM, D), lambda i: (i, 0)),
        compiler_params=_parallel(),
    )(x.reshape(M, D), w1, b1.reshape(1, DH), w2, b2.reshape(1, D),
      gamma.reshape(1, D), beta.reshape(1, D))
    return out.reshape(B, S, D)


def embed_proj3d(tok_emb, num_feat, params):
    B, S, TD = tok_emb.shape
    FD = num_feat.shape[-1]
    ND = params["num_emb_w"].shape[1]
    H = params["tok2c_w"].shape[1]
    M = B * S
    TM = _choose_tm(M)
    out = pl.pallas_call(
        _embed_proj_kernel,
        out_shape=jax.ShapeDtypeStruct((M, H), ACT_DTYPE),
        grid=(pl.cdiv(M, TM),),
        in_specs=[
            pl.BlockSpec((TM, TD), lambda i: (i, 0)),
            pl.BlockSpec((TM, FD), lambda i: (i, 0)),
            pl.BlockSpec((FD, ND), lambda i: (0, 0)),
            pl.BlockSpec((1, ND), lambda i: (0, 0)),
            pl.BlockSpec((TD, H), lambda i: (0, 0)),
            pl.BlockSpec((1, H), lambda i: (0, 0)),
            pl.BlockSpec((ND, H), lambda i: (0, 0)),
            pl.BlockSpec((1, H), lambda i: (0, 0)),
        ],
        out_specs=pl.BlockSpec((TM, H), lambda i: (i, 0)),
        compiler_params=_parallel(),
    )(tok_emb.reshape(M, TD), num_feat.reshape(M, FD),
      params["num_emb_w"], params["num_emb_b"].reshape(1, ND),
      params["tok2c_w"], params["tok2c_b"].reshape(1, H),
      params["num2c_w"], params["num2c_b"].reshape(1, H))
    return out.reshape(B, S, H)


def dual_head3d(x, wt, bt, wn, bn):
    B, S, H = x.shape
    V = wt.shape[1]
    F = wn.shape[1]
    M = B * S
    TM = _choose_tm(M)
    tok, num = pl.pallas_call(
        _dual_head_kernel,
        out_shape=(jax.ShapeDtypeStruct((M, V), jnp.float32),
                   jax.ShapeDtypeStruct((M, F), jnp.float32)),
        grid=(pl.cdiv(M, TM),),
        in_specs=[
            pl.BlockSpec((TM, H), lambda i: (i, 0)),
            pl.BlockSpec((H, V), lambda i: (0, 0)),
            pl.BlockSpec((1, V), lambda i: (0, 0)),
            pl.BlockSpec((H, F), lambda i: (0, 0)),
            pl.BlockSpec((1, F), lambda i: (0, 0)),
        ],
        out_specs=(pl.BlockSpec((TM, V), lambda i: (i, 0)),
                   pl.BlockSpec((TM, F), lambda i: (i, 0))),
        compiler_params=_parallel(),
    )(x.reshape(M, H), wt, bt.reshape(1, V), wn, bn.reshape(1, F))
    return tok.reshape(B, S, V), num.reshape(B, S, F)


def self_attn_block(qkv, pad_row, residual, wo, bo, gamma, beta, nheads,
                    causal):
    """qkv: [3,B,S,H] bf16, pad_row: [B,1,S] f32, residual: [B,S,H] bf16.
    Returns LN(residual + out_proj(attn)) as [B,S,H] bf16."""
    _, B, S, H = qkv.shape
    scale = 1.0 / float(H // nheads) ** 0.5
    return pl.pallas_call(
        functools.partial(_self_attn_block_kernel, scale=scale, nheads=nheads,
                          causal=causal),
        out_shape=jax.ShapeDtypeStruct((B, S, H), ACT_DTYPE),
        grid=(B,),
        in_specs=[
            pl.BlockSpec((None, None, S, H), lambda b: (0, b, 0, 0)),
            pl.BlockSpec((None, None, S, H), lambda b: (1, b, 0, 0)),
            pl.BlockSpec((None, None, S, H), lambda b: (2, b, 0, 0)),
            pl.BlockSpec((None, 1, S), lambda b: (b, 0, 0)),
            pl.BlockSpec((None, S, H), lambda b: (b, 0, 0)),
            pl.BlockSpec((H, H), lambda b: (0, 0)),
            pl.BlockSpec((1, H), lambda b: (0, 0)),
            pl.BlockSpec((1, H), lambda b: (0, 0)),
            pl.BlockSpec((1, H), lambda b: (0, 0)),
        ],
        out_specs=pl.BlockSpec((None, S, H), lambda b: (b, 0, 0)),
        compiler_params=_parallel(),
    )(qkv, qkv, qkv, pad_row, residual, wo, bo.reshape(1, H),
      gamma.reshape(1, H), beta.reshape(1, H))


def cross_attn_block(x, kv, pad_row, wq, bq, wo, bo, gamma, beta, nheads):
    """x: [B,Sq,H] bf16 (query source & residual), kv: [2,B,Sk,H] bf16,
    pad_row: [B,1,Sk] f32.  Returns LN(x + out_proj(attn(xWq, K, V)))."""
    B, Sq, H = x.shape
    Sk = kv.shape[2]
    scale = 1.0 / float(H // nheads) ** 0.5
    return pl.pallas_call(
        functools.partial(_cross_attn_block_kernel, scale=scale, nheads=nheads),
        out_shape=jax.ShapeDtypeStruct((B, Sq, H), ACT_DTYPE),
        grid=(B,),
        in_specs=[
            pl.BlockSpec((None, Sq, H), lambda b: (b, 0, 0)),
            pl.BlockSpec((H, H), lambda b: (0, 0)),
            pl.BlockSpec((1, H), lambda b: (0, 0)),
            pl.BlockSpec((None, None, Sk, H), lambda b: (0, b, 0, 0)),
            pl.BlockSpec((None, None, Sk, H), lambda b: (1, b, 0, 0)),
            pl.BlockSpec((None, 1, Sk), lambda b: (b, 0, 0)),
            pl.BlockSpec((H, H), lambda b: (0, 0)),
            pl.BlockSpec((1, H), lambda b: (0, 0)),
            pl.BlockSpec((1, H), lambda b: (0, 0)),
            pl.BlockSpec((1, H), lambda b: (0, 0)),
        ],
        out_specs=pl.BlockSpec((None, Sq, H), lambda b: (b, 0, 0)),
        compiler_params=_parallel(),
    )(x, wq, bq.reshape(1, H), kv, kv, pad_row, wo, bo.reshape(1, H),
      gamma.reshape(1, H), beta.reshape(1, H))


# --------------------------------------------------------------------------
# Transformer layers (post-LN, as in PyTorch default)
# --------------------------------------------------------------------------

def encoder_layer(x, p, pad_row, nheads):
    qkv = stacked_proj3d(x, p["sa_w_qkv"], p["sa_b_qkv"])
    x = self_attn_block(qkv, pad_row, x, p["sa_wo"], p["sa_bo"],
                        p["ln1_g"], p["ln1_b"], nheads, causal=False)
    x = ffn_res_ln3d(x, p["ff_w1"], p["ff_b1"], p["ff_w2"], p["ff_b2"],
                     p["ln2_g"], p["ln2_b"])
    return x


def decoder_layer(x, memory, p, self_pad, cross_pad, nheads):
    qkv = stacked_proj3d(x, p["sa_w_qkv"], p["sa_b_qkv"])
    x = self_attn_block(qkv, self_pad, x, p["sa_wo"], p["sa_bo"],
                        p["ln1_g"], p["ln1_b"], nheads, causal=True)
    kv = stacked_proj3d(memory, p["ca_w_kv"], p["ca_b_kv"])
    x = cross_attn_block(x, kv, cross_pad, p["ca_wq"], p["ca_bq"],
                         p["ca_wo"], p["ca_bo"], p["ln2_g"], p["ln2_b"], nheads)
    x = ffn_res_ln3d(x, p["ff_w1"], p["ff_b1"], p["ff_w2"], p["ff_b2"],
                     p["ln3_g"], p["ln3_b"])
    return x


def padding_row(kpm):
    """kpm: [B, Sk] bool (True == ignore) -> additive bias row [B, 1, Sk]."""
    return jnp.where(kpm, NEG_INF, 0.0).astype(jnp.float32)[:, None, :]


# --------------------------------------------------------------------------
# Full model forward (matches ImprovedCrossEmbeddingSeq2SeqModel.forward)
# --------------------------------------------------------------------------

def model_forward(params, enc_tok, enc_num, enc_kpm,
                  dec_tok, dec_num, dec_kpm, *, nheads):
    enc_pad = padding_row(enc_kpm)
    dec_pad = padding_row(dec_kpm)

    # Token-embedding gather stays in XLA (no clean Pallas equivalent needed).
    enc_tok_emb = jnp.take(params["tok_emb"], enc_tok, axis=0)
    memory = embed_proj3d(enc_tok_emb, enc_num, params)
    for lp in params["enc_layers"]:
        memory = encoder_layer(memory, lp, enc_pad, nheads)

    dec_tok_emb = jnp.take(params["tok_emb"], dec_tok, axis=0)
    x = embed_proj3d(dec_tok_emb, dec_num, params)
    for lp in params["dec_layers"]:
        x = decoder_layer(x, memory, lp, dec_pad, enc_pad, nheads)

    return dual_head3d(x, params["tok_head_w"], params["tok_head_b"],
                       params["num_head_w"], params["num_head_b"])


# --------------------------------------------------------------------------
# Deterministic parameter initialization (weights pre-cast to bf16)
# --------------------------------------------------------------------------

def init_params(key, vocab_size, token_dim, num_dim, hidden,
                encoder_layers, decoder_layers, feature_dim):
    keys = iter(jax.random.split(key, 1024))
    wdt = jnp.bfloat16   # matmul-operand storage dtype

    def lin(din, dout):
        w = (jax.random.normal(next(keys), (din, dout), jnp.float32)
             / jnp.sqrt(jnp.float32(din))).astype(wdt)
        b = jax.random.normal(next(keys), (dout,), jnp.float32) * 0.01
        return w, b

    def self_attn(h):
        wq, bq = lin(h, h); wk, bk = lin(h, h)
        wv, bv = lin(h, h); wo, bo = lin(h, h)
        return dict(sa_w_qkv=jnp.stack([wq, wk, wv]),
                    sa_b_qkv=jnp.stack([bq, bk, bv]),
                    sa_wo=wo, sa_bo=bo)

    def cross_attn(h):
        wq, bq = lin(h, h); wk, bk = lin(h, h)
        wv, bv = lin(h, h); wo, bo = lin(h, h)
        return dict(ca_wq=wq, ca_bq=bq,
                    ca_w_kv=jnp.stack([wk, wv]),
                    ca_b_kv=jnp.stack([bk, bv]),
                    ca_wo=wo, ca_bo=bo)

    def enc_layer(h):
        w1, b1 = lin(h, 4 * h)
        w2, b2 = lin(4 * h, h)
        p = dict(ln1_g=jnp.ones((h,), jnp.float32),
                 ln1_b=jnp.zeros((h,), jnp.float32),
                 ln2_g=jnp.ones((h,), jnp.float32),
                 ln2_b=jnp.zeros((h,), jnp.float32),
                 ff_w1=w1, ff_b1=b1, ff_w2=w2, ff_b2=b2)
        p.update(self_attn(h))
        return p

    def dec_layer(h):
        p = enc_layer(h)
        p.update(cross_attn(h))
        p["ln3_g"] = jnp.ones((h,), jnp.float32)
        p["ln3_b"] = jnp.zeros((h,), jnp.float32)
        return p

    tok_emb = (jax.random.normal(next(keys), (vocab_size, token_dim),
                                 jnp.float32) * 0.02).astype(wdt)
    num_emb_w, num_emb_b = lin(feature_dim, num_dim)
    tok2c_w, tok2c_b = lin(token_dim, hidden)
    num2c_w, num2c_b = lin(num_dim, hidden)
    tok_head_w, tok_head_b = lin(hidden, vocab_size)
    num_head_w, num_head_b = lin(hidden, feature_dim)

    return dict(
        tok_emb=tok_emb,
        num_emb_w=num_emb_w, num_emb_b=num_emb_b,
        tok2c_w=tok2c_w, tok2c_b=tok2c_b,
        num2c_w=num2c_w, num2c_b=num2c_b,
        enc_layers=[enc_layer(hidden) for _ in range(encoder_layers)],
        dec_layers=[dec_layer(hidden) for _ in range(decoder_layers)],
        tok_head_w=tok_head_w, tok_head_b=tok_head_b,
        num_head_w=num_head_w, num_head_b=num_head_b,
    )


# --------------------------------------------------------------------------

if __name__ == "__main__":
    VOCAB, TOKEN_DIM, NUM_DIM, HIDDEN = 64, 16, 16, 32
    ENC_LAYERS, DEC_LAYERS, FEATURE_DIM, NHEADS = 2, 2, 4, 8
    B, S_ENC, S_DEC = 2, 8, 8

    key = jax.random.PRNGKey(0)
    kp, k1, k2, k3, k4 = jax.random.split(key, 5)

    params = init_params(kp, VOCAB, TOKEN_DIM, NUM_DIM, HIDDEN,
                         ENC_LAYERS, DEC_LAYERS, FEATURE_DIM)

    enc_tok = jax.random.randint(k1, (B, S_ENC), 0, VOCAB, dtype=jnp.int32)
    enc_num = jax.random.normal(k2, (B, S_ENC, FEATURE_DIM), jnp.float32)
    dec_tok = jax.random.randint(k3, (B, S_DEC), 0, VOCAB, dtype=jnp.int32)
    dec_num = jax.random.normal(k4, (B, S_DEC, FEATURE_DIM), jnp.float32)

    # key_padding masks: bool, True == padded/ignored (PyTorch convention).
    enc_kpm = jnp.arange(S_ENC)[None, :] >= jnp.array([S_ENC, S_ENC - 2])[:, None]
    dec_kpm = jnp.arange(S_DEC)[None, :] >= jnp.array([S_DEC - 1, S_DEC])[:, None]

    fwd = jax.jit(functools.partial(model_forward, nheads=NHEADS))
    token_logits, num_out = fwd(params, enc_tok, enc_num, enc_kpm,
                                dec_tok, dec_num, dec_kpm)
    jax.block_until_ready((token_logits, num_out))

    assert token_logits.shape == (B, S_DEC, VOCAB)
    assert num_out.shape == (B, S_DEC, FEATURE_DIM)
    assert token_logits.dtype == jnp.float32 and num_out.dtype == jnp.float32
    assert bool(jnp.all(jnp.isfinite(token_logits)))
    assert bool(jnp.all(jnp.isfinite(num_out)))
    print("KERNEL_OK")
</pallas_src>

<mosaic_0001>
module attributes {stable_mosaic.version = 11 : i64} {
  func.func @_embed_proj_kernel(%arg0: i32, %arg1: memref<8x16xbf16, #tpu.memory_space<vmem>>, %arg2: memref<8x4xf32, #tpu.memory_space<vmem>>, %arg3: memref<4x16xbf16, #tpu.memory_space<vmem>>, %arg4: memref<1x16xf32, #tpu.memory_space<vmem>>, %arg5: memref<16x32xbf16, #tpu.memory_space<vmem>>, %arg6: memref<1x32xf32, #tpu.memory_space<vmem>>, %arg7: memref<16x32xbf16, #tpu.memory_space<vmem>>, %arg8: memref<1x32xf32, #tpu.memory_space<vmem>>, %arg9: memref<8x32xbf16, #tpu.memory_space<vmem>>) attributes {dimension_semantics = [#tpu.dimension_semantics<parallel>], iteration_bounds = array<i64: 2>, scalar_prefetch = 0 : i64, scratch_operands = 0 : i64, tpu.core_type = #tpu.core_type<tc>, window_params = [{transform_indices = @transform_0, window_bounds = array<i64: 8, 16>}, {transform_indices = @transform_1, window_bounds = array<i64: 8, 4>}, {pipeline_mode = #tpu.pipeline_mode<synchronous>, transform_indices = @transform_2, window_bounds = array<i64: 4, 16>}, {pipeline_mode = #tpu.pipeline_mode<synchronous>, transform_indices = @transform_3, window_bounds = array<i64: 1, 16>}, {pipeline_mode = #tpu.pipeline_mode<synchronous>, transform_indices = @transform_4, window_bounds = array<i64: 16, 32>}, {pipeline_mode = #tpu.pipeline_mode<synchronous>, transform_indices = @transform_5, window_bounds = array<i64: 1, 32>}, {pipeline_mode = #tpu.pipeline_mode<synchronous>, transform_indices = @transform_6, window_bounds = array<i64: 16, 32>}, {pipeline_mode = #tpu.pipeline_mode<synchronous>, transform_indices = @transform_7, window_bounds = array<i64: 1, 32>}, {transform_indices = @transform_8, window_bounds = array<i64: 8, 32>}]} {
    %c0 = arith.constant 0 : index
    %c0_0 = arith.constant 0 : index
    %0 = vector.load %arg2[%c0, %c0_0] : memref<8x4xf32, #tpu.memory_space<vmem>>, vector<8x4xf32>
    %1 = arith.truncf %0 : vector<8x4xf32> to vector<8x4xbf16>
    %c0_1 = arith.constant 0 : index
    %c0_2 = arith.constant 0 : index
    %2 = vector.load %arg3[%c0_1, %c0_2] : memref<4x16xbf16, #tpu.memory_space<vmem>>, vector<4x16xbf16>
    %cst = arith.constant dense<0.000000e+00> : vector<8x16xf32>
    %3 = tpu.matmul %1, %2, %cst {dimension_numbers = #tpu.dot_dimension_numbers<[1], [0], [0], [1], [0, 0, 1, 1], [], []>} : vector<8x4xbf16>, vector<4x16xbf16>, vector<8x16xf32> -> vector<8x16xf32>
    %c0_3 = arith.constant 0 : index
    %c0_4 = arith.constant 0 : index
    %4 = vector.load %arg4[%c0_3, %c0_4] : memref<1x16xf32, #tpu.memory_space<vmem>>, vector<1x16xf32>
    %5 = vector.broadcast %4 : vector<1x16xf32> to vector<8x16xf32>
    %6 = arith.addf %3, %5 : vector<8x16xf32>
    %c0_5 = arith.constant 0 : index
    %c0_6 = arith.constant 0 : index
    %7 = vector.load %arg1[%c0_5, %c0_6] : memref<8x16xbf16, #tpu.memory_space<vmem>>, vector<8x16xbf16>
    %c0_7 = arith.constant 0 : index
    %c0_8 = arith.constant 0 : index
    %8 = vector.load %arg5[%c0_7, %c0_8] : memref<16x32xbf16, #tpu.memory_space<vmem>>, vector<16x32xbf16>
    %cst_9 = arith.constant dense<0.000000e+00> : vector<8x32xf32>
    %9 = tpu.matmul %7, %8, %cst_9 {dimension_numbers = #tpu.dot_dimension_numbers<[1], [0], [0], [1], [0, 0, 1, 1], [], []>} : vector<8x16xbf16>, vector<16x32xbf16>, vector<8x32xf32> -> vector<8x32xf32>
    %c0_10 = arith.constant 0 : index
    %c0_11 = arith.constant 0 : index
    %10 = vector.load %arg6[%c0_10, %c0_11] : memref<1x32xf32, #tpu.memory_space<vmem>>, vector<1x32xf32>
    %11 = vector.broadcast %10 : vector<1x32xf32> to vector<8x32xf32>
    %12 = arith.addf %9, %11 : vector<8x32xf32>
    %13 = arith.truncf %6 : vector<8x16xf32> to vector<8x16xbf16>
    %c0_12 = arith.constant 0 : index
    %c0_13 = arith.constant 0 : index
    %14 = vector.load %arg7[%c0_12, %c0_13] : memref<16x32xbf16, #tpu.memory_space<vmem>>, vector<16x32xbf16>
    %cst_14 = arith.constant dense<0.000000e+00> : vector<8x32xf32>
    %15 = tpu.matmul %13, %14, %cst_14 {dimension_numbers = #tpu.dot_dimension_numbers<[1], [0], [0], [1], [0, 0, 1, 1], [], []>} : vector<8x16xbf16>, vector<16x32xbf16>, vector<8x32xf32> -> vector<8x32xf32>
    %c0_15 = arith.constant 0 : index
    %c0_16 = arith.constant 0 : index
    %16 = vector.load %arg8[%c0_15, %c0_16] : memref<1x32xf32, #tpu.memory_space<vmem>>, vector<1x32xf32>
    %17 = vector.broadcast %16 : vector<1x32xf32> to vector<8x32xf32>
    %18 = arith.addf %15, %17 : vector<8x32xf32>
    %19 = arith.addf %12, %18 : vector<8x32xf32>
    %20 = arith.truncf %19 : vector<8x32xf32> to vector<8x32xbf16>
    %c0_17 = arith.constant 0 : index
    %c0_18 = arith.constant 0 : index
    %21 = vector.load %arg9[%c0_17, %c0_18] : memref<8x32xbf16, #tpu.memory_space<vmem>>, vector<8x32xbf16>
    tpu.vector_store %arg9[%c0_17, %c0_18], %20 {strides = array<i32>} : memref<8x32xbf16, #tpu.memory_space<vmem>>, vector<8x32xbf16>,
    return
  }
  func.func @transform_0(%arg0: i32) -> (i32, i32) {
    %c0_i32 = arith.constant 0 : i32
    %c0_i32_0 = arith.constant 0 : i32
    return %arg0, %c0_i32 : i32, i32
  }
  func.func @transform_1(%arg0: i32) -> (i32, i32) {
    %c0_i32 = arith.constant 0 : i32
    %c0_i32_0 = arith.constant 0 : i32
    return %arg0, %c0_i32 : i32, i32
  }
  func.func @transform_2(%arg0: i32) -> (i32, i32) {
    %c0_i32 = arith.constant 0 : i32
    %c0_i32_0 = arith.constant 0 : i32
    %c0_i32_1 = arith.constant 0 : i32
    return %c0_i32, %c0_i32_0 : i32, i32
  }
  func.func @transform_3(%arg0: i32) -> (i32, i32) {
    %c0_i32 = arith.constant 0 : i32
    %c0_i32_0 = arith.constant 0 : i32
    %c0_i32_1 = arith.constant 0 : i32
    return %c0_i32, %c0_i32_0 : i32, i32
  }
  func.func @transform_4(%arg0: i32) -> (i32, i32) {
    %c0_i32 = arith.constant 0 : i32
    %c0_i32_0 = arith.constant 0 : i32
    %c0_i32_1 = arith.constant 0 : i32
    return %c0_i32, %c0_i32_0 : i32, i32
  }
  func.func @transform_5(%arg0: i32) -> (i32, i32) {
    %c0_i32 = arith.constant 0 : i32
    %c0_i32_0 = arith.constant 0 : i32
    %c0_i32_1 = arith.constant 0 : i32
    return %c0_i32, %c0_i32_0 : i32, i32
  }
  func.func @transform_6(%arg0: i32) -> (i32, i32) {
    %c0_i32 = arith.constant 0 : i32
    %c0_i32_0 = arith.constant 0 : i32
    %c0_i32_1 = arith.constant 0 : i32
    return %c0_i32, %c0_i32_0 : i32, i32
  }
  func.func @transform_7(%arg0: i32) -> (i32, i32) {
    %c0_i32 = arith.constant 0 : i32
    %c0_i32_0 = arith.constant 0 : i32
    %c0_i32_1 = arith.constant 0 : i32
    return %c0_i32, %c0_i32_0 : i32, i32
  }
  func.func @transform_8(%arg0: i32) -> (i32, i32) {
    %c0_i32 = arith.constant 0 : i32
    %c0_i32_0 = arith.constant 0 : i32
    return %arg0, %c0_i32 : i32, i32
  }
}

module attributes {stable_mosaic.version = 11 : i64} {
  func.func @_stacked_proj_kernel(%arg0: i32, %arg1: memref<8x32xbf16, #tpu.memory_space<vmem>>, %arg2: memref<3x32x32xbf16, #tpu.memory_space<vmem>>, %arg3: memref<3x1x32xf32, #tpu.memory_space<vmem>>, %arg4: memref<3x8x32xbf16, #tpu.memory_space<vmem>>) attributes {dimension_semantics = [#tpu.dimension_semantics<parallel>], iteration_bounds = array<i64: 2>, scalar_prefetch = 0 : i64, scratch_operands = 0 : i64, tpu.core_type = #tpu.core_type<tc>, window_params = [{transform_indices = @transform_0, window_bounds = array<i64: 8, 32>}, {pipeline_mode = #tpu.pipeline_mode<synchronous>, transform_indices = @transform_1, window_bounds = array<i64: 3, 32, 32>}, {pipeline_mode = #tpu.pipeline_mode<synchronous>, transform_indices = @transform_2, window_bounds = array<i64: 3, 1, 32>}, {transform_indices = @transform_3, window_bounds = array<i64: 3, 8, 32>}]} {
    %c0 = arith.constant 0 : index
    %c0_0 = arith.constant 0 : index
    %0 = vector.load %arg1[%c0, %c0_0] : memref<8x32xbf16, #tpu.memory_space<vmem>>, vector<8x32xbf16>
    %c0_1 = arith.constant 0 : index
    %c0_2 = arith.constant 0 : index
    %c0_3 = arith.constant 0 : index
    %1 = vector.load %arg2[%c0_1, %c0_2, %c0_3] : memref<3x32x32xbf16, #tpu.memory_space<vmem>>, vector<1x32x32xbf16>
    %2 = vector.shape_cast %1 : vector<1x32x32xbf16> to vector<32x32xbf16>
    %cst = arith.constant dense<0.000000e+00> : vector<8x32xf32>
    %3 = tpu.matmul %0, %2, %cst {dimension_numbers = #tpu.dot_dimension_numbers<[1], [0], [0], [1], [0, 0, 1, 1], [], []>} : vector<8x32xbf16>, vector<32x32xbf16>, vector<8x32xf32> -> vector<8x32xf32>
    %c0_4 = arith.constant 0 : index
    %c0_5 = arith.constant 0 : index
    %c0_6 = arith.constant 0 : index
    %4 = vector.load %arg3[%c0_4, %c0_5, %c0_6] : memref<3x1x32xf32, #tpu.memory_space<vmem>>, vector<1x1x32xf32>
    %5 = vector.shape_cast %4 : vector<1x1x32xf32> to vector<1x32xf32>
    %6 = vector.broadcast %5 : vector<1x32xf32> to vector<8x32xf32>
    %7 = arith.addf %3, %6 : vector<8x32xf32>
    %8 = arith.truncf %7 : vector<8x32xf32> to vector<8x32xbf16>
    %c0_7 = arith.constant 0 : index
    %c0_8 = arith.constant 0 : index
    %c0_9 = arith.constant 0 : index
    %9 = vector.load %arg4[%c0_7, %c0_8, %c0_9] : memref<3x8x32xbf16, #tpu.memory_space<vmem>>, vector<1x8x32xbf16>
    %10 = vector.shape_cast %9 : vector<1x8x32xbf16> to vector<8x32xbf16>
    %11 = vector.shape_cast %8 : vector<8x32xbf16> to vector<1x8x32xbf16>
    tpu.vector_store %arg4[%c0_7, %c0_8, %c0_9], %11 {strides = array<i32>} : memref<3x8x32xbf16, #tpu.memory_space<vmem>>, vector<1x8x32xbf16>,
    %c1 = arith.constant 1 : index
    %c0_10 = arith.constant 0 : index
    %c0_11 = arith.constant 0 : index
    %12 = vector.load %arg2[%c1, %c0_10, %c0_11] : memref<3x32x32xbf16, #tpu.memory_space<vmem>>, vector<1x32x32xbf16>
    %13 = vector.shape_cast %12 : vector<1x32x32xbf16> to vector<32x32xbf16>
    %cst_12 = arith.constant dense<0.000000e+00> : vector<8x32xf32>
    %14 = tpu.matmul %0, %13, %cst_12 {dimension_numbers = #tpu.dot_dimension_numbers<[1], [0], [0], [1], [0, 0, 1, 1], [], []>} : vector<8x32xbf16>, vector<32x32xbf16>, vector<8x32xf32> -> vector<8x32xf32>
    %c1_13 = arith.constant 1 : index
    %c0_14 = arith.constant 0 : index
    %c0_15 = arith.constant 0 : index
    %15 = vector.load %arg3[%c1_13, %c0_14, %c0_15] : memref<3x1x32xf32, #tpu.memory_space<vmem>>, vector<1x1x32xf32>
    %16 = vector.shape_cast %15 : vector<1x1x32xf32> to vector<1x32xf32>
    %17 = vector.broadcast %16 : vector<1x32xf32> to vector<8x32xf32>
    %18 = arith.addf %14, %17 : vector<8x32xf32>
    %19 = arith.truncf %18 : vector<8x32xf32> to vector<8x32xbf16>
    %c1_16 = arith.constant 1 : index
    %c0_17 = arith.constant 0 : index
    %c0_18 = arith.constant 0 : index
    %20 = vector.load %arg4[%c1_16, %c0_17, %c0_18] : memref<3x8x32xbf16, #tpu.memory_space<vmem>>, vector<1x8x32xbf16>
    %21 = vector.shape_cast %20 : vector<1x8x32xbf16> to vector<8x32xbf16>
    %22 = vector.shape_cast %19 : vector<8x32xbf16> to vector<1x8x32xbf16>
    tpu.vector_store %arg4[%c1_16, %c0_17, %c0_18], %22 {strides = array<i32>} : memref<3x8x32xbf16, #tpu.memory_space<vmem>>, vector<1x8x32xbf16>,
    %c2 = arith.constant 2 : index
    %c0_19 = arith.constant 0 : index
    %c0_20 = arith.constant 0 : index
    %23 = vector.load %arg2[%c2, %c0_19, %c0_20] : memref<3x32x32xbf16, #tpu.memory_space<vmem>>, vector<1x32x32xbf16>
    %24 = vector.shape_cast %23 : vector<1x32x32xbf16> to vector<32x32xbf16>
    %cst_21 = arith.constant dense<0.000000e+00> : vector<8x32xf32>
    %25 = tpu.matmul %0, %24, %cst_21 {dimension_numbers = #tpu.dot_dimension_numbers<[1], [0], [0], [1], [0, 0, 1, 1], [], []>} : vector<8x32xbf16>, vector<32x32xbf16>, vector<8x32xf32> -> vector<8x32xf32>
    %c2_22 = arith.constant 2 : index
    %c0_23 = arith.constant 0 : index
    %c0_24 = arith.constant 0 : index
    %26 = vector.load %arg3[%c2_22, %c0_23, %c0_24] : memref<3x1x32xf32, #tpu.memory_space<vmem>>, vector<1x1x32xf32>
    %27 = vector.shape_cast %26 : vector<1x1x32xf32> to vector<1x32xf32>
    %28 = vector.broadcast %27 : vector<1x32xf32> to vector<8x32xf32>
    %29 = arith.addf %25, %28 : vector<8x32xf32>
    %30 = arith.truncf %29 : vector<8x32xf32> to vector<8x32xbf16>
    %c2_25 = arith.constant 2 : index
    %c0_26 = arith.constant 0 : index
    %c0_27 = arith.constant 0 : index
    %31 = vector.load %arg4[%c2_25, %c0_26, %c0_27] : memref<3x8x32xbf16, #tpu.memory_space<vmem>>, vector<1x8x32xbf16>
    %32 = vector.shape_cast %31 : vector<1x8x32xbf16> to vector<8x32xbf16>
    %33 = vector.shape_cast %30 : vector<8x32xbf16> to vector<1x8x32xbf16>
    tpu.vector_store %arg4[%c2_25, %c0_26, %c0_27], %33 {strides = array<i32>} : memref<3x8x32xbf16, #tpu.memory_space<vmem>>, vector<1x8x32xbf16>,
    return
  }
  func.func @transform_0(%arg0: i32) -> (i32, i32) {
    %c0_i32 = arith.constant 0 : i32
    %c0_i32_0 = arith.constant 0 : i32
    return %arg0, %c0_i32 : i32, i32
  }
  func.func @transform_1(%arg0: i32) -> (i32, i32, i32) {
    %c0_i32 = arith.constant 0 : i32
    %c0_i32_0 = arith.constant 0 : i32
    %c0_i32_1 = arith.constant 0 : i32
    %c0_i32_2 = arith.constant 0 : i32
    return %c0_i32, %c0_i32_0, %c0_i32_1 : i32, i32, i32
  }
  func.func @transform_2(%arg0: i32) -> (i32, i32, i32) {
    %c0_i32 = arith.constant 0 : i32
    %c0_i32_0 = arith.constant 0 : i32
    %c0_i32_1 = arith.constant 0 : i32
    %c0_i32_2 = arith.constant 0 : i32
    return %c0_i32, %c0_i32_0, %c0_i32_1 : i32, i32, i32
  }
  func.func @transform_3(%arg0: i32) -> (i32, i32, i32) {
    %c0_i32 = arith.constant 0 : i32
    %c0_i32_0 = arith.constant 0 : i32
    %c0_i32_1 = arith.constant 0 : i32
    return %c0_i32, %arg0, %c0_i32_0 : i32, i32, i32
  }
}

module attributes {stable_mosaic.version = 11 : i64} {
  func.func @_self_attn_block_kernel(%arg0: i32, %arg1: memref<1x1x8x32xbf16, #tpu.memory_space<vmem>>, %arg2: memref<1x1x8x32xbf16, #tpu.memory_space<vmem>>, %arg3: memref<1x1x8x32xbf16, #tpu.memory_space<vmem>>, %arg4: memref<1x1x8xf32, #tpu.memory_space<vmem>>, %arg5: memref<1x8x32xbf16, #tpu.memory_space<vmem>>, %arg6: memref<32x32xbf16, #tpu.memory_space<vmem>>, %arg7: memref<1x32xf32, #tpu.memory_space<vmem>>, %arg8: memref<1x32xf32, #tpu.memory_space<vmem>>, %arg9: memref<1x32xf32, #tpu.memory_space<vmem>>, %arg10: memref<1x8x32xbf16, #tpu.memory_space<vmem>>) attributes {dimension_semantics = [#tpu.dimension_semantics<parallel>], iteration_bounds = array<i64: 2>, scalar_prefetch = 0 : i64, scratch_operands = 0 : i64, tpu.core_type = #tpu.core_type<tc>, window_params = [{transform_indices = @transform_0, window_bounds = array<i64: 1, 1, 8, 32>}, {transform_indices = @transform_1, window_bounds = array<i64: 1, 1, 8, 32>}, {transform_indices = @transform_2, window_bounds = array<i64: 1, 1, 8, 32>}, {transform_indices = @transform_3, window_bounds = array<i64: 1, 1, 8>}, {transform_indices = @transform_4, window_bounds = array<i64: 1, 8, 32>}, {pipeline_mode = #tpu.pipeline_mode<synchronous>, transform_indices = @transform_5, window_bounds = array<i64: 32, 32>}, {pipeline_mode = #tpu.pipeline_mode<synchronous>, transform_indices = @transform_6, window_bounds = array<i64: 1, 32>}, {pipeline_mode = #tpu.pipeline_mode<synchronous>, transform_indices = @transform_7, window_bounds = array<i64: 1, 32>}, {pipeline_mode = #tpu.pipeline_mode<synchronous>, transform_indices = @transform_8, window_bounds = array<i64: 1, 32>}, {transform_indices = @transform_9, window_bounds = array<i64: 1, 8, 32>}]} {
    %c0 = arith.constant 0 : index
    %c0_0 = arith.constant 0 : index
    %c0_1 = arith.constant 0 : index
    %c0_2 = arith.constant 0 : index
    %0 = vector.load %arg1[%c0, %c0_0, %c0_1, %c0_2] : memref<1x1x8x32xbf16, #tpu.memory_space<vmem>>, vector<1x1x8x32xbf16>
    %1 = vector.shape_cast %0 : vector<1x1x8x32xbf16> to vector<8x32xbf16>
    %2 = arith.extf %1 : vector<8x32xbf16> to vector<8x32xf32>
    %cst = arith.constant 5.000000e-01 : f32
    %3 = vector.broadcast %cst : f32 to vector<8x32xf32>
    %4 = arith.mulf %2, %3 : vector<8x32xf32>
    %c0_3 = arith.constant 0 : index
    %c0_4 = arith.constant 0 : index
    %c0_5 = arith.constant 0 : index
    %c0_6 = arith.constant 0 : index
    %5 = vector.load %arg2[%c0_3, %c0_4, %c0_5, %c0_6] : memref<1x1x8x32xbf16, #tpu.memory_space<vmem>>, vector<1x1x8x32xbf16>
    %6 = vector.shape_cast %5 : vector<1x1x8x32xbf16> to vector<8x32xbf16>
    %c0_7 = arith.constant 0 : index
    %c0_8 = arith.constant 0 : index
    %c0_9 = arith.constant 0 : index
    %c0_10 = arith.constant 0 : index
    %7 = vector.load %arg3[%c0_7, %c0_8, %c0_9, %c0_10] : memref<1x1x8x32xbf16, #tpu.memory_space<vmem>>, vector<1x1x8x32xbf16>
    %8 = vector.shape_cast %7 : vector<1x1x8x32xbf16> to vector<8x32xbf16>
    %c0_11 = arith.constant 0 : index
    %c0_12 = arith.constant 0 : index
    %c0_13 = arith.constant 0 : index
    %9 = vector.load %arg4[%c0_11, %c0_12, %c0_13] : memref<1x1x8xf32, #tpu.memory_space<vmem>>, vector<1x1x8xf32>
    %10 = vector.shape_cast %9 : vector<1x1x8xf32> to vector<1x8xf32>
    %11 = tpu.iota {dimensions = array<i32: 0>} : vector<8x8xi32>
    %12 = tpu.iota {dimensions = array<i32: 1>} : vector<8x8xi32>
    %13 = arith.cmpi sgt, %12, %11 : vector<8x8xi32>
    %cst_14 = arith.constant -1.000000e+09 : f32
    %cst_15 = arith.constant 0.000000e+00 : f32
    %14 = vector.broadcast %cst_14 : f32 to vector<8x8xf32>
    %15 = vector.broadcast %cst_15 : f32 to vector<8x8xf32>
    %16 = arith.select %13, %14, %15 : vector<8x8xi1>, vector<8x8xf32>
    %17 = vector.broadcast %10 : vector<1x8xf32> to vector<8x8xf32>
    %18 = arith.addf %17, %16 : vector<8x8xf32>
    %19 = arith.truncf %4 : vector<8x32xf32> to vector<8x32xbf16>
    %20 = tpu.iota {dimensions = array<i32: 1>} : vector<1x32xi32>
    %cst_16 = arith.constant 0.000000e+00 : f32
    %21 = vector.broadcast %cst_16 : f32 to vector<8x32xf32>
    %c0_i32 = arith.constant 0 : i32
    %22 = vector.broadcast %c0_i32 : i32 to vector<1x32xi32>
    %23 = arith.cmpi sge, %20, %22 : vector<1x32xi32>
    %c4_i32 = arith.constant 4 : i32
    %24 = vector.broadcast %c4_i32 : i32 to vector<1x32xi32>
    %25 = arith.cmpi slt, %20, %24 : vector<1x32xi32>
    %26 = arith.andi %23, %25 : vector<1x32xi1>
    %cst_17 = arith.constant 0.000000e+00 : f32
    %27 = arith.truncf %cst_17 : f32 to bf16
    %28 = vector.shape_cast %26 : vector<1x32xi1> to vector<1x32xi1>
    %29 = vector.broadcast %28 : vector<1x32xi1> to vector<8x32xi1>
    %30 = vector.broadcast %27 : bf16 to vector<8x32xbf16>
    %31 = arith.select %29, %19, %30 : vector<8x32xi1>, vector<8x32xbf16>
    %cst_18 = arith.constant 0.000000e+00 : f32
    %32 = arith.truncf %cst_18 : f32 to bf16
    %33 = vector.shape_cast %26 : vector<1x32xi1> to vector<1x32xi1>
    %34 = vector.broadcast %33 : vector<1x32xi1> to vector<8x32xi1>
    %35 = vector.broadcast %32 : bf16 to vector<8x32xbf16>
    %36 = arith.select %34, %8, %35 : vector<8x32xi1>, vector<8x32xbf16>
    %cst_19 = arith.constant dense<0.000000e+00> : vector<8x8xf32>
    %37 = tpu.matmul %31, %6, %cst_19 {dimension_numbers = #tpu.dot_dimension_numbers<[1], [1], [0], [0], [0, 0, 1, 0], [], []>} : vector<8x32xbf16>, vector<8x32xbf16>, vector<8x8xf32> -> vector<8x8xf32>
    %38 = arith.addf %37, %18 : vector<8x8xf32>
    %cst_20 = arith.constant dense<0xFF800000> : vector<8xf32>
    %39 = vector.multi_reduction <maximumf>, %38, %cst_20 [1] : vector<8x8xf32> to vector<8xf32>
    %40 = vector.shape_cast %39 : vector<8xf32> to vector<8x1xf32>
    %41 = vector.broadcast %40 : vector<8x1xf32> to vector<8x8xf32>
    %42 = arith.subf %38, %41 : vector<8x8xf32>
    %43 = math.exp %42 : vector<8x8xf32>
    %cst_21 = arith.constant dense<0.000000e+00> : vector<8xf32>
    %44 = vector.multi_reduction <add>, %43, %cst_21 [1] : vector<8x8xf32> to vector<8xf32>
    %45 = vector.shape_cast %44 : vector<8xf32> to vector<8x1xf32>
    %46 = tpu.reciprocal %45 {approx = true} : vector<8x1xf32> -> vector<8x1xf32>
    %47 = arith.truncf %43 : vector<8x8xf32> to vector<8x8xbf16>
    %cst_22 = arith.constant dense<0.000000e+00> : vector<8x32xf32>
    %48 = tpu.matmul %47, %36, %cst_22 {dimension_numbers = #tpu.dot_dimension_numbers<[1], [0], [0], [1], [0, 0, 1, 1], [], []>} : vector<8x8xbf16>, vector<8x32xbf16>, vector<8x32xf32> -> vector<8x32xf32>
    %49 = vector.broadcast %46 : vector<8x1xf32> to vector<8x32xf32>
    %50 = arith.mulf %48, %49 : vector<8x32xf32>
    %51 = arith.addf %21, %50 : vector<8x32xf32>
    %c4_i32_23 = arith.constant 4 : i32
    %52 = vector.broadcast %c4_i32_23 : i32 to vector<1x32xi32>
    %53 = arith.cmpi sge, %20, %52 : vector<1x32xi32>
    %c8_i32 = arith.constant 8 : i32
    %54 = vector.broadcast %c8_i32 : i32 to vector<1x32xi32>
    %55 = arith.cmpi slt, %20, %54 : vector<1x32xi32>
    %56 = arith.andi %53, %55 : vector<1x32xi1>
    %cst_24 = arith.constant 0.000000e+00 : f32
    %57 = arith.truncf %cst_24 : f32 to bf16
    %58 = vector.shape_cast %56 : vector<1x32xi1> to vector<1x32xi1>
    %59 = vector.broadcast %58 : vector<1x32xi1> to vector<8x32xi1>
    %60 = vector.broadcast %57 : bf16 to vector<8x32xbf16>
    %61 = arith.select %59, %19, %60 : vector<8x32xi1>, vector<8x32xbf16>
    %cst_25 = arith.constant 0.000000e+00 : f32
    %62 = arith.truncf %cst_25 : f32 to bf16
    %63 = vector.shape_cast %56 : vector<1x32xi1> to vector<1x32xi1>
    %64 = vector.broadcast %63 : vector<1x32xi1> to vector<8x32xi1>
    %65 = vector.broadcast %62 : bf16 to vector<8x32xbf16>
    %66 = arith.select %64, %8, %65 : vector<8x32xi1>, vector<8x32xbf16>
    %cst_26 = arith.constant dense<0.000000e+00> : vector<8x8xf32>
    %67 = tpu.matmul %61, %6, %cst_26 {dimension_numbers = #tpu.dot_dimension_numbers<[1], [1], [0], [0], [0, 0, 1, 0], [], []>} : vector<8x32xbf16>, vector<8x32xbf16>, vector<8x8xf32> -> vector<8x8xf32>
    %68 = arith.addf %67, %18 : vector<8x8xf32>
    %cst_27 = arith.constant dense<0xFF800000> : vector<8xf32>
    %69 = vector.multi_reduction <maximumf>, %68, %cst_27 [1] : vector<8x8xf32> to vector<8xf32>
    %70 = vector.shape_cast %69 : vector<8xf32> to vector<8x1xf32>
    %71 = vector.broadcast %70 : vector<8x1xf32> to vector<8x8xf32>
    %72 = arith.subf %68, %71 : vector<8x8xf32>
    %73 = math.exp %72 : vector<8x8xf32>
    %cst_28 = arith.constant dense<0.000000e+00> : vector<8xf32>
    %74 = vector.multi_reduction <add>, %73, %cst_28 [1] : vector<8x8xf32> to vector<8xf32>
    %75 = vector.shape_cast %74 : vector<8xf32> to vector<8x1xf32>
    %76 = tpu.reciprocal %75 {approx = true} : vector<8x1xf32> -> vector<8x1xf32>
    %77 = arith.truncf %73 : vector<8x8xf32> to vector<8x8xbf16>
    %cst_29 = arith.constant dense<0.000000e+00> : vector<8x32xf32>
    %78 = tpu.matmul %77, %66, %cst_29 {dimension_numbers = #tpu.dot_dimension_numbers<[1], [0], [0], [1], [0, 0, 1, 1], [], []>} : vector<8x8xbf16>, vector<8x32xbf16>, vector<8x32xf32> -> vector<8x32xf32>
    %79 = vector.broadcast %76 : vector<8x1xf32> to vector<8x32xf32>
    %80 = arith.mulf %78, %79 : vector<8x32xf32>
    %81 = arith.addf %51, %80 : vector<8x32xf32>
    %c8_i32_30 = arith.constant 8 : i32
    %82 = vector.broadcast %c8_i32_30 : i32 to vector<1x32xi32>
    %83 = arith.cmpi sge, %20, %82 : vector<1x32xi32>
    %c12_i32 = arith.constant 12 : i32
    %84 = vector.broadcast %c12_i32 : i32 to vector<1x32xi32>
    %85 = arith.cmpi slt, %20, %84 : vector<1x32xi32>
    %86 = arith.andi %83, %85 : vector<1x32xi1>
    %cst_31 = arith.constant 0.000000e+00 : f32
    %87 = arith.truncf %cst_31 : f32 to bf16
    %88 = vector.shape_cast %86 : vector<1x32xi1> to vector<1x32xi1>
    %89 = vector.broadcast %88 : vector<1x32xi1> to vector<8x32xi1>
    %90 = vector.broadcast %87 : bf16 to vector<8x32xbf16>
    %91 = arith.select %89, %19, %90 : vector<8x32xi1>, vector<8x32xbf16>
    %cst_32 = arith.constant 0.000000e+00 : f32
    %92 = arith.truncf %cst_32 : f32 to bf16
    %93 = vector.shape_cast %86 : vector<1x32xi1> to vector<1x32xi1>
    %94 = vector.broadcast %93 : vector<1x32xi1> to vector<8x32xi1>
    %95 = vector.broadcast %92 : bf16 to vector<8x32xbf16>
    %96 = arith.select %94, %8, %95 : vector<8x32xi1>, vector<8x32xbf16>
    %cst_33 = arith.constant dense<0.000000e+00> : vector<8x8xf32>
    %97 = tpu.matmul %91, %6, %cst_33 {dimension_numbers = #tpu.dot_dimension_numbers<[1], [1], [0], [0], [0, 0, 1, 0], [], []>} : vector<8x32xbf16>, vector<8x32xbf16>, vector<8x8xf32> -> vector<8x8xf32>
    %98 = arith.addf %97, %18 : vector<8x8xf32>
    %cst_34 = arith.constant dense<0xFF800000> : vector<8xf32>
    %99 = vector.multi_reduction <maximumf>, %98, %cst_34 [1] : vector<8x8xf32> to vector<8xf32>
    %100 = vector.shape_cast %99 : vector<8xf32> to vector<8x1xf32>
    %101 = vector.broadcast %100 : vector<8x1xf32> to vector<8x8xf32>
    %102 = arith.subf %98, %101 : vector<8x8xf32>
    %103 = math.exp %102 : vector<8x8xf32>
    %cst_35 = arith.constant dense<0.000000e+00> : vector<8xf32>
    %104 = vector.multi_reduction <add>, %103, %cst_35 [1] : vector<8x8xf32> to vector<8xf32>
    %105 = vector.shape_cast %104 : vector<8xf32> to vector<8x1xf32>
    %106 = tpu.reciprocal %105 {approx = true} : vector<8x1xf32> -> vector<8x1xf32>
    %107 = arith.truncf %103 : vector<8x8xf32> to vector<8x8xbf16>
    %cst_36 = arith.constant dense<0.000000e+00> : vector<8x32xf32>
    %108 = tpu.matmul %107, %96, %cst_36 {dimension_numbers = #tpu.dot_dimension_numbers<[1], [0], [0], [1], [0, 0, 1, 1], [], []>} : vector<8x8xbf16>, vector<8x32xbf16>, vector<8x32xf32> -> vector<8x32xf32>
    %109 = vector.broadcast %106 : vector<8x1xf32> to vector<8x32xf32>
    %110 = arith.mulf %108, %109 : vector<8x32xf32>
    %111 = arith.addf %81, %110 : vector<8x32xf32>
    %c12_i32_37 = arith.constant 12 : i32
    %112 = vector.broadcast %c12_i32_37 : i32 to vector<1x32xi32>
    %113 = arith.cmpi sge, %20, %112 : vector<1x32xi32>
    %c16_i32 = arith.constant 16 : i32
    %114 = vector.broadcast %c16_i32 : i32 to vector<1x32xi32>
    %115 = arith.cmpi slt, %20, %114 : vector<1x32xi32>
    %116 = arith.andi %113, %115 : vector<1x32xi1>
    %cst_38 = arith.constant 0.000000e+00 : f32
    %117 = arith.truncf %cst_38 : f32 to bf16
    %118 = vector.shape_cast %116 : vector<1x32xi1> to vector<1x32xi1>
    %119 = vector.broadcast %118 : vector<1x32xi1> to vector<8x32xi1>
    %120 = vector.broadcast %117 : bf16 to vector<8x32xbf16>
    %121 = arith.select %119, %19, %120 : vector<8x32xi1>, vector<8x32xbf16>
    %cst_39 = arith.constant 0.000000e+00 : f32
    %122 = arith.truncf %cst_39 : f32 to bf16
    %123 = vector.shape_cast %116 : vector<1x32xi1> to vector<1x32xi1>
    %124 = vector.broadcast %123 : vector<1x32xi1> to vector<8x32xi1>
    %125 = vector.broadcast %122 : bf16 to vector<8x32xbf16>
    %126 = arith.select %124, %8, %125 : vector<8x32xi1>, vector<8x32xbf16>
    %cst_40 = arith.constant dense<0.000000e+00> : vector<8x8xf32>
    %127 = tpu.matmul %121, %6, %cst_40 {dimension_numbers = #tpu.dot_dimension_numbers<[1], [1], [0], [0], [0, 0, 1, 0], [], []>} : vector<8x32xbf16>, vector<8x32xbf16>, vector<8x8xf32> -> vector<8x8xf32>
    %128 = arith.addf %127, %18 : vector<8x8xf32>
    %cst_41 = arith.constant dense<0xFF800000> : vector<8xf32>
    %129 = vector.multi_reduction <maximumf>, %128, %cst_41 [1] : vector<8x8xf32> to vector<8xf32>
    %130 = vector.shape_cast %129 : vector<8xf32> to vector<8x1xf32>
    %131 = vector.broadcast %130 : vector<8x1xf32> to vector<8x8xf32>
    %132 = arith.subf %128, %131 : vector<8x8xf32>
    %133 = math.exp %132 : vector<8x8xf32>
    %cst_42 = arith.constant dense<0.000000e+00> : vector<8xf32>
    %134 = vector.multi_reduction <add>, %133, %cst_42 [1] : vector<8x8xf32> to vector<8xf32>
    %135 = vector.shape_cast %134 : vector<8xf32> to vector<8x1xf32>
    %136 = tpu.reciprocal %135 {approx = true} : vector<8x1xf32> -> vector<8x1xf32>
    %137 = arith.truncf %133 : vector<8x8xf32> to vector<8x8xbf16>
    %cst_43 = arith.constant dense<0.000000e+00> : vector<8x32xf32>
    %138 = tpu.matmul %137, %126, %cst_43 {dimension_numbers = #tpu.dot_dimension_numbers<[1], [0], [0], [1], [0, 0, 1, 1], [], []>} : vector<8x8xbf16>, vector<8x32xbf16>, vector<8x32xf32> -> vector<8x32xf32>
    %139 = vector.broadcast %136 : vector<8x1xf32> to vector<8x32xf32>
    %140 = arith.mulf %138, %139 : vector<8x32xf32>
    %141 = arith.addf %111, %140 : vector<8x32xf32>
    %c16_i32_44 = arith.constant 16 : i32
    %142 = vector.broadcast %c16_i32_44 : i32 to vector<1x32xi32>
    %143 = arith.cmpi sge, %20, %142 : vector<1x32xi32>
    %c20_i32 = arith.constant 20 : i32
    %144 = vector.broadcast %c20_i32 : i32 to vector<1x32xi32>
    %145 = arith.cmpi slt, %20, %144 : vector<1x32xi32>
    %146 = arith.andi %143, %145 : vector<1x32xi1>
    %cst_45 = arith.constant 0.000000e+00 : f32
    %147 = arith.truncf %cst_45 : f32 to bf16
    %148 = vector.shape_cast %146 : vector<1x32xi1> to vector<1x32xi1>
    %149 = vector.broadcast %148 : vector<1x32xi1> to vector<8x32xi1>
    %150 = vector.broadcast %147 : bf16 to vector<8x32xbf16>
    %151 = arith.select %149, %19, %150 : vector<8x32xi1>, vector<8x32xbf16>
    %cst_46 = arith.constant 0.000000e+00 : f32
    %152 = arith.truncf %cst_46 : f32 to bf16
    %153 = vector.shape_cast %146 : vector<1x32xi1> to vector<1x32xi1>
    %154 = vector.broadcast %153 : vector<1x32xi1> to vector<8x32xi1>
    %155 = vector.broadcast %152 : bf16 to vector<8x32xbf16>
    %156 = arith.select %154, %8, %155 : vector<8x32xi1>, vector<8x32xbf16>
    %cst_47 = arith.constant dense<0.000000e+00> : vector<8x8xf32>
    %157 = tpu.matmul %151, %6, %cst_47 {dimension_numbers = #tpu.dot_dimension_numbers<[1], [1], [0], [0], [0, 0, 1, 0], [], []>} : vector<8x32xbf16>, vector<8x32xbf16>, vector<8x8xf32> -> vector<8x8xf32>
    %158 = arith.addf %157, %18 : vector<8x8xf32>
    %cst_48 = arith.constant dense<0xFF800000> : vector<8xf32>
    %159 = vector.multi_reduction <maximumf>, %158, %cst_48 [1] : vector<8x8xf32> to vector<8xf32>
    %160 = vector.shape_cast %159 : vector<8xf32> to vector<8x1xf32>
    %161 = vector.broadcast %160 : vector<8x1xf32> to vector<8x8xf32>
    %162 = arith.subf %158, %161 : vector<8x8xf32>
    %163 = math.exp %162 : vector<8x8xf32>
    %cst_49 = arith.constant dense<0.000000e+00> : vector<8xf32>
    %164 = vector.multi_reduction <add>, %163, %cst_49 [1] : vector<8x8xf32> to vector<8xf32>
    %165 = vector.shape_cast %164 : vector<8xf32> to vector<8x1xf32>
    %166 = tpu.reciprocal %165 {approx = true} : vector<8x1xf32> -> vector<8x1xf32>
    %167 = arith.truncf %163 : vector<8x8xf32> to vector<8x8xbf16>
    %cst_50 = arith.constant dense<0.000000e+00> : vector<8x32xf32>
    %168 = tpu.matmul %167, %156, %cst_50 {dimension_numbers = #tpu.dot_dimension_numbers<[1], [0], [0], [1], [0, 0, 1, 1], [], []>} : vector<8x8xbf16>, vector<8x32xbf16>, vector<8x32xf32> -> vector<8x32xf32>
    %169 = vector.broadcast %166 : vector<8x1xf32> to vector<8x32xf32>
    %170 = arith.mulf %168, %169 : vector<8x32xf32>
    %171 = arith.addf %141, %170 : vector<8x32xf32>
    %c20_i32_51 = arith.constant 20 : i32
    %172 = vector.broadcast %c20_i32_51 : i32 to vector<1x32xi32>
    %173 = arith.cmpi sge, %20, %172 : vector<1x32xi32>
    %c24_i32 = arith.constant 24 : i32
    %174 = vector.broadcast %c24_i32 : i32 to vector<1x32xi32>
    %175 = arith.cmpi slt, %20, %174 : vector<1x32xi32>
    %176 = arith.andi %173, %175 : vector<1x32xi1>
    %cst_52 = arith.constant 0.000000e+00 : f32
    %177 = arith.truncf %cst_52 : f32 to bf16
    %178 = vector.shape_cast %176 : vector<1x32xi1> to vector<1x32xi1>
    %179 = vector.broadcast %178 : vector<1x32xi1> to vector<8x32xi1>
    %180 = vector.broadcast %177 : bf16 to vector<8x32xbf16>
    %181 = arith.select %179, %19, %180 : vector<8x32xi1>, vector<8x32xbf16>
    %cst_53 = arith.constant 0.000000e+00 : f32
    %182 = arith.truncf %cst_53 : f32 to bf16
    %183 = vector.shape_cast %176 : vector<1x32xi1> to vector<1x32xi1>
    %184 = vector.broadcast %183 : vector<1x32xi1> to vector<8x32xi1>
    %185 = vector.broadcast %182 : bf16 to vector<8x32xbf16>
    %186 = arith.select %184, %8, %185 : vector<8x32xi1>, vector<8x32xbf16>
    %cst_54 = arith.constant dense<0.000000e+00> : vector<8x8xf32>
    %187 = tpu.matmul %181, %6, %cst_54 {dimension_numbers = #tpu.dot_dimension_numbers<[1], [1], [0], [0], [0, 0, 1, 0], [], []>} : vector<8x32xbf16>, vector<8x32xbf16>, vector<8x8xf32> -> vector<8x8xf32>
    %188 = arith.addf %187, %18 : vector<8x8xf32>
    %cst_55 = arith.constant dense<0xFF800000> : vector<8xf32>
    %189 = vector.multi_reduction <maximumf>, %188, %cst_55 [1] : vector<8x8xf32> to vector<8xf32>
    %190 = vector.shape_cast %189 : vector<8xf32> to vector<8x1xf32>
    %191 = vector.broadcast %190 : vector<8x1xf32> to vector<8x8xf32>
    %192 = arith.subf %188, %191 : vector<8x8xf32>
    %193 = math.exp %192 : vector<8x8xf32>
    %cst_56 = arith.constant dense<0.000000e+00> : vector<8xf32>
    %194 = vector.multi_reduction <add>, %193, %cst_56 [1] : vector<8x8xf32> to vector<8xf32>
    %195 = vector.shape_cast %194 : vector<8xf32> to vector<8x1xf32>
    %196 = tpu.reciprocal %195 {approx = true} : vector<8x1xf32> -> vector<8x1xf32>
    %197 = arith.truncf %193 : vector<8x8xf32> to vector<8x8xbf16>
    %cst_57 = arith.constant dense<0.000000e+00> : vector<8x32xf32>
    %198 = tpu.matmul %197, %186, %cst_57 {dimension_numbers = #tpu.dot_dimension_numbers<[1], [0], [0], [1], [0, 0, 1, 1], [], []>} : vector<8x8xbf16>, vector<8x32xbf16>, vector<8x32xf32> -> vector<8x32xf32>
    %199 = vector.broadcast %196 : vector<8x1xf32> to vector<8x32xf32>
    %200 = arith.mulf %198, %199 : vector<8x32xf32>
    %201 = arith.addf %171, %200 : vector<8x32xf32>
    %c24_i32_58 = arith.constant 24 : i32
    %202 = vector.broadcast %c24_i32_58 : i32 to vector<1x32xi32>
    %203 = arith.cmpi sge, %20, %202 : vector<1x32xi32>
    %c28_i32 = arith.constant 28 : i32
    %204 = vector.broadcast %c28_i32 : i32 to vector<1x32xi32>
    %205 = arith.cmpi slt, %20, %204 : vector<1x32xi32>
    %206 = arith.andi %203, %205 : vector<1x32xi1>
    %cst_59 = arith.constant 0.000000e+00 : f32
    %207 = arith.truncf %cst_59 : f32 to bf16
    %208 = vector.shape_cast %206 : vector<1x32xi1> to vector<1x32xi1>
    %209 = vector.broadcast %208 : vector<1x32xi1> to vector<8x32xi1>
    %210 = vector.broadcast %207 : bf16 to vector<8x32xbf16>
    %211 = arith.select %209, %19, %210 : vector<8x32xi1>, vector<8x32xbf16>
    %cst_60 = arith.constant 0.000000e+00 : f32
    %212 = arith.truncf %cst_60 : f32 to bf16
    %213 = vector.shape_cast %206 : vector<1x32xi1> to vector<1x32xi1>
    %214 = vector.broadcast %213 : vector<1x32xi1> to vector<8x32xi1>
    %215 = vector.broadcast %212 : bf16 to vector<8x32xbf16>
    %216 = arith.select %214, %8, %215 : vector<8x32xi1>, vector<8x32xbf16>
    %cst_61 = arith.constant dense<0.000000e+00> : vector<8x8xf32>
    %217 = tpu.matmul %211, %6, %cst_61 {dimension_numbers = #tpu.dot_dimension_numbers<[1], [1], [0], [0], [0, 0, 1, 0], [], []>} : vector<8x32xbf16>, vector<8x32xbf16>, vector<8x8xf32> -> vector<8x8xf32>
    %218 = arith.addf %217, %18 : vector<8x8xf32>
    %cst_62 = arith.constant dense<0xFF800000> : vector<8xf32>
    %219 = vector.multi_reduction <maximumf>, %218, %cst_62 [1] : vector<8x8xf32> to vector<8xf32>
    %220 = vector.shape_cast %219 : vector<8xf32> to vector<8x1xf32>
    %221 = vector.broadcast %220 : vector<8x1xf32> to vector<8x8xf32>
    %222 = arith.subf %218, %221 : vector<8x8xf32>
    %223 = math.exp %222 : vector<8x8xf32>
    %cst_63 = arith.constant dense<0.000000e+00> : vector<8xf32>
    %224 = vector.multi_reduction <add>, %223, %cst_63 [1] : vector<8x8xf32> to vector<8xf32>
    %225 = vector.shape_cast %224 : vector<8xf32> to vector<8x1xf32>
    %226 = tpu.reciprocal %225 {approx = true} : vector<8x1xf32> -> vector<8x1xf32>
    %227 = arith.truncf %223 : vector<8x8xf32> to vector<8x8xbf16>
    %cst_64 = arith.constant dense<0.000000e+00> : vector<8x32xf32>
    %228 = tpu.matmul %227, %216, %cst_64 {dimension_numbers = #tpu.dot_dimension_numbers<[1], [0], [0], [1], [0, 0, 1, 1], [], []>} : vector<8x8xbf16>, vector<8x32xbf16>, vector<8x32xf32> -> vector<8x32xf32>
    %229 = vector.broadcast %226 : vector<8x1xf32> to vector<8x32xf32>
    %230 = arith.mulf %228, %229 : vector<8x32xf32>
    %231 = arith.addf %201, %230 : vector<8x32xf32>
    %c28_i32_65 = arith.constant 28 : i32
    %232 = vector.broadcast %c28_i32_65 : i32 to vector<1x32xi32>
    %233 = arith.cmpi sge, %20, %232 : vector<1x32xi32>
    %c32_i32 = arith.constant 32 : i32
    %234 = vector.broadcast %c32_i32 : i32 to vector<1x32xi32>
    %235 = arith.cmpi slt, %20, %234 : vector<1x32xi32>
    %236 = arith.andi %233, %235 : vector<1x32xi1>
    %cst_66 = arith.constant 0.000000e+00 : f32
    %237 = arith.truncf %cst_66 : f32 to bf16
    %238 = vector.shape_cast %236 : vector<1x32xi1> to vector<1x32xi1>
    %239 = vector.broadcast %238 : vector<1x32xi1> to vector<8x32xi1>
    %240 = vector.broadcast %237 : bf16 to vector<8x32xbf16>
    %241 = arith.select %239, %19, %240 : vector<8x32xi1>, vector<8x32xbf16>
    %cst_67 = arith.constant 0.000000e+00 : f32
    %242 = arith.truncf %cst_67 : f32 to bf16
    %243 = vector.shape_cast %236 : vector<1x32xi1> to vector<1x32xi1>
    %244 = vector.broadcast %243 : vector<1x32xi1> to vector<8x32xi1>
    %245 = vector.broadcast %242 : bf16 to vector<8x32xbf16>
    %246 = arith.select %244, %8, %245 : vector<8x32xi1>, vector<8x32xbf16>
    %cst_68 = arith.constant dense<0.000000e+00> : vector<8x8xf32>
    %247 = tpu.matmul %241, %6, %cst_68 {dimension_numbers = #tpu.dot_dimension_numbers<[1], [1], [0], [0], [0, 0, 1, 0], [], []>} : vector<8x32xbf16>, vector<8x32xbf16>, vector<8x8xf32> -> vector<8x8xf32>
    %248 = arith.addf %247, %18 : vector<8x8xf32>
    %cst_69 = arith.constant dense<0xFF800000> : vector<8xf32>
    %249 = vector.multi_reduction <maximumf>, %248, %cst_69 [1] : vector<8x8xf32> to vector<8xf32>
    %250 = vector.shape_cast %249 : vector<8xf32> to vector<8x1xf32>
    %251 = vector.broadcast %250 : vector<8x1xf32> to vector<8x8xf32>
    %252 = arith.subf %248, %251 : vector<8x8xf32>
    %253 = math.exp %252 : vector<8x8xf32>
    %cst_70 = arith.constant dense<0.000000e+00> : vector<8xf32>
    %254 = vector.multi_reduction <add>, %253, %cst_70 [1] : vector<8x8xf32> to vector<8xf32>
    %255 = vector.shape_cast %254 : vector<8xf32> to vector<8x1xf32>
    %256 = tpu.reciprocal %255 {approx = true} : vector<8x1xf32> -> vector<8x1xf32>
    %257 = arith.truncf %253 : vector<8x8xf32> to vector<8x8xbf16>
    %cst_71 = arith.constant dense<0.000000e+00> : vector<8x32xf32>
    %258 = tpu.matmul %257, %246, %cst_71 {dimension_numbers = #tpu.dot_dimension_numbers<[1], [0], [0], [1], [0, 0, 1, 1], [], []>} : vector<8x8xbf16>, vector<8x32xbf16>, vector<8x32xf32> -> vector<8x32xf32>
    %259 = vector.broadcast %256 : vector<8x1xf32> to vector<8x32xf32>
    %260 = arith.mulf %258, %259 : vector<8x32xf32>
    %261 = arith.addf %231, %260 : vector<8x32xf32>
    %262 = arith.truncf %261 : vector<8x32xf32> to vector<8x32xbf16>
    %c0_72 = arith.constant 0 : index
    %c0_73 = arith.constant 0 : index
    %263 = vector.load %arg6[%c0_72, %c0_73] : memref<32x32xbf16, #tpu.memory_space<vmem>>, vector<32x32xbf16>
    %cst_74 = arith.constant dense<0.000000e+00> : vector<8x32xf32>
    %264 = tpu.matmul %262, %263, %cst_74 {dimension_numbers = #tpu.dot_dimension_numbers<[1], [0], [0], [1], [0, 0, 1, 1], [], []>} : vector<8x32xbf16>, vector<32x32xbf16>, vector<8x32xf32> -> vector<8x32xf32>
    %c0_75 = arith.constant 0 : index
    %c0_76 = arith.constant 0 : index
    %265 = vector.load %arg7[%c0_75, %c0_76] : memref<1x32xf32, #tpu.memory_space<vmem>>, vector<1x32xf32>
    %266 = vector.broadcast %265 : vector<1x32xf32> to vector<8x32xf32>
    %267 = arith.addf %264, %266 : vector<8x32xf32>
    %c0_77 = arith.constant 0 : index
    %c0_78 = arith.constant 0 : index
    %c0_79 = arith.constant 0 : index
    %268 = vector.load %arg5[%c0_77, %c0_78, %c0_79] : memref<1x8x32xbf16, #tpu.memory_space<vmem>>, vector<1x8x32xbf16>
    %269 = vector.shape_cast %268 : vector<1x8x32xbf16> to vector<8x32xbf16>
    %270 = arith.extf %269 : vector<8x32xbf16> to vector<8x32xf32>
    %271 = arith.addf %267, %270 : vector<8x32xf32>
    %c0_80 = arith.constant 0 : index
    %c0_81 = arith.constant 0 : index
    %272 = vector.load %arg8[%c0_80, %c0_81] : memref<1x32xf32, #tpu.memory_space<vmem>>, vector<1x32xf32>
    %c0_82 = arith.constant 0 : index
    %c0_83 = arith.constant 0 : index
    %273 = vector.load %arg9[%c0_82, %c0_83] : memref<1x32xf32, #tpu.memory_space<vmem>>, vector<1x32xf32>
    %cst_84 = arith.constant dense<0.000000e+00> : vector<8xf32>
    %274 = vector.multi_reduction <add>, %271, %cst_84 [1] : vector<8x32xf32> to vector<8xf32>
    %275 = vector.shape_cast %274 : vector<8xf32> to vector<8x1xf32>
    %cst_85 = arith.constant 3.200000e+01 : f32
    %276 = vector.broadcast %cst_85 : f32 to vector<8x1xf32>
    %277 = arith.divf %275, %276 : vector<8x1xf32>
    %278 = vector.broadcast %277 : vector<8x1xf32> to vector<8x32xf32>
    %279 = arith.subf %271, %278 : vector<8x32xf32>
    %280 = arith.mulf %279, %279 : vector<8x32xf32>
    %cst_86 = arith.constant dense<0.000000e+00> : vector<8xf32>
    %281 = vector.multi_reduction <add>, %280, %cst_86 [1] : vector<8x32xf32> to vector<8xf32>
    %282 = vector.shape_cast %281 : vector<8xf32> to vector<8x1xf32>
    %cst_87 = arith.constant 3.200000e+01 : f32
    %283 = vector.broadcast %cst_87 : f32 to vector<8x1xf32>
    %284 = arith.divf %282, %283 : vector<8x1xf32>
    %285 = vector.broadcast %277 : vector<8x1xf32> to vector<8x32xf32>
    %286 = arith.subf %271, %285 : vector<8x32xf32>
    %cst_88 = arith.constant 9.99999974E-6 : f32
    %287 = vector.broadcast %cst_88 : f32 to vector<8x1xf32>
    %288 = arith.addf %284, %287 : vector<8x1xf32>
    %289 = math.rsqrt %288 : vector<8x1xf32>
    %290 = vector.broadcast %289 : vector<8x1xf32> to vector<8x32xf32>
    %291 = arith.mulf %286, %290 : vector<8x32xf32>
    %292 = vector.broadcast %272 : vector<1x32xf32> to vector<8x32xf32>
    %293 = arith.mulf %291, %292 : vector<8x32xf32>
    %294 = vector.broadcast %273 : vector<1x32xf32> to vector<8x32xf32>
    %295 = arith.addf %293, %294 : vector<8x32xf32>
    %296 = arith.truncf %295 : vector<8x32xf32> to vector<8x32xbf16>
    %c0_89 = arith.constant 0 : index
    %c0_90 = arith.constant 0 : index
    %c0_91 = arith.constant 0 : index
    %297 = vector.load %arg10[%c0_89, %c0_90, %c0_91] : memref<1x8x32xbf16, #tpu.memory_space<vmem>>, vector<1x8x32xbf16>
    %298 = vector.shape_cast %297 : vector<1x8x32xbf16> to vector<8x32xbf16>
    %299 = vector.shape_cast %296 : vector<8x32xbf16> to vector<1x8x32xbf16>
    tpu.vector_store %arg10[%c0_89, %c0_90, %c0_91], %299 {strides = array<i32>} : memref<1x8x32xbf16, #tpu.memory_space<vmem>>, vector<1x8x32xbf16>,
    return
  }
  func.func @transform_0(%arg0: i32) -> (i32, i32, i32, i32) {
    %c0_i32 = arith.constant 0 : i32
    %c0_i32_0 = arith.constant 0 : i32
    %c0_i32_1 = arith.constant 0 : i32
    %c0_i32_2 = arith.constant 0 : i32
    return %c0_i32, %arg0, %c0_i32_0, %c0_i32_1 : i32, i32, i32, i32
  }
  func.func @transform_1(%arg0: i32) -> (i32, i32, i32, i32) {
    %c1_i32 = arith.constant 1 : i32
    %c0_i32 = arith.constant 0 : i32
    %c0_i32_0 = arith.constant 0 : i32
    %c0_i32_1 = arith.constant 0 : i32
    return %c1_i32, %arg0, %c0_i32, %c0_i32_0 : i32, i32, i32, i32
  }
  func.func @transform_2(%arg0: i32) -> (i32, i32, i32, i32) {
    %c2_i32 = arith.constant 2 : i32
    %c0_i32 = arith.constant 0 : i32
    %c0_i32_0 = arith.constant 0 : i32
    %c0_i32_1 = arith.constant 0 : i32
    return %c2_i32, %arg0, %c0_i32, %c0_i32_0 : i32, i32, i32, i32
  }
  func.func @transform_3(%arg0: i32) -> (i32, i32, i32) {
    %c0_i32 = arith.constant 0 : i32
    %c0_i32_0 = arith.constant 0 : i32
    %c0_i32_1 = arith.constant 0 : i32
    return %arg0, %c0_i32, %c0_i32_0 : i32, i32, i32
  }
  func.func @transform_4(%arg0: i32) -> (i32, i32, i32) {
    %c0_i32 = arith.constant 0 : i32
    %c0_i32_0 = arith.constant 0 : i32
    %c0_i32_1 = arith.constant 0 : i32
    return %arg0, %c0_i32, %c0_i32_0 : i32, i32, i32
  }
  func.func @transform_5(%arg0: i32) -> (i32, i32) {
    %c0_i32 = arith.constant 0 : i32
    %c0_i32_0 = arith.constant 0 : i32
    %c0_i32_1 = arith.constant 0 : i32
    return %c0_i32, %c0_i32_0 : i32, i32
  }
  func.func @transform_6(%arg0: i32) -> (i32, i32) {
    %c0_i32 = arith.constant 0 : i32
    %c0_i32_0 = arith.constant 0 : i32
    %c0_i32_1 = arith.constant 0 : i32
    return %c0_i32, %c0_i32_0 : i32, i32
  }
  func.func @transform_7(%arg0: i32) -> (i32, i32) {
    %c0_i32 = arith.constant 0 : i32
    %c0_i32_0 = arith.constant 0 : i32
    %c0_i32_1 = arith.constant 0 : i32
    return %c0_i32, %c0_i32_0 : i32, i32
  }
  func.func @transform_8(%arg0: i32) -> (i32, i32) {
    %c0_i32 = arith.constant 0 : i32
    %c0_i32_0 = arith.constant 0 : i32
    %c0_i32_1 = arith.constant 0 : i32
    return %c0_i32, %c0_i32_0 : i32, i32
  }
  func.func @transform_9(%arg0: i32) -> (i32, i32, i32) {
    %c0_i32 = arith.constant 0 : i32
    %c0_i32_0 = arith.constant 0 : i32
    %c0_i32_1 = arith.constant 0 : i32
    return %arg0, %c0_i32, %c0_i32_0 : i32, i32, i32
  }
}

module attributes {stable_mosaic.version = 11 : i64} {
  func.func @_self_attn_block_kernel(%arg0: i32, %arg1: memref<1x1x8x32xbf16, #tpu.memory_space<vmem>>, %arg2: memref<1x1x8x32xbf16, #tpu.memory_space<vmem>>, %arg3: memref<1x1x8x32xbf16, #tpu.memory_space<vmem>>, %arg4: memref<1x1x8xf32, #tpu.memory_space<vmem>>, %arg5: memref<1x8x32xbf16, #tpu.memory_space<vmem>>, %arg6: memref<32x32xbf16, #tpu.memory_space<vmem>>, %arg7: memref<1x32xf32, #tpu.memory_space<vmem>>, %arg8: memref<1x32xf32, #tpu.memory_space<vmem>>, %arg9: memref<1x32xf32, #tpu.memory_space<vmem>>, %arg10: memref<1x8x32xbf16, #tpu.memory_space<vmem>>) attributes {dimension_semantics = [#tpu.dimension_semantics<parallel>], iteration_bounds = array<i64: 2>, scalar_prefetch = 0 : i64, scratch_operands = 0 : i64, tpu.core_type = #tpu.core_type<tc>, window_params = [{transform_indices = @transform_0, window_bounds = array<i64: 1, 1, 8, 32>}, {transform_indices = @transform_1, window_bounds = array<i64: 1, 1, 8, 32>}, {transform_indices = @transform_2, window_bounds = array<i64: 1, 1, 8, 32>}, {transform_indices = @transform_3, window_bounds = array<i64: 1, 1, 8>}, {transform_indices = @transform_4, window_bounds = array<i64: 1, 8, 32>}, {pipeline_mode = #tpu.pipeline_mode<synchronous>, transform_indices = @transform_5, window_bounds = array<i64: 32, 32>}, {pipeline_mode = #tpu.pipeline_mode<synchronous>, transform_indices = @transform_6, window_bounds = array<i64: 1, 32>}, {pipeline_mode = #tpu.pipeline_mode<synchronous>, transform_indices = @transform_7, window_bounds = array<i64: 1, 32>}, {pipeline_mode = #tpu.pipeline_mode<synchronous>, transform_indices = @transform_8, window_bounds = array<i64: 1, 32>}, {transform_indices = @transform_9, window_bounds = array<i64: 1, 8, 32>}]} {
    %c0 = arith.constant 0 : index
    %c0_0 = arith.constant 0 : index
    %c0_1 = arith.constant 0 : index
    %c0_2 = arith.constant 0 : index
    %0 = vector.load %arg1[%c0, %c0_0, %c0_1, %c0_2] : memref<1x1x8x32xbf16, #tpu.memory_space<vmem>>, vector<1x1x8x32xbf16>
    %1 = vector.shape_cast %0 : vector<1x1x8x32xbf16> to vector<8x32xbf16>
    %2 = arith.extf %1 : vector<8x32xbf16> to vector<8x32xf32>
    %cst = arith.constant 5.000000e-01 : f32
    %3 = vector.broadcast %cst : f32 to vector<8x32xf32>
    %4 = arith.mulf %2, %3 : vector<8x32xf32>
    %c0_3 = arith.constant 0 : index
    %c0_4 = arith.constant 0 : index
    %c0_5 = arith.constant 0 : index
    %c0_6 = arith.constant 0 : index
    %5 = vector.load %arg2[%c0_3, %c0_4, %c0_5, %c0_6] : memref<1x1x8x32xbf16, #tpu.memory_space<vmem>>, vector<1x1x8x32xbf16>
    %6 = vector.shape_cast %5 : vector<1x1x8x32xbf16> to vector<8x32xbf16>
    %c0_7 = arith.constant 0 : index
    %c0_8 = arith.constant 0 : index
    %c0_9 = arith.constant 0 : index
    %c0_10 = arith.constant 0 : index
    %7 = vector.load %arg3[%c0_7, %c0_8, %c0_9, %c0_10] : memref<1x1x8x32xbf16, #tpu.memory_space<vmem>>, vector<1x1x8x32xbf16>
    %8 = vector.shape_cast %7 : vector<1x1x8x32xbf16> to vector<8x32xbf16>
    %c0_11 = arith.constant 0 : index
    %c0_12 = arith.constant 0 : index
    %c0_13 = arith.constant 0 : index
    %9 = vector.load %arg4[%c0_11, %c0_12, %c0_13] : memref<1x1x8xf32, #tpu.memory_space<vmem>>, vector<1x1x8xf32>
    %10 = vector.shape_cast %9 : vector<1x1x8xf32> to vector<1x8xf32>
    %11 = arith.truncf %4 : vector<8x32xf32> to vector<8x32xbf16>
    %12 = tpu.iota {dimensions = array<i32: 1>} : vector<1x32xi32>
    %cst_14 = arith.constant 0.000000e+00 : f32
    %13 = vector.broadcast %cst_14 : f32 to vector<8x32xf32>
    %c0_i32 = arith.constant 0 : i32
    %14 = vector.broadcast %c0_i32 : i32 to vector<1x32xi32>
    %15 = arith.cmpi sge, %12, %14 : vector<1x32xi32>
    %c4_i32 = arith.constant 4 : i32
    %16 = vector.broadcast %c4_i32 : i32 to vector<1x32xi32>
    %17 = arith.cmpi slt, %12, %16 : vector<1x32xi32>
    %18 = arith.andi %15, %17 : vector<1x32xi1>
    %cst_15 = arith.constant 0.000000e+00 : f32
    %19 = arith.truncf %cst_15 : f32 to bf16
    %20 = vector.shape_cast %18 : vector<1x32xi1> to vector<1x32xi1>
    %21 = vector.broadcast %20 : vector<1x32xi1> to vector<8x32xi1>
    %22 = vector.broadcast %19 : bf16 to vector<8x32xbf16>
    %23 = arith.select %21, %11, %22 : vector<8x32xi1>, vector<8x32xbf16>
    %cst_16 = arith.constant 0.000000e+00 : f32
    %24 = arith.truncf %cst_16 : f32 to bf16
    %25 = vector.shape_cast %18 : vector<1x32xi1> to vector<1x32xi1>
    %26 = vector.broadcast %25 : vector<1x32xi1> to vector<8x32xi1>
    %27 = vector.broadcast %24 : bf16 to vector<8x32xbf16>
    %28 = arith.select %26, %8, %27 : vector<8x32xi1>, vector<8x32xbf16>
    %cst_17 = arith.constant dense<0.000000e+00> : vector<8x8xf32>
    %29 = tpu.matmul %23, %6, %cst_17 {dimension_numbers = #tpu.dot_dimension_numbers<[1], [1], [0], [0], [0, 0, 1, 0], [], []>} : vector<8x32xbf16>, vector<8x32xbf16>, vector<8x8xf32> -> vector<8x8xf32>
    %30 = vector.broadcast %10 : vector<1x8xf32> to vector<8x8xf32>
    %31 = arith.addf %29, %30 : vector<8x8xf32>
    %cst_18 = arith.constant dense<0xFF800000> : vector<8xf32>
    %32 = vector.multi_reduction <maximumf>, %31, %cst_18 [1] : vector<8x8xf32> to vector<8xf32>
    %33 = vector.shape_cast %32 : vector<8xf32> to vector<8x1xf32>
    %34 = vector.broadcast %33 : vector<8x1xf32> to vector<8x8xf32>
    %35 = arith.subf %31, %34 : vector<8x8xf32>
    %36 = math.exp %35 : vector<8x8xf32>
    %cst_19 = arith.constant dense<0.000000e+00> : vector<8xf32>
    %37 = vector.multi_reduction <add>, %36, %cst_19 [1] : vector<8x8xf32> to vector<8xf32>
    %38 = vector.shape_cast %37 : vector<8xf32> to vector<8x1xf32>
    %39 = tpu.reciprocal %38 {approx = true} : vector<8x1xf32> -> vector<8x1xf32>
    %40 = arith.truncf %36 : vector<8x8xf32> to vector<8x8xbf16>
    %cst_20 = arith.constant dense<0.000000e+00> : vector<8x32xf32>
    %41 = tpu.matmul %40, %28, %cst_20 {dimension_numbers = #tpu.dot_dimension_numbers<[1], [0], [0], [1], [0, 0, 1, 1], [], []>} : vector<8x8xbf16>, vector<8x32xbf16>, vector<8x32xf32> -> vector<8x32xf32>
    %42 = vector.broadcast %39 : vector<8x1xf32> to vector<8x32xf32>
    %43 = arith.mulf %41, %42 : vector<8x32xf32>
    %44 = arith.addf %13, %43 : vector<8x32xf32>
    %c4_i32_21 = arith.constant 4 : i32
    %45 = vector.broadcast %c4_i32_21 : i32 to vector<1x32xi32>
    %46 = arith.cmpi sge, %12, %45 : vector<1x32xi32>
    %c8_i32 = arith.constant 8 : i32
    %47 = vector.broadcast %c8_i32 : i32 to vector<1x32xi32>
    %48 = arith.cmpi slt, %12, %47 : vector<1x32xi32>
    %49 = arith.andi %46, %48 : vector<1x32xi1>
    %cst_22 = arith.constant 0.000000e+00 : f32
    %50 = arith.truncf %cst_22 : f32 to bf16
    %51 = vector.shape_cast %49 : vector<1x32xi1> to vector<1x32xi1>
    %52 = vector.broadcast %51 : vector<1x32xi1> to vector<8x32xi1>
    %53 = vector.broadcast %50 : bf16 to vector<8x32xbf16>
    %54 = arith.select %52, %11, %53 : vector<8x32xi1>, vector<8x32xbf16>
    %cst_23 = arith.constant 0.000000e+00 : f32
    %55 = arith.truncf %cst_23 : f32 to bf16
    %56 = vector.shape_cast %49 : vector<1x32xi1> to vector<1x32xi1>
    %57 = vector.broadcast %56 : vector<1x32xi1> to vector<8x32xi1>
    %58 = vector.broadcast %55 : bf16 to vector<8x32xbf16>
    %59 = arith.select %57, %8, %58 : vector<8x32xi1>, vector<8x32xbf16>
    %cst_24 = arith.constant dense<0.000000e+00> : vector<8x8xf32>
    %60 = tpu.matmul %54, %6, %cst_24 {dimension_numbers = #tpu.dot_dimension_numbers<[1], [1], [0], [0], [0, 0, 1, 0], [], []>} : vector<8x32xbf16>, vector<8x32xbf16>, vector<8x8xf32> -> vector<8x8xf32>
    %61 = vector.broadcast %10 : vector<1x8xf32> to vector<8x8xf32>
    %62 = arith.addf %60, %61 : vector<8x8xf32>
    %cst_25 = arith.constant dense<0xFF800000> : vector<8xf32>
    %63 = vector.multi_reduction <maximumf>, %62, %cst_25 [1] : vector<8x8xf32> to vector<8xf32>
    %64 = vector.shape_cast %63 : vector<8xf32> to vector<8x1xf32>
    %65 = vector.broadcast %64 : vector<8x1xf32> to vector<8x8xf32>
    %66 = arith.subf %62, %65 : vector<8x8xf32>
    %67 = math.exp %66 : vector<8x8xf32>
    %cst_26 = arith.constant dense<0.000000e+00> : vector<8xf32>
    %68 = vector.multi_reduction <add>, %67, %cst_26 [1] : vector<8x8xf32> to vector<8xf32>
    %69 = vector.shape_cast %68 : vector<8xf32> to vector<8x1xf32>
    %70 = tpu.reciprocal %69 {approx = true} : vector<8x1xf32> -> vector<8x1xf32>
    %71 = arith.truncf %67 : vector<8x8xf32> to vector<8x8xbf16>
    %cst_27 = arith.constant dense<0.000000e+00> : vector<8x32xf32>
    %72 = tpu.matmul %71, %59, %cst_27 {dimension_numbers = #tpu.dot_dimension_numbers<[1], [0], [0], [1], [0, 0, 1, 1], [], []>} : vector<8x8xbf16>, vector<8x32xbf16>, vector<8x32xf32> -> vector<8x32xf32>
    %73 = vector.broadcast %70 : vector<8x1xf32> to vector<8x32xf32>
    %74 = arith.mulf %72, %73 : vector<8x32xf32>
    %75 = arith.addf %44, %74 : vector<8x32xf32>
    %c8_i32_28 = arith.constant 8 : i32
    %76 = vector.broadcast %c8_i32_28 : i32 to vector<1x32xi32>
    %77 = arith.cmpi sge, %12, %76 : vector<1x32xi32>
    %c12_i32 = arith.constant 12 : i32
    %78 = vector.broadcast %c12_i32 : i32 to vector<1x32xi32>
    %79 = arith.cmpi slt, %12, %78 : vector<1x32xi32>
    %80 = arith.andi %77, %79 : vector<1x32xi1>
    %cst_29 = arith.constant 0.000000e+00 : f32
    %81 = arith.truncf %cst_29 : f32 to bf16
    %82 = vector.shape_cast %80 : vector<1x32xi1> to vector<1x32xi1>
    %83 = vector.broadcast %82 : vector<1x32xi1> to vector<8x32xi1>
    %84 = vector.broadcast %81 : bf16 to vector<8x32xbf16>
    %85 = arith.select %83, %11, %84 : vector<8x32xi1>, vector<8x32xbf16>
    %cst_30 = arith.constant 0.000000e+00 : f32
    %86 = arith.truncf %cst_30 : f32 to bf16
    %87 = vector.shape_cast %80 : vector<1x32xi1> to vector<1x32xi1>
    %88 = vector.broadcast %87 : vector<1x32xi1> to vector<8x32xi1>
    %89 = vector.broadcast %86 : bf16 to vector<8x32xbf16>
    %90 = arith.select %88, %8, %89 : vector<8x32xi1>, vector<8x32xbf16>
    %cst_31 = arith.constant dense<0.000000e+00> : vector<8x8xf32>
    %91 = tpu.matmul %85, %6, %cst_31 {dimension_numbers = #tpu.dot_dimension_numbers<[1], [1], [0], [0], [0, 0, 1, 0], [], []>} : vector<8x32xbf16>, vector<8x32xbf16>, vector<8x8xf32> -> vector<8x8xf32>
    %92 = vector.broadcast %10 : vector<1x8xf32> to vector<8x8xf32>
    %93 = arith.addf %91, %92 : vector<8x8xf32>
    %cst_32 = arith.constant dense<0xFF800000> : vector<8xf32>
    %94 = vector.multi_reduction <maximumf>, %93, %cst_32 [1] : vector<8x8xf32> to vector<8xf32>
    %95 = vector.shape_cast %94 : vector<8xf32> to vector<8x1xf32>
    %96 = vector.broadcast %95 : vector<8x1xf32> to vector<8x8xf32>
    %97 = arith.subf %93, %96 : vector<8x8xf32>
    %98 = math.exp %97 : vector<8x8xf32>
    %cst_33 = arith.constant dense<0.000000e+00> : vector<8xf32>
    %99 = vector.multi_reduction <add>, %98, %cst_33 [1] : vector<8x8xf32> to vector<8xf32>
    %100 = vector.shape_cast %99 : vector<8xf32> to vector<8x1xf32>
    %101 = tpu.reciprocal %100 {approx = true} : vector<8x1xf32> -> vector<8x1xf32>
    %102 = arith.truncf %98 : vector<8x8xf32> to vector<8x8xbf16>
    %cst_34 = arith.constant dense<0.000000e+00> : vector<8x32xf32>
    %103 = tpu.matmul %102, %90, %cst_34 {dimension_numbers = #tpu.dot_dimension_numbers<[1], [0], [0], [1], [0, 0, 1, 1], [], []>} : vector<8x8xbf16>, vector<8x32xbf16>, vector<8x32xf32> -> vector<8x32xf32>
    %104 = vector.broadcast %101 : vector<8x1xf32> to vector<8x32xf32>
    %105 = arith.mulf %103, %104 : vector<8x32xf32>
    %106 = arith.addf %75, %105 : vector<8x32xf32>
    %c12_i32_35 = arith.constant 12 : i32
    %107 = vector.broadcast %c12_i32_35 : i32 to vector<1x32xi32>
    %108 = arith.cmpi sge, %12, %107 : vector<1x32xi32>
    %c16_i32 = arith.constant 16 : i32
    %109 = vector.broadcast %c16_i32 : i32 to vector<1x32xi32>
    %110 = arith.cmpi slt, %12, %109 : vector<1x32xi32>
    %111 = arith.andi %108, %110 : vector<1x32xi1>
    %cst_36 = arith.constant 0.000000e+00 : f32
    %112 = arith.truncf %cst_36 : f32 to bf16
    %113 = vector.shape_cast %111 : vector<1x32xi1> to vector<1x32xi1>
    %114 = vector.broadcast %113 : vector<1x32xi1> to vector<8x32xi1>
    %115 = vector.broadcast %112 : bf16 to vector<8x32xbf16>
    %116 = arith.select %114, %11, %115 : vector<8x32xi1>, vector<8x32xbf16>
    %cst_37 = arith.constant 0.000000e+00 : f32
    %117 = arith.truncf %cst_37 : f32 to bf16
    %118 = vector.shape_cast %111 : vector<1x32xi1> to vector<1x32xi1>
    %119 = vector.broadcast %118 : vector<1x32xi1> to vector<8x32xi1>
    %120 = vector.broadcast %117 : bf16 to vector<8x32xbf16>
    %121 = arith.select %119, %8, %120 : vector<8x32xi1>, vector<8x32xbf16>
    %cst_38 = arith.constant dense<0.000000e+00> : vector<8x8xf32>
    %122 = tpu.matmul %116, %6, %cst_38 {dimension_numbers = #tpu.dot_dimension_numbers<[1], [1], [0], [0], [0, 0, 1, 0], [], []>} : vector<8x32xbf16>, vector<8x32xbf16>, vector<8x8xf32> -> vector<8x8xf32>
    %123 = vector.broadcast %10 : vector<1x8xf32> to vector<8x8xf32>
    %124 = arith.addf %122, %123 : vector<8x8xf32>
    %cst_39 = arith.constant dense<0xFF800000> : vector<8xf32>
    %125 = vector.multi_reduction <maximumf>, %124, %cst_39 [1] : vector<8x8xf32> to vector<8xf32>
    %126 = vector.shape_cast %125 : vector<8xf32> to vector<8x1xf32>
    %127 = vector.broadcast %126 : vector<8x1xf32> to vector<8x8xf32>
    %128 = arith.subf %124, %127 : vector<8x8xf32>
    %129 = math.exp %128 : vector<8x8xf32>
    %cst_40 = arith.constant dense<0.000000e+00> : vector<8xf32>
    %130 = vector.multi_reduction <add>, %129, %cst_40 [1] : vector<8x8xf32> to vector<8xf32>
    %131 = vector.shape_cast %130 : vector<8xf32> to vector<8x1xf32>
    %132 = tpu.reciprocal %131 {approx = true} : vector<8x1xf32> -> vector<8x1xf32>
    %133 = arith.truncf %129 : vector<8x8xf32> to vector<8x8xbf16>
    %cst_41 = arith.constant dense<0.000000e+00> : vector<8x32xf32>
    %134 = tpu.matmul %133, %121, %cst_41 {dimension_numbers = #tpu.dot_dimension_numbers<[1], [0], [0], [1], [0, 0, 1, 1], [], []>} : vector<8x8xbf16>, vector<8x32xbf16>, vector<8x32xf32> -> vector<8x32xf32>
    %135 = vector.broadcast %132 : vector<8x1xf32> to vector<8x32xf32>
    %136 = arith.mulf %134, %135 : vector<8x32xf32>
    %137 = arith.addf %106, %136 : vector<8x32xf32>
    %c16_i32_42 = arith.constant 16 : i32
    %138 = vector.broadcast %c16_i32_42 : i32 to vector<1x32xi32>
    %139 = arith.cmpi sge, %12, %138 : vector<1x32xi32>
    %c20_i32 = arith.constant 20 : i32
    %140 = vector.broadcast %c20_i32 : i32 to vector<1x32xi32>
    %141 = arith.cmpi slt, %12, %140 : vector<1x32xi32>
    %142 = arith.andi %139, %141 : vector<1x32xi1>
    %cst_43 = arith.constant 0.000000e+00 : f32
    %143 = arith.truncf %cst_43 : f32 to bf16
    %144 = vector.shape_cast %142 : vector<1x32xi1> to vector<1x32xi1>
    %145 = vector.broadcast %144 : vector<1x32xi1> to vector<8x32xi1>
    %146 = vector.broadcast %143 : bf16 to vector<8x32xbf16>
    %147 = arith.select %145, %11, %146 : vector<8x32xi1>, vector<8x32xbf16>
    %cst_44 = arith.constant 0.000000e+00 : f32
    %148 = arith.truncf %cst_44 : f32 to bf16
    %149 = vector.shape_cast %142 : vector<1x32xi1> to vector<1x32xi1>
    %150 = vector.broadcast %149 : vector<1x32xi1> to vector<8x32xi1>
    %151 = vector.broadcast %148 : bf16 to vector<8x32xbf16>
    %152 = arith.select %150, %8, %151 : vector<8x32xi1>, vector<8x32xbf16>
    %cst_45 = arith.constant dense<0.000000e+00> : vector<8x8xf32>
    %153 = tpu.matmul %147, %6, %cst_45 {dimension_numbers = #tpu.dot_dimension_numbers<[1], [1], [0], [0], [0, 0, 1, 0], [], []>} : vector<8x32xbf16>, vector<8x32xbf16>, vector<8x8xf32> -> vector<8x8xf32>
    %154 = vector.broadcast %10 : vector<1x8xf32> to vector<8x8xf32>
    %155 = arith.addf %153, %154 : vector<8x8xf32>
    %cst_46 = arith.constant dense<0xFF800000> : vector<8xf32>
    %156 = vector.multi_reduction <maximumf>, %155, %cst_46 [1] : vector<8x8xf32> to vector<8xf32>
    %157 = vector.shape_cast %156 : vector<8xf32> to vector<8x1xf32>
    %158 = vector.broadcast %157 : vector<8x1xf32> to vector<8x8xf32>
    %159 = arith.subf %155, %158 : vector<8x8xf32>
    %160 = math.exp %159 : vector<8x8xf32>
    %cst_47 = arith.constant dense<0.000000e+00> : vector<8xf32>
    %161 = vector.multi_reduction <add>, %160, %cst_47 [1] : vector<8x8xf32> to vector<8xf32>
    %162 = vector.shape_cast %161 : vector<8xf32> to vector<8x1xf32>
    %163 = tpu.reciprocal %162 {approx = true} : vector<8x1xf32> -> vector<8x1xf32>
    %164 = arith.truncf %160 : vector<8x8xf32> to vector<8x8xbf16>
    %cst_48 = arith.constant dense<0.000000e+00> : vector<8x32xf32>
    %165 = tpu.matmul %164, %152, %cst_48 {dimension_numbers = #tpu.dot_dimension_numbers<[1], [0], [0], [1], [0, 0, 1, 1], [], []>} : vector<8x8xbf16>, vector<8x32xbf16>, vector<8x32xf32> -> vector<8x32xf32>
    %166 = vector.broadcast %163 : vector<8x1xf32> to vector<8x32xf32>
    %167 = arith.mulf %165, %166 : vector<8x32xf32>
    %168 = arith.addf %137, %167 : vector<8x32xf32>
    %c20_i32_49 = arith.constant 20 : i32
    %169 = vector.broadcast %c20_i32_49 : i32 to vector<1x32xi32>
    %170 = arith.cmpi sge, %12, %169 : vector<1x32xi32>
    %c24_i32 = arith.constant 24 : i32
    %171 = vector.broadcast %c24_i32 : i32 to vector<1x32xi32>
    %172 = arith.cmpi slt, %12, %171 : vector<1x32xi32>
    %173 = arith.andi %170, %172 : vector<1x32xi1>
    %cst_50 = arith.constant 0.000000e+00 : f32
    %174 = arith.truncf %cst_50 : f32 to bf16
    %175 = vector.shape_cast %173 : vector<1x32xi1> to vector<1x32xi1>
    %176 = vector.broadcast %175 : vector<1x32xi1> to vector<8x32xi1>
    %177 = vector.broadcast %174 : bf16 to vector<8x32xbf16>
    %178 = arith.select %176, %11, %177 : vector<8x32xi1>, vector<8x32xbf16>
    %cst_51 = arith.constant 0.000000e+00 : f32
    %179 = arith.truncf %cst_51 : f32 to bf16
    %180 = vector.shape_cast %173 : vector<1x32xi1> to vector<1x32xi1>
    %181 = vector.broadcast %180 : vector<1x32xi1> to vector<8x32xi1>
    %182 = vector.broadcast %179 : bf16 to vector<8x32xbf16>
    %183 = arith.select %181, %8, %182 : vector<8x32xi1>, vector<8x32xbf16>
    %cst_52 = arith.constant dense<0.000000e+00> : vector<8x8xf32>
    %184 = tpu.matmul %178, %6, %cst_52 {dimension_numbers = #tpu.dot_dimension_numbers<[1], [1], [0], [0], [0, 0, 1, 0], [], []>} : vector<8x32xbf16>, vector<8x32xbf16>, vector<8x8xf32> -> vector<8x8xf32>
    %185 = vector.broadcast %10 : vector<1x8xf32> to vector<8x8xf32>
    %186 = arith.addf %184, %185 : vector<8x8xf32>
    %cst_53 = arith.constant dense<0xFF800000> : vector<8xf32>
    %187 = vector.multi_reduction <maximumf>, %186, %cst_53 [1] : vector<8x8xf32> to vector<8xf32>
    %188 = vector.shape_cast %187 : vector<8xf32> to vector<8x1xf32>
    %189 = vector.broadcast %188 : vector<8x1xf32> to vector<8x8xf32>
    %190 = arith.subf %186, %189 : vector<8x8xf32>
    %191 = math.exp %190 : vector<8x8xf32>
    %cst_54 = arith.constant dense<0.000000e+00> : vector<8xf32>
    %192 = vector.multi_reduction <add>, %191, %cst_54 [1] : vector<8x8xf32> to vector<8xf32>
    %193 = vector.shape_cast %192 : vector<8xf32> to vector<8x1xf32>
    %194 = tpu.reciprocal %193 {approx = true} : vector<8x1xf32> -> vector<8x1xf32>
    %195 = arith.truncf %191 : vector<8x8xf32> to vector<8x8xbf16>
    %cst_55 = arith.constant dense<0.000000e+00> : vector<8x32xf32>
    %196 = tpu.matmul %195, %183, %cst_55 {dimension_numbers = #tpu.dot_dimension_numbers<[1], [0], [0], [1], [0, 0, 1, 1], [], []>} : vector<8x8xbf16>, vector<8x32xbf16>, vector<8x32xf32> -> vector<8x32xf32>
    %197 = vector.broadcast %194 : vector<8x1xf32> to vector<8x32xf32>
    %198 = arith.mulf %196, %197 : vector<8x32xf32>
    %199 = arith.addf %168, %198 : vector<8x32xf32>
    %c24_i32_56 = arith.constant 24 : i32
    %200 = vector.broadcast %c24_i32_56 : i32 to vector<1x32xi32>
    %201 = arith.cmpi sge, %12, %200 : vector<1x32xi32>
    %c28_i32 = arith.constant 28 : i32
    %202 = vector.broadcast %c28_i32 : i32 to vector<1x32xi32>
    %203 = arith.cmpi slt, %12, %202 : vector<1x32xi32>
    %204 = arith.andi %201, %203 : vector<1x32xi1>
    %cst_57 = arith.constant 0.000000e+00 : f32
    %205 = arith.truncf %cst_57 : f32 to bf16
    %206 = vector.shape_cast %204 : vector<1x32xi1> to vector<1x32xi1>
    %207 = vector.broadcast %206 : vector<1x32xi1> to vector<8x32xi1>
    %208 = vector.broadcast %205 : bf16 to vector<8x32xbf16>
    %209 = arith.select %207, %11, %208 : vector<8x32xi1>, vector<8x32xbf16>
    %cst_58 = arith.constant 0.000000e+00 : f32
    %210 = arith.truncf %cst_58 : f32 to bf16
    %211 = vector.shape_cast %204 : vector<1x32xi1> to vector<1x32xi1>
    %212 = vector.broadcast %211 : vector<1x32xi1> to vector<8x32xi1>
    %213 = vector.broadcast %210 : bf16 to vector<8x32xbf16>
    %214 = arith.select %212, %8, %213 : vector<8x32xi1>, vector<8x32xbf16>
    %cst_59 = arith.constant dense<0.000000e+00> : vector<8x8xf32>
    %215 = tpu.matmul %209, %6, %cst_59 {dimension_numbers = #tpu.dot_dimension_numbers<[1], [1], [0], [0], [0, 0, 1, 0], [], []>} : vector<8x32xbf16>, vector<8x32xbf16>, vector<8x8xf32> -> vector<8x8xf32>
    %216 = vector.broadcast %10 : vector<1x8xf32> to vector<8x8xf32>
    %217 = arith.addf %215, %216 : vector<8x8xf32>
    %cst_60 = arith.constant dense<0xFF800000> : vector<8xf32>
    %218 = vector.multi_reduction <maximumf>, %217, %cst_60 [1] : vector<8x8xf32> to vector<8xf32>
    %219 = vector.shape_cast %218 : vector<8xf32> to vector<8x1xf32>
    %220 = vector.broadcast %219 : vector<8x1xf32> to vector<8x8xf32>
    %221 = arith.subf %217, %220 : vector<8x8xf32>
    %222 = math.exp %221 : vector<8x8xf32>
    %cst_61 = arith.constant dense<0.000000e+00> : vector<8xf32>
    %223 = vector.multi_reduction <add>, %222, %cst_61 [1] : vector<8x8xf32> to vector<8xf32>
    %224 = vector.shape_cast %223 : vector<8xf32> to vector<8x1xf32>
    %225 = tpu.reciprocal %224 {approx = true} : vector<8x1xf32> -> vector<8x1xf32>
    %226 = arith.truncf %222 : vector<8x8xf32> to vector<8x8xbf16>
    %cst_62 = arith.constant dense<0.000000e+00> : vector<8x32xf32>
    %227 = tpu.matmul %226, %214, %cst_62 {dimension_numbers = #tpu.dot_dimension_numbers<[1], [0], [0], [1], [0, 0, 1, 1], [], []>} : vector<8x8xbf16>, vector<8x32xbf16>, vector<8x32xf32> -> vector<8x32xf32>
    %228 = vector.broadcast %225 : vector<8x1xf32> to vector<8x32xf32>
    %229 = arith.mulf %227, %228 : vector<8x32xf32>
    %230 = arith.addf %199, %229 : vector<8x32xf32>
    %c28_i32_63 = arith.constant 28 : i32
    %231 = vector.broadcast %c28_i32_63 : i32 to vector<1x32xi32>
    %232 = arith.cmpi sge, %12, %231 : vector<1x32xi32>
    %c32_i32 = arith.constant 32 : i32
    %233 = vector.broadcast %c32_i32 : i32 to vector<1x32xi32>
    %234 = arith.cmpi slt, %12, %233 : vector<1x32xi32>
    %235 = arith.andi %232, %234 : vector<1x32xi1>
    %cst_64 = arith.constant 0.000000e+00 : f32
    %236 = arith.truncf %cst_64 : f32 to bf16
    %237 = vector.shape_cast %235 : vector<1x32xi1> to vector<1x32xi1>
    %238 = vector.broadcast %237 : vector<1x32xi1> to vector<8x32xi1>
    %239 = vector.broadcast %236 : bf16 to vector<8x32xbf16>
    %240 = arith.select %238, %11, %239 : vector<8x32xi1>, vector<8x32xbf16>
    %cst_65 = arith.constant 0.000000e+00 : f32
    %241 = arith.truncf %cst_65 : f32 to bf16
    %242 = vector.shape_cast %235 : vector<1x32xi1> to vector<1x32xi1>
    %243 = vector.broadcast %242 : vector<1x32xi1> to vector<8x32xi1>
    %244 = vector.broadcast %241 : bf16 to vector<8x32xbf16>
    %245 = arith.select %243, %8, %244 : vector<8x32xi1>, vector<8x32xbf16>
    %cst_66 = arith.constant dense<0.000000e+00> : vector<8x8xf32>
    %246 = tpu.matmul %240, %6, %cst_66 {dimension_numbers = #tpu.dot_dimension_numbers<[1], [1], [0], [0], [0, 0, 1, 0], [], []>} : vector<8x32xbf16>, vector<8x32xbf16>, vector<8x8xf32> -> vector<8x8xf32>
    %247 = vector.broadcast %10 : vector<1x8xf32> to vector<8x8xf32>
    %248 = arith.addf %246, %247 : vector<8x8xf32>
    %cst_67 = arith.constant dense<0xFF800000> : vector<8xf32>
    %249 = vector.multi_reduction <maximumf>, %248, %cst_67 [1] : vector<8x8xf32> to vector<8xf32>
    %250 = vector.shape_cast %249 : vector<8xf32> to vector<8x1xf32>
    %251 = vector.broadcast %250 : vector<8x1xf32> to vector<8x8xf32>
    %252 = arith.subf %248, %251 : vector<8x8xf32>
    %253 = math.exp %252 : vector<8x8xf32>
    %cst_68 = arith.constant dense<0.000000e+00> : vector<8xf32>
    %254 = vector.multi_reduction <add>, %253, %cst_68 [1] : vector<8x8xf32> to vector<8xf32>
    %255 = vector.shape_cast %254 : vector<8xf32> to vector<8x1xf32>
    %256 = tpu.reciprocal %255 {approx = true} : vector<8x1xf32> -> vector<8x1xf32>
    %257 = arith.truncf %253 : vector<8x8xf32> to vector<8x8xbf16>
    %cst_69 = arith.constant dense<0.000000e+00> : vector<8x32xf32>
    %258 = tpu.matmul %257, %245, %cst_69 {dimension_numbers = #tpu.dot_dimension_numbers<[1], [0], [0], [1], [0, 0, 1, 1], [], []>} : vector<8x8xbf16>, vector<8x32xbf16>, vector<8x32xf32> -> vector<8x32xf32>
    %259 = vector.broadcast %256 : vector<8x1xf32> to vector<8x32xf32>
    %260 = arith.mulf %258, %259 : vector<8x32xf32>
    %261 = arith.addf %230, %260 : vector<8x32xf32>
    %262 = arith.truncf %261 : vector<8x32xf32> to vector<8x32xbf16>
    %c0_70 = arith.constant 0 : index
    %c0_71 = arith.constant 0 : index
    %263 = vector.load %arg6[%c0_70, %c0_71] : memref<32x32xbf16, #tpu.memory_space<vmem>>, vector<32x32xbf16>
    %cst_72 = arith.constant dense<0.000000e+00> : vector<8x32xf32>
    %264 = tpu.matmul %262, %263, %cst_72 {dimension_numbers = #tpu.dot_dimension_numbers<[1], [0], [0], [1], [0, 0, 1, 1], [], []>} : vector<8x32xbf16>, vector<32x32xbf16>, vector<8x32xf32> -> vector<8x32xf32>
    %c0_73 = arith.constant 0 : index
    %c0_74 = arith.constant 0 : index
    %265 = vector.load %arg7[%c0_73, %c0_74] : memref<1x32xf32, #tpu.memory_space<vmem>>, vector<1x32xf32>
    %266 = vector.broadcast %265 : vector<1x32xf32> to vector<8x32xf32>
    %267 = arith.addf %264, %266 : vector<8x32xf32>
    %c0_75 = arith.constant 0 : index
    %c0_76 = arith.constant 0 : index
    %c0_77 = arith.constant 0 : index
    %268 = vector.load %arg5[%c0_75, %c0_76, %c0_77] : memref<1x8x32xbf16, #tpu.memory_space<vmem>>, vector<1x8x32xbf16>
    %269 = vector.shape_cast %268 : vector<1x8x32xbf16> to vector<8x32xbf16>
    %270 = arith.extf %269 : vector<8x32xbf16> to vector<8x32xf32>
    %271 = arith.addf %267, %270 : vector<8x32xf32>
    %c0_78 = arith.constant 0 : index
    %c0_79 = arith.constant 0 : index
    %272 = vector.load %arg8[%c0_78, %c0_79] : memref<1x32xf32, #tpu.memory_space<vmem>>, vector<1x32xf32>
    %c0_80 = arith.constant 0 : index
    %c0_81 = arith.constant 0 : index
    %273 = vector.load %arg9[%c0_80, %c0_81] : memref<1x32xf32, #tpu.memory_space<vmem>>, vector<1x32xf32>
    %cst_82 = arith.constant dense<0.000000e+00> : vector<8xf32>
    %274 = vector.multi_reduction <add>, %271, %cst_82 [1] : vector<8x32xf32> to vector<8xf32>
    %275 = vector.shape_cast %274 : vector<8xf32> to vector<8x1xf32>
    %cst_83 = arith.constant 3.200000e+01 : f32
    %276 = vector.broadcast %cst_83 : f32 to vector<8x1xf32>
    %277 = arith.divf %275, %276 : vector<8x1xf32>
    %278 = vector.broadcast %277 : vector<8x1xf32> to vector<8x32xf32>
    %279 = arith.subf %271, %278 : vector<8x32xf32>
    %280 = arith.mulf %279, %279 : vector<8x32xf32>
    %cst_84 = arith.constant dense<0.000000e+00> : vector<8xf32>
    %281 = vector.multi_reduction <add>, %280, %cst_84 [1] : vector<8x32xf32> to vector<8xf32>
    %282 = vector.shape_cast %281 : vector<8xf32> to vector<8x1xf32>
    %cst_85 = arith.constant 3.200000e+01 : f32
    %283 = vector.broadcast %cst_85 : f32 to vector<8x1xf32>
    %284 = arith.divf %282, %283 : vector<8x1xf32>
    %285 = vector.broadcast %277 : vector<8x1xf32> to vector<8x32xf32>
    %286 = arith.subf %271, %285 : vector<8x32xf32>
    %cst_86 = arith.constant 9.99999974E-6 : f32
    %287 = vector.broadcast %cst_86 : f32 to vector<8x1xf32>
    %288 = arith.addf %284, %287 : vector<8x1xf32>
    %289 = math.rsqrt %288 : vector<8x1xf32>
    %290 = vector.broadcast %289 : vector<8x1xf32> to vector<8x32xf32>
    %291 = arith.mulf %286, %290 : vector<8x32xf32>
    %292 = vector.broadcast %272 : vector<1x32xf32> to vector<8x32xf32>
    %293 = arith.mulf %291, %292 : vector<8x32xf32>
    %294 = vector.broadcast %273 : vector<1x32xf32> to vector<8x32xf32>
    %295 = arith.addf %293, %294 : vector<8x32xf32>
    %296 = arith.truncf %295 : vector<8x32xf32> to vector<8x32xbf16>
    %c0_87 = arith.constant 0 : index
    %c0_88 = arith.constant 0 : index
    %c0_89 = arith.constant 0 : index
    %297 = vector.load %arg10[%c0_87, %c0_88, %c0_89] : memref<1x8x32xbf16, #tpu.memory_space<vmem>>, vector<1x8x32xbf16>
    %298 = vector.shape_cast %297 : vector<1x8x32xbf16> to vector<8x32xbf16>
    %299 = vector.shape_cast %296 : vector<8x32xbf16> to vector<1x8x32xbf16>
    tpu.vector_store %arg10[%c0_87, %c0_88, %c0_89], %299 {strides = array<i32>} : memref<1x8x32xbf16, #tpu.memory_space<vmem>>, vector<1x8x32xbf16>,
    return
  }
  func.func @transform_0(%arg0: i32) -> (i32, i32, i32, i32) {
    %c0_i32 = arith.constant 0 : i32
    %c0_i32_0 = arith.constant 0 : i32
    %c0_i32_1 = arith.constant 0 : i32
    %c0_i32_2 = arith.constant 0 : i32
    return %c0_i32, %arg0, %c0_i32_0, %c0_i32_1 : i32, i32, i32, i32
  }
  func.func @transform_1(%arg0: i32) -> (i32, i32, i32, i32) {
    %c1_i32 = arith.constant 1 : i32
    %c0_i32 = arith.constant 0 : i32
    %c0_i32_0 = arith.constant 0 : i32
    %c0_i32_1 = arith.constant 0 : i32
    return %c1_i32, %arg0, %c0_i32, %c0_i32_0 : i32, i32, i32, i32
  }
  func.func @transform_2(%arg0: i32) -> (i32, i32, i32, i32) {
    %c2_i32 = arith.constant 2 : i32
    %c0_i32 = arith.constant 0 : i32
    %c0_i32_0 = arith.constant 0 : i32
    %c0_i32_1 = arith.constant 0 : i32
    return %c2_i32, %arg0, %c0_i32, %c0_i32_0 : i32, i32, i32, i32
  }
  func.func @transform_3(%arg0: i32) -> (i32, i32, i32) {
    %c0_i32 = arith.constant 0 : i32
    %c0_i32_0 = arith.constant 0 : i32
    %c0_i32_1 = arith.constant 0 : i32
    return %arg0, %c0_i32, %c0_i32_0 : i32, i32, i32
  }
  func.func @transform_4(%arg0: i32) -> (i32, i32, i32) {
    %c0_i32 = arith.constant 0 : i32
    %c0_i32_0 = arith.constant 0 : i32
    %c0_i32_1 = arith.constant 0 : i32
    return %arg0, %c0_i32, %c0_i32_0 : i32, i32, i32
  }
  func.func @transform_5(%arg0: i32) -> (i32, i32) {
    %c0_i32 = arith.constant 0 : i32
    %c0_i32_0 = arith.constant 0 : i32
    %c0_i32_1 = arith.constant 0 : i32
    return %c0_i32, %c0_i32_0 : i32, i32
  }
  func.func @transform_6(%arg0: i32) -> (i32, i32) {
    %c0_i32 = arith.constant 0 : i32
    %c0_i32_0 = arith.constant 0 : i32
    %c0_i32_1 = arith.constant 0 : i32
    return %c0_i32, %c0_i32_0 : i32, i32
  }
  func.func @transform_7(%arg0: i32) -> (i32, i32) {
    %c0_i32 = arith.constant 0 : i32
    %c0_i32_0 = arith.constant 0 : i32
    %c0_i32_1 = arith.constant 0 : i32
    return %c0_i32, %c0_i32_0 : i32, i32
  }
  func.func @transform_8(%arg0: i32) -> (i32, i32) {
    %c0_i32 = arith.constant 0 : i32
    %c0_i32_0 = arith.constant 0 : i32
    %c0_i32_1 = arith.constant 0 : i32
    return %c0_i32, %c0_i32_0 : i32, i32
  }
  func.func @transform_9(%arg0: i32) -> (i32, i32, i32) {
    %c0_i32 = arith.constant 0 : i32
    %c0_i32_0 = arith.constant 0 : i32
    %c0_i32_1 = arith.constant 0 : i32
    return %arg0, %c0_i32, %c0_i32_0 : i32, i32, i32
  }
}

module attributes {stable_mosaic.version = 11 : i64} {
  func.func @_ffn_res_ln_kernel(%arg0: i32, %arg1: memref<8x32xbf16, #tpu.memory_space<vmem>>, %arg2: memref<32x128xbf16, #tpu.memory_space<vmem>>, %arg3: memref<1x128xf32, #tpu.memory_space<vmem>>, %arg4: memref<128x32xbf16, #tpu.memory_space<vmem>>, %arg5: memref<1x32xf32, #tpu.memory_space<vmem>>, %arg6: memref<1x32xf32, #tpu.memory_space<vmem>>, %arg7: memref<1x32xf32, #tpu.memory_space<vmem>>, %arg8: memref<8x32xbf16, #tpu.memory_space<vmem>>) attributes {dimension_semantics = [#tpu.dimension_semantics<parallel>], iteration_bounds = array<i64: 2>, scalar_prefetch = 0 : i64, scratch_operands = 0 : i64, tpu.core_type = #tpu.core_type<tc>, window_params = [{transform_indices = @transform_0, window_bounds = array<i64: 8, 32>}, {pipeline_mode = #tpu.pipeline_mode<synchronous>, transform_indices = @transform_1, window_bounds = array<i64: 32, 128>}, {pipeline_mode = #tpu.pipeline_mode<synchronous>, transform_indices = @transform_2, window_bounds = array<i64: 1, 128>}, {pipeline_mode = #tpu.pipeline_mode<synchronous>, transform_indices = @transform_3, window_bounds = array<i64: 128, 32>}, {pipeline_mode = #tpu.pipeline_mode<synchronous>, transform_indices = @transform_4, window_bounds = array<i64: 1, 32>}, {pipeline_mode = #tpu.pipeline_mode<synchronous>, transform_indices = @transform_5, window_bounds = array<i64: 1, 32>}, {pipeline_mode = #tpu.pipeline_mode<synchronous>, transform_indices = @transform_6, window_bounds = array<i64: 1, 32>}, {transform_indices = @transform_7, window_bounds = array<i64: 8, 32>}]} {
    %c0 = arith.constant 0 : index
    %c0_0 = arith.constant 0 : index
    %0 = vector.load %arg1[%c0, %c0_0] : memref<8x32xbf16, #tpu.memory_space<vmem>>, vector<8x32xbf16>
    %c0_1 = arith.constant 0 : index
    %c0_2 = arith.constant 0 : index
    %1 = vector.load %arg2[%c0_1, %c0_2] : memref<32x128xbf16, #tpu.memory_space<vmem>>, vector<32x128xbf16>
    %cst = arith.constant dense<0.000000e+00> : vector<8x128xf32>
    %2 = tpu.matmul %0, %1, %cst {dimension_numbers = #tpu.dot_dimension_numbers<[1], [0], [0], [1], [0, 0, 1, 1], [], []>} : vector<8x32xbf16>, vector<32x128xbf16>, vector<8x128xf32> -> vector<8x128xf32>
    %c0_3 = arith.constant 0 : index
    %c0_4 = arith.constant 0 : index
    %3 = vector.load %arg3[%c0_3, %c0_4] : memref<1x128xf32, #tpu.memory_space<vmem>>, vector<1x128xf32>
    %4 = vector.broadcast %3 : vector<1x128xf32> to vector<8x128xf32>
    %5 = arith.addf %2, %4 : vector<8x128xf32>
    %cst_5 = arith.constant 0.000000e+00 : f32
    %6 = vector.broadcast %cst_5 : f32 to vector<8x128xf32>
    %7 = arith.maximumf %5, %6 : vector<8x128xf32>
    %8 = arith.truncf %7 : vector<8x128xf32> to vector<8x128xbf16>
    %c0_6 = arith.constant 0 : index
    %c0_7 = arith.constant 0 : index
    %9 = vector.load %arg4[%c0_6, %c0_7] : memref<128x32xbf16, #tpu.memory_space<vmem>>, vector<128x32xbf16>
    %cst_8 = arith.constant dense<0.000000e+00> : vector<8x32xf32>
    %10 = tpu.matmul %8, %9, %cst_8 {dimension_numbers = #tpu.dot_dimension_numbers<[1], [0], [0], [1], [0, 0, 1, 1], [], []>} : vector<8x128xbf16>, vector<128x32xbf16>, vector<8x32xf32> -> vector<8x32xf32>
    %c0_9 = arith.constant 0 : index
    %c0_10 = arith.constant 0 : index
    %11 = vector.load %arg5[%c0_9, %c0_10] : memref<1x32xf32, #tpu.memory_space<vmem>>, vector<1x32xf32>
    %12 = vector.broadcast %11 : vector<1x32xf32> to vector<8x32xf32>
    %13 = arith.addf %10, %12 : vector<8x32xf32>
    %14 = arith.extf %0 : vector<8x32xbf16> to vector<8x32xf32>
    %15 = arith.addf %13, %14 : vector<8x32xf32>
    %c0_11 = arith.constant 0 : index
    %c0_12 = arith.constant 0 : index
    %16 = vector.load %arg6[%c0_11, %c0_12] : memref<1x32xf32, #tpu.memory_space<vmem>>, vector<1x32xf32>
    %c0_13 = arith.constant 0 : index
    %c0_14 = arith.constant 0 : index
    %17 = vector.load %arg7[%c0_13, %c0_14] : memref<1x32xf32, #tpu.memory_space<vmem>>, vector<1x32xf32>
    %cst_15 = arith.constant dense<0.000000e+00> : vector<8xf32>
    %18 = vector.multi_reduction <add>, %15, %cst_15 [1] : vector<8x32xf32> to vector<8xf32>
    %19 = vector.shape_cast %18 : vector<8xf32> to vector<8x1xf32>
    %cst_16 = arith.constant 3.200000e+01 : f32
    %20 = vector.broadcast %cst_16 : f32 to vector<8x1xf32>
    %21 = arith.divf %19, %20 : vector<8x1xf32>
    %22 = vector.broadcast %21 : vector<8x1xf32> to vector<8x32xf32>
    %23 = arith.subf %15, %22 : vector<8x32xf32>
    %24 = arith.mulf %23, %23 : vector<8x32xf32>
    %cst_17 = arith.constant dense<0.000000e+00> : vector<8xf32>
    %25 = vector.multi_reduction <add>, %24, %cst_17 [1] : vector<8x32xf32> to vector<8xf32>
    %26 = vector.shape_cast %25 : vector<8xf32> to vector<8x1xf32>
    %cst_18 = arith.constant 3.200000e+01 : f32
    %27 = vector.broadcast %cst_18 : f32 to vector<8x1xf32>
    %28 = arith.divf %26, %27 : vector<8x1xf32>
    %29 = vector.broadcast %21 : vector<8x1xf32> to vector<8x32xf32>
    %30 = arith.subf %15, %29 : vector<8x32xf32>
    %cst_19 = arith.constant 9.99999974E-6 : f32
    %31 = vector.broadcast %cst_19 : f32 to vector<8x1xf32>
    %32 = arith.addf %28, %31 : vector<8x1xf32>
    %33 = math.rsqrt %32 : vector<8x1xf32>
    %34 = vector.broadcast %33 : vector<8x1xf32> to vector<8x32xf32>
    %35 = arith.mulf %30, %34 : vector<8x32xf32>
    %36 = vector.broadcast %16 : vector<1x32xf32> to vector<8x32xf32>
    %37 = arith.mulf %35, %36 : vector<8x32xf32>
    %38 = vector.broadcast %17 : vector<1x32xf32> to vector<8x32xf32>
    %39 = arith.addf %37, %38 : vector<8x32xf32>
    %40 = arith.truncf %39 : vector<8x32xf32> to vector<8x32xbf16>
    %c0_20 = arith.constant 0 : index
    %c0_21 = arith.constant 0 : index
    %41 = vector.load %arg8[%c0_20, %c0_21] : memref<8x32xbf16, #tpu.memory_space<vmem>>, vector<8x32xbf16>
    tpu.vector_store %arg8[%c0_20, %c0_21], %40 {strides = array<i32>} : memref<8x32xbf16, #tpu.memory_space<vmem>>, vector<8x32xbf16>,
    return
  }
  func.func @transform_0(%arg0: i32) -> (i32, i32) {
    %c0_i32 = arith.constant 0 : i32
    %c0_i32_0 = arith.constant 0 : i32
    return %arg0, %c0_i32 : i32, i32
  }
  func.func @transform_1(%arg0: i32) -> (i32, i32) {
    %c0_i32 = arith.constant 0 : i32
    %c0_i32_0 = arith.constant 0 : i32
    %c0_i32_1 = arith.constant 0 : i32
    return %c0_i32, %c0_i32_0 : i32, i32
  }
  func.func @transform_2(%arg0: i32) -> (i32, i32) {
    %c0_i32 = arith.constant 0 : i32
    %c0_i32_0 = arith.constant 0 : i32
    %c0_i32_1 = arith.constant 0 : i32
    return %c0_i32, %c0_i32_0 : i32, i32
  }
  func.func @transform_3(%arg0: i32) -> (i32, i32) {
    %c0_i32 = arith.constant 0 : i32
    %c0_i32_0 = arith.constant 0 : i32
    %c0_i32_1 = arith.constant 0 : i32
    return %c0_i32, %c0_i32_0 : i32, i32
  }
  func.func @transform_4(%arg0: i32) -> (i32, i32) {
    %c0_i32 = arith.constant 0 : i32
    %c0_i32_0 = arith.constant 0 : i32
    %c0_i32_1 = arith.constant 0 : i32
    return %c0_i32, %c0_i32_0 : i32, i32
  }
  func.func @transform_5(%arg0: i32) -> (i32, i32) {
    %c0_i32 = arith.constant 0 : i32
    %c0_i32_0 = arith.constant 0 : i32
    %c0_i32_1 = arith.constant 0 : i32
    return %c0_i32, %c0_i32_0 : i32, i32
  }
  func.func @transform_6(%arg0: i32) -> (i32, i32) {
    %c0_i32 = arith.constant 0 : i32
    %c0_i32_0 = arith.constant 0 : i32
    %c0_i32_1 = arith.constant 0 : i32
    return %c0_i32, %c0_i32_0 : i32, i32
  }
  func.func @transform_7(%arg0: i32) -> (i32, i32) {
    %c0_i32 = arith.constant 0 : i32
    %c0_i32_0 = arith.constant 0 : i32
    return %arg0, %c0_i32 : i32, i32
  }
}

module attributes {stable_mosaic.version = 11 : i64} {
  func.func @_stacked_proj_kernel(%arg0: i32, %arg1: memref<8x32xbf16, #tpu.memory_space<vmem>>, %arg2: memref<2x32x32xbf16, #tpu.memory_space<vmem>>, %arg3: memref<2x1x32xf32, #tpu.memory_space<vmem>>, %arg4: memref<2x8x32xbf16, #tpu.memory_space<vmem>>) attributes {dimension_semantics = [#tpu.dimension_semantics<parallel>], iteration_bounds = array<i64: 2>, scalar_prefetch = 0 : i64, scratch_operands = 0 : i64, tpu.core_type = #tpu.core_type<tc>, window_params = [{transform_indices = @transform_0, window_bounds = array<i64: 8, 32>}, {pipeline_mode = #tpu.pipeline_mode<synchronous>, transform_indices = @transform_1, window_bounds = array<i64: 2, 32, 32>}, {pipeline_mode = #tpu.pipeline_mode<synchronous>, transform_indices = @transform_2, window_bounds = array<i64: 2, 1, 32>}, {transform_indices = @transform_3, window_bounds = array<i64: 2, 8, 32>}]} {
    %c0 = arith.constant 0 : index
    %c0_0 = arith.constant 0 : index
    %0 = vector.load %arg1[%c0, %c0_0] : memref<8x32xbf16, #tpu.memory_space<vmem>>, vector<8x32xbf16>
    %c0_1 = arith.constant 0 : index
    %c0_2 = arith.constant 0 : index
    %c0_3 = arith.constant 0 : index
    %1 = vector.load %arg2[%c0_1, %c0_2, %c0_3] : memref<2x32x32xbf16, #tpu.memory_space<vmem>>, vector<1x32x32xbf16>
    %2 = vector.shape_cast %1 : vector<1x32x32xbf16> to vector<32x32xbf16>
    %cst = arith.constant dense<0.000000e+00> : vector<8x32xf32>
    %3 = tpu.matmul %0, %2, %cst {dimension_numbers = #tpu.dot_dimension_numbers<[1], [0], [0], [1], [0, 0, 1, 1], [], []>} : vector<8x32xbf16>, vector<32x32xbf16>, vector<8x32xf32> -> vector<8x32xf32>
    %c0_4 = arith.constant 0 : index
    %c0_5 = arith.constant 0 : index
    %c0_6 = arith.constant 0 : index
    %4 = vector.load %arg3[%c0_4, %c0_5, %c0_6] : memref<2x1x32xf32, #tpu.memory_space<vmem>>, vector<1x1x32xf32>
    %5 = vector.shape_cast %4 : vector<1x1x32xf32> to vector<1x32xf32>
    %6 = vector.broadcast %5 : vector<1x32xf32> to vector<8x32xf32>
    %7 = arith.addf %3, %6 : vector<8x32xf32>
    %8 = arith.truncf %7 : vector<8x32xf32> to vector<8x32xbf16>
    %c0_7 = arith.constant 0 : index
    %c0_8 = arith.constant 0 : index
    %c0_9 = arith.constant 0 : index
    %9 = vector.load %arg4[%c0_7, %c0_8, %c0_9] : memref<2x8x32xbf16, #tpu.memory_space<vmem>>, vector<1x8x32xbf16>
    %10 = vector.shape_cast %9 : vector<1x8x32xbf16> to vector<8x32xbf16>
    %11 = vector.shape_cast %8 : vector<8x32xbf16> to vector<1x8x32xbf16>
    tpu.vector_store %arg4[%c0_7, %c0_8, %c0_9], %11 {strides = array<i32>} : memref<2x8x32xbf16, #tpu.memory_space<vmem>>, vector<1x8x32xbf16>,
    %c1 = arith.constant 1 : index
    %c0_10 = arith.constant 0 : index
    %c0_11 = arith.constant 0 : index
    %12 = vector.load %arg2[%c1, %c0_10, %c0_11] : memref<2x32x32xbf16, #tpu.memory_space<vmem>>, vector<1x32x32xbf16>
    %13 = vector.shape_cast %12 : vector<1x32x32xbf16> to vector<32x32xbf16>
    %cst_12 = arith.constant dense<0.000000e+00> : vector<8x32xf32>
    %14 = tpu.matmul %0, %13, %cst_12 {dimension_numbers = #tpu.dot_dimension_numbers<[1], [0], [0], [1], [0, 0, 1, 1], [], []>} : vector<8x32xbf16>, vector<32x32xbf16>, vector<8x32xf32> -> vector<8x32xf32>
    %c1_13 = arith.constant 1 : index
    %c0_14 = arith.constant 0 : index
    %c0_15 = arith.constant 0 : index
    %15 = vector.load %arg3[%c1_13, %c0_14, %c0_15] : memref<2x1x32xf32, #tpu.memory_space<vmem>>, vector<1x1x32xf32>
    %16 = vector.shape_cast %15 : vector<1x1x32xf32> to vector<1x32xf32>
    %17 = vector.broadcast %16 : vector<1x32xf32> to vector<8x32xf32>
    %18 = arith.addf %14, %17 : vector<8x32xf32>
    %19 = arith.truncf %18 : vector<8x32xf32> to vector<8x32xbf16>
    %c1_16 = arith.constant 1 : index
    %c0_17 = arith.constant 0 : index
    %c0_18 = arith.constant 0 : index
    %20 = vector.load %arg4[%c1_16, %c0_17, %c0_18] : memref<2x8x32xbf16, #tpu.memory_space<vmem>>, vector<1x8x32xbf16>
    %21 = vector.shape_cast %20 : vector<1x8x32xbf16> to vector<8x32xbf16>
    %22 = vector.shape_cast %19 : vector<8x32xbf16> to vector<1x8x32xbf16>
    tpu.vector_store %arg4[%c1_16, %c0_17, %c0_18], %22 {strides = array<i32>} : memref<2x8x32xbf16, #tpu.memory_space<vmem>>, vector<1x8x32xbf16>,
    return
  }
  func.func @transform_0(%arg0: i32) -> (i32, i32) {
    %c0_i32 = arith.constant 0 : i32
    %c0_i32_0 = arith.constant 0 : i32
    return %arg0, %c0_i32 : i32, i32
  }
  func.func @transform_1(%arg0: i32) -> (i32, i32, i32) {
    %c0_i32 = arith.constant 0 : i32
    %c0_i32_0 = arith.constant 0 : i32
    %c0_i32_1 = arith.constant 0 : i32
    %c0_i32_2 = arith.constant 0 : i32
    return %c0_i32, %c0_i32_0, %c0_i32_1 : i32, i32, i32
  }
  func.func @transform_2(%arg0: i32) -> (i32, i32, i32) {
    %c0_i32 = arith.constant 0 : i32
    %c0_i32_0 = arith.constant 0 : i32
    %c0_i32_1 = arith.constant 0 : i32
    %c0_i32_2 = arith.constant 0 : i32
    return %c0_i32, %c0_i32_0, %c0_i32_1 : i32, i32, i32
  }
  func.func @transform_3(%arg0: i32) -> (i32, i32, i32) {
    %c0_i32 = arith.constant 0 : i32
    %c0_i32_0 = arith.constant 0 : i32
    %c0_i32_1 = arith.constant 0 : i32
    return %c0_i32, %arg0, %c0_i32_0 : i32, i32, i32
  }
}

module attributes {stable_mosaic.version = 11 : i64} {
  func.func @_dual_head_kernel(%arg0: i32, %arg1: memref<8x32xbf16, #tpu.memory_space<vmem>>, %arg2: memref<32x64xbf16, #tpu.memory_space<vmem>>, %arg3: memref<1x64xf32, #tpu.memory_space<vmem>>, %arg4: memref<32x4xbf16, #tpu.memory_space<vmem>>, %arg5: memref<1x4xf32, #tpu.memory_space<vmem>>, %arg6: memref<8x64xf32, #tpu.memory_space<vmem>>, %arg7: memref<8x4xf32, #tpu.memory_space<vmem>>) attributes {dimension_semantics = [#tpu.dimension_semantics<parallel>], iteration_bounds = array<i64: 2>, scalar_prefetch = 0 : i64, scratch_operands = 0 : i64, tpu.core_type = #tpu.core_type<tc>, window_params = [{transform_indices = @transform_0, window_bounds = array<i64: 8, 32>}, {pipeline_mode = #tpu.pipeline_mode<synchronous>, transform_indices = @transform_1, window_bounds = array<i64: 32, 64>}, {pipeline_mode = #tpu.pipeline_mode<synchronous>, transform_indices = @transform_2, window_bounds = array<i64: 1, 64>}, {pipeline_mode = #tpu.pipeline_mode<synchronous>, transform_indices = @transform_3, window_bounds = array<i64: 32, 4>}, {pipeline_mode = #tpu.pipeline_mode<synchronous>, transform_indices = @transform_4, window_bounds = array<i64: 1, 4>}, {transform_indices = @transform_5, window_bounds = array<i64: 8, 64>}, {transform_indices = @transform_6, window_bounds = array<i64: 8, 4>}]} {
    %c0 = arith.constant 0 : index
    %c0_0 = arith.constant 0 : index
    %0 = vector.load %arg1[%c0, %c0_0] : memref<8x32xbf16, #tpu.memory_space<vmem>>, vector<8x32xbf16>
    %c0_1 = arith.constant 0 : index
    %c0_2 = arith.constant 0 : index
    %1 = vector.load %arg2[%c0_1, %c0_2] : memref<32x64xbf16, #tpu.memory_space<vmem>>, vector<32x64xbf16>
    %cst = arith.constant dense<0.000000e+00> : vector<8x64xf32>
    %2 = tpu.matmul %0, %1, %cst {dimension_numbers = #tpu.dot_dimension_numbers<[1], [0], [0], [1], [0, 0, 1, 1], [], []>} : vector<8x32xbf16>, vector<32x64xbf16>, vector<8x64xf32> -> vector<8x64xf32>
    %c0_3 = arith.constant 0 : index
    %c0_4 = arith.constant 0 : index
    %3 = vector.load %arg3[%c0_3, %c0_4] : memref<1x64xf32, #tpu.memory_space<vmem>>, vector<1x64xf32>
    %4 = vector.broadcast %3 : vector<1x64xf32> to vector<8x64xf32>
    %5 = arith.addf %2, %4 : vector<8x64xf32>
    %c0_5 = arith.constant 0 : index
    %c0_6 = arith.constant 0 : index
    %6 = vector.load %arg6[%c0_5, %c0_6] : memref<8x64xf32, #tpu.memory_space<vmem>>, vector<8x64xf32>
    tpu.vector_store %arg6[%c0_5, %c0_6], %5 {strides = array<i32>} : memref<8x64xf32, #tpu.memory_space<vmem>>, vector<8x64xf32>,
    %c0_7 = arith.constant 0 : index
    %c0_8 = arith.constant 0 : index
    %7 = vector.load %arg4[%c0_7, %c0_8] : memref<32x4xbf16, #tpu.memory_space<vmem>>, vector<32x4xbf16>
    %cst_9 = arith.constant dense<0.000000e+00> : vector<8x4xf32>
    %8 = tpu.matmul %0, %7, %cst_9 {dimension_numbers = #tpu.dot_dimension_numbers<[1], [0], [0], [1], [0, 0, 1, 1], [], []>} : vector<8x32xbf16>, vector<32x4xbf16>, vector<8x4xf32> -> vector<8x4xf32>
    %c0_10 = arith.constant 0 : index
    %c0_11 = arith.constant 0 : index
    %9 = vector.load %arg5[%c0_10, %c0_11] : memref<1x4xf32, #tpu.memory_space<vmem>>, vector<1x4xf32>
    %10 = vector.broadcast %9 : vector<1x4xf32> to vector<8x4xf32>
    %11 = arith.addf %8, %10 : vector<8x4xf32>
    %12 = math.tanh %11 : vector<8x4xf32>
    %c0_12 = arith.constant 0 : index
    %c0_13 = arith.constant 0 : index
    %13 = vector.load %arg7[%c0_12, %c0_13] : memref<8x4xf32, #tpu.memory_space<vmem>>, vector<8x4xf32>
    tpu.vector_store %arg7[%c0_12, %c0_13], %12 {strides = array<i32>} : memref<8x4xf32, #tpu.memory_space<vmem>>, vector<8x4xf32>,
    return
  }
  func.func @transform_0(%arg0: i32) -> (i32, i32) {
    %c0_i32 = arith.constant 0 : i32
    %c0_i32_0 = arith.constant 0 : i32
    return %arg0, %c0_i32 : i32, i32
  }
  func.func @transform_1(%arg0: i32) -> (i32, i32) {
    %c0_i32 = arith.constant 0 : i32
    %c0_i32_0 = arith.constant 0 : i32
    %c0_i32_1 = arith.constant 0 : i32
    return %c0_i32, %c0_i32_0 : i32, i32
  }
  func.func @transform_2(%arg0: i32) -> (i32, i32) {
    %c0_i32 = arith.constant 0 : i32
    %c0_i32_0 = arith.constant 0 : i32
    %c0_i32_1 = arith.constant 0 : i32
    return %c0_i32, %c0_i32_0 : i32, i32
  }
  func.func @transform_3(%arg0: i32) -> (i32, i32) {
    %c0_i32 = arith.constant 0 : i32
    %c0_i32_0 = arith.constant 0 : i32
    %c0_i32_1 = arith.constant 0 : i32
    return %c0_i32, %c0_i32_0 : i32, i32
  }
  func.func @transform_4(%arg0: i32) -> (i32, i32) {
    %c0_i32 = arith.constant 0 : i32
    %c0_i32_0 = arith.constant 0 : i32
    %c0_i32_1 = arith.constant 0 : i32
    return %c0_i32, %c0_i32_0 : i32, i32
  }
  func.func @transform_5(%arg0: i32) -> (i32, i32) {
    %c0_i32 = arith.constant 0 : i32
    %c0_i32_0 = arith.constant 0 : i32
    return %arg0, %c0_i32 : i32, i32
  }
  func.func @transform_6(%arg0: i32) -> (i32, i32) {
    %c0_i32 = arith.constant 0 : i32
    %c0_i32_0 = arith.constant 0 : i32
    return %arg0, %c0_i32 : i32, i32
  }
}

module attributes {stable_mosaic.version = 11 : i64} {
  func.func @_cross_attn_block_kernel(%arg0: i32, %arg1: memref<1x8x32xbf16, #tpu.memory_space<vmem>>, %arg2: memref<32x32xbf16, #tpu.memory_space<vmem>>, %arg3: memref<1x32xf32, #tpu.memory_space<vmem>>, %arg4: memref<1x1x8x32xbf16, #tpu.memory_space<vmem>>, %arg5: memref<1x1x8x32xbf16, #tpu.memory_space<vmem>>, %arg6: memref<1x1x8xf32, #tpu.memory_space<vmem>>, %arg7: memref<32x32xbf16, #tpu.memory_space<vmem>>, %arg8: memref<1x32xf32, #tpu.memory_space<vmem>>, %arg9: memref<1x32xf32, #tpu.memory_space<vmem>>, %arg10: memref<1x32xf32, #tpu.memory_space<vmem>>, %arg11: memref<1x8x32xbf16, #tpu.memory_space<vmem>>) attributes {dimension_semantics = [#tpu.dimension_semantics<parallel>], iteration_bounds = array<i64: 2>, scalar_prefetch = 0 : i64, scratch_operands = 0 : i64, tpu.core_type = #tpu.core_type<tc>, window_params = [{transform_indices = @transform_0, window_bounds = array<i64: 1, 8, 32>}, {pipeline_mode = #tpu.pipeline_mode<synchronous>, transform_indices = @transform_1, window_bounds = array<i64: 32, 32>}, {pipeline_mode = #tpu.pipeline_mode<synchronous>, transform_indices = @transform_2, window_bounds = array<i64: 1, 32>}, {transform_indices = @transform_3, window_bounds = array<i64: 1, 1, 8, 32>}, {transform_indices = @transform_4, window_bounds = array<i64: 1, 1, 8, 32>}, {transform_indices = @transform_5, window_bounds = array<i64: 1, 1, 8>}, {pipeline_mode = #tpu.pipeline_mode<synchronous>, transform_indices = @transform_6, window_bounds = array<i64: 32, 32>}, {pipeline_mode = #tpu.pipeline_mode<synchronous>, transform_indices = @transform_7, window_bounds = array<i64: 1, 32>}, {pipeline_mode = #tpu.pipeline_mode<synchronous>, transform_indices = @transform_8, window_bounds = array<i64: 1, 32>}, {pipeline_mode = #tpu.pipeline_mode<synchronous>, transform_indices = @transform_9, window_bounds = array<i64: 1, 32>}, {transform_indices = @transform_10, window_bounds = array<i64: 1, 8, 32>}]} {
    %c0 = arith.constant 0 : index
    %c0_0 = arith.constant 0 : index
    %c0_1 = arith.constant 0 : index
    %0 = vector.load %arg1[%c0, %c0_0, %c0_1] : memref<1x8x32xbf16, #tpu.memory_space<vmem>>, vector<1x8x32xbf16>
    %1 = vector.shape_cast %0 : vector<1x8x32xbf16> to vector<8x32xbf16>
    %c0_2 = arith.constant 0 : index
    %c0_3 = arith.constant 0 : index
    %2 = vector.load %arg2[%c0_2, %c0_3] : memref<32x32xbf16, #tpu.memory_space<vmem>>, vector<32x32xbf16>
    %cst = arith.constant dense<0.000000e+00> : vector<8x32xf32>
    %3 = tpu.matmul %1, %2, %cst {dimension_numbers = #tpu.dot_dimension_numbers<[1], [0], [0], [1], [0, 0, 1, 1], [], []>} : vector<8x32xbf16>, vector<32x32xbf16>, vector<8x32xf32> -> vector<8x32xf32>
    %c0_4 = arith.constant 0 : index
    %c0_5 = arith.constant 0 : index
    %4 = vector.load %arg3[%c0_4, %c0_5] : memref<1x32xf32, #tpu.memory_space<vmem>>, vector<1x32xf32>
    %5 = vector.broadcast %4 : vector<1x32xf32> to vector<8x32xf32>
    %6 = arith.addf %3, %5 : vector<8x32xf32>
    %cst_6 = arith.constant 5.000000e-01 : f32
    %7 = vector.broadcast %cst_6 : f32 to vector<8x32xf32>
    %8 = arith.mulf %6, %7 : vector<8x32xf32>
    %c0_7 = arith.constant 0 : index
    %c0_8 = arith.constant 0 : index
    %c0_9 = arith.constant 0 : index
    %c0_10 = arith.constant 0 : index
    %9 = vector.load %arg4[%c0_7, %c0_8, %c0_9, %c0_10] : memref<1x1x8x32xbf16, #tpu.memory_space<vmem>>, vector<1x1x8x32xbf16>
    %10 = vector.shape_cast %9 : vector<1x1x8x32xbf16> to vector<8x32xbf16>
    %c0_11 = arith.constant 0 : index
    %c0_12 = arith.constant 0 : index
    %c0_13 = arith.constant 0 : index
    %c0_14 = arith.constant 0 : index
    %11 = vector.load %arg5[%c0_11, %c0_12, %c0_13, %c0_14] : memref<1x1x8x32xbf16, #tpu.memory_space<vmem>>, vector<1x1x8x32xbf16>
    %12 = vector.shape_cast %11 : vector<1x1x8x32xbf16> to vector<8x32xbf16>
    %c0_15 = arith.constant 0 : index
    %c0_16 = arith.constant 0 : index
    %c0_17 = arith.constant 0 : index
    %13 = vector.load %arg6[%c0_15, %c0_16, %c0_17] : memref<1x1x8xf32, #tpu.memory_space<vmem>>, vector<1x1x8xf32>
    %14 = vector.shape_cast %13 : vector<1x1x8xf32> to vector<1x8xf32>
    %15 = arith.truncf %8 : vector<8x32xf32> to vector<8x32xbf16>
    %16 = tpu.iota {dimensions = array<i32: 1>} : vector<1x32xi32>
    %cst_18 = arith.constant 0.000000e+00 : f32
    %17 = vector.broadcast %cst_18 : f32 to vector<8x32xf32>
    %c0_i32 = arith.constant 0 : i32
    %18 = vector.broadcast %c0_i32 : i32 to vector<1x32xi32>
    %19 = arith.cmpi sge, %16, %18 : vector<1x32xi32>
    %c4_i32 = arith.constant 4 : i32
    %20 = vector.broadcast %c4_i32 : i32 to vector<1x32xi32>
    %21 = arith.cmpi slt, %16, %20 : vector<1x32xi32>
    %22 = arith.andi %19, %21 : vector<1x32xi1>
    %cst_19 = arith.constant 0.000000e+00 : f32
    %23 = arith.truncf %cst_19 : f32 to bf16
    %24 = vector.shape_cast %22 : vector<1x32xi1> to vector<1x32xi1>
    %25 = vector.broadcast %24 : vector<1x32xi1> to vector<8x32xi1>
    %26 = vector.broadcast %23 : bf16 to vector<8x32xbf16>
    %27 = arith.select %25, %15, %26 : vector<8x32xi1>, vector<8x32xbf16>
    %cst_20 = arith.constant 0.000000e+00 : f32
    %28 = arith.truncf %cst_20 : f32 to bf16
    %29 = vector.shape_cast %22 : vector<1x32xi1> to vector<1x32xi1>
    %30 = vector.broadcast %29 : vector<1x32xi1> to vector<8x32xi1>
    %31 = vector.broadcast %28 : bf16 to vector<8x32xbf16>
    %32 = arith.select %30, %12, %31 : vector<8x32xi1>, vector<8x32xbf16>
    %cst_21 = arith.constant dense<0.000000e+00> : vector<8x8xf32>
    %33 = tpu.matmul %27, %10, %cst_21 {dimension_numbers = #tpu.dot_dimension_numbers<[1], [1], [0], [0], [0, 0, 1, 0], [], []>} : vector<8x32xbf16>, vector<8x32xbf16>, vector<8x8xf32> -> vector<8x8xf32>
    %34 = vector.broadcast %14 : vector<1x8xf32> to vector<8x8xf32>
    %35 = arith.addf %33, %34 : vector<8x8xf32>
    %cst_22 = arith.constant dense<0xFF800000> : vector<8xf32>
    %36 = vector.multi_reduction <maximumf>, %35, %cst_22 [1] : vector<8x8xf32> to vector<8xf32>
    %37 = vector.shape_cast %36 : vector<8xf32> to vector<8x1xf32>
    %38 = vector.broadcast %37 : vector<8x1xf32> to vector<8x8xf32>
    %39 = arith.subf %35, %38 : vector<8x8xf32>
    %40 = math.exp %39 : vector<8x8xf32>
    %cst_23 = arith.constant dense<0.000000e+00> : vector<8xf32>
    %41 = vector.multi_reduction <add>, %40, %cst_23 [1] : vector<8x8xf32> to vector<8xf32>
    %42 = vector.shape_cast %41 : vector<8xf32> to vector<8x1xf32>
    %43 = tpu.reciprocal %42 {approx = true} : vector<8x1xf32> -> vector<8x1xf32>
    %44 = arith.truncf %40 : vector<8x8xf32> to vector<8x8xbf16>
    %cst_24 = arith.constant dense<0.000000e+00> : vector<8x32xf32>
    %45 = tpu.matmul %44, %32, %cst_24 {dimension_numbers = #tpu.dot_dimension_numbers<[1], [0], [0], [1], [0, 0, 1, 1], [], []>} : vector<8x8xbf16>, vector<8x32xbf16>, vector<8x32xf32> -> vector<8x32xf32>
    %46 = vector.broadcast %43 : vector<8x1xf32> to vector<8x32xf32>
    %47 = arith.mulf %45, %46 : vector<8x32xf32>
    %48 = arith.addf %17, %47 : vector<8x32xf32>
    %c4_i32_25 = arith.constant 4 : i32
    %49 = vector.broadcast %c4_i32_25 : i32 to vector<1x32xi32>
    %50 = arith.cmpi sge, %16, %49 : vector<1x32xi32>
    %c8_i32 = arith.constant 8 : i32
    %51 = vector.broadcast %c8_i32 : i32 to vector<1x32xi32>
    %52 = arith.cmpi slt, %16, %51 : vector<1x32xi32>
    %53 = arith.andi %50, %52 : vector<1x32xi1>
    %cst_26 = arith.constant 0.000000e+00 : f32
    %54 = arith.truncf %cst_26 : f32 to bf16
    %55 = vector.shape_cast %53 : vector<1x32xi1> to vector<1x32xi1>
    %56 = vector.broadcast %55 : vector<1x32xi1> to vector<8x32xi1>
    %57 = vector.broadcast %54 : bf16 to vector<8x32xbf16>
    %58 = arith.select %56, %15, %57 : vector<8x32xi1>, vector<8x32xbf16>
    %cst_27 = arith.constant 0.000000e+00 : f32
    %59 = arith.truncf %cst_27 : f32 to bf16
    %60 = vector.shape_cast %53 : vector<1x32xi1> to vector<1x32xi1>
    %61 = vector.broadcast %60 : vector<1x32xi1> to vector<8x32xi1>
    %62 = vector.broadcast %59 : bf16 to vector<8x32xbf16>
    %63 = arith.select %61, %12, %62 : vector<8x32xi1>, vector<8x32xbf16>
    %cst_28 = arith.constant dense<0.000000e+00> : vector<8x8xf32>
    %64 = tpu.matmul %58, %10, %cst_28 {dimension_numbers = #tpu.dot_dimension_numbers<[1], [1], [0], [0], [0, 0, 1, 0], [], []>} : vector<8x32xbf16>, vector<8x32xbf16>, vector<8x8xf32> -> vector<8x8xf32>
    %65 = vector.broadcast %14 : vector<1x8xf32> to vector<8x8xf32>
    %66 = arith.addf %64, %65 : vector<8x8xf32>
    %cst_29 = arith.constant dense<0xFF800000> : vector<8xf32>
    %67 = vector.multi_reduction <maximumf>, %66, %cst_29 [1] : vector<8x8xf32> to vector<8xf32>
    %68 = vector.shape_cast %67 : vector<8xf32> to vector<8x1xf32>
    %69 = vector.broadcast %68 : vector<8x1xf32> to vector<8x8xf32>
    %70 = arith.subf %66, %69 : vector<8x8xf32>
    %71 = math.exp %70 : vector<8x8xf32>
    %cst_30 = arith.constant dense<0.000000e+00> : vector<8xf32>
    %72 = vector.multi_reduction <add>, %71, %cst_30 [1] : vector<8x8xf32> to vector<8xf32>
    %73 = vector.shape_cast %72 : vector<8xf32> to vector<8x1xf32>
    %74 = tpu.reciprocal %73 {approx = true} : vector<8x1xf32> -> vector<8x1xf32>
    %75 = arith.truncf %71 : vector<8x8xf32> to vector<8x8xbf16>
    %cst_31 = arith.constant dense<0.000000e+00> : vector<8x32xf32>
    %76 = tpu.matmul %75, %63, %cst_31 {dimension_numbers = #tpu.dot_dimension_numbers<[1], [0], [0], [1], [0, 0, 1, 1], [], []>} : vector<8x8xbf16>, vector<8x32xbf16>, vector<8x32xf32> -> vector<8x32xf32>
    %77 = vector.broadcast %74 : vector<8x1xf32> to vector<8x32xf32>
    %78 = arith.mulf %76, %77 : vector<8x32xf32>
    %79 = arith.addf %48, %78 : vector<8x32xf32>
    %c8_i32_32 = arith.constant 8 : i32
    %80 = vector.broadcast %c8_i32_32 : i32 to vector<1x32xi32>
    %81 = arith.cmpi sge, %16, %80 : vector<1x32xi32>
    %c12_i32 = arith.constant 12 : i32
    %82 = vector.broadcast %c12_i32 : i32 to vector<1x32xi32>
    %83 = arith.cmpi slt, %16, %82 : vector<1x32xi32>
    %84 = arith.andi %81, %83 : vector<1x32xi1>
    %cst_33 = arith.constant 0.000000e+00 : f32
    %85 = arith.truncf %cst_33 : f32 to bf16
    %86 = vector.shape_cast %84 : vector<1x32xi1> to vector<1x32xi1>
    %87 = vector.broadcast %86 : vector<1x32xi1> to vector<8x32xi1>
    %88 = vector.broadcast %85 : bf16 to vector<8x32xbf16>
    %89 = arith.select %87, %15, %88 : vector<8x32xi1>, vector<8x32xbf16>
    %cst_34 = arith.constant 0.000000e+00 : f32
    %90 = arith.truncf %cst_34 : f32 to bf16
    %91 = vector.shape_cast %84 : vector<1x32xi1> to vector<1x32xi1>
    %92 = vector.broadcast %91 : vector<1x32xi1> to vector<8x32xi1>
    %93 = vector.broadcast %90 : bf16 to vector<8x32xbf16>
    %94 = arith.select %92, %12, %93 : vector<8x32xi1>, vector<8x32xbf16>
    %cst_35 = arith.constant dense<0.000000e+00> : vector<8x8xf32>
    %95 = tpu.matmul %89, %10, %cst_35 {dimension_numbers = #tpu.dot_dimension_numbers<[1], [1], [0], [0], [0, 0, 1, 0], [], []>} : vector<8x32xbf16>, vector<8x32xbf16>, vector<8x8xf32> -> vector<8x8xf32>
    %96 = vector.broadcast %14 : vector<1x8xf32> to vector<8x8xf32>
    %97 = arith.addf %95, %96 : vector<8x8xf32>
    %cst_36 = arith.constant dense<0xFF800000> : vector<8xf32>
    %98 = vector.multi_reduction <maximumf>, %97, %cst_36 [1] : vector<8x8xf32> to vector<8xf32>
    %99 = vector.shape_cast %98 : vector<8xf32> to vector<8x1xf32>
    %100 = vector.broadcast %99 : vector<8x1xf32> to vector<8x8xf32>
    %101 = arith.subf %97, %100 : vector<8x8xf32>
    %102 = math.exp %101 : vector<8x8xf32>
    %cst_37 = arith.constant dense<0.000000e+00> : vector<8xf32>
    %103 = vector.multi_reduction <add>, %102, %cst_37 [1] : vector<8x8xf32> to vector<8xf32>
    %104 = vector.shape_cast %103 : vector<8xf32> to vector<8x1xf32>
    %105 = tpu.reciprocal %104 {approx = true} : vector<8x1xf32> -> vector<8x1xf32>
    %106 = arith.truncf %102 : vector<8x8xf32> to vector<8x8xbf16>
    %cst_38 = arith.constant dense<0.000000e+00> : vector<8x32xf32>
    %107 = tpu.matmul %106, %94, %cst_38 {dimension_numbers = #tpu.dot_dimension_numbers<[1], [0], [0], [1], [0, 0, 1, 1], [], []>} : vector<8x8xbf16>, vector<8x32xbf16>, vector<8x32xf32> -> vector<8x32xf32>
    %108 = vector.broadcast %105 : vector<8x1xf32> to vector<8x32xf32>
    %109 = arith.mulf %107, %108 : vector<8x32xf32>
    %110 = arith.addf %79, %109 : vector<8x32xf32>
    %c12_i32_39 = arith.constant 12 : i32
    %111 = vector.broadcast %c12_i32_39 : i32 to vector<1x32xi32>
    %112 = arith.cmpi sge, %16, %111 : vector<1x32xi32>
    %c16_i32 = arith.constant 16 : i32
    %113 = vector.broadcast %c16_i32 : i32 to vector<1x32xi32>
    %114 = arith.cmpi slt, %16, %113 : vector<1x32xi32>
    %115 = arith.andi %112, %114 : vector<1x32xi1>
    %cst_40 = arith.constant 0.000000e+00 : f32
    %116 = arith.truncf %cst_40 : f32 to bf16
    %117 = vector.shape_cast %115 : vector<1x32xi1> to vector<1x32xi1>
    %118 = vector.broadcast %117 : vector<1x32xi1> to vector<8x32xi1>
    %119 = vector.broadcast %116 : bf16 to vector<8x32xbf16>
    %120 = arith.select %118, %15, %119 : vector<8x32xi1>, vector<8x32xbf16>
    %cst_41 = arith.constant 0.000000e+00 : f32
    %121 = arith.truncf %cst_41 : f32 to bf16
    %122 = vector.shape_cast %115 : vector<1x32xi1> to vector<1x32xi1>
    %123 = vector.broadcast %122 : vector<1x32xi1> to vector<8x32xi1>
    %124 = vector.broadcast %121 : bf16 to vector<8x32xbf16>
    %125 = arith.select %123, %12, %124 : vector<8x32xi1>, vector<8x32xbf16>
    %cst_42 = arith.constant dense<0.000000e+00> : vector<8x8xf32>
    %126 = tpu.matmul %120, %10, %cst_42 {dimension_numbers = #tpu.dot_dimension_numbers<[1], [1], [0], [0], [0, 0, 1, 0], [], []>} : vector<8x32xbf16>, vector<8x32xbf16>, vector<8x8xf32> -> vector<8x8xf32>
    %127 = vector.broadcast %14 : vector<1x8xf32> to vector<8x8xf32>
    %128 = arith.addf %126, %127 : vector<8x8xf32>
    %cst_43 = arith.constant dense<0xFF800000> : vector<8xf32>
    %129 = vector.multi_reduction <maximumf>, %128, %cst_43 [1] : vector<8x8xf32> to vector<8xf32>
    %130 = vector.shape_cast %129 : vector<8xf32> to vector<8x1xf32>
    %131 = vector.broadcast %130 : vector<8x1xf32> to vector<8x8xf32>
    %132 = arith.subf %128, %131 : vector<8x8xf32>
    %133 = math.exp %132 : vector<8x8xf32>
    %cst_44 = arith.constant dense<0.000000e+00> : vector<8xf32>
    %134 = vector.multi_reduction <add>, %133, %cst_44 [1] : vector<8x8xf32> to vector<8xf32>
    %135 = vector.shape_cast %134 : vector<8xf32> to vector<8x1xf32>
    %136 = tpu.reciprocal %135 {approx = true} : vector<8x1xf32> -> vector<8x1xf32>
    %137 = arith.truncf %133 : vector<8x8xf32> to vector<8x8xbf16>
    %cst_45 = arith.constant dense<0.000000e+00> : vector<8x32xf32>
    %138 = tpu.matmul %137, %125, %cst_45 {dimension_numbers = #tpu.dot_dimension_numbers<[1], [0], [0], [1], [0, 0, 1, 1], [], []>} : vector<8x8xbf16>, vector<8x32xbf16>, vector<8x32xf32> -> vector<8x32xf32>
    %139 = vector.broadcast %136 : vector<8x1xf32> to vector<8x32xf32>
    %140 = arith.mulf %138, %139 : vector<8x32xf32>
    %141 = arith.addf %110, %140 : vector<8x32xf32>
    %c16_i32_46 = arith.constant 16 : i32
    %142 = vector.broadcast %c16_i32_46 : i32 to vector<1x32xi32>
    %143 = arith.cmpi sge, %16, %142 : vector<1x32xi32>
    %c20_i32 = arith.constant 20 : i32
    %144 = vector.broadcast %c20_i32 : i32 to vector<1x32xi32>
    %145 = arith.cmpi slt, %16, %144 : vector<1x32xi32>
    %146 = arith.andi %143, %145 : vector<1x32xi1>
    %cst_47 = arith.constant 0.000000e+00 : f32
    %147 = arith.truncf %cst_47 : f32 to bf16
    %148 = vector.shape_cast %146 : vector<1x32xi1> to vector<1x32xi1>
    %149 = vector.broadcast %148 : vector<1x32xi1> to vector<8x32xi1>
    %150 = vector.broadcast %147 : bf16 to vector<8x32xbf16>
    %151 = arith.select %149, %15, %150 : vector<8x32xi1>, vector<8x32xbf16>
    %cst_48 = arith.constant 0.000000e+00 : f32
    %152 = arith.truncf %cst_48 : f32 to bf16
    %153 = vector.shape_cast %146 : vector<1x32xi1> to vector<1x32xi1>
    %154 = vector.broadcast %153 : vector<1x32xi1> to vector<8x32xi1>
    %155 = vector.broadcast %152 : bf16 to vector<8x32xbf16>
    %156 = arith.select %154, %12, %155 : vector<8x32xi1>, vector<8x32xbf16>
    %cst_49 = arith.constant dense<0.000000e+00> : vector<8x8xf32>
    %157 = tpu.matmul %151, %10, %cst_49 {dimension_numbers = #tpu.dot_dimension_numbers<[1], [1], [0], [0], [0, 0, 1, 0], [], []>} : vector<8x32xbf16>, vector<8x32xbf16>, vector<8x8xf32> -> vector<8x8xf32>
    %158 = vector.broadcast %14 : vector<1x8xf32> to vector<8x8xf32>
    %159 = arith.addf %157, %158 : vector<8x8xf32>
    %cst_50 = arith.constant dense<0xFF800000> : vector<8xf32>
    %160 = vector.multi_reduction <maximumf>, %159, %cst_50 [1] : vector<8x8xf32> to vector<8xf32>
    %161 = vector.shape_cast %160 : vector<8xf32> to vector<8x1xf32>
    %162 = vector.broadcast %161 : vector<8x1xf32> to vector<8x8xf32>
    %163 = arith.subf %159, %162 : vector<8x8xf32>
    %164 = math.exp %163 : vector<8x8xf32>
    %cst_51 = arith.constant dense<0.000000e+00> : vector<8xf32>
    %165 = vector.multi_reduction <add>, %164, %cst_51 [1] : vector<8x8xf32> to vector<8xf32>
    %166 = vector.shape_cast %165 : vector<8xf32> to vector<8x1xf32>
    %167 = tpu.reciprocal %166 {approx = true} : vector<8x1xf32> -> vector<8x1xf32>
    %168 = arith.truncf %164 : vector<8x8xf32> to vector<8x8xbf16>
    %cst_52 = arith.constant dense<0.000000e+00> : vector<8x32xf32>
    %169 = tpu.matmul %168, %156, %cst_52 {dimension_numbers = #tpu.dot_dimension_numbers<[1], [0], [0], [1], [0, 0, 1, 1], [], []>} : vector<8x8xbf16>, vector<8x32xbf16>, vector<8x32xf32> -> vector<8x32xf32>
    %170 = vector.broadcast %167 : vector<8x1xf32> to vector<8x32xf32>
    %171 = arith.mulf %169, %170 : vector<8x32xf32>
    %172 = arith.addf %141, %171 : vector<8x32xf32>
    %c20_i32_53 = arith.constant 20 : i32
    %173 = vector.broadcast %c20_i32_53 : i32 to vector<1x32xi32>
    %174 = arith.cmpi sge, %16, %173 : vector<1x32xi32>
    %c24_i32 = arith.constant 24 : i32
    %175 = vector.broadcast %c24_i32 : i32 to vector<1x32xi32>
    %176 = arith.cmpi slt, %16, %175 : vector<1x32xi32>
    %177 = arith.andi %174, %176 : vector<1x32xi1>
    %cst_54 = arith.constant 0.000000e+00 : f32
    %178 = arith.truncf %cst_54 : f32 to bf16
    %179 = vector.shape_cast %177 : vector<1x32xi1> to vector<1x32xi1>
    %180 = vector.broadcast %179 : vector<1x32xi1> to vector<8x32xi1>
    %181 = vector.broadcast %178 : bf16 to vector<8x32xbf16>
    %182 = arith.select %180, %15, %181 : vector<8x32xi1>, vector<8x32xbf16>
    %cst_55 = arith.constant 0.000000e+00 : f32
    %183 = arith.truncf %cst_55 : f32 to bf16
    %184 = vector.shape_cast %177 : vector<1x32xi1> to vector<1x32xi1>
    %185 = vector.broadcast %184 : vector<1x32xi1> to vector<8x32xi1>
    %186 = vector.broadcast %183 : bf16 to vector<8x32xbf16>
    %187 = arith.select %185, %12, %186 : vector<8x32xi1>, vector<8x32xbf16>
    %cst_56 = arith.constant dense<0.000000e+00> : vector<8x8xf32>
    %188 = tpu.matmul %182, %10, %cst_56 {dimension_numbers = #tpu.dot_dimension_numbers<[1], [1], [0], [0], [0, 0, 1, 0], [], []>} : vector<8x32xbf16>, vector<8x32xbf16>, vector<8x8xf32> -> vector<8x8xf32>
    %189 = vector.broadcast %14 : vector<1x8xf32> to vector<8x8xf32>
    %190 = arith.addf %188, %189 : vector<8x8xf32>
    %cst_57 = arith.constant dense<0xFF800000> : vector<8xf32>
    %191 = vector.multi_reduction <maximumf>, %190, %cst_57 [1] : vector<8x8xf32> to vector<8xf32>
    %192 = vector.shape_cast %191 : vector<8xf32> to vector<8x1xf32>
    %193 = vector.broadcast %192 : vector<8x1xf32> to vector<8x8xf32>
    %194 = arith.subf %190, %193 : vector<8x8xf32>
    %195 = math.exp %194 : vector<8x8xf32>
    %cst_58 = arith.constant dense<0.000000e+00> : vector<8xf32>
    %196 = vector.multi_reduction <add>, %195, %cst_58 [1] : vector<8x8xf32> to vector<8xf32>
    %197 = vector.shape_cast %196 : vector<8xf32> to vector<8x1xf32>
    %198 = tpu.reciprocal %197 {approx = true} : vector<8x1xf32> -> vector<8x1xf32>
    %199 = arith.truncf %195 : vector<8x8xf32> to vector<8x8xbf16>
    %cst_59 = arith.constant dense<0.000000e+00> : vector<8x32xf32>
    %200 = tpu.matmul %199, %187, %cst_59 {dimension_numbers = #tpu.dot_dimension_numbers<[1], [0], [0], [1], [0, 0, 1, 1], [], []>} : vector<8x8xbf16>, vector<8x32xbf16>, vector<8x32xf32> -> vector<8x32xf32>
    %201 = vector.broadcast %198 : vector<8x1xf32> to vector<8x32xf32>
    %202 = arith.mulf %200, %201 : vector<8x32xf32>
    %203 = arith.addf %172, %202 : vector<8x32xf32>
    %c24_i32_60 = arith.constant 24 : i32
    %204 = vector.broadcast %c24_i32_60 : i32 to vector<1x32xi32>
    %205 = arith.cmpi sge, %16, %204 : vector<1x32xi32>
    %c28_i32 = arith.constant 28 : i32
    %206 = vector.broadcast %c28_i32 : i32 to vector<1x32xi32>
    %207 = arith.cmpi slt, %16, %206 : vector<1x32xi32>
    %208 = arith.andi %205, %207 : vector<1x32xi1>
    %cst_61 = arith.constant 0.000000e+00 : f32
    %209 = arith.truncf %cst_61 : f32 to bf16
    %210 = vector.shape_cast %208 : vector<1x32xi1> to vector<1x32xi1>
    %211 = vector.broadcast %210 : vector<1x32xi1> to vector<8x32xi1>
    %212 = vector.broadcast %209 : bf16 to vector<8x32xbf16>
    %213 = arith.select %211, %15, %212 : vector<8x32xi1>, vector<8x32xbf16>
    %cst_62 = arith.constant 0.000000e+00 : f32
    %214 = arith.truncf %cst_62 : f32 to bf16
    %215 = vector.shape_cast %208 : vector<1x32xi1> to vector<1x32xi1>
    %216 = vector.broadcast %215 : vector<1x32xi1> to vector<8x32xi1>
    %217 = vector.broadcast %214 : bf16 to vector<8x32xbf16>
    %218 = arith.select %216, %12, %217 : vector<8x32xi1>, vector<8x32xbf16>
    %cst_63 = arith.constant dense<0.000000e+00> : vector<8x8xf32>
    %219 = tpu.matmul %213, %10, %cst_63 {dimension_numbers = #tpu.dot_dimension_numbers<[1], [1], [0], [0], [0, 0, 1, 0], [], []>} : vector<8x32xbf16>, vector<8x32xbf16>, vector<8x8xf32> -> vector<8x8xf32>
    %220 = vector.broadcast %14 : vector<1x8xf32> to vector<8x8xf32>
    %221 = arith.addf %219, %220 : vector<8x8xf32>
    %cst_64 = arith.constant dense<0xFF800000> : vector<8xf32>
    %222 = vector.multi_reduction <maximumf>, %221, %cst_64 [1] : vector<8x8xf32> to vector<8xf32>
    %223 = vector.shape_cast %222 : vector<8xf32> to vector<8x1xf32>
    %224 = vector.broadcast %223 : vector<8x1xf32> to vector<8x8xf32>
    %225 = arith.subf %221, %224 : vector<8x8xf32>
    %226 = math.exp %225 : vector<8x8xf32>
    %cst_65 = arith.constant dense<0.000000e+00> : vector<8xf32>
    %227 = vector.multi_reduction <add>, %226, %cst_65 [1] : vector<8x8xf32> to vector<8xf32>
    %228 = vector.shape_cast %227 : vector<8xf32> to vector<8x1xf32>
    %229 = tpu.reciprocal %228 {approx = true} : vector<8x1xf32> -> vector<8x1xf32>
    %230 = arith.truncf %226 : vector<8x8xf32> to vector<8x8xbf16>
    %cst_66 = arith.constant dense<0.000000e+00> : vector<8x32xf32>
    %231 = tpu.matmul %230, %218, %cst_66 {dimension_numbers = #tpu.dot_dimension_numbers<[1], [0], [0], [1], [0, 0, 1, 1], [], []>} : vector<8x8xbf16>, vector<8x32xbf16>, vector<8x32xf32> -> vector<8x32xf32>
    %232 = vector.broadcast %229 : vector<8x1xf32> to vector<8x32xf32>
    %233 = arith.mulf %231, %232 : vector<8x32xf32>
    %234 = arith.addf %203, %233 : vector<8x32xf32>
    %c28_i32_67 = arith.constant 28 : i32
    %235 = vector.broadcast %c28_i32_67 : i32 to vector<1x32xi32>
    %236 = arith.cmpi sge, %16, %235 : vector<1x32xi32>
    %c32_i32 = arith.constant 32 : i32
    %237 = vector.broadcast %c32_i32 : i32 to vector<1x32xi32>
    %238 = arith.cmpi slt, %16, %237 : vector<1x32xi32>
    %239 = arith.andi %236, %238 : vector<1x32xi1>
    %cst_68 = arith.constant 0.000000e+00 : f32
    %240 = arith.truncf %cst_68 : f32 to bf16
    %241 = vector.shape_cast %239 : vector<1x32xi1> to vector<1x32xi1>
    %242 = vector.broadcast %241 : vector<1x32xi1> to vector<8x32xi1>
    %243 = vector.broadcast %240 : bf16 to vector<8x32xbf16>
    %244 = arith.select %242, %15, %243 : vector<8x32xi1>, vector<8x32xbf16>
    %cst_69 = arith.constant 0.000000e+00 : f32
    %245 = arith.truncf %cst_69 : f32 to bf16
    %246 = vector.shape_cast %239 : vector<1x32xi1> to vector<1x32xi1>
    %247 = vector.broadcast %246 : vector<1x32xi1> to vector<8x32xi1>
    %248 = vector.broadcast %245 : bf16 to vector<8x32xbf16>
    %249 = arith.select %247, %12, %248 : vector<8x32xi1>, vector<8x32xbf16>
    %cst_70 = arith.constant dense<0.000000e+00> : vector<8x8xf32>
    %250 = tpu.matmul %244, %10, %cst_70 {dimension_numbers = #tpu.dot_dimension_numbers<[1], [1], [0], [0], [0, 0, 1, 0], [], []>} : vector<8x32xbf16>, vector<8x32xbf16>, vector<8x8xf32> -> vector<8x8xf32>
    %251 = vector.broadcast %14 : vector<1x8xf32> to vector<8x8xf32>
    %252 = arith.addf %250, %251 : vector<8x8xf32>
    %cst_71 = arith.constant dense<0xFF800000> : vector<8xf32>
    %253 = vector.multi_reduction <maximumf>, %252, %cst_71 [1] : vector<8x8xf32> to vector<8xf32>
    %254 = vector.shape_cast %253 : vector<8xf32> to vector<8x1xf32>
    %255 = vector.broadcast %254 : vector<8x1xf32> to vector<8x8xf32>
    %256 = arith.subf %252, %255 : vector<8x8xf32>
    %257 = math.exp %256 : vector<8x8xf32>
    %cst_72 = arith.constant dense<0.000000e+00> : vector<8xf32>
    %258 = vector.multi_reduction <add>, %257, %cst_72 [1] : vector<8x8xf32> to vector<8xf32>
    %259 = vector.shape_cast %258 : vector<8xf32> to vector<8x1xf32>
    %260 = tpu.reciprocal %259 {approx = true} : vector<8x1xf32> -> vector<8x1xf32>
    %261 = arith.truncf %257 : vector<8x8xf32> to vector<8x8xbf16>
    %cst_73 = arith.constant dense<0.000000e+00> : vector<8x32xf32>
    %262 = tpu.matmul %261, %249, %cst_73 {dimension_numbers = #tpu.dot_dimension_numbers<[1], [0], [0], [1], [0, 0, 1, 1], [], []>} : vector<8x8xbf16>, vector<8x32xbf16>, vector<8x32xf32> -> vector<8x32xf32>
    %263 = vector.broadcast %260 : vector<8x1xf32> to vector<8x32xf32>
    %264 = arith.mulf %262, %263 : vector<8x32xf32>
    %265 = arith.addf %234, %264 : vector<8x32xf32>
    %266 = arith.truncf %265 : vector<8x32xf32> to vector<8x32xbf16>
    %c0_74 = arith.constant 0 : index
    %c0_75 = arith.constant 0 : index
    %267 = vector.load %arg7[%c0_74, %c0_75] : memref<32x32xbf16, #tpu.memory_space<vmem>>, vector<32x32xbf16>
    %cst_76 = arith.constant dense<0.000000e+00> : vector<8x32xf32>
    %268 = tpu.matmul %266, %267, %cst_76 {dimension_numbers = #tpu.dot_dimension_numbers<[1], [0], [0], [1], [0, 0, 1, 1], [], []>} : vector<8x32xbf16>, vector<32x32xbf16>, vector<8x32xf32> -> vector<8x32xf32>
    %c0_77 = arith.constant 0 : index
    %c0_78 = arith.constant 0 : index
    %269 = vector.load %arg8[%c0_77, %c0_78] : memref<1x32xf32, #tpu.memory_space<vmem>>, vector<1x32xf32>
    %270 = vector.broadcast %269 : vector<1x32xf32> to vector<8x32xf32>
    %271 = arith.addf %268, %270 : vector<8x32xf32>
    %272 = arith.extf %1 : vector<8x32xbf16> to vector<8x32xf32>
    %273 = arith.addf %271, %272 : vector<8x32xf32>
    %c0_79 = arith.constant 0 : index
    %c0_80 = arith.constant 0 : index
    %274 = vector.load %arg9[%c0_79, %c0_80] : memref<1x32xf32, #tpu.memory_space<vmem>>, vector<1x32xf32>
    %c0_81 = arith.constant 0 : index
    %c0_82 = arith.constant 0 : index
    %275 = vector.load %arg10[%c0_81, %c0_82] : memref<1x32xf32, #tpu.memory_space<vmem>>, vector<1x32xf32>
    %cst_83 = arith.constant dense<0.000000e+00> : vector<8xf32>
    %276 = vector.multi_reduction <add>, %273, %cst_83 [1] : vector<8x32xf32> to vector<8xf32>
    %277 = vector.shape_cast %276 : vector<8xf32> to vector<8x1xf32>
    %cst_84 = arith.constant 3.200000e+01 : f32
    %278 = vector.broadcast %cst_84 : f32 to vector<8x1xf32>
    %279 = arith.divf %277, %278 : vector<8x1xf32>
    %280 = vector.broadcast %279 : vector<8x1xf32> to vector<8x32xf32>
    %281 = arith.subf %273, %280 : vector<8x32xf32>
    %282 = arith.mulf %281, %281 : vector<8x32xf32>
    %cst_85 = arith.constant dense<0.000000e+00> : vector<8xf32>
    %283 = vector.multi_reduction <add>, %282, %cst_85 [1] : vector<8x32xf32> to vector<8xf32>
    %284 = vector.shape_cast %283 : vector<8xf32> to vector<8x1xf32>
    %cst_86 = arith.constant 3.200000e+01 : f32
    %285 = vector.broadcast %cst_86 : f32 to vector<8x1xf32>
    %286 = arith.divf %284, %285 : vector<8x1xf32>
    %287 = vector.broadcast %279 : vector<8x1xf32> to vector<8x32xf32>
    %288 = arith.subf %273, %287 : vector<8x32xf32>
    %cst_87 = arith.constant 9.99999974E-6 : f32
    %289 = vector.broadcast %cst_87 : f32 to vector<8x1xf32>
    %290 = arith.addf %286, %289 : vector<8x1xf32>
    %291 = math.rsqrt %290 : vector<8x1xf32>
    %292 = vector.broadcast %291 : vector<8x1xf32> to vector<8x32xf32>
    %293 = arith.mulf %288, %292 : vector<8x32xf32>
    %294 = vector.broadcast %274 : vector<1x32xf32> to vector<8x32xf32>
    %295 = arith.mulf %293, %294 : vector<8x32xf32>
    %296 = vector.broadcast %275 : vector<1x32xf32> to vector<8x32xf32>
    %297 = arith.addf %295, %296 : vector<8x32xf32>
    %298 = arith.truncf %297 : vector<8x32xf32> to vector<8x32xbf16>
    %c0_88 = arith.constant 0 : index
    %c0_89 = arith.constant 0 : index
    %c0_90 = arith.constant 0 : index
    %299 = vector.load %arg11[%c0_88, %c0_89, %c0_90] : memref<1x8x32xbf16, #tpu.memory_space<vmem>>, vector<1x8x32xbf16>
    %300 = vector.shape_cast %299 : vector<1x8x32xbf16> to vector<8x32xbf16>
    %301 = vector.shape_cast %298 : vector<8x32xbf16> to vector<1x8x32xbf16>
    tpu.vector_store %arg11[%c0_88, %c0_89, %c0_90], %301 {strides = array<i32>} : memref<1x8x32xbf16, #tpu.memory_space<vmem>>, vector<1x8x32xbf16>,
    return
  }
  func.func @transform_0(%arg0: i32) -> (i32, i32, i32) {
    %c0_i32 = arith.constant 0 : i32
    %c0_i32_0 = arith.constant 0 : i32
    %c0_i32_1 = arith.constant 0 : i32
    return %arg0, %c0_i32, %c0_i32_0 : i32, i32, i32
  }
  func.func @transform_1(%arg0: i32) -> (i32, i32) {
    %c0_i32 = arith.constant 0 : i32
    %c0_i32_0 = arith.constant 0 : i32
    %c0_i32_1 = arith.constant 0 : i32
    return %c0_i32, %c0_i32_0 : i32, i32
  }
  func.func @transform_2(%arg0: i32) -> (i32, i32) {
    %c0_i32 = arith.constant 0 : i32
    %c0_i32_0 = arith.constant 0 : i32
    %c0_i32_1 = arith.constant 0 : i32
    return %c0_i32, %c0_i32_0 : i32, i32
  }
  func.func @transform_3(%arg0: i32) -> (i32, i32, i32, i32) {
    %c0_i32 = arith.constant 0 : i32
    %c0_i32_0 = arith.constant 0 : i32
    %c0_i32_1 = arith.constant 0 : i32
    %c0_i32_2 = arith.constant 0 : i32
    return %c0_i32, %arg0, %c0_i32_0, %c0_i32_1 : i32, i32, i32, i32
  }
  func.func @transform_4(%arg0: i32) -> (i32, i32, i32, i32) {
    %c1_i32 = arith.constant 1 : i32
    %c0_i32 = arith.constant 0 : i32
    %c0_i32_0 = arith.constant 0 : i32
    %c0_i32_1 = arith.constant 0 : i32
    return %c1_i32, %arg0, %c0_i32, %c0_i32_0 : i32, i32, i32, i32
  }
  func.func @transform_5(%arg0: i32) -> (i32, i32, i32) {
    %c0_i32 = arith.constant 0 : i32
    %c0_i32_0 = arith.constant 0 : i32
    %c0_i32_1 = arith.constant 0 : i32
    return %arg0, %c0_i32, %c0_i32_0 : i32, i32, i32
  }
  func.func @transform_6(%arg0: i32) -> (i32, i32) {
    %c0_i32 = arith.constant 0 : i32
    %c0_i32_0 = arith.constant 0 : i32
    %c0_i32_1 = arith.constant 0 : i32
    return %c0_i32, %c0_i32_0 : i32, i32
  }
  func.func @transform_7(%arg0: i32) -> (i32, i32) {
    %c0_i32 = arith.constant 0 : i32
    %c0_i32_0 = arith.constant 0 : i32
    %c0_i32_1 = arith.constant 0 : i32
    return %c0_i32, %c0_i32_0 : i32, i32
  }
  func.func @transform_8(%arg0: i32) -> (i32, i32) {
    %c0_i32 = arith.constant 0 : i32
    %c0_i32_0 = arith.constant 0 : i32
    %c0_i32_1 = arith.constant 0 : i32
    return %c0_i32, %c0_i32_0 : i32, i32
  }
  func.func @transform_9(%arg0: i32) -> (i32, i32) {
    %c0_i32 = arith.constant 0 : i32
    %c0_i32_0 = arith.constant 0 : i32
    %c0_i32_1 = arith.constant 0 : i32
    return %c0_i32, %c0_i32_0 : i32, i32
  }
  func.func @transform_10(%arg0: i32) -> (i32, i32, i32) {
    %c0_i32 = arith.constant 0 : i32
    %c0_i32_0 = arith.constant 0 : i32
    %c0_i32_1 = arith.constant 0 : i32
    return %arg0, %c0_i32, %c0_i32_0 : i32, i32, i32
  }
}

</mosaic_0001>

<llo_original>
// kernel: model_forward.27
$region0: #{model_forward.27}
  #allocation0 [shape = 'u32[]', space=smem, size = 0x4, offset = 0x4, fixed_abs, tag = 'smem constant byte address 0x4 - core index']
  #allocation1 [shape = 'u32[144,128]{1,0:T(1,128)}', space=vmem, size = 0x12000, scoped, tag = 'internal scratch']
  %s0 = inlined_call_operand.vmem [shape: bf16[16,32], index: 0, kind: input, shape index: {}]
  %s1 = inlined_call_operand.vmem [shape: bf16[3,32,32], index: 1, kind: input, shape index: {}]
  %s2 = inlined_call_operand.vmem [shape: f32[3,1,32], index: 2, kind: input, shape index: {}]
  %s3 = inlined_call_operand.vmem [shape: bf16[3,16,32], index: 3, kind: output, shape index: {}]
  %s4 = sld [smem:[#allocation0]]
  $region82: #{model_forward.27} parent=0
    _
  %s6 = ssub.s32 1, %s4
  %s7 = scalar_select 0, %s6, %s4
  $region1: #{model_forward.27} parent=0
    #allocation2 [shape = 'u8[12288]{0}', space=vmem, size = 0x3000, scoped, tag = 'output window, operand 0']
    loop: start=0, step=1, limit=4
    $region2: #{model_forward.27} parent=1 // loop_pre_header
      _
    $region3: #{model_forward.27} parent=1 // loop_header
      %s9 = sphi 0, %s13
      %p10 = scmp.ge.s32.totalorder %s9, 4
      %s19 = sphi 0, %s21
      %s22 = sphi 0, %s19
      %s23 = sphi 0, %s22
      %s39 = sphi 0, %s23
      %s43 = sphi 0, %s43
      %s45 = sphi 0, %s43
      %s46 = sphi 0, %s45
      %s60 = sphi 0, %s46
      %s64 = sphi 0, %s64
      %s66 = sphi 0, %s64
      %s67 = sphi 0, %s66
      %s81 = sphi 0, %s67
      %s87 = sphi 0, %s89
      %s90 = sphi 0, %s87
      %s91 = sphi 0, %s90
      %s107 = sphi 0, %s91
    $region4: #{model_forward.27} parent=1 // loop_header_branch
      %12 = sbr.rel (%p10) target = $region8
    $region5: #{model_forward.27} parent=1 // loop_body
      %s14 = ssub.s32 %s9, 1
      %s15 = ssub.s32 %s9, 2
      %s16 = sadd.s32 %s9, 1
      %s17 = ssub.s32 %s9, %s16
      %p18 = scmp.eq.s32.totalorder %s17, 0
      %s20 = sadd.s32 %s19, 1
      %s21 = scalar_select %p18, %s19, %s20
      %p24 = pneg %p18
      %p25 = scmp.eq.s32.totalorder %s9, 1
      %p26 = por %p24, %p25
      %p27 = scmp.ne.s32.totalorder %s19, %s22
      %p28 = scmp.eq.s32.totalorder %s9, 0
      %p29 = por %p27, %p28
      %p30 = scmp.ne.s32.totalorder %s19, %s22
      %p31 = scmp.eq.s32.totalorder %s14, 1
      %p32 = por %p30, %p31
      %p33 = scmp.ne.s32.totalorder %s22, %s23
      %p34 = scmp.eq.s32.totalorder %s14, 0
      %p35 = por %p33, %p34
      %p36 = scmp.ne.s32.totalorder %s22, %s23
      %p37 = scmp.eq.s32.totalorder %s15, 1
      %p38 = por %p36, %p37
      %p40 = scmp.ne.s32.totalorder %s23, %s39
      %p41 = scmp.eq.s32.totalorder %s15, 0
      %p42 = por %p40, %p41
      %s44 = sadd.s32 %s43, 1
      %p47 = scmp.eq.s32.totalorder %s9, 1
      %p48 = scmp.ne.s32.totalorder %s43, %s45
      %p49 = scmp.eq.s32.totalorder %s9, 0
      %p50 = por %p48, %p49
      %p51 = scmp.ne.s32.totalorder %s43, %s45
      %p52 = scmp.eq.s32.totalorder %s14, 1
      %p53 = por %p51, %p52
      %p54 = scmp.ne.s32.totalorder %s45, %s46
      %p55 = scmp.eq.s32.totalorder %s14, 0
      %p56 = por %p54, %p55
      %p57 = scmp.ne.s32.totalorder %s45, %s46
      %p58 = scmp.eq.s32.totalorder %s15, 1
      %p59 = por %p57, %p58
      %p61 = scmp.ne.s32.totalorder %s46, %s60
      %p62 = scmp.eq.s32.totalorder %s15, 0
      %p63 = por %p61, %p62
      %s65 = sadd.s32 %s64, 1
      %p68 = scmp.eq.s32.totalorder %s9, 1
      %p69 = scmp.ne.s32.totalorder %s64, %s66
      %p70 = scmp.eq.s32.totalorder %s9, 0
      %p71 = por %p69, %p70
      %p72 = scmp.ne.s32.totalorder %s64, %s66
      %p73 = scmp.eq.s32.totalorder %s14, 1
      %p74 = por %p72, %p73
      %p75 = scmp.ne.s32.totalorder %s66, %s67
      %p76 = scmp.eq.s32.totalorder %s14, 0
      %p77 = por %p75, %p76
      %p78 = scmp.ne.s32.totalorder %s66, %s67
      %p79 = scmp.eq.s32.totalorder %s15, 1
      %p80 = por %p78, %p79
      %p82 = scmp.ne.s32.totalorder %s67, %s81
      %p83 = scmp.eq.s32.totalorder %s15, 0
      %p84 = por %p82, %p83
      %s85 = ssub.s32 %s9, %s16
      %p86 = scmp.eq.s32.totalorder %s85, 0
      %s88 = sadd.s32 %s87, 1
      %s89 = scalar_select %p86, %s87, %s88
      %p92 = pneg %p86
      %p93 = scmp.eq.s32.totalorder %s9, 1
      %p94 = por %p92, %p93
      %p95 = scmp.ne.s32.totalorder %s87, %s90
      %p96 = scmp.eq.s32.totalorder %s9, 0
      %p97 = por %p95, %p96
      %p98 = scmp.ne.s32.totalorder %s87, %s90
      %p99 = scmp.eq.s32.totalorder %s14, 1
      %p100 = por %p98, %p99
      %p101 = scmp.ne.s32.totalorder %s90, %s91
      %p102 = scmp.eq.s32.totalorder %s14, 0
      %p103 = por %p101, %p102
      %p104 = scmp.ne.s32.totalorder %s90, %s91
      %p105 = scmp.eq.s32.totalorder %s15, 1
      %p106 = por %p104, %p105
      %p108 = scmp.ne.s32.totalorder %s91, %s107
      %p109 = scmp.eq.s32.totalorder %s15, 0
      %p110 = por %p108, %p109
      %p111 = scmp.le.s32.totalorder 1, %s9
      %p112 = scmp.lt.s32.totalorder %s9, 3
      %p113 = pnand %p111, %p112
      %p114 = pneg %p113
      // Predicated region
      $region9: #{model_forward.27} parent=5 // pred_check
        _
      $region10: #{model_forward.27} parent=5 // pred_check_branch
        %116 = sbr.rel (%p113) target = $region12
      $region11: #{model_forward.27} parent=5 // pred_region
        %s117 = ssub.s32 %s9, 1
        // Predicated region
        $region13: #{model_forward.27} parent=11 // pred_check
          %p118 = pneg %p56
        $region14: #{model_forward.27} parent=11 // pred_check_branch
          %120 = sbr.rel (%p118) target = $region16
        $region15: #{model_forward.27} parent=11 // pred_region
          _
        $region16: #{model_forward.27} parent=11 // pred_fallthru
          _
        // Predicated region
        $region17: #{model_forward.27} parent=11 // pred_check
          %p121 = pneg %p77
        $region18: #{model_forward.27} parent=11 // pred_check_branch
          %123 = sbr.rel (%p121) target = $region20
        $region19: #{model_forward.27} parent=11 // pred_region
          _
        $region20: #{model_forward.27} parent=11 // pred_fallthru
          _
      $region12: #{model_forward.27} parent=5 // pred_fallthru
        _
      %p124 = scmp.lt.s32.totalorder %s9, 2
      // Predicated region
      $region21: #{model_forward.27} parent=5 // pred_check
        %p125 = pneg %p124
      $region22: #{model_forward.27} parent=5 // pred_check_branch
        %127 = sbr.rel (%p125) target = $region24
      $region23: #{model_forward.27} parent=5 // pred_region
        // Predicated region
        $region25: #{model_forward.27} parent=23 // pred_check
          %p128 = pneg %p29
        $region26: #{model_forward.27} parent=23 // pred_check_branch
          %130 = sbr.rel (%p128) target = $region28
        $region27: #{model_forward.27} parent=23 // pred_region
          %p131 = scmp.lt.s32.totalorder %s9, 1
          %s132 = scalar_select %p131, %s9, 1
          %s133 = smul.addr %s132, 4
          %s134 = scalar_lea.vmem %s0, %s133
        $region28: #{model_forward.27} parent=23 // pred_fallthru
          _
      $region24: #{model_forward.27} parent=5 // pred_fallthru
        _
      %p135 = scmp.le.s32.totalorder 1, %s9
      %p136 = scmp.lt.s32.totalorder %s9, 3
      %p137 = pnand %p135, %p136
      %p138 = pneg %p137
      // Predicated region
      $region29: #{model_forward.27} parent=5 // pred_check
        _
      $region30: #{model_forward.27} parent=5 // pred_check_branch
        %140 = sbr.rel (%p137) target = $region32
      $region31: #{model_forward.27} parent=5 // pred_region
        %s141 = ssub.s32 %s9, 1
        %p142 = scmp.lt.s32.totalorder %s14, 1
        %s143 = scalar_select %p142, %s14, 1
        %s144 = smul.addr %s143, 4
        %s145 = scalar_lea.vmem %s0, %s144
        %p146 = pneg %p35
        %p147 = pneg %p32
        %p148 = pneg %p56
        %p149 = pneg %p53
        %p150 = pneg %p77
        %p151 = pneg %p74
        %p152 = pneg %p103
        %p153 = pneg %p100
        %s154 = sand.u32 %s90, 1
        %s155 = sand.u32 %s90, 1
        %s156 = smul.addr %s155, 12
        %s157 = scalar_lea.vmem [#allocation2], %s156
        %p158 = scmp.lt.s32.totalorder %s14, 1
        %s159 = scalar_select %p158, %s14, 1
        %s160 = smul.addr %s159, 4
        %s161 = scalar_lea.vmem %s0, %s160
        %v163 = vld [vmem:[%s161] sm:$0xf]
        %v164 = vld [vmem:[%s1] sm:$0xf]
        %v165 = vld [vmem:[%s1 + $0x4] sm:$0xf]
        %v166 = vld [vmem:[%s1 + $0x8] sm:$0xf]
        %v167 = vld [vmem:[%s1 + $0xc] sm:$0xf]
        %v168 = vld [vmem:[%s2] sm:$0x1]
        %v170 = vlaneseq
        %v171 = vshrl.u32 %v170, 7
        %v172 = vsub.s32 0, %v171
        %v173 = vrot.slane %v168, %v172
        %v179 = vunpack.c.l.b16 %v164
        %v180 = vunpack.c.l.b16 %v165
        %v181 = vunpack.c.l.b16 %v166
        %v182 = vunpack.c.l.b16 %v167
        %v183 = vpack.c.b16 %v180, %v179
        %v184 = vpack.c.b16 %v182, %v181
        %vm187 = vcmask 261120
        %v189 = vsel %vm187, %v163, 0
        %191 = vmatprep.subr.bf16.mxu0 0
        %192 = vmatpush1.bf16.msra.mxu0 %v183
        %193 = vmatprep.subr.bf16.mxu0 0
        %194 = vmatpush1.bf16.msra.mxu0 %v184
        %195 = vmatprep.subr.bf16.mxu0 0
        %196 = vmatpush1.bf16.msra.mxu0 0
        %197 = vmatprep.subr.bf16.mxu0 0
        %198 = vmatpush1.bf16.msra.mxu0 0
        %199 = vmatprep.subr.bf16.mxu0 0
        %200 = vmatpush1.bf16.msra.mxu0 0
        %201 = vmatprep.subr.bf16.mxu0 0
        %202 = vmatpush1.bf16.msra.mxu0 0
        %203 = vmatprep.subr.bf16.mxu0 0
        %204 = vmatpush1.bf16.msra.mxu0 0
        %205 = vmatprep.subr.bf16.mxu0 0
        %206 = vmatpush1.bf16.msra.mxu0 0
        %207 = vmatprep.subr.bf16.mxu0 0
        %208 = vmatpush1.bf16.msra.mxu0 0
        %209 = vmatprep.subr.bf16.mxu0 0
        %210 = vmatpush1.bf16.msra.mxu0 0
        %211 = vmatprep.subr.bf16.mxu0 0
        %212 = vmatpush1.bf16.msra.mxu0 0
        %213 = vmatprep.subr.bf16.mxu0 0
        %214 = vmatpush1.bf16.msra.mxu0 0
        %215 = vmatprep.subr.bf16.mxu0 0
        %216 = vmatpush1.bf16.msra.mxu0 0
        %217 = vmatprep.subr.bf16.mxu0 0
        %218 = vmatpush1.bf16.msra.mxu0 0
        %219 = vmatprep.subr.bf16.mxu0 0
        %220 = vmatpush1.bf16.msra.mxu0 0
        %221 = vmatprep.subr.bf16.mxu0 0
        %222 = vmatpush1.bf16.msra.mxu0 0
        %223 = vmatprep.mubr.bf16.mxu0 0
        %224 = vmatmul.mubr.bf16.gmra.mrb[0].mxu0 %v189
        %v225 = vpop.f32.mrb[0].mxu0
        %v226 = vadd.f32 %v173, %v225
        %v227 = vpop.f32.mrb[0].mxu0
        %v228 = vpop.f32.mrb[0].mxu0
        %v229 = vpop.f32.mrb[0].mxu0
        %230 = vdwg.mxu0
        %v231 = vpack.c.bf16 %v226, %v226
        %vm232 = vcmask 257024
        %233 = vst.msk [vmem:[%s157] sm:$0xf] %vm232, %v231
        %s234 = scalar_lea.vmem %s1, 16
        %v235 = vld [vmem:[%s234] sm:$0xf]
        %v236 = vld [vmem:[%s234 + $0x4] sm:$0xf]
        %v237 = vld [vmem:[%s234 + $0x8] sm:$0xf]
        %v238 = vld [vmem:[%s234 + $0xc] sm:$0xf]
        %s239 = scalar_lea.vmem %s2, 1
        %v240 = vld [vmem:[%s239] sm:$0x1]
        %v242 = vlaneseq
        %v243 = vshrl.u32 %v242, 7
        %v244 = vsub.s32 0, %v243
        %v245 = vrot.slane %v240, %v244
        %v251 = vunpack.c.l.b16 %v235
        %v252 = vunpack.c.l.b16 %v236
        %v253 = vunpack.c.l.b16 %v237
        %v254 = vunpack.c.l.b16 %v238
        %v255 = vpack.c.b16 %v252, %v251
        %v256 = vpack.c.b16 %v254, %v253
        %259 = vmatprep.subr.bf16.mxu0 0
        %260 = vmatpush1.bf16.msra.mxu0 %v255
        %261 = vmatprep.subr.bf16.mxu0 0
        %262 = vmatpush1.bf16.msra.mxu0 %v256
        %263 = vmatprep.subr.bf16.mxu0 0
        %264 = vmatpush1.bf16.msra.mxu0 0
        %265 = vmatprep.subr.bf16.mxu0 0
        %266 = vmatpush1.bf16.msra.mxu0 0
        %267 = vmatprep.subr.bf16.mxu0 0
        %268 = vmatpush1.bf16.msra.mxu0 0
        %269 = vmatprep.subr.bf16.mxu0 0
        %270 = vmatpush1.bf16.msra.mxu0 0
        %271 = vmatprep.subr.bf16.mxu0 0
        %272 = vmatpush1.bf16.msra.mxu0 0
        %273 = vmatprep.subr.bf16.mxu0 0
        %274 = vmatpush1.bf16.msra.mxu0 0
        %275 = vmatprep.subr.bf16.mxu0 0
        %276 = vmatpush1.bf16.msra.mxu0 0
        %277 = vmatprep.subr.bf16.mxu0 0
        %278 = vmatpush1.bf16.msra.mxu0 0
        %279 = vmatprep.subr.bf16.mxu0 0
        %280 = vmatpush1.bf16.msra.mxu0 0
        %281 = vmatprep.subr.bf16.mxu0 0
        %282 = vmatpush1.bf16.msra.mxu0 0
        %283 = vmatprep.subr.bf16.mxu0 0
        %284 = vmatpush1.bf16.msra.mxu0 0
        %285 = vmatprep.subr.bf16.mxu0 0
        %286 = vmatpush1.bf16.msra.mxu0 0
        %287 = vmatprep.subr.bf16.mxu0 0
        %288 = vmatpush1.bf16.msra.mxu0 0
        %289 = vmatprep.subr.bf16.mxu0 0
        %290 = vmatpush1.bf16.msra.mxu0 0
        %291 = vmatprep.mubr.bf16.mxu0 0
        %292 = vmatmul.mubr.bf16.gmra.mrb[0].mxu0 %v189
        %v293 = vpop.f32.mrb[0].mxu0
        %v294 = vadd.f32 %v245, %v293
        %v295 = vpop.f32.mrb[0].mxu0
        %v296 = vpop.f32.mrb[0].mxu0
        %v297 = vpop.f32.mrb[0].mxu0
        %298 = vdwg.mxu0
        %v299 = vpack.c.bf16 %v294, %v294
        %s300 = scalar_lea.vmem %s157, 4 [#allocation2]
        %301 = vst.msk [vmem:[%s300] sm:$0xf] %vm232, %v299
        %s302 = scalar_lea.vmem %s1, 32
        %v303 = vld [vmem:[%s302] sm:$0xf]
        %v304 = vld [vmem:[%s302 + $0x4] sm:$0xf]
        %v305 = vld [vmem:[%s302 + $0x8] sm:$0xf]
        %v306 = vld [vmem:[%s302 + $0xc] sm:$0xf]
        %s307 = scalar_lea.vmem %s2, 2
        %v308 = vld [vmem:[%s307] sm:$0x1]
        %v310 = vlaneseq
        %v311 = vshrl.u32 %v310, 7
        %v312 = vsub.s32 0, %v311
        %v313 = vrot.slane %v308, %v312
        %v319 = vunpack.c.l.b16 %v303
        %v320 = vunpack.c.l.b16 %v304
        %v321 = vunpack.c.l.b16 %v305
        %v322 = vunpack.c.l.b16 %v306
        %v323 = vpack.c.b16 %v320, %v319
        %v324 = vpack.c.b16 %v322, %v321
        %327 = vmatprep.subr.bf16.mxu0 0
        %328 = vmatpush1.bf16.msra.mxu0 %v323
        %329 = vmatprep.subr.bf16.mxu0 0
        %330 = vmatpush1.bf16.msra.mxu0 %v324
        %331 = vmatprep.subr.bf16.mxu0 0
        %332 = vmatpush1.bf16.msra.mxu0 0
        %333 = vmatprep.subr.bf16.mxu0 0
        %334 = vmatpush1.bf16.msra.mxu0 0
        %335 = vmatprep.subr.bf16.mxu0 0
        %336 = vmatpush1.bf16.msra.mxu0 0
        %337 = vmatprep.subr.bf16.mxu0 0
        %338 = vmatpush1.bf16.msra.mxu0 0
        %339 = vmatprep.subr.bf16.mxu0 0
        %340 = vmatpush1.bf16.msra.mxu0 0
        %341 = vmatprep.subr.bf16.mxu0 0
        %342 = vmatpush1.bf16.msra.mxu0 0
        %343 = vmatprep.subr.bf16.mxu0 0
        %344 = vmatpush1.bf16.msra.mxu0 0
        %345 = vmatprep.subr.bf16.mxu0 0
        %346 = vmatpush1.bf16.msra.mxu0 0
        %347 = vmatprep.subr.bf16.mxu0 0
        %348 = vmatpush1.bf16.msra.mxu0 0
        %349 = vmatprep.subr.bf16.mxu0 0
        %350 = vmatpush1.bf16.msra.mxu0 0
        %351 = vmatprep.subr.bf16.mxu0 0
        %352 = vmatpush1.bf16.msra.mxu0 0
        %353 = vmatprep.subr.bf16.mxu0 0
        %354 = vmatpush1.bf16.msra.mxu0 0
        %355 = vmatprep.subr.bf16.mxu0 0
        %356 = vmatpush1.bf16.msra.mxu0 0
        %357 = vmatprep.subr.bf16.mxu0 0
        %358 = vmatpush1.bf16.msra.mxu0 0
        %359 = vmatprep.mubr.bf16.mxu0 0
        %360 = vmatmul.mubr.bf16.gmra.mrb[0].mxu0 %v189
        %v361 = vpop.f32.mrb[0].mxu0
        %v362 = vadd.f32 %v313, %v361
        %v363 = vpop.f32.mrb[0].mxu0
        %v364 = vpop.f32.mrb[0].mxu0
        %v365 = vpop.f32.mrb[0].mxu0
        %366 = vdwg.mxu0
        %v367 = vpack.c.bf16 %v362, %v362
        %s368 = scalar_lea.vmem %s157, 8 [#allocation2]
        %369 = vst.msk [vmem:[%s368] sm:$0xf] %vm232, %v367
        %s370 = sand.u32 %s90, 1
        %s371 = sand.u32 %s90, 1
        %s372 = smul.addr %s371, 12
        %s373 = scalar_lea.vmem [#allocation2], %s372
        // Predicated region
        $region33: #{model_forward.27} parent=31 // pred_check
          %p374 = pneg %p100
        $region34: #{model_forward.27} parent=31 // pred_check_branch
          %376 = sbr.rel (%p374) target = $region36
        $region35: #{model_forward.27} parent=31 // pred_region
          %s377 = smul.addr %s14, 4
          %s378 = scalar_lea.vmem %s3, %s377
          // Predicated region
          $region37: #{model_forward.27} parent=35 // pred_check
            _
          $region38: #{model_forward.27} parent=35 // pred_check_branch
            %380 = sbr.rel (0) target = $region40
          $region39: #{model_forward.27} parent=35 // pred_region
            // Predicated region
            $region41: #{model_forward.27} parent=39 // pred_check
              _
            $region42: #{model_forward.27} parent=39 // pred_check_branch
              %382 = sbr.rel target = $region44
            $region43: #{model_forward.27} parent=39 // pred_region
              // Predicated region
              $region56: #{model_forward.27} parent=43 // pred_check
                _
              $region57: #{model_forward.27} parent=43 // pred_check_branch
                %401 = sbr.rel (0) target = $region59
              $region58: #{model_forward.27} parent=43 // pred_region
                loop: start=0, step=1, limit=1
                $region60: #{model_forward.27} parent=58 // loop_pre_header
                  _
                $region61: #{model_forward.27} parent=58 // loop_header
                  %s403 = sphi 0, %s407
                  %p404 = scmp.ge.s32.totalorder %s403, 1
                  %s408 = sphi %s373, %s373
                  %s409 = sphi %s378, %s378
                $region62: #{model_forward.27} parent=58 // loop_header_branch
                  %406 = sbr.rel (%p404) target = $region66
                $region63: #{model_forward.27} parent=58 // loop_body
                  _
                $region64: #{model_forward.27} parent=58 // loop_footer
                  %s407 = sadd.s32 1, %s403
                $region65: #{model_forward.27} parent=58 // loop_footer_branch
                  %402 = sbr.rel target = $region61
                $region66: #{model_forward.27} parent=58 // loop_exit
                  _
                loop: start=0, step=1, limit=1
                $region67: #{model_forward.27} parent=58 // loop_pre_header
                  _
                $region68: #{model_forward.27} parent=58 // loop_header
                  %s412 = sphi 0, %s416
                  %p413 = scmp.ge.s32.totalorder %s412, 1
                  %s417 = sphi %s373, %s373
                  %s418 = sphi %s378, %s378
                $region69: #{model_forward.27} parent=58 // loop_header_branch
                  %415 = sbr.rel (%p413) target = $region73
                $region70: #{model_forward.27} parent=58 // loop_body
                  %v419 = vld [vmem:[%s417] sm:$0xf]
                  %420 = vst [vmem:[%s418] sm:$0xf] %v419
                  %v421 = vld [vmem:[%s417 + $0x4] sm:$0xf]
                  %422 = vst [vmem:[%s418 + $0x8] sm:$0xf] %v421
                  %v423 = vld [vmem:[%s417 + $0x8] sm:$0xf]
                  %424 = vst [vmem:[%s418 + $0x10] sm:$0xf] %v423
                $region71: #{model_forward.27} parent=58 // loop_footer
                  %s416 = sadd.s32 1, %s412
                $region72: #{model_forward.27} parent=58 // loop_footer_branch
                  %411 = sbr.rel target = $region68
                $region73: #{model_forward.27} parent=58 // loop_exit
                  _
              $region59: #{model_forward.27} parent=43 // pred_fallthru
                _
            $region44: #{model_forward.27} parent=39 // pred_fallthru
              _
            // Predicated region
            $region45: #{model_forward.27} parent=39 // pred_check
              _
            $region46: #{model_forward.27} parent=39 // pred_check_branch
              %384 = sbr.rel (0) target = $region48
            $region47: #{model_forward.27} parent=39 // pred_region
              loop: start=0, step=1, limit=1
              $region49: #{model_forward.27} parent=47 // loop_pre_header
                _
              $region50: #{model_forward.27} parent=47 // loop_header
                %s387 = sphi 0, %s391
                %p388 = scmp.ge.s32.totalorder %s387, 1
                %s392 = sphi %s373, %s373
                %s393 = sphi %s378, %s378
              $region51: #{model_forward.27} parent=47 // loop_header_branch
                %390 = sbr.rel (%p388) target = $region55
              $region52: #{model_forward.27} parent=47 // loop_body
                %v394 = vld [vmem:[%s392] sm:$0xf]
                %395 = vst [vmem:[%s393] sm:$0xf] %v394
                %v396 = vld [vmem:[%s392 + $0x4] sm:$0xf]
                %397 = vst [vmem:[%s393 + $0x8] sm:$0xf] %v396
                %v398 = vld [vmem:[%s392 + $0x8] sm:$0xf]
                %399 = vst [vmem:[%s393 + $0x10] sm:$0xf] %v398
              $region53: #{model_forward.27} parent=47 // loop_footer
                %s391 = sadd.s32 1, %s387
              $region54: #{model_forward.27} parent=47 // loop_footer_branch
                %386 = sbr.rel target = $region50
              $region55: #{model_forward.27} parent=47 // loop_exit
                _
            $region48: #{model_forward.27} parent=39 // pred_fallthru
              _
          $region40: #{model_forward.27} parent=35 // pred_fallthru
            _
          %425 = vnop
        $region36: #{model_forward.27} parent=31 // pred_fallthru
          _
      $region32: #{model_forward.27} parent=5 // pred_fallthru
        _
      %p426 = scmp.le.s32.totalorder 2, %s9
      // Predicated region
      $region74: #{model_forward.27} parent=5 // pred_check
        %p427 = pneg %p426
      $region75: #{model_forward.27} parent=5 // pred_check_branch
        %429 = sbr.rel (%p427) target = $region77
      $region76: #{model_forward.27} parent=5 // pred_region
        %s430 = ssub.s32 %s9, 2
        // Predicated region
        $region78: #{model_forward.27} parent=76 // pred_check
          %p431 = pneg %p106
        $region79: #{model_forward.27} parent=76 // pred_check_branch
          %433 = sbr.rel (%p431) target = $region81
        $region80: #{model_forward.27} parent=76 // pred_region
          %s434 = sand.u32 %s91, 1
          %s435 = sand.u32 %s91, 1
          %s436 = smul.addr %s435, 12
          %s437 = scalar_lea.vmem [#allocation2], %s436
        $region81: #{model_forward.27} parent=76 // pred_fallthru
          _
      $region77: #{model_forward.27} parent=5 // pred_fallthru
        _
    $region6: #{model_forward.27} parent=1 // loop_footer
      %s13 = sadd.s32 1, %s9
    $region7: #{model_forward.27} parent=1 // loop_footer_branch
      %8 = sbr.rel target = $region3
    $region8: #{model_forward.27} parent=1 // loop_exit
      _

// kernel: model_forward.26
$region0: #{model_forward.26}
  #allocation0 [shape = 'u32[]', space=smem, size = 0x4, offset = 0x4, fixed_abs, tag = 'smem constant byte address 0x4 - core index']
  #allocation1 [shape = 'u32[144,128]{1,0:T(1,128)}', space=vmem, size = 0x12000, scoped, tag = 'internal scratch']
  %s0 = inlined_call_operand.vmem [shape: bf16[16,16], index: 0, kind: input, shape index: {}]
  %s1 = inlined_call_operand.vmem [shape: f32[16,4], index: 1, kind: input, shape index: {}]
  %s2 = inlined_call_operand.vmem [shape: bf16[4,16], index: 2, kind: input, shape index: {}]
  %s3 = inlined_call_operand.vmem [shape: f32[1,16], index: 3, kind: input, shape index: {}]
  %s4 = inlined_call_operand.vmem [shape: bf16[16,32], index: 4, kind: input, shape index: {}]
  %s5 = inlined_call_operand.vmem [shape: f32[1,32], index: 5, kind: input, shape index: {}]
  %s6 = inlined_call_operand.vmem [shape: bf16[16,32], index: 6, kind: input, shape index: {}]
  %s7 = inlined_call_operand.vmem [shape: f32[1,32], index: 7, kind: input, shape index: {}]
  %s8 = inlined_call_operand.vmem [shape: bf16[16,32], index: 8, kind: output, shape index: {}]
  %s9 = sld [smem:[#allocation0]]
  $region65: #{model_forward.26} parent=0
    _
  %s11 = ssub.s32 1, %s9
  %s12 = scalar_select 0, %s11, %s9
  loop: start=0, step=1, limit=4
  $region2: #{model_forward.26} parent=0 // loop_pre_header
    _
  $region3: #{model_forward.26} parent=0 // loop_header
    %s14 = sphi 0, %s18
    %p15 = scmp.ge.s32.totalorder %s14, 4
    %s24 = sphi 0, %s26
    %s27 = sphi 0, %s24
    %s28 = sphi 0, %s27
    %s44 = sphi 0, %s28
    %s50 = sphi 0, %s52
    %s53 = sphi 0, %s50
    %s54 = sphi 0, %s53
    %s70 = sphi 0, %s54
    %s74 = sphi 0, %s74
    %s76 = sphi 0, %s74
    %s77 = sphi 0, %s76
    %s91 = sphi 0, %s77
    %s95 = sphi 0, %s95
    %s97 = sphi 0, %s95
    %s98 = sphi 0, %s97
    %s112 = sphi 0, %s98
    %s116 = sphi 0, %s116
    %s118 = sphi 0, %s116
    %s119 = sphi 0, %s118
    %s133 = sphi 0, %s119
    %s137 = sphi 0, %s137
    %s139 = sphi 0, %s137
    %s140 = sphi 0, %s139
    %s154 = sphi 0, %s140
    %s158 = sphi 0, %s158
    %s160 = sphi 0, %s158
    %s161 = sphi 0, %s160
    %s175 = sphi 0, %s161
    %s179 = sphi 0, %s179
    %s181 = sphi 0, %s179
    %s182 = sphi 0, %s181
    %s196 = sphi 0, %s182
    %s202 = sphi 0, %s204
    %s205 = sphi 0, %s202
    %s206 = sphi 0, %s205
    %s222 = sphi 0, %s206
  $region4: #{model_forward.26} parent=0 // loop_header_branch
    %17 = sbr.rel (%p15) target = $region8
  $region5: #{model_forward.26} parent=0 // loop_body
    %s19 = ssub.s32 %s14, 1
    %s20 = ssub.s32 %s14, 2
    %s21 = sadd.s32 %s14, 1
    %s22 = ssub.s32 %s14, %s21
    %p23 = scmp.eq.s32.totalorder %s22, 0
    %s25 = sadd.s32 %s24, 1
    %s26 = scalar_select %p23, %s24, %s25
    %p29 = pneg %p23
    %p30 = scmp.eq.s32.totalorder %s14, 1
    %p31 = por %p29, %p30
    %p32 = scmp.ne.s32.totalorder %s24, %s27
    %p33 = scmp.eq.s32.totalorder %s14, 0
    %p34 = por %p32, %p33
    %p35 = scmp.ne.s32.totalorder %s24, %s27
    %p36 = scmp.eq.s32.totalorder %s19, 1
    %p37 = por %p35, %p36
    %p38 = scmp.ne.s32.totalorder %s27, %s28
    %p39 = scmp.eq.s32.totalorder %s19, 0
    %p40 = por %p38, %p39
    %p41 = scmp.ne.s32.totalorder %s27, %s28
    %p42 = scmp.eq.s32.totalorder %s20, 1
    %p43 = por %p41, %p42
    %p45 = scmp.ne.s32.totalorder %s28, %s44
    %p46 = scmp.eq.s32.totalorder %s20, 0
    %p47 = por %p45, %p46
    %s48 = ssub.s32 %s14, %s21
    %p49 = scmp.eq.s32.totalorder %s48, 0
    %s51 = sadd.s32 %s50, 1
    %s52 = scalar_select %p49, %s50, %s51
    %p55 = pneg %p49
    %p56 = scmp.eq.s32.totalorder %s14, 1
    %p57 = por %p55, %p56
    %p58 = scmp.ne.s32.totalorder %s50, %s53
    %p59 = scmp.eq.s32.totalorder %s14, 0
    %p60 = por %p58, %p59
    %p61 = scmp.ne.s32.totalorder %s50, %s53
    %p62 = scmp.eq.s32.totalorder %s19, 1
    %p63 = por %p61, %p62
    %p64 = scmp.ne.s32.totalorder %s53, %s54
    %p65 = scmp.eq.s32.totalorder %s19, 0
    %p66 = por %p64, %p65
    %p67 = scmp.ne.s32.totalorder %s53, %s54
    %p68 = scmp.eq.s32.totalorder %s20, 1
    %p69 = por %p67, %p68
    %p71 = scmp.ne.s32.totalorder %s54, %s70
    %p72 = scmp.eq.s32.totalorder %s20, 0
    %p73 = por %p71, %p72
    %s75 = sadd.s32 %s74, 1
    %p78 = scmp.eq.s32.totalorder %s14, 1
    %p79 = scmp.ne.s32.totalorder %s74, %s76
    %p80 = scmp.eq.s32.totalorder %s14, 0
    %p81 = por %p79, %p80
    %p82 = scmp.ne.s32.totalorder %s74, %s76
    %p83 = scmp.eq.s32.totalorder %s19, 1
    %p84 = por %p82, %p83
    %p85 = scmp.ne.s32.totalorder %s76, %s77
    %p86 = scmp.eq.s32.totalorder %s19, 0
    %p87 = por %p85, %p86
    %p88 = scmp.ne.s32.totalorder %s76, %s77
    %p89 = scmp.eq.s32.totalorder %s20, 1
    %p90 = por %p88, %p89
    %p92 = scmp.ne.s32.totalorder %s77, %s91
    %p93 = scmp.eq.s32.totalorder %s20, 0
    %p94 = por %p92, %p93
    %s96 = sadd.s32 %s95, 1
    %p99 = scmp.eq.s32.totalorder %s14, 1
    %p100 = scmp.ne.s32.totalorder %s95, %s97
    %p101 = scmp.eq.s32.totalorder %s14, 0
    %p102 = por %p100, %p101
    %p103 = scmp.ne.s32.totalorder %s95, %s97
    %p104 = scmp.eq.s32.totalorder %s19, 1
    %p105 = por %p103, %p104
    %p106 = scmp.ne.s32.totalorder %s97, %s98
    %p107 = scmp.eq.s32.totalorder %s19, 0
    %p108 = por %p106, %p107
    %p109 = scmp.ne.s32.totalorder %s97, %s98
    %p110 = scmp.eq.s32.totalorder %s20, 1
    %p111 = por %p109, %p110
    %p113 = scmp.ne.s32.totalorder %s98, %s112
    %p114 = scmp.eq.s32.totalorder %s20, 0
    %p115 = por %p113, %p114
    %s117 = sadd.s32 %s116, 1
    %p120 = scmp.eq.s32.totalorder %s14, 1
    %p121 = scmp.ne.s32.totalorder %s116, %s118
    %p122 = scmp.eq.s32.totalorder %s14, 0
    %p123 = por %p121, %p122
    %p124 = scmp.ne.s32.totalorder %s116, %s118
    %p125 = scmp.eq.s32.totalorder %s19, 1
    %p126 = por %p124, %p125
    %p127 = scmp.ne.s32.totalorder %s118, %s119
    %p128 = scmp.eq.s32.totalorder %s19, 0
    %p129 = por %p127, %p128
    %p130 = scmp.ne.s32.totalorder %s118, %s119
    %p131 = scmp.eq.s32.totalorder %s20, 1
    %p132 = por %p130, %p131
    %p134 = scmp.ne.s32.totalorder %s119, %s133
    %p135 = scmp.eq.s32.totalorder %s20, 0
    %p136 = por %p134, %p135
    %s138 = sadd.s32 %s137, 1
    %p141 = scmp.eq.s32.totalorder %s14, 1
    %p142 = scmp.ne.s32.totalorder %s137, %s139
    %p143 = scmp.eq.s32.totalorder %s14, 0
    %p144 = por %p142, %p143
    %p145 = scmp.ne.s32.totalorder %s137, %s139
    %p146 = scmp.eq.s32.totalorder %s19, 1
    %p147 = por %p145, %p146
    %p148 = scmp.ne.s32.totalorder %s139, %s140
    %p149 = scmp.eq.s32.totalorder %s19, 0
    %p150 = por %p148, %p149
    %p151 = scmp.ne.s32.totalorder %s139, %s140
    %p152 = scmp.eq.s32.totalorder %s20, 1
    %p153 = por %p151, %p152
    %p155 = scmp.ne.s32.totalorder %s140, %s154
    %p156 = scmp.eq.s32.totalorder %s20, 0
    %p157 = por %p155, %p156
    %s159 = sadd.s32 %s158, 1
    %p162 = scmp.eq.s32.totalorder %s14, 1
    %p163 = scmp.ne.s32.totalorder %s158, %s160
    %p164 = scmp.eq.s32.totalorder %s14, 0
    %p165 = por %p163, %p164
    %p166 = scmp.ne.s32.totalorder %s158, %s160
    %p167 = scmp.eq.s32.totalorder %s19, 1
    %p168 = por %p166, %p167
    %p169 = scmp.ne.s32.totalorder %s160, %s161
    %p170 = scmp.eq.s32.totalorder %s19, 0
    %p171 = por %p169, %p170
    %p172 = scmp.ne.s32.totalorder %s160, %s161
    %p173 = scmp.eq.s32.totalorder %s20, 1
    %p174 = por %p172, %p173
    %p176 = scmp.ne.s32.totalorder %s161, %s175
    %p177 = scmp.eq.s32.totalorder %s20, 0
    %p178 = por %p176, %p177
    %s180 = sadd.s32 %s179, 1
    %p183 = scmp.eq.s32.totalorder %s14, 1
    %p184 = scmp.ne.s32.totalorder %s179, %s181
    %p185 = scmp.eq.s32.totalorder %s14, 0
    %p186 = por %p184, %p185
    %p187 = scmp.ne.s32.totalorder %s179, %s181
    %p188 = scmp.eq.s32.totalorder %s19, 1
    %p189 = por %p187, %p188
    %p190 = scmp.ne.s32.totalorder %s181, %s182
    %p191 = scmp.eq.s32.totalorder %s19, 0
    %p192 = por %p190, %p191
    %p193 = scmp.ne.s32.totalorder %s181, %s182
    %p194 = scmp.eq.s32.totalorder %s20, 1
    %p195 = por %p193, %p194
    %p197 = scmp.ne.s32.totalorder %s182, %s196
    %p198 = scmp.eq.s32.totalorder %s20, 0
    %p199 = por %p197, %p198
    %s200 = ssub.s32 %s14, %s21
    %p201 = scmp.eq.s32.totalorder %s200, 0
    %s203 = sadd.s32 %s202, 1
    %s204 = scalar_select %p201, %s202, %s203
    %p207 = pneg %p201
    %p208 = scmp.eq.s32.totalorder %s14, 1
    %p209 = por %p207, %p208
    %p210 = scmp.ne.s32.totalorder %s202, %s205
    %p211 = scmp.eq.s32.totalorder %s14, 0
    %p212 = por %p210, %p211
    %p213 = scmp.ne.s32.totalorder %s202, %s205
    %p214 = scmp.eq.s32.totalorder %s19, 1
    %p215 = por %p213, %p214
    %p216 = scmp.ne.s32.totalorder %s205, %s206
    %p217 = scmp.eq.s32.totalorder %s19, 0
    %p218 = por %p216, %p217
    %p219 = scmp.ne.s32.totalorder %s205, %s206
    %p220 = scmp.eq.s32.totalorder %s20, 1
    %p221 = por %p219, %p220
    %p223 = scmp.ne.s32.totalorder %s206, %s222
    %p224 = scmp.eq.s32.totalorder %s20, 0
    %p225 = por %p223, %p224
    %p226 = scmp.le.s32.totalorder 1, %s14
    %p227 = scmp.lt.s32.totalorder %s14, 3
    %p228 = pnand %p226, %p227
    %p229 = pneg %p228
    // Predicated region
    $region9: #{model_forward.26} parent=5 // pred_check
      _
    $region10: #{model_forward.26} parent=5 // pred_check_branch
      %231 = sbr.rel (%p228) target = $region12
    $region11: #{model_forward.26} parent=5 // pred_region
      %s232 = ssub.s32 %s14, 1
      // Predicated region
      $region13: #{model_forward.26} parent=11 // pred_check
        %p233 = pneg %p87
      $region14: #{model_forward.26} parent=11 // pred_check_branch
        %235 = sbr.rel (%p233) target = $region16
      $region15: #{model_forward.26} parent=11 // pred_region
        _
      $region16: #{model_forward.26} parent=11 // pred_fallthru
        _
      // Predicated region
      $region17: #{model_forward.26} parent=11 // pred_check
        %p236 = pneg %p108
      $region18: #{model_forward.26} parent=11 // pred_check_branch
        %238 = sbr.rel (%p236) target = $region20
      $region19: #{model_forward.26} parent=11 // pred_region
        _
      $region20: #{model_forward.26} parent=11 // pred_fallthru
        _
      // Predicated region
      $region21: #{model_forward.26} parent=11 // pred_check
        %p239 = pneg %p129
      $region22: #{model_forward.26} parent=11 // pred_check_branch
        %241 = sbr.rel (%p239) target = $region24
      $region23: #{model_forward.26} parent=11 // pred_region
        _
      $region24: #{model_forward.26} parent=11 // pred_fallthru
        _
      // Predicated region
      $region25: #{model_forward.26} parent=11 // pred_check
        %p242 = pneg %p150
      $region26: #{model_forward.26} parent=11 // pred_check_branch
        %244 = sbr.rel (%p242) target = $region28
      $region27: #{model_forward.26} parent=11 // pred_region
        _
      $region28: #{model_forward.26} parent=11 // pred_fallthru
        _
      // Predicated region
      $region29: #{model_forward.26} parent=11 // pred_check
        %p245 = pneg %p171
      $region30: #{model_forward.26} parent=11 // pred_check_branch
        %247 = sbr.rel (%p245) target = $region32
      $region31: #{model_forward.26} parent=11 // pred_region
        _
      $region32: #{model_forward.26} parent=11 // pred_fallthru
        _
      // Predicated region
      $region33: #{model_forward.26} parent=11 // pred_check
        %p248 = pneg %p192
      $region34: #{model_forward.26} parent=11 // pred_check_branch
        %250 = sbr.rel (%p248) target = $region36
      $region35: #{model_forward.26} parent=11 // pred_region
        _
      $region36: #{model_forward.26} parent=11 // pred_fallthru
        _
    $region12: #{model_forward.26} parent=5 // pred_fallthru
      _
    %p251 = scmp.lt.s32.totalorder %s14, 2
    // Predicated region
    $region37: #{model_forward.26} parent=5 // pred_check
      %p252 = pneg %p251
    $region38: #{model_forward.26} parent=5 // pred_check_branch
      %254 = sbr.rel (%p252) target = $region40
    $region39: #{model_forward.26} parent=5 // pred_region
      // Predicated region
      $region41: #{model_forward.26} parent=39 // pred_check
        %p255 = pneg %p34
      $region42: #{model_forward.26} parent=39 // pred_check_branch
        %257 = sbr.rel (%p255) target = $region44
      $region43: #{model_forward.26} parent=39 // pred_region
        %p258 = scmp.lt.s32.totalorder %s14, 1
        %s259 = scalar_select %p258, %s14, 1
        %s260 = smul.addr %s259, 4
        %s261 = scalar_lea.vmem %s0, %s260
      $region44: #{model_forward.26} parent=39 // pred_fallthru
        _
      // Predicated region
      $region45: #{model_forward.26} parent=39 // pred_check
        %p262 = pneg %p60
      $region46: #{model_forward.26} parent=39 // pred_check_branch
        %264 = sbr.rel (%p262) target = $region48
      $region47: #{model_forward.26} parent=39 // pred_region
        %p265 = scmp.lt.s32.totalorder %s14, 1
        %s266 = scalar_select %p265, %s14, 1
        %s267 = smul.addr %s266, 8
        %s268 = scalar_lea.vmem %s1, %s267
      $region48: #{model_forward.26} parent=39 // pred_fallthru
        _
    $region40: #{model_forward.26} parent=5 // pred_fallthru
      _
    %p269 = scmp.le.s32.totalorder 1, %s14
    %p270 = scmp.lt.s32.totalorder %s14, 3
    %p271 = pnand %p269, %p270
    %p272 = pneg %p271
    // Predicated region
    $region49: #{model_forward.26} parent=5 // pred_check
      _
    $region50: #{model_forward.26} parent=5 // pred_check_branch
      %274 = sbr.rel (%p271) target = $region52
    $region51: #{model_forward.26} parent=5 // pred_region
      %s275 = ssub.s32 %s14, 1
      %p276 = scmp.lt.s32.totalorder %s19, 1
      %s277 = scalar_select %p276, %s19, 1
      %s278 = smul.addr %s277, 4
      %s279 = scalar_lea.vmem %s0, %s278
      %p280 = pneg %p40
      %p281 = pneg %p37
      %p282 = scmp.lt.s32.totalorder %s19, 1
      %s283 = scalar_select %p282, %s19, 1
      %s284 = smul.addr %s283, 8
      %s285 = scalar_lea.vmem %s1, %s284
      %p286 = pneg %p66
      %p287 = pneg %p63
      %p288 = pneg %p87
      %p289 = pneg %p84
      %p290 = pneg %p108
      %p291 = pneg %p105
      %p292 = pneg %p129
      %p293 = pneg %p126
      %p294 = pneg %p150
      %p295 = pneg %p147
      %p296 = pneg %p171
      %p297 = pneg %p168
      %p298 = pneg %p192
      %p299 = pneg %p189
      %p300 = pneg %p218
      %p301 = pneg %p215
      %p302 = scmp.lt.s32.totalorder %s19, 1
      %s303 = scalar_select %p302, %s19, 1
      %s304 = smul.addr %s303, 4
      %s305 = scalar_lea.vmem %s8, %s304
      %p306 = scmp.lt.s32.totalorder %s19, 1
      %s307 = scalar_select %p306, %s19, 1
      %s308 = smul.addr %s307, 4
      %s309 = scalar_lea.vmem %s0, %s308
      %p310 = scmp.lt.s32.totalorder %s19, 1
      %s311 = scalar_select %p310, %s19, 1
      %s312 = smul.addr %s311, 8
      %s313 = scalar_lea.vmem %s1, %s312
      %p314 = scmp.lt.s32.totalorder %s19, 1
      %s315 = scalar_select %p314, %s19, 1
      %s316 = smul.addr %s315, 4
      %s317 = scalar_lea.vmem %s8, %s316
      %v319 = vld [vmem:[%s313] sm:$0xff]
      %v320 = vpack.c.bf16 %v319, %v319
      %v321 = vld [vmem:[%s2] sm:$0x3]
      %v322 = vld [vmem:[%s3] sm:$0x1]
      %v324 = vlaneseq
      %v325 = vshrl.u32 %v324, 7
      %v326 = vsub.s32 0, %v325
      %v327 = vrot.slane %v322, %v326
      %vm329 = vcmask 31744
      %v331 = vsel %vm329, %v320, 0
      %vm333 = vcmask 1041408
      %v335 = vsel %vm333, %v321, 0
      %337 = vmatprep.subr.bf16.mxu0 0
      %338 = vmatpush1.bf16.msra.mxu0 %v335
      %339 = vmatprep.subr.bf16.mxu0 0
      %340 = vmatpush1.bf16.msra.mxu0 0
      %341 = vmatprep.subr.bf16.mxu0 0
      %342 = vmatpush1.bf16.msra.mxu0 0
      %343 = vmatprep.subr.bf16.mxu0 0
      %344 = vmatpush1.bf16.msra.mxu0 0
      %345 = vmatprep.subr.bf16.mxu0 0
      %346 = vmatpush1.bf16.msra.mxu0 0
      %347 = vmatprep.subr.bf16.mxu0 0
      %348 = vmatpush1.bf16.msra.mxu0 0
      %349 = vmatprep.subr.bf16.mxu0 0
      %350 = vmatpush1.bf16.msra.mxu0 0
      %351 = vmatprep.subr.bf16.mxu0 0
      %352 = vmatpush1.bf16.msra.mxu0 0
      %353 = vmatprep.subr.bf16.mxu0 0
      %354 = vmatpush1.bf16.msra.mxu0 0
      %355 = vmatprep.subr.bf16.mxu0 0
      %356 = vmatpush1.bf16.msra.mxu0 0
      %357 = vmatprep.subr.bf16.mxu0 0
      %358 = vmatpush1.bf16.msra.mxu0 0
      %359 = vmatprep.subr.bf16.mxu0 0
      %360 = vmatpush1.bf16.msra.mxu0 0
      %361 = vmatprep.subr.bf16.mxu0 0
      %362 = vmatpush1.bf16.msra.mxu0 0
      %363 = vmatprep.subr.bf16.mxu0 0
      %364 = vmatpush1.bf16.msra.mxu0 0
      %365 = vmatprep.subr.bf16.mxu0 0
      %366 = vmatpush1.bf16.msra.mxu0 0
      %367 = vmatprep.subr.bf16.mxu0 0
      %368 = vmatpush1.bf16.msra.mxu0 0
      %369 = vmatprep.mubr.bf16.mxu0 0
      %370 = vmatmul.mubr.bf16.gmra.mrb[0].mxu0 %v331
      %v371 = vpop.f32.mrb[0].mxu0
      %v372 = vadd.f32 %v327, %v371
      %v373 = vpop.f32.mrb[0].mxu0
      %v374 = vpop.f32.mrb[0].mxu0
      %v375 = vpop.f32.mrb[0].mxu0
      %376 = vdwg.mxu0
      %v377 = vld [vmem:[%s309] sm:$0xf]
      %v378 = vld [vmem:[%s4] sm:$0xf]
      %v379 = vld [vmem:[%s4 + $0x4] sm:$0xf]
      %v380 = vld [vmem:[%s5] sm:$0x1]
      %v382 = vlaneseq
      %v383 = vshrl.u32 %v382, 7
      %v384 = vsub.s32 0, %v383
      %v385 = vrot.slane %v380, %v384
      %v389 = vunpack.c.l.b16 %v378
      %v390 = vunpack.c.l.b16 %v379
      %v391 = vpack.c.b16 %v390, %v389
      %vm393 = vcmask 130048
      %v395 = vsel %vm393, %v377, 0
      %397 = vmatprep.subr.bf16.mxu0 0
      %398 = vmatpush1.bf16.msra.mxu0 %v391
      %399 = vmatprep.subr.bf16.mxu0 0
      %400 = vmatpush1.bf16.msra.mxu0 0
      %401 = vmatprep.subr.bf16.mxu0 0
      %402 = vmatpush1.bf16.msra.mxu0 0
      %403 = vmatprep.subr.bf16.mxu0 0
      %404 = vmatpush1.bf16.msra.mxu0 0
      %405 = vmatprep.subr.bf16.mxu0 0
      %406 = vmatpush1.bf16.msra.mxu0 0
      %407 = vmatprep.subr.bf16.mxu0 0
      %408 = vmatpush1.bf16.msra.mxu0 0
      %409 = vmatprep.subr.bf16.mxu0 0
      %410 = vmatpush1.bf16.msra.mxu0 0
      %411 = vmatprep.subr.bf16.mxu0 0
      %412 = vmatpush1.bf16.msra.mxu0 0
      %413 = vmatprep.subr.bf16.mxu0 0
      %414 = vmatpush1.bf16.msra.mxu0 0
      %415 = vmatprep.subr.bf16.mxu0 0
      %416 = vmatpush1.bf16.msra.mxu0 0
      %417 = vmatprep.subr.bf16.mxu0 0
      %418 = vmatpush1.bf16.msra.mxu0 0
      %419 = vmatprep.subr.bf16.mxu0 0
      %420 = vmatpush1.bf16.msra.mxu0 0
      %421 = vmatprep.subr.bf16.mxu0 0
      %422 = vmatpush1.bf16.msra.mxu0 0
      %423 = vmatprep.subr.bf16.mxu0 0
      %424 = vmatpush1.bf16.msra.mxu0 0
      %425 = vmatprep.subr.bf16.mxu0 0
      %426 = vmatpush1.bf16.msra.mxu0 0
      %427 = vmatprep.subr.bf16.mxu0 0
      %428 = vmatpush1.bf16.msra.mxu0 0
      %429 = vmatprep.mubr.bf16.mxu0 0
      %430 = vmatmul.mubr.bf16.gmra.mrb[0].mxu0 %v395
      %v431 = vpop.f32.mrb[0].mxu0
      %v432 = vadd.f32 %v385, %v431
      %v433 = vpop.f32.mrb[0].mxu0
      %v434 = vpop.f32.mrb[0].mxu0
      %v435 = vpop.f32.mrb[0].mxu0
      %436 = vdwg.mxu0
      %v437 = vpack.c.bf16 %v372, %v372
      %v438 = vld [vmem:[%s6] sm:$0xf]
      %v439 = vld [vmem:[%s6 + $0x4] sm:$0xf]
      %v440 = vld [vmem:[%s7] sm:$0x1]
      %v442 = vlaneseq
      %v443 = vshrl.u32 %v442, 7
      %v444 = vsub.s32 0, %v443
      %v445 = vrot.slane %v440, %v444
      %v449 = vunpack.c.l.b16 %v438
      %v450 = vunpack.c.l.b16 %v439
      %v451 = vpack.c.b16 %v450, %v449
      %v454 = vsel %vm393, %v437, 0
      %456 = vmatprep.subr.bf16.mxu0 0
      %457 = vmatpush1.bf16.msra.mxu0 %v451
      %458 = vmatprep.subr.bf16.mxu0 0
      %459 = vmatpush1.bf16.msra.mxu0 0
      %460 = vmatprep.subr.bf16.mxu0 0
      %461 = vmatpush1.bf16.msra.mxu0 0
      %462 = vmatprep.subr.bf16.mxu0 0
      %463 = vmatpush1.bf16.msra.mxu0 0
      %464 = vmatprep.subr.bf16.mxu0 0
      %465 = vmatpush1.bf16.msra.mxu0 0
      %466 = vmatprep.subr.bf16.mxu0 0
      %467 = vmatpush1.bf16.msra.mxu0 0
      %468 = vmatprep.subr.bf16.mxu0 0
      %469 = vmatpush1.bf16.msra.mxu0 0
      %470 = vmatprep.subr.bf16.mxu0 0
      %471 = vmatpush1.bf16.msra.mxu0 0
      %472 = vmatprep.subr.bf16.mxu0 0
      %473 = vmatpush1.bf16.msra.mxu0 0
      %474 = vmatprep.subr.bf16.mxu0 0
      %475 = vmatpush1.bf16.msra.mxu0 0
      %476 = vmatprep.subr.bf16.mxu0 0
      %477 = vmatpush1.bf16.msra.mxu0 0
      %478 = vmatprep.subr.bf16.mxu0 0
      %479 = vmatpush1.bf16.msra.mxu0 0
      %480 = vmatprep.subr.bf16.mxu0 0
      %481 = vmatpush1.bf16.msra.mxu0 0
      %482 = vmatprep.subr.bf16.mxu0 0
      %483 = vmatpush1.bf16.msra.mxu0 0
      %484 = vmatprep.subr.bf16.mxu0 0
      %485 = vmatpush1.bf16.msra.mxu0 0
      %486 = vmatprep.subr.bf16.mxu0 0
      %487 = vmatpush1.bf16.msra.mxu0 0
      %488 = vmatprep.mubr.bf16.mxu0 0
      %489 = vmatmul.mubr.bf16.gmra.mrb[0].mxu0 %v454
      %v490 = vpop.f32.mrb[0].mxu0
      %v491 = vadd.f32 %v445, %v490
      %v492 = vpop.f32.mrb[0].mxu0
      %v493 = vpop.f32.mrb[0].mxu0
      %v494 = vpop.f32.mrb[0].mxu0
      %495 = vdwg.mxu0
      %v496 = vadd.f32 %v432, %v491
      %v497 = vpack.c.bf16 %v496, %v496
      %vm498 = vcmask 257024
      %499 = vst.msk [vmem:[%s317] sm:$0xf] %vm498, %v497
      %p500 = scmp.lt.s32.totalorder %s19, 1
      %s501 = scalar_select %p500, %s19, 1
      %s502 = smul.addr %s501, 4
      %s503 = scalar_lea.vmem %s8, %s502
      // Predicated region
      $region53: #{model_forward.26} parent=51 // pred_check
        %p504 = pneg %p215
      $region54: #{model_forward.26} parent=51 // pred_check_branch
        %506 = sbr.rel (%p504) target = $region56
      $region55: #{model_forward.26} parent=51 // pred_region
        _
      $region56: #{model_forward.26} parent=51 // pred_fallthru
        _
    $region52: #{model_forward.26} parent=5 // pred_fallthru
      _
    %p507 = scmp.le.s32.totalorder 2, %s14
    // Predicated region
    $region57: #{model_forward.26} parent=5 // pred_check
      %p508 = pneg %p507
    $region58: #{model_forward.26} parent=5 // pred_check_branch
      %510 = sbr.rel (%p508) target = $region60
    $region59: #{model_forward.26} parent=5 // pred_region
      %s511 = ssub.s32 %s14, 2
      // Predicated region
      $region61: #{model_forward.26} parent=59 // pred_check
        %p512 = pneg %p221
      $region62: #{model_forward.26} parent=59 // pred_check_branch
        %514 = sbr.rel (%p512) target = $region64
      $region63: #{model_forward.26} parent=59 // pred_region
        %p515 = scmp.lt.s32.totalorder %s20, 1
        %s516 = scalar_select %p515, %s20, 1
        %s517 = smul.addr %s516, 4
        %s518 = scalar_lea.vmem %s8, %s517
      $region64: #{model_forward.26} parent=59 // pred_fallthru
        _
    $region60: #{model_forward.26} parent=5 // pred_fallthru
      _
  $region6: #{model_forward.26} parent=0 // loop_footer
    %s18 = sadd.s32 1, %s14
  $region7: #{model_forward.26} parent=0 // loop_footer_branch
    %13 = sbr.rel target = $region3
  $region8: #{model_forward.26} parent=0 // loop_exit
    _

// kernel: model_forward.28
$region0: #{model_forward.28}
  #allocation0 [shape = 'u32[]', space=smem, size = 0x4, offset = 0x4, fixed_abs, tag = 'smem constant byte address 0x4 - core index']
  #allocation1 [shape = 'u32[144,128]{1,0:T(1,128)}', space=vmem, size = 0x12000, scoped, tag = 'internal scratch']
  %s0 = inlined_call_operand.vmem [shape: bf16[3,2,8,32], index: 0, kind: input, shape index: {}, may-alias: {0,1,2}]
  %s1 = inlined_call_operand.vmem [shape: bf16[3,2,8,32], index: 1, kind: input, shape index: {}, may-alias: {0,1,2}]
  %s2 = inlined_call_operand.vmem [shape: bf16[3,2,8,32], index: 2, kind: input, shape index: {}, may-alias: {0,1,2}]
  %s3 = inlined_call_operand.vmem [shape: f32[2,1,8], index: 3, kind: input, shape index: {}]
  %s4 = inlined_call_operand.vmem [shape: bf16[2,8,32], index: 4, kind: input, shape index: {}]
  %s5 = inlined_call_operand.vmem [shape: bf16[32,32], index: 5, kind: input, shape index: {}]
  %s6 = inlined_call_operand.vmem [shape: f32[1,32], index: 6, kind: input, shape index: {}]
  %s7 = inlined_call_operand.vmem [shape: f32[1,32], index: 7, kind: input, shape index: {}]
  %s8 = inlined_call_operand.vmem [shape: f32[1,32], index: 8, kind: input, shape index: {}]
  %s9 = inlined_call_operand.vmem [shape: bf16[2,8,32], index: 9, kind: output, shape index: {}]
  %s10 = sld [smem:[#allocation0]]
  $region69: #{model_forward.28} parent=0
    _
  %s12 = ssub.s32 1, %s10
  %s13 = scalar_select 0, %s12, %s10
  loop: start=0, step=1, limit=4
  $region2: #{model_forward.28} parent=0 // loop_pre_header
    _
  $region3: #{model_forward.28} parent=0 // loop_header
    %s15 = sphi 0, %s19
    %p16 = scmp.ge.s32.totalorder %s15, 4
    %s25 = sphi 0, %s27
    %s28 = sphi 0, %s25
    %s29 = sphi 0, %s28
    %s45 = sphi 0, %s29
    %s51 = sphi 0, %s53
    %s54 = sphi 0, %s51
    %s55 = sphi 0, %s54
    %s71 = sphi 0, %s55
    %s77 = sphi 0, %s79
    %s80 = sphi 0, %s77
    %s81 = sphi 0, %s80
    %s97 = sphi 0, %s81
    %s103 = sphi 0, %s105
    %s106 = sphi 0, %s103
    %s107 = sphi 0, %s106
    %s123 = sphi 0, %s107
    %s129 = sphi 0, %s131
    %s132 = sphi 0, %s129
    %s133 = sphi 0, %s132
    %s149 = sphi 0, %s133
    %s153 = sphi 0, %s153
    %s155 = sphi 0, %s153
    %s156 = sphi 0, %s155
    %s170 = sphi 0, %s156
    %s174 = sphi 0, %s174
    %s176 = sphi 0, %s174
    %s177 = sphi 0, %s176
    %s191 = sphi 0, %s177
    %s195 = sphi 0, %s195
    %s197 = sphi 0, %s195
    %s198 = sphi 0, %s197
    %s212 = sphi 0, %s198
    %s216 = sphi 0, %s216
    %s218 = sphi 0, %s216
    %s219 = sphi 0, %s218
    %s233 = sphi 0, %s219
    %s239 = sphi 0, %s241
    %s242 = sphi 0, %s239
    %s243 = sphi 0, %s242
    %s259 = sphi 0, %s243
  $region4: #{model_forward.28} parent=0 // loop_header_branch
    %18 = sbr.rel (%p16) target = $region8
  $region5: #{model_forward.28} parent=0 // loop_body
    %s20 = ssub.s32 %s15, 1
    %s21 = ssub.s32 %s15, 2
    %s22 = sadd.s32 %s15, 1
    %s23 = ssub.s32 %s15, %s22
    %p24 = scmp.eq.s32.totalorder %s23, 0
    %s26 = sadd.s32 %s25, 1
    %s27 = scalar_select %p24, %s25, %s26
    %p30 = pneg %p24
    %p31 = scmp.eq.s32.totalorder %s15, 1
    %p32 = por %p30, %p31
    %p33 = scmp.ne.s32.totalorder %s25, %s28
    %p34 = scmp.eq.s32.totalorder %s15, 0
    %p35 = por %p33, %p34
    %p36 = scmp.ne.s32.totalorder %s25, %s28
    %p37 = scmp.eq.s32.totalorder %s20, 1
    %p38 = por %p36, %p37
    %p39 = scmp.ne.s32.totalorder %s28, %s29
    %p40 = scmp.eq.s32.totalorder %s20, 0
    %p41 = por %p39, %p40
    %p42 = scmp.ne.s32.totalorder %s28, %s29
    %p43 = scmp.eq.s32.totalorder %s21, 1
    %p44 = por %p42, %p43
    %p46 = scmp.ne.s32.totalorder %s29, %s45
    %p47 = scmp.eq.s32.totalorder %s21, 0
    %p48 = por %p46, %p47
    %s49 = ssub.s32 %s15, %s22
    %p50 = scmp.eq.s32.totalorder %s49, 0
    %s52 = sadd.s32 %s51, 1
    %s53 = scalar_select %p50, %s51, %s52
    %p56 = pneg %p50
    %p57 = scmp.eq.s32.totalorder %s15, 1
    %p58 = por %p56, %p57
    %p59 = scmp.ne.s32.totalorder %s51, %s54
    %p60 = scmp.eq.s32.totalorder %s15, 0
    %p61 = por %p59, %p60
    %p62 = scmp.ne.s32.totalorder %s51, %s54
    %p63 = scmp.eq.s32.totalorder %s20, 1
    %p64 = por %p62, %p63
    %p65 = scmp.ne.s32.totalorder %s54, %s55
    %p66 = scmp.eq.s32.totalorder %s20, 0
    %p67 = por %p65, %p66
    %p68 = scmp.ne.s32.totalorder %s54, %s55
    %p69 = scmp.eq.s32.totalorder %s21, 1
    %p70 = por %p68, %p69
    %p72 = scmp.ne.s32.totalorder %s55, %s71
    %p73 = scmp.eq.s32.totalorder %s21, 0
    %p74 = por %p72, %p73
    %s75 = ssub.s32 %s15, %s22
    %p76 = scmp.eq.s32.totalorder %s75, 0
    %s78 = sadd.s32 %s77, 1
    %s79 = scalar_select %p76, %s77, %s78
    %p82 = pneg %p76
    %p83 = scmp.eq.s32.totalorder %s15, 1
    %p84 = por %p82, %p83
    %p85 = scmp.ne.s32.totalorder %s77, %s80
    %p86 = scmp.eq.s32.totalorder %s15, 0
    %p87 = por %p85, %p86
    %p88 = scmp.ne.s32.totalorder %s77, %s80
    %p89 = scmp.eq.s32.totalorder %s20, 1
    %p90 = por %p88, %p89
    %p91 = scmp.ne.s32.totalorder %s80, %s81
    %p92 = scmp.eq.s32.totalorder %s20, 0
    %p93 = por %p91, %p92
    %p94 = scmp.ne.s32.totalorder %s80, %s81
    %p95 = scmp.eq.s32.totalorder %s21, 1
    %p96 = por %p94, %p95
    %p98 = scmp.ne.s32.totalorder %s81, %s97
    %p99 = scmp.eq.s32.totalorder %s21, 0
    %p100 = por %p98, %p99
    %s101 = ssub.s32 %s15, %s22
    %p102 = scmp.eq.s32.totalorder %s101, 0
    %s104 = sadd.s32 %s103, 1
    %s105 = scalar_select %p102, %s103, %s104
    %p108 = pneg %p102
    %p109 = scmp.eq.s32.totalorder %s15, 1
    %p110 = por %p108, %p109
    %p111 = scmp.ne.s32.totalorder %s103, %s106
    %p112 = scmp.eq.s32.totalorder %s15, 0
    %p113 = por %p111, %p112
    %p114 = scmp.ne.s32.totalorder %s103, %s106
    %p115 = scmp.eq.s32.totalorder %s20, 1
    %p116 = por %p114, %p115
    %p117 = scmp.ne.s32.totalorder %s106, %s107
    %p118 = scmp.eq.s32.totalorder %s20, 0
    %p119 = por %p117, %p118
    %p120 = scmp.ne.s32.totalorder %s106, %s107
    %p121 = scmp.eq.s32.totalorder %s21, 1
    %p122 = por %p120, %p121
    %p124 = scmp.ne.s32.totalorder %s107, %s123
    %p125 = scmp.eq.s32.totalorder %s21, 0
    %p126 = por %p124, %p125
    %s127 = ssub.s32 %s15, %s22
    %p128 = scmp.eq.s32.totalorder %s127, 0
    %s130 = sadd.s32 %s129, 1
    %s131 = scalar_select %p128, %s129, %s130
    %p134 = pneg %p128
    %p135 = scmp.eq.s32.totalorder %s15, 1
    %p136 = por %p134, %p135
    %p137 = scmp.ne.s32.totalorder %s129, %s132
    %p138 = scmp.eq.s32.totalorder %s15, 0
    %p139 = por %p137, %p138
    %p140 = scmp.ne.s32.totalorder %s129, %s132
    %p141 = scmp.eq.s32.totalorder %s20, 1
    %p142 = por %p140, %p141
    %p143 = scmp.ne.s32.totalorder %s132, %s133
    %p144 = scmp.eq.s32.totalorder %s20, 0
    %p145 = por %p143, %p144
    %p146 = scmp.ne.s32.totalorder %s132, %s133
    %p147 = scmp.eq.s32.totalorder %s21, 1
    %p148 = por %p146, %p147
    %p150 = scmp.ne.s32.totalorder %s133, %s149
    %p151 = scmp.eq.s32.totalorder %s21, 0
    %p152 = por %p150, %p151
    %s154 = sadd.s32 %s153, 1
    %p157 = scmp.eq.s32.totalorder %s15, 1
    %p158 = scmp.ne.s32.totalorder %s153, %s155
    %p159 = scmp.eq.s32.totalorder %s15, 0
    %p160 = por %p158, %p159
    %p161 = scmp.ne.s32.totalorder %s153, %s155
    %p162 = scmp.eq.s32.totalorder %s20, 1
    %p163 = por %p161, %p162
    %p164 = scmp.ne.s32.totalorder %s155, %s156
    %p165 = scmp.eq.s32.totalorder %s20, 0
    %p166 = por %p164, %p165
    %p167 = scmp.ne.s32.totalorder %s155, %s156
    %p168 = scmp.eq.s32.totalorder %s21, 1
    %p169 = por %p167, %p168
    %p171 = scmp.ne.s32.totalorder %s156, %s170
    %p172 = scmp.eq.s32.totalorder %s21, 0
    %p173 = por %p171, %p172
    %s175 = sadd.s32 %s174, 1
    %p178 = scmp.eq.s32.totalorder %s15, 1
    %p179 = scmp.ne.s32.totalorder %s174, %s176
    %p180 = scmp.eq.s32.totalorder %s15, 0
    %p181 = por %p179, %p180
    %p182 = scmp.ne.s32.totalorder %s174, %s176
    %p183 = scmp.eq.s32.totalorder %s20, 1
    %p184 = por %p182, %p183
    %p185 = scmp.ne.s32.totalorder %s176, %s177
    %p186 = scmp.eq.s32.totalorder %s20, 0
    %p187 = por %p185, %p186
    %p188 = scmp.ne.s32.totalorder %s176, %s177
    %p189 = scmp.eq.s32.totalorder %s21, 1
    %p190 = por %p188, %p189
    %p192 = scmp.ne.s32.totalorder %s177, %s191
    %p193 = scmp.eq.s32.totalorder %s21, 0
    %p194 = por %p192, %p193
    %s196 = sadd.s32 %s195, 1
    %p199 = scmp.eq.s32.totalorder %s15, 1
    %p200 = scmp.ne.s32.totalorder %s195, %s197
    %p201 = scmp.eq.s32.totalorder %s15, 0
    %p202 = por %p200, %p201
    %p203 = scmp.ne.s32.totalorder %s195, %s197
    %p204 = scmp.eq.s32.totalorder %s20, 1
    %p205 = por %p203, %p204
    %p206 = scmp.ne.s32.totalorder %s197, %s198
    %p207 = scmp.eq.s32.totalorder %s20, 0
    %p208 = por %p206, %p207
    %p209 = scmp.ne.s32.totalorder %s197, %s198
    %p210 = scmp.eq.s32.totalorder %s21, 1
    %p211 = por %p209, %p210
    %p213 = scmp.ne.s32.totalorder %s198, %s212
    %p214 = scmp.eq.s32.totalorder %s21, 0
    %p215 = por %p213, %p214
    %s217 = sadd.s32 %s216, 1
    %p220 = scmp.eq.s32.totalorder %s15, 1
    %p221 = scmp.ne.s32.totalorder %s216, %s218
    %p222 = scmp.eq.s32.totalorder %s15, 0
    %p223 = por %p221, %p222
    %p224 = scmp.ne.s32.totalorder %s216, %s218
    %p225 = scmp.eq.s32.totalorder %s20, 1
    %p226 = por %p224, %p225
    %p227 = scmp.ne.s32.totalorder %s218, %s219
    %p228 = scmp.eq.s32.totalorder %s20, 0
    %p229 = por %p227, %p228
    %p230 = scmp.ne.s32.totalorder %s218, %s219
    %p231 = scmp.eq.s32.totalorder %s21, 1
    %p232 = por %p230, %p231
    %p234 = scmp.ne.s32.totalorder %s219, %s233
    %p235 = scmp.eq.s32.totalorder %s21, 0
    %p236 = por %p234, %p235
    %s237 = ssub.s32 %s15, %s22
    %p238 = scmp.eq.s32.totalorder %s237, 0
    %s240 = sadd.s32 %s239, 1
    %s241 = scalar_select %p238, %s239, %s240
    %p244 = pneg %p238
    %p245 = scmp.eq.s32.totalorder %s15, 1
    %p246 = por %p244, %p245
    %p247 = scmp.ne.s32.totalorder %s239, %s242
    %p248 = scmp.eq.s32.totalorder %s15, 0
    %p249 = por %p247, %p248
    %p250 = scmp.ne.s32.totalorder %s239, %s242
    %p251 = scmp.eq.s32.totalorder %s20, 1
    %p252 = por %p250, %p251
    %p253 = scmp.ne.s32.totalorder %s242, %s243
    %p254 = scmp.eq.s32.totalorder %s20, 0
    %p255 = por %p253, %p254
    %p256 = scmp.ne.s32.totalorder %s242, %s243
    %p257 = scmp.eq.s32.totalorder %s21, 1
    %p258 = por %p256, %p257
    %p260 = scmp.ne.s32.totalorder %s243, %s259
    %p261 = scmp.eq.s32.totalorder %s21, 0
    %p262 = por %p260, %p261
    %p263 = scmp.le.s32.totalorder 1, %s15
    %p264 = scmp.lt.s32.totalorder %s15, 3
    %p265 = pnand %p263, %p264
    %p266 = pneg %p265
    // Predicated region
    $region9: #{model_forward.28} parent=5 // pred_check
      _
    $region10: #{model_forward.28} parent=5 // pred_check_branch
      %268 = sbr.rel (%p265) target = $region12
    $region11: #{model_forward.28} parent=5 // pred_region
      %s269 = ssub.s32 %s15, 1
      // Predicated region
      $region13: #{model_forward.28} parent=11 // pred_check
        %p270 = pneg %p166
      $region14: #{model_forward.28} parent=11 // pred_check_branch
        %272 = sbr.rel (%p270) target = $region16
      $region15: #{model_forward.28} parent=11 // pred_region
        _
      $region16: #{model_forward.28} parent=11 // pred_fallthru
        _
      // Predicated region
      $region17: #{model_forward.28} parent=11 // pred_check
        %p273 = pneg %p187
      $region18: #{model_forward.28} parent=11 // pred_check_branch
        %275 = sbr.rel (%p273) target = $region20
      $region19: #{model_forward.28} parent=11 // pred_region
        _
      $region20: #{model_forward.28} parent=11 // pred_fallthru
        _
      // Predicated region
      $region21: #{model_forward.28} parent=11 // pred_check
        %p276 = pneg %p208
      $region22: #{model_forward.28} parent=11 // pred_check_branch
        %278 = sbr.rel (%p276) target = $region24
      $region23: #{model_forward.28} parent=11 // pred_region
        _
      $region24: #{model_forward.28} parent=11 // pred_fallthru
        _
      // Predicated region
      $region25: #{model_forward.28} parent=11 // pred_check
        %p279 = pneg %p229
      $region26: #{model_forward.28} parent=11 // pred_check_branch
        %281 = sbr.rel (%p279) target = $region28
      $region27: #{model_forward.28} parent=11 // pred_region
        _
      $region28: #{model_forward.28} parent=11 // pred_fallthru
        _
    $region12: #{model_forward.28} parent=5 // pred_fallthru
      _
    %p282 = scmp.lt.s32.totalorder %s15, 2
    // Predicated region
    $region29: #{model_forward.28} parent=5 // pred_check
      %p283 = pneg %p282
    $region30: #{model_forward.28} parent=5 // pred_check_branch
      %285 = sbr.rel (%p283) target = $region32
    $region31: #{model_forward.28} parent=5 // pred_region
      // Predicated region
      $region33: #{model_forward.28} parent=31 // pred_check
        %p286 = pneg %p35
      $region34: #{model_forward.28} parent=31 // pred_check_branch
        %288 = sbr.rel (%p286) target = $region36
      $region35: #{model_forward.28} parent=31 // pred_region
        %p289 = scmp.lt.s32.totalorder %s15, 1
        %s290 = scalar_select %p289, %s15, 1
        %s291 = smul.addr %s290, 4
        %s292 = scalar_lea.vmem %s0, %s291
      $region36: #{model_forward.28} parent=31 // pred_fallthru
        _
      // Predicated region
      $region37: #{model_forward.28} parent=31 // pred_check
        %p293 = pneg %p61
      $region38: #{model_forward.28} parent=31 // pred_check_branch
        %295 = sbr.rel (%p293) target = $region40
      $region39: #{model_forward.28} parent=31 // pred_region
        %p296 = scmp.lt.s32.totalorder %s15, 1
        %s297 = scalar_select %p296, %s15, 1
        %s298 = sadd.s32 %s297, 2
        %s299 = smul.addr %s298, 4
        %s300 = scalar_lea.vmem %s1, %s299
      $region40: #{model_forward.28} parent=31 // pred_fallthru
        _
      // Predicated region
      $region41: #{model_forward.28} parent=31 // pred_check
        %p301 = pneg %p87
      $region42: #{model_forward.28} parent=31 // pred_check_branch
        %303 = sbr.rel (%p301) target = $region44
      $region43: #{model_forward.28} parent=31 // pred_region
        %p304 = scmp.lt.s32.totalorder %s15, 1
        %s305 = scalar_select %p304, %s15, 1
        %s306 = sadd.s32 %s305, 4
        %s307 = smul.addr %s306, 4
        %s308 = scalar_lea.vmem %s2, %s307
      $region44: #{model_forward.28} parent=31 // pred_fallthru
        _
      // Predicated region
      $region45: #{model_forward.28} parent=31 // pred_check
        %p309 = pneg %p113
      $region46: #{model_forward.28} parent=31 // pred_check_branch
        %311 = sbr.rel (%p309) target = $region48
      $region47: #{model_forward.28} parent=31 // pred_region
        %p312 = scmp.lt.s32.totalorder %s15, 1
        %s313 = scalar_select %p312, %s15, 1
        %s314 = scalar_lea.vmem %s3, %s313
      $region48: #{model_forward.28} parent=31 // pred_fallthru
        _
      // Predicated region
      $region49: #{model_forward.28} parent=31 // pred_check
        %p315 = pneg %p139
      $region50: #{model_forward.28} parent=31 // pred_check_branch
        %317 = sbr.rel (%p315) target = $region52
      $region51: #{model_forward.28} parent=31 // pred_region
        %p318 = scmp.lt.s32.totalorder %s15, 1
        %s319 = scalar_select %p318, %s15, 1
        %s320 = smul.addr %s319, 4
        %s321 = scalar_lea.vmem %s4, %s320
      $region52: #{model_forward.28} parent=31 // pred_fallthru
        _
    $region32: #{model_forward.28} parent=5 // pred_fallthru
      _
    %p322 = scmp.le.s32.totalorder 1, %s15
    %p323 = scmp.lt.s32.totalorder %s15, 3
    %p324 = pnand %p322, %p323
    %p325 = pneg %p324
    // Predicated region
    $region53: #{model_forward.28} parent=5 // pred_check
      _
    $region54: #{model_forward.28} parent=5 // pred_check_branch
      %327 = sbr.rel (%p324) target = $region56
    $region55: #{model_forward.28} parent=5 // pred_region
      %s328 = ssub.s32 %s15, 1
      %p329 = scmp.lt.s32.totalorder %s20, 1
      %s330 = scalar_select %p329, %s20, 1
      %s331 = smul.addr %s330, 4
      %s332 = scalar_lea.vmem %s0, %s331
      %p333 = pneg %p41
      %p334 = pneg %p38
      %p335 = scmp.lt.s32.totalorder %s20, 1
      %s336 = scalar_select %p335, %s20, 1
      %s337 = sadd.s32 %s336, 2
      %s338 = smul.addr %s337, 4
      %s339 = scalar_lea.vmem %s1, %s338
      %p340 = pneg %p67
      %p341 = pneg %p64
      %p342 = scmp.lt.s32.totalorder %s20, 1
      %s343 = scalar_select %p342, %s20, 1
      %s344 = sadd.s32 %s343, 4
      %s345 = smul.addr %s344, 4
      %s346 = scalar_lea.vmem %s2, %s345
      %p347 = pneg %p93
      %p348 = pneg %p90
      %p349 = scmp.lt.s32.totalorder %s20, 1
      %s350 = scalar_select %p349, %s20, 1
      %s351 = scalar_lea.vmem %s3, %s350
      %p352 = pneg %p119
      %p353 = pneg %p116
      %p354 = scmp.lt.s32.totalorder %s20, 1
      %s355 = scalar_select %p354, %s20, 1
      %s356 = smul.addr %s355, 4
      %s357 = scalar_lea.vmem %s4, %s356
      %p358 = pneg %p145
      %p359 = pneg %p142
      %p360 = pneg %p166
      %p361 = pneg %p163
      %p362 = pneg %p187
      %p363 = pneg %p184
      %p364 = pneg %p208
      %p365 = pneg %p205
      %p366 = pneg %p229
      %p367 = pneg %p226
      %p368 = pneg %p255
      %p369 = pneg %p252
      %p370 = scmp.lt.s32.totalorder %s20, 1
      %s371 = scalar_select %p370, %s20, 1
      %s372 = smul.addr %s371, 4
      %s373 = scalar_lea.vmem %s9, %s372
      %p374 = scmp.lt.s32.totalorder %s20, 1
      %s375 = scalar_select %p374, %s20, 1
      %s376 = smul.addr %s375, 4
      %s377 = scalar_lea.vmem %s0, %s376
      %p378 = scmp.lt.s32.totalorder %s20, 1
      %s379 = scalar_select %p378, %s20, 1
      %s380 = sadd.s32 %s379, 2
      %s381 = smul.addr %s380, 4
      %s382 = scalar_lea.vmem %s1, %s381
      %p383 = scmp.lt.s32.totalorder %s20, 1
      %s384 = scalar_select %p383, %s20, 1
      %s385 = sadd.s32 %s384, 4
      %s386 = smul.addr %s385, 4
      %s387 = scalar_lea.vmem %s2, %s386
      %p388 = scmp.lt.s32.totalorder %s20, 1
      %s389 = scalar_select %p388, %s20, 1
      %s390 = scalar_lea.vmem %s3, %s389
      %p391 = scmp.lt.s32.totalorder %s20, 1
      %s392 = scalar_select %p391, %s20, 1
      %s393 = smul.addr %s392, 4
      %s394 = scalar_lea.vmem %s4, %s393
      %p395 = scmp.lt.s32.totalorder %s20, 1
      %s396 = scalar_select %p395, %s20, 1
      %s397 = smul.addr %s396, 4
      %s398 = scalar_lea.vmem %s9, %s397
      %v400 = vld [vmem:[%s377] sm:$0xf]
      %v401 = vunpack.c.l.bf16 %v400
      %v402 = vmul.f32 %v401, 0.5
      %v403 = vld [vmem:[%s382] sm:$0xf]
      %v404 = vld [vmem:[%s387] sm:$0xf]
      %v405 = vld [vmem:[%s390] sm:$0x1]
      %v406 = vlaneseq
      %v407 = vshrl.u32 %v406, 7
      %v408 = vlaneseq
      %v409 = vand.u32 %v408, 127
      %vm410 = vcmp.gt.s32.totalorder %v409, %v407
      %v411 = vsel %vm410, -1e+09, 0.0
      %v413 = vlaneseq
      %v414 = vshrl.u32 %v413, 7
      %v415 = vsub.s32 0, %v414
      %v416 = vrot.slane %v405, %v415
      %v418 = vadd.f32 %v416, %v411
      %v419 = vpack.c.bf16 %v402, %v402
      %vm420 = vcmp.ge.s32.totalorder %v409, 0
      %vm421 = vcmp.lt.s32.totalorder %v409, 4
      %vm422 = vmand %vm420, %vm421
      %v423 = vsel %vm422, 1, 0
      %vm424 = vcmp.eq.s32.totalorder %v423, 1
      %vm425 = vmpackc.low %vm424, %vm424
      %v426 = vsel %vm425, %v419, 0
      %v427 = vsel %vm425, %v404, 0
      %vm428 = vcmask 261120
      %v430 = vsel %vm428, %v426, 0
      %v433 = vsel %vm428, %v403, 0
      %435 = vmatprep.subr.bf16.mxu0 0
      %436 = vmatpush1.bf16.xpose.msra.mxu0 %v433
      %437 = vmatprep.subr.bf16.mxu0 0
      %438 = vmatpush1.bf16.xpose.msra.mxu0 0
      %439 = vmatprep.subr.bf16.mxu0 0
      %440 = vmatpush1.bf16.xpose.msra.mxu0 0
      %441 = vmatprep.subr.bf16.mxu0 0
      %442 = vmatpush1.bf16.xpose.msra.mxu0 0
      %443 = vmatprep.subr.bf16.mxu0 0
      %444 = vmatpush1.bf16.xpose.msra.mxu0 0
      %445 = vmatprep.subr.bf16.mxu0 0
      %446 = vmatpush1.bf16.xpose.msra.mxu0 0
      %447 = vmatprep.subr.bf16.mxu0 0
      %448 = vmatpush1.bf16.xpose.msra.mxu0 0
      %449 = vmatprep.subr.bf16.mxu0 0
      %450 = vmatpush1.bf16.xpose.msra.mxu0 0
      %451 = vmatprep.subr.bf16.mxu0 0
      %452 = vmatpush1.bf16.xpose.msra.mxu0 0
      %453 = vmatprep.subr.bf16.mxu0 0
      %454 = vmatpush1.bf16.xpose.msra.mxu0 0
      %455 = vmatprep.subr.bf16.mxu0 0
      %456 = vmatpush1.bf16.xpose.msra.mxu0 0
      %457 = vmatprep.subr.bf16.mxu0 0
      %458 = vmatpush1.bf16.xpose.msra.mxu0 0
      %459 = vmatprep.subr.bf16.mxu0 0
      %460 = vmatpush1.bf16.xpose.msra.mxu0 0
      %461 = vmatprep.subr.bf16.mxu0 0
      %462 = vmatpush1.bf16.xpose.msra.mxu0 0
      %463 = vmatprep.subr.bf16.mxu0 0
      %464 = vmatpush1.bf16.xpose.msra.mxu0 0
      %465 = vmatprep.subr.bf16.mxu0 0
      %466 = vmatpush1.bf16.xpose.msra.mxu0 0
      %467 = vmatprep.mubr.bf16.mxu0 0
      %468 = vmatmul.mubr.bf16.gmra.mrb[0].mxu0 %v430
      %v469 = vpop.f32.mrb[0].mxu0
      %v470 = vadd.f32 %v418, %v469
      %v471 = vpop.f32.mrb[0].mxu0
      %v472 = vpop.f32.mrb[0].mxu0
      %v473 = vpop.f32.mrb[0].mxu0
      %474 = vdwg.mxu0
      %vm475 = vcmask 64512
      %v476 = vsel %vm475, %v470, -inf
      %477 = vmax.xlane.f32.xlu0 %v476
      %v478 = vpop.xlane.xlu0 %477
      %v479 = vsub.f32 %v470, %v478
      %v480 = vmul.f32 %v479, 1.442695
      %v481 = vpow.pop %v480
      %v482 = vsel %vm475, %v481, 0.0
      %483 = vadd.xlane.f32.xlu0 %v482
      %v484 = vpop.xlane.xlu0 %483
      %v485 = vrcp.pop %v484
      %v486 = vpack.c.bf16 %v481, %v481
      %v488 = vsel %vm475, %v486, 0
      %vm490 = vcmask 1043456
      %v492 = vsel %vm490, %v427, 0
      %494 = vmatprep.subr.bf16.mxu0 0
      %495 = vmatpush1.bf16.msra.mxu0 %v492
      %496 = vmatprep.subr.bf16.mxu0 0
      %497 = vmatpush1.bf16.msra.mxu0 0
      %498 = vmatprep.subr.bf16.mxu0 0
      %499 = vmatpush1.bf16.msra.mxu0 0
      %500 = vmatprep.subr.bf16.mxu0 0
      %501 = vmatpush1.bf16.msra.mxu0 0
      %502 = vmatprep.subr.bf16.mxu0 0
      %503 = vmatpush1.bf16.msra.mxu0 0
      %504 = vmatprep.subr.bf16.mxu0 0
      %505 = vmatpush1.bf16.msra.mxu0 0
      %506 = vmatprep.subr.bf16.mxu0 0
      %507 = vmatpush1.bf16.msra.mxu0 0
      %508 = vmatprep.subr.bf16.mxu0 0
      %509 = vmatpush1.bf16.msra.mxu0 0
      %510 = vmatprep.subr.bf16.mxu0 0
      %511 = vmatpush1.bf16.msra.mxu0 0
      %512 = vmatprep.subr.bf16.mxu0 0
      %513 = vmatpush1.bf16.msra.mxu0 0
      %514 = vmatprep.subr.bf16.mxu0 0
      %515 = vmatpush1.bf16.msra.mxu0 0
      %516 = vmatprep.subr.bf16.mxu0 0
      %517 = vmatpush1.bf16.msra.mxu0 0
      %518 = vmatprep.subr.bf16.mxu0 0
      %519 = vmatpush1.bf16.msra.mxu0 0
      %520 = vmatprep.subr.bf16.mxu0 0
      %521 = vmatpush1.bf16.msra.mxu0 0
      %522 = vmatprep.subr.bf16.mxu0 0
      %523 = vmatpush1.bf16.msra.mxu0 0
      %524 = vmatprep.subr.bf16.mxu0 0
      %525 = vmatpush1.bf16.msra.mxu0 0
      %526 = vmatprep.mubr.bf16.mxu0 0
      %527 = vmatmul.mubr.bf16.gmra.mrb[0].mxu0 %v488
      %v528 = vpop.f32.mrb[0].mxu0
      %v529 = vadd.f32 0.0, %v528
      %v530 = vpop.f32.mrb[0].mxu0
      %v531 = vpop.f32.mrb[0].mxu0
      %v532 = vpop.f32.mrb[0].mxu0
      %533 = vdwg.mxu0
      %v534 = vmul.f32 %v529, %v485
      %v535 = vadd.f32 %v534, 0.0
      %vm536 = vcmp.ge.s32.totalorder %v409, 4
      %vm537 = vcmp.lt.s32.totalorder %v409, 8
      %vm538 = vmand %vm536, %vm537
      %v539 = vsel %vm538, 1, 0
      %vm540 = vcmp.eq.s32.totalorder %v539, 1
      %vm541 = vmpackc.low %vm540, %vm540
      %v542 = vsel %vm541, %v419, 0
      %v543 = vsel %vm541, %v404, 0
      %v545 = vsel %vm428, %v542, 0
      %547 = vmatprep.subr.bf16.mxu0 0
      %548 = vmatpush1.bf16.xpose.msra.mxu0 %v433
      %549 = vmatprep.subr.bf16.mxu0 0
      %550 = vmatpush1.bf16.xpose.msra.mxu0 0
      %551 = vmatprep.subr.bf16.mxu0 0
      %552 = vmatpush1.bf16.xpose.msra.mxu0 0
      %553 = vmatprep.subr.bf16.mxu0 0
      %554 = vmatpush1.bf16.xpose.msra.mxu0 0
      %555 = vmatprep.subr.bf16.mxu0 0
      %556 = vmatpush1.bf16.xpose.msra.mxu0 0
      %557 = vmatprep.subr.bf16.mxu0 0
      %558 = vmatpush1.bf16.xpose.msra.mxu0 0
      %559 = vmatprep.subr.bf16.mxu0 0
      %560 = vmatpush1.bf16.xpose.msra.mxu0 0
      %561 = vmatprep.subr.bf16.mxu0 0
      %562 = vmatpush1.bf16.xpose.msra.mxu0 0
      %563 = vmatprep.subr.bf16.mxu0 0
      %564 = vmatpush1.bf16.xpose.msra.mxu0 0
      %565 = vmatprep.subr.bf16.mxu0 0
      %566 = vmatpush1.bf16.xpose.msra.mxu0 0
      %567 = vmatprep.subr.bf16.mxu0 0
      %568 = vmatpush1.bf16.xpose.msra.mxu0 0
      %569 = vmatprep.subr.bf16.mxu0 0
      %570 = vmatpush1.bf16.xpose.msra.mxu0 0
      %571 = vmatprep.subr.bf16.mxu0 0
      %572 = vmatpush1.bf16.xpose.msra.mxu0 0
      %573 = vmatprep.subr.bf16.mxu0 0
      %574 = vmatpush1.bf16.xpose.msra.mxu0 0
      %575 = vmatprep.subr.bf16.mxu0 0
      %576 = vmatpush1.bf16.xpose.msra.mxu0 0
      %577 = vmatprep.subr.bf16.mxu0 0
      %578 = vmatpush1.bf16.xpose.msra.mxu0 0
      %579 = vmatprep.mubr.bf16.mxu0 0
      %580 = vmatmul.mubr.bf16.gmra.mrb[0].mxu0 %v545
      %v581 = vpop.f32.mrb[0].mxu0
      %v582 = vadd.f32 %v418, %v581
      %v583 = vpop.f32.mrb[0].mxu0
      %v584 = vpop.f32.mrb[0].mxu0
      %v585 = vpop.f32.mrb[0].mxu0
      %586 = vdwg.mxu0
      %v587 = vsel %vm475, %v582, -inf
      %588 = vmax.xlane.f32.xlu0 %v587
      %v589 = vpop.xlane.xlu0 %588
      %v590 = vsub.f32 %v582, %v589
      %v591 = vmul.f32 %v590, 1.442695
      %v592 = vpow.pop %v591
      %v593 = vsel %vm475, %v592, 0.0
      %594 = vadd.xlane.f32.xlu0 %v593
      %v595 = vpop.xlane.xlu0 %594
      %v596 = vrcp.pop %v595
      %v597 = vpack.c.bf16 %v592, %v592
      %v599 = vsel %vm475, %v597, 0
      %v602 = vsel %vm490, %v543, 0
      %604 = vmatprep.subr.bf16.mxu0 0
      %605 = vmatpush1.bf16.msra.mxu0 %v602
      %606 = vmatprep.subr.bf16.mxu0 0
      %607 = vmatpush1.bf16.msra.mxu0 0
      %608 = vmatprep.subr.bf16.mxu0 0
      %609 = vmatpush1.bf16.msra.mxu0 0
      %610 = vmatprep.subr.bf16.mxu0 0
      %611 = vmatpush1.bf16.msra.mxu0 0
      %612 = vmatprep.subr.bf16.mxu0 0
      %613 = vmatpush1.bf16.msra.mxu0 0
      %614 = vmatprep.subr.bf16.mxu0 0
      %615 = vmatpush1.bf16.msra.mxu0 0
      %616 = vmatprep.subr.bf16.mxu0 0
      %617 = vmatpush1.bf16.msra.mxu0 0
      %618 = vmatprep.subr.bf16.mxu0 0
      %619 = vmatpush1.bf16.msra.mxu0 0
      %620 = vmatprep.subr.bf16.mxu0 0
      %621 = vmatpush1.bf16.msra.mxu0 0
      %622 = vmatprep.subr.bf16.mxu0 0
      %623 = vmatpush1.bf16.msra.mxu0 0
      %624 = vmatprep.subr.bf16.mxu0 0
      %625 = vmatpush1.bf16.msra.mxu0 0
      %626 = vmatprep.subr.bf16.mxu0 0
      %627 = vmatpush1.bf16.msra.mxu0 0
      %628 = vmatprep.subr.bf16.mxu0 0
      %629 = vmatpush1.bf16.msra.mxu0 0
      %630 = vmatprep.subr.bf16.mxu0 0
      %631 = vmatpush1.bf16.msra.mxu0 0
      %632 = vmatprep.subr.bf16.mxu0 0
      %633 = vmatpush1.bf16.msra.mxu0 0
      %634 = vmatprep.subr.bf16.mxu0 0
      %635 = vmatpush1.bf16.msra.mxu0 0
      %636 = vmatprep.mubr.bf16.mxu0 0
      %637 = vmatmul.mubr.bf16.gmra.mrb[0].mxu0 %v599
      %v638 = vpop.f32.mrb[0].mxu0
      %v639 = vadd.f32 0.0, %v638
      %v640 = vpop.f32.mrb[0].mxu0
      %v641 = vpop.f32.mrb[0].mxu0
      %v642 = vpop.f32.mrb[0].mxu0
      %643 = vdwg.mxu0
      %v644 = vmul.f32 %v639, %v596
      %v645 = vadd.f32 %v535, %v644
      %vm646 = vcmp.ge.s32.totalorder %v409, 8
      %vm647 = vcmp.lt.s32.totalorder %v409, 12
      %vm648 = vmand %vm646, %vm647
      %v649 = vsel %vm648, 1, 0
      %vm650 = vcmp.eq.s32.totalorder %v649, 1
      %vm651 = vmpackc.low %vm650, %vm650
      %v652 = vsel %vm651, %v419, 0
      %v653 = vsel %vm651, %v404, 0
      %v655 = vsel %vm428, %v652, 0
      %657 = vmatprep.subr.bf16.mxu0 0
      %658 = vmatpush1.bf16.xpose.msra.mxu0 %v433
      %659 = vmatprep.subr.bf16.mxu0 0
      %660 = vmatpush1.bf16.xpose.msra.mxu0 0
      %661 = vmatprep.subr.bf16.mxu0 0
      %662 = vmatpush1.bf16.xpose.msra.mxu0 0
      %663 = vmatprep.subr.bf16.mxu0 0
      %664 = vmatpush1.bf16.xpose.msra.mxu0 0
      %665 = vmatprep.subr.bf16.mxu0 0
      %666 = vmatpush1.bf16.xpose.msra.mxu0 0
      %667 = vmatprep.subr.bf16.mxu0 0
      %668 = vmatpush1.bf16.xpose.msra.mxu0 0
      %669 = vmatprep.subr.bf16.mxu0 0
      %670 = vmatpush1.bf16.xpose.msra.mxu0 0
      %671 = vmatprep.subr.bf16.mxu0 0
      %672 = vmatpush1.bf16.xpose.msra.mxu0 0
      %673 = vmatprep.subr.bf16.mxu0 0
      %674 = vmatpush1.bf16.xpose.msra.mxu0 0
      %675 = vmatprep.subr.bf16.mxu0 0
      %676 = vmatpush1.bf16.xpose.msra.mxu0 0
      %677 = vmatprep.subr.bf16.mxu0 0
      %678 = vmatpush1.bf16.xpose.msra.mxu0 0
      %679 = vmatprep.subr.bf16.mxu0 0
      %680 = vmatpush1.bf16.xpose.msra.mxu0 0
      %681 = vmatprep.subr.bf16.mxu0 0
      %682 = vmatpush1.bf16.xpose.msra.mxu0 0
      %683 = vmatprep.subr.bf16.mxu0 0
      %684 = vmatpush1.bf16.xpose.msra.mxu0 0
      %685 = vmatprep.subr.bf16.mxu0 0
      %686 = vmatpush1.bf16.xpose.msra.mxu0 0
      %687 = vmatprep.subr.bf16.mxu0 0
      %688 = vmatpush1.bf16.xpose.msra.mxu0 0
      %689 = vmatprep.mubr.bf16.mxu0 0
      %690 = vmatmul.mubr.bf16.gmra.mrb[0].mxu0 %v655
      %v691 = vpop.f32.mrb[0].mxu0
      %v692 = vadd.f32 %v418, %v691
      %v693 = vpop.f32.mrb[0].mxu0
      %v694 = vpop.f32.mrb[0].mxu0
      %v695 = vpop.f32.mrb[0].mxu0
      %696 = vdwg.mxu0
      %v697 = vsel %vm475, %v692, -inf
      %698 = vmax.xlane.f32.xlu0 %v697
      %v699 = vpop.xlane.xlu0 %698
      %v700 = vsub.f32 %v692, %v699
      %v701 = vmul.f32 %v700, 1.442695
      %v702 = vpow.pop %v701
      %v703 = vsel %vm475, %v702, 0.0
      %704 = vadd.xlane.f32.xlu0 %v703
      %v705 = vpop.xlane.xlu0 %704
      %v706 = vrcp.pop %v705
      %v707 = vpack.c.bf16 %v702, %v702
      %v709 = vsel %vm475, %v707, 0
      %v712 = vsel %vm490, %v653, 0
      %714 = vmatprep.subr.bf16.mxu0 0
      %715 = vmatpush1.bf16.msra.mxu0 %v712
      %716 = vmatprep.subr.bf16.mxu0 0
      %717 = vmatpush1.bf16.msra.mxu0 0
      %718 = vmatprep.subr.bf16.mxu0 0
      %719 = vmatpush1.bf16.msra.mxu0 0
      %720 = vmatprep.subr.bf16.mxu0 0
      %721 = vmatpush1.bf16.msra.mxu0 0
      %722 = vmatprep.subr.bf16.mxu0 0
      %723 = vmatpush1.bf16.msra.mxu0 0
      %724 = vmatprep.subr.bf16.mxu0 0
      %725 = vmatpush1.bf16.msra.mxu0 0
      %726 = vmatprep.subr.bf16.mxu0 0
      %727 = vmatpush1.bf16.msra.mxu0 0
      %728 = vmatprep.subr.bf16.mxu0 0
      %729 = vmatpush1.bf16.msra.mxu0 0
      %730 = vmatprep.subr.bf16.mxu0 0
      %731 = vmatpush1.bf16.msra.mxu0 0
      %732 = vmatprep.subr.bf16.mxu0 0
      %733 = vmatpush1.bf16.msra.mxu0 0
      %734 = vmatprep.subr.bf16.mxu0 0
      %735 = vmatpush1.bf16.msra.mxu0 0
      %736 = vmatprep.subr.bf16.mxu0 0
      %737 = vmatpush1.bf16.msra.mxu0 0
      %738 = vmatprep.subr.bf16.mxu0 0
      %739 = vmatpush1.bf16.msra.mxu0 0
      %740 = vmatprep.subr.bf16.mxu0 0
      %741 = vmatpush1.bf16.msra.mxu0 0
      %742 = vmatprep.subr.bf16.mxu0 0
      %743 = vmatpush1.bf16.msra.mxu0 0
      %744 = vmatprep.subr.bf16.mxu0 0
      %745 = vmatpush1.bf16.msra.mxu0 0
      %746 = vmatprep.mubr.bf16.mxu0 0
      %747 = vmatmul.mubr.bf16.gmra.mrb[0].mxu0 %v709
      %v748 = vpop.f32.mrb[0].mxu0
      %v749 = vadd.f32 0.0, %v748
      %v750 = vpop.f32.mrb[0].mxu0
      %v751 = vpop.f32.mrb[0].mxu0
      %v752 = vpop.f32.mrb[0].mxu0
      %753 = vdwg.mxu0
      %v754 = vmul.f32 %v749, %v706
      %v755 = vadd.f32 %v645, %v754
      %vm756 = vcmp.ge.s32.totalorder %v409, 12
      %vm757 = vcmp.lt.s32.totalorder %v409, 16
      %vm758 = vmand %vm756, %vm757
      %v759 = vsel %vm758, 1, 0
      %vm760 = vcmp.eq.s32.totalorder %v759, 1
      %vm761 = vmpackc.low %vm760, %vm760
      %v762 = vsel %vm761, %v419, 0
      %v763 = vsel %vm761, %v404, 0
      %v765 = vsel %vm428, %v762, 0
      %767 = vmatprep.subr.bf16.mxu0 0
      %768 = vmatpush1.bf16.xpose.msra.mxu0 %v433
      %769 = vmatprep.subr.bf16.mxu0 0
      %770 = vmatpush1.bf16.xpose.msra.mxu0 0
      %771 = vmatprep.subr.bf16.mxu0 0
      %772 = vmatpush1.bf16.xpose.msra.mxu0 0
      %773 = vmatprep.subr.bf16.mxu0 0
      %774 = vmatpush1.bf16.xpose.msra.mxu0 0
      %775 = vmatprep.subr.bf16.mxu0 0
      %776 = vmatpush1.bf16.xpose.msra.mxu0 0
      %777 = vmatprep.subr.bf16.mxu0 0
      %778 = vmatpush1.bf16.xpose.msra.mxu0 0
      %779 = vmatprep.subr.bf16.mxu0 0
      %780 = vmatpush1.bf16.xpose.msra.mxu0 0
      %781 = vmatprep.subr.bf16.mxu0 0
      %782 = vmatpush1.bf16.xpose.msra.mxu0 0
      %783 = vmatprep.subr.bf16.mxu0 0
      %784 = vmatpush1.bf16.xpose.msra.mxu0 0
      %785 = vmatprep.subr.bf16.mxu0 0
      %786 = vmatpush1.bf16.xpose.msra.mxu0 0
      %787 = vmatprep.subr.bf16.mxu0 0
      %788 = vmatpush1.bf16.xpose.msra.mxu0 0
      %789 = vmatprep.subr.bf16.mxu0 0
      %790 = vmatpush1.bf16.xpose.msra.mxu0 0
      %791 = vmatprep.subr.bf16.mxu0 0
      %792 = vmatpush1.bf16.xpose.msra.mxu0 0
      %793 = vmatprep.subr.bf16.mxu0 0
      %794 = vmatpush1.bf16.xpose.msra.mxu0 0
      %795 = vmatprep.subr.bf16.mxu0 0
      %796 = vmatpush1.bf16.xpose.msra.mxu0 0
      %797 = vmatprep.subr.bf16.mxu0 0
      %798 = vmatpush1.bf16.xpose.msra.mxu0 0
      %799 = vmatprep.mubr.bf16.mxu0 0
      %800 = vmatmul.mubr.bf16.gmra.mrb[0].mxu0 %v765
      %v801 = vpop.f32.mrb[0].mxu0
      %v802 = vadd.f32 %v418, %v801
      %v803 = vpop.f32.mrb[0].mxu0
      %v804 = vpop.f32.mrb[0].mxu0
      %v805 = vpop.f32.mrb[0].mxu0
      %806 = vdwg.mxu0
      %v807 = vsel %vm475, %v802, -inf
      %808 = vmax.xlane.f32.xlu0 %v807
      %v809 = vpop.xlane.xlu0 %808
      %v810 = vsub.f32 %v802, %v809
      %v811 = vmul.f32 %v810, 1.442695
      %v812 = vpow.pop %v811
      %v813 = vsel %vm475, %v812, 0.0
      %814 = vadd.xlane.f32.xlu0 %v813
      %v815 = vpop.xlane.xlu0 %814
      %v816 = vrcp.pop %v815
      %v817 = vpack.c.bf16 %v812, %v812
      %v819 = vsel %vm475, %v817, 0
      %v822 = vsel %vm490, %v763, 0
      %824 = vmatprep.subr.bf16.mxu0 0
      %825 = vmatpush1.bf16.msra.mxu0 %v822
      %826 = vmatprep.subr.bf16.mxu0 0
      %827 = vmatpush1.bf16.msra.mxu0 0
      %828 = vmatprep.subr.bf16.mxu0 0
      %829 = vmatpush1.bf16.msra.mxu0 0
      %830 = vmatprep.subr.bf16.mxu0 0
      %831 = vmatpush1.bf16.msra.mxu0 0
      %832 = vmatprep.subr.bf16.mxu0 0
      %833 = vmatpush1.bf16.msra.mxu0 0
      %834 = vmatprep.subr.bf16.mxu0 0
      %835 = vmatpush1.bf16.msra.mxu0 0
      %836 = vmatprep.subr.bf16.mxu0 0
      %837 = vmatpush1.bf16.msra.mxu0 0
      %838 = vmatprep.subr.bf16.mxu0 0
      %839 = vmatpush1.bf16.msra.mxu0 0
      %840 = vmatprep.subr.bf16.mxu0 0
      %841 = vmatpush1.bf16.msra.mxu0 0
      %842 = vmatprep.subr.bf16.mxu0 0
      %843 = vmatpush1.bf16.msra.mxu0 0
      %844 = vmatprep.subr.bf16.mxu0 0
      %845 = vmatpush1.bf16.msra.mxu0 0
      %846 = vmatprep.subr.bf16.mxu0 0
      %847 = vmatpush1.bf16.msra.mxu0 0
      %848 = vmatprep.subr.bf16.mxu0 0
      %849 = vmatpush1.bf16.msra.mxu0 0
      %850 = vmatprep.subr.bf16.mxu0 0
      %851 = vmatpush1.bf16.msra.mxu0 0
      %852 = vmatprep.subr.bf16.mxu0 0
      %853 = vmatpush1.bf16.msra.mxu0 0
      %854 = vmatprep.subr.bf16.mxu0 0
      %855 = vmatpush1.bf16.msra.mxu0 0
      %856 = vmatprep.mubr.bf16.mxu0 0
      %857 = vmatmul.mubr.bf16.gmra.mrb[0].mxu0 %v819
      %v858 = vpop.f32.mrb[0].mxu0
      %v859 = vadd.f32 0.0, %v858
      %v860 = vpop.f32.mrb[0].mxu0
      %v861 = vpop.f32.mrb[0].mxu0
      %v862 = vpop.f32.mrb[0].mxu0
      %863 = vdwg.mxu0
      %v864 = vmul.f32 %v859, %v816
      %v865 = vadd.f32 %v755, %v864
      %vm866 = vcmp.ge.s32.totalorder %v409, 16
      %vm867 = vcmp.lt.s32.totalorder %v409, 20
      %vm868 = vmand %vm866, %vm867
      %v869 = vsel %vm868, 1, 0
      %vm870 = vcmp.eq.s32.totalorder %v869, 1
      %vm871 = vmpackc.low %vm870, %vm870
      %v872 = vsel %vm871, %v419, 0
      %v873 = vsel %vm871, %v404, 0
      %v875 = vsel %vm428, %v872, 0
      %877 = vmatprep.subr.bf16.mxu0 0
      %878 = vmatpush1.bf16.xpose.msra.mxu0 %v433
      %879 = vmatprep.subr.bf16.mxu0 0
      %880 = vmatpush1.bf16.xpose.msra.mxu0 0
      %881 = vmatprep.subr.bf16.mxu0 0
      %882 = vmatpush1.bf16.xpose.msra.mxu0 0
      %883 = vmatprep.subr.bf16.mxu0 0
      %884 = vmatpush1.bf16.xpose.msra.mxu0 0
      %885 = vmatprep.subr.bf16.mxu0 0
      %886 = vmatpush1.bf16.xpose.msra.mxu0 0
      %887 = vmatprep.subr.bf16.mxu0 0
      %888 = vmatpush1.bf16.xpose.msra.mxu0 0
      %889 = vmatprep.subr.bf16.mxu0 0
      %890 = vmatpush1.bf16.xpose.msra.mxu0 0
      %891 = vmatprep.subr.bf16.mxu0 0
      %892 = vmatpush1.bf16.xpose.msra.mxu0 0
      %893 = vmatprep.subr.bf16.mxu0 0
      %894 = vmatpush1.bf16.xpose.msra.mxu0 0
      %895 = vmatprep.subr.bf16.mxu0 0
      %896 = vmatpush1.bf16.xpose.msra.mxu0 0
      %897 = vmatprep.subr.bf16.mxu0 0
      %898 = vmatpush1.bf16.xpose.msra.mxu0 0
      %899 = vmatprep.subr.bf16.mxu0 0
      %900 = vmatpush1.bf16.xpose.msra.mxu0 0
      %901 = vmatprep.subr.bf16.mxu0 0
      %902 = vmatpush1.bf16.xpose.msra.mxu0 0
      %903 = vmatprep.subr.bf16.mxu0 0
      %904 = vmatpush1.bf16.xpose.msra.mxu0 0
      %905 = vmatprep.subr.bf16.mxu0 0
      %906 = vmatpush1.bf16.xpose.msra.mxu0 0
      %907 = vmatprep.subr.bf16.mxu0 0
      %908 = vmatpush1.bf16.xpose.msra.mxu0 0
      %909 = vmatprep.mubr.bf16.mxu0 0
      %910 = vmatmul.mubr.bf16.gmra.mrb[0].mxu0 %v875
      %v911 = vpop.f32.mrb[0].mxu0
      %v912 = vadd.f32 %v418, %v911
      %v913 = vpop.f32.mrb[0].mxu0
      %v914 = vpop.f32.mrb[0].mxu0
      %v915 = vpop.f32.mrb[0].mxu0
      %916 = vdwg.mxu0
      %v917 = vsel %vm475, %v912, -inf
      %918 = vmax.xlane.f32.xlu0 %v917
      %v919 = vpop.xlane.xlu0 %918
      %v920 = vsub.f32 %v912, %v919
      %v921 = vmul.f32 %v920, 1.442695
      %v922 = vpow.pop %v921
      %v923 = vsel %vm475, %v922, 0.0
      %924 = vadd.xlane.f32.xlu0 %v923
      %v925 = vpop.xlane.xlu0 %924
      %v926 = vrcp.pop %v925
      %v927 = vpack.c.bf16 %v922, %v922
      %v929 = vsel %vm475, %v927, 0
      %v932 = vsel %vm490, %v873, 0
      %934 = vmatprep.subr.bf16.mxu0 0
      %935 = vmatpush1.bf16.msra.mxu0 %v932
      %936 = vmatprep.subr.bf16.mxu0 0
      %937 = vmatpush1.bf16.msra.mxu0 0
      %938 = vmatprep.subr.bf16.mxu0 0
      %939 = vmatpush1.bf16.msra.mxu0 0
      %940 = vmatprep.subr.bf16.mxu0 0
      %941 = vmatpush1.bf16.msra.mxu0 0
      %942 = vmatprep.subr.bf16.mxu0 0
      %943 = vmatpush1.bf16.msra.mxu0 0
      %944 = vmatprep.subr.bf16.mxu0 0
      %945 = vmatpush1.bf16.msra.mxu0 0
      %946 = vmatprep.subr.bf16.mxu0 0
      %947 = vmatpush1.bf16.msra.mxu0 0
      %948 = vmatprep.subr.bf16.mxu0 0
      %949 = vmatpush1.bf16.msra.mxu0 0
      %950 = vmatprep.subr.bf16.mxu0 0
      %951 = vmatpush1.bf16.msra.mxu0 0
      %952 = vmatprep.subr.bf16.mxu0 0
      %953 = vmatpush1.bf16.msra.mxu0 0
      %954 = vmatprep.subr.bf16.mxu0 0
      %955 = vmatpush1.bf16.msra.mxu0 0
      %956 = vmatprep.subr.bf16.mxu0 0
      %957 = vmatpush1.bf16.msra.mxu0 0
      %958 = vmatprep.subr.bf16.mxu0 0
      %959 = vmatpush1.bf16.msra.mxu0 0
      %960 = vmatprep.subr.bf16.mxu0 0
      %961 = vmatpush1.bf16.msra.mxu0 0
      %962 = vmatprep.subr.bf16.mxu0 0
      %963 = vmatpush1.bf16.msra.mxu0 0
      %964 = vmatprep.subr.bf16.mxu0 0
      %965 = vmatpush1.bf16.msra.mxu0 0
      %966 = vmatprep.mubr.bf16.mxu0 0
      %967 = vmatmul.mubr.bf16.gmra.mrb[0].mxu0 %v929
      %v968 = vpop.f32.mrb[0].mxu0
      %v969 = vadd.f32 0.0, %v968
      %v970 = vpop.f32.mrb[0].mxu0
      %v971 = vpop.f32.mrb[0].mxu0
      %v972 = vpop.f32.mrb[0].mxu0
      %973 = vdwg.mxu0
      %v974 = vmul.f32 %v969, %v926
      %v975 = vadd.f32 %v865, %v974
      %vm976 = vcmp.ge.s32.totalorder %v409, 20
      %vm977 = vcmp.lt.s32.totalorder %v409, 24
      %vm978 = vmand %vm976, %vm977
      %v979 = vsel %vm978, 1, 0
      %vm980 = vcmp.eq.s32.totalorder %v979, 1
      %vm981 = vmpackc.low %vm980, %vm980
      %v982 = vsel %vm981, %v419, 0
      %v983 = vsel %vm981, %v404, 0
      %v985 = vsel %vm428, %v982, 0
      %987 = vmatprep.subr.bf16.mxu0 0
      %988 = vmatpush1.bf16.xpose.msra.mxu0 %v433
      %989 = vmatprep.subr.bf16.mxu0 0
      %990 = vmatpush1.bf16.xpose.msra.mxu0 0
      %991 = vmatprep.subr.bf16.mxu0 0
      %992 = vmatpush1.bf16.xpose.msra.mxu0 0
      %993 = vmatprep.subr.bf16.mxu0 0
      %994 = vmatpush1.bf16.xpose.msra.mxu0 0
      %995 = vmatprep.subr.bf16.mxu0 0
      %996 = vmatpush1.bf16.xpose.msra.mxu0 0
      %997 = vmatprep.subr.bf16.mxu0 0
      %998 = vmatpush1.bf16.xpose.msra.mxu0 0
      %999 = vmatprep.subr.bf16.mxu0 0
      %1000 = vmatpush1.bf16.xpose.msra.mxu0 0
      %1001 = vmatprep.subr.bf16.mxu0 0
      %1002 = vmatpush1.bf16.xpose.msra.mxu0 0
      %1003 = vmatprep.subr.bf16.mxu0 0
      %1004 = vmatpush1.bf16.xpose.msra.mxu0 0
      %1005 = vmatprep.subr.bf16.mxu0 0
      %1006 = vmatpush1.bf16.xpose.msra.mxu0 0
      %1007 = vmatprep.subr.bf16.mxu0 0
      %1008 = vmatpush1.bf16.xpose.msra.mxu0 0
      %1009 = vmatprep.subr.bf16.mxu0 0
      %1010 = vmatpush1.bf16.xpose.msra.mxu0 0
      %1011 = vmatprep.subr.bf16.mxu0 0
      %1012 = vmatpush1.bf16.xpose.msra.mxu0 0
      %1013 = vmatprep.subr.bf16.mxu0 0
      %1014 = vmatpush1.bf16.xpose.msra.mxu0 0
      %1015 = vmatprep.subr.bf16.mxu0 0
      %1016 = vmatpush1.bf16.xpose.msra.mxu0 0
      %1017 = vmatprep.subr.bf16.mxu0 0
      %1018 = vmatpush1.bf16.xpose.msra.mxu0 0
      %1019 = vmatprep.mubr.bf16.mxu0 0
      %1020 = vmatmul.mubr.bf16.gmra.mrb[0].mxu0 %v985
      %v1021 = vpop.f32.mrb[0].mxu0
      %v1022 = vadd.f32 %v418, %v1021
      %v1023 = vpop.f32.mrb[0].mxu0
      %v1024 = vpop.f32.mrb[0].mxu0
      %v1025 = vpop.f32.mrb[0].mxu0
      %1026 = vdwg.mxu0
      %v1027 = vsel %vm475, %v1022, -inf
      %1028 = vmax.xlane.f32.xlu0 %v1027
      %v1029 = vpop.xlane.xlu0 %1028
      %v1030 = vsub.f32 %v1022, %v1029
      %v1031 = vmul.f32 %v1030, 1.442695
      %v1032 = vpow.pop %v1031
      %v1033 = vsel %vm475, %v1032, 0.0
      %1034 = vadd.xlane.f32.xlu0 %v1033
      %v1035 = vpop.xlane.xlu0 %1034
      %v1036 = vrcp.pop %v1035
      %v1037 = vpack.c.bf16 %v1032, %v1032
      %v1039 = vsel %vm475, %v1037, 0
      %v1042 = vsel %vm490, %v983, 0
      %1044 = vmatprep.subr.bf16.mxu0 0
      %1045 = vmatpush1.bf16.msra.mxu0 %v1042
      %1046 = vmatprep.subr.bf16.mxu0 0
      %1047 = vmatpush1.bf16.msra.mxu0 0
      %1048 = vmatprep.subr.bf16.mxu0 0
      %1049 = vmatpush1.bf16.msra.mxu0 0
      %1050 = vmatprep.subr.bf16.mxu0 0
      %1051 = vmatpush1.bf16.msra.mxu0 0
      %1052 = vmatprep.subr.bf16.mxu0 0
      %1053 = vmatpush1.bf16.msra.mxu0 0
      %1054 = vmatprep.subr.bf16.mxu0 0
      %1055 = vmatpush1.bf16.msra.mxu0 0
      %1056 = vmatprep.subr.bf16.mxu0 0
      %1057 = vmatpush1.bf16.msra.mxu0 0
      %1058 = vmatprep.subr.bf16.mxu0 0
      %1059 = vmatpush1.bf16.msra.mxu0 0
      %1060 = vmatprep.subr.bf16.mxu0 0
      %1061 = vmatpush1.bf16.msra.mxu0 0
      %1062 = vmatprep.subr.bf16.mxu0 0
      %1063 = vmatpush1.bf16.msra.mxu0 0
      %1064 = vmatprep.subr.bf16.mxu0 0
      %1065 = vmatpush1.bf16.msra.mxu0 0
      %1066 = vmatprep.subr.bf16.mxu0 0
      %1067 = vmatpush1.bf16.msra.mxu0 0
      %1068 = vmatprep.subr.bf16.mxu0 0
      %1069 = vmatpush1.bf16.msra.mxu0 0
      %1070 = vmatprep.subr.bf16.mxu0 0
      %1071 = vmatpush1.bf16.msra.mxu0 0
      %1072 = vmatprep.subr.bf16.mxu0 0
      %1073 = vmatpush1.bf16.msra.mxu0 0
      %1074 = vmatprep.subr.bf16.mxu0 0
      %1075 = vmatpush1.bf16.msra.mxu0 0
      %1076 = vmatprep.mubr.bf16.mxu0 0
      %1077 = vmatmul.mubr.bf16.gmra.mrb[0].mxu0 %v1039
      %v1078 = vpop.f32.mrb[0].mxu0
      %v1079 = vadd.f32 0.0, %v1078
      %v1080 = vpop.f32.mrb[0].mxu0
      %v1081 = vpop.f32.mrb[0].mxu0
      %v1082 = vpop.f32.mrb[0].mxu0
      %1083 = vdwg.mxu0
      %v1084 = vmul.f32 %v1079, %v1036
      %v1085 = vadd.f32 %v975, %v1084
      %vm1086 = vcmp.ge.s32.totalorder %v409, 24
      %vm1087 = vcmp.lt.s32.totalorder %v409, 28
      %vm1088 = vmand %vm1086, %vm1087
      %v1089 = vsel %vm1088, 1, 0
      %vm1090 = vcmp.eq.s32.totalorder %v1089, 1
      %vm1091 = vmpackc.low %vm1090, %vm1090
      %v1092 = vsel %vm1091, %v419, 0
      %v1093 = vsel %vm1091, %v404, 0
      %v1095 = vsel %vm428, %v1092, 0
      %1097 = vmatprep.subr.bf16.mxu0 0
      %1098 = vmatpush1.bf16.xpose.msra.mxu0 %v433
      %1099 = vmatprep.subr.bf16.mxu0 0
      %1100 = vmatpush1.bf16.xpose.msra.mxu0 0
      %1101 = vmatprep.subr.bf16.mxu0 0
      %1102 = vmatpush1.bf16.xpose.msra.mxu0 0
      %1103 = vmatprep.subr.bf16.mxu0 0
      %1104 = vmatpush1.bf16.xpose.msra.mxu0 0
      %1105 = vmatprep.subr.bf16.mxu0 0
      %1106 = vmatpush1.bf16.xpose.msra.mxu0 0
      %1107 = vmatprep.subr.bf16.mxu0 0
      %1108 = vmatpush1.bf16.xpose.msra.mxu0 0
      %1109 = vmatprep.subr.bf16.mxu0 0
      %1110 = vmatpush1.bf16.xpose.msra.mxu0 0
      %1111 = vmatprep.subr.bf16.mxu0 0
      %1112 = vmatpush1.bf16.xpose.msra.mxu0 0
      %1113 = vmatprep.subr.bf16.mxu0 0
      %1114 = vmatpush1.bf16.xpose.msra.mxu0 0
      %1115 = vmatprep.subr.bf16.mxu0 0
      %1116 = vmatpush1.bf16.xpose.msra.mxu0 0
      %1117 = vmatprep.subr.bf16.mxu0 0
      %1118 = vmatpush1.bf16.xpose.msra.mxu0 0
      %1119 = vmatprep.subr.bf16.mxu0 0
      %1120 = vmatpush1.bf16.xpose.msra.mxu0 0
      %1121 = vmatprep.subr.bf16.mxu0 0
      %1122 = vmatpush1.bf16.xpose.msra.mxu0 0
      %1123 = vmatprep.subr.bf16.mxu0 0
      %1124 = vmatpush1.bf16.xpose.msra.mxu0 0
      %1125 = vmatprep.subr.bf16.mxu0 0
      %1126 = vmatpush1.bf16.xpose.msra.mxu0 0
      %1127 = vmatprep.subr.bf16.mxu0 0
      %1128 = vmatpush1.bf16.xpose.msra.mxu0 0
      %1129 = vmatprep.mubr.bf16.mxu0 0
      %1130 = vmatmul.mubr.bf16.gmra.mrb[0].mxu0 %v1095
      %v1131 = vpop.f32.mrb[0].mxu0
      %v1132 = vadd.f32 %v418, %v1131
      %v1133 = vpop.f32.mrb[0].mxu0
      %v1134 = vpop.f32.mrb[0].mxu0
      %v1135 = vpop.f32.mrb[0].mxu0
      %1136 = vdwg.mxu0
      %v1137 = vsel %vm475, %v1132, -inf
      %1138 = vmax.xlane.f32.xlu0 %v1137
      %v1139 = vpop.xlane.xlu0 %1138
      %v1140 = vsub.f32 %v1132, %v1139
      %v1141 = vmul.f32 %v1140, 1.442695
      %v1142 = vpow.pop %v1141
      %v1143 = vsel %vm475, %v1142, 0.0
      %1144 = vadd.xlane.f32.xlu0 %v1143
      %v1145 = vpop.xlane.xlu0 %1144
      %v1146 = vrcp.pop %v1145
      %v1147 = vpack.c.bf16 %v1142, %v1142
      %v1149 = vsel %vm475, %v1147, 0
      %v1152 = vsel %vm490, %v1093, 0
      %1154 = vmatprep.subr.bf16.mxu0 0
      %1155 = vmatpush1.bf16.msra.mxu0 %v1152
      %1156 = vmatprep.subr.bf16.mxu0 0
      %1157 = vmatpush1.bf16.msra.mxu0 0
      %1158 = vmatprep.subr.bf16.mxu0 0
      %1159 = vmatpush1.bf16.msra.mxu0 0
      %1160 = vmatprep.subr.bf16.mxu0 0
      %1161 = vmatpush1.bf16.msra.mxu0 0
      %1162 = vmatprep.subr.bf16.mxu0 0
      %1163 = vmatpush1.bf16.msra.mxu0 0
      %1164 = vmatprep.subr.bf16.mxu0 0
      %1165 = vmatpush1.bf16.msra.mxu0 0
      %1166 = vmatprep.subr.bf16.mxu0 0
      %1167 = vmatpush1.bf16.msra.mxu0 0
      %1168 = vmatprep.subr.bf16.mxu0 0
      %1169 = vmatpush1.bf16.msra.mxu0 0
      %1170 = vmatprep.subr.bf16.mxu0 0
      %1171 = vmatpush1.bf16.msra.mxu0 0
      %1172 = vmatprep.subr.bf16.mxu0 0
      %1173 = vmatpush1.bf16.msra.mxu0 0
      %1174 = vmatprep.subr.bf16.mxu0 0
      %1175 = vmatpush1.bf16.msra.mxu0 0
      %1176 = vmatprep.subr.bf16.mxu0 0
      %1177 = vmatpush1.bf16.msra.mxu0 0
      %1178 = vmatprep.subr.bf16.mxu0 0
      %1179 = vmatpush1.bf16.msra.mxu0 0
      %1180 = vmatprep.subr.bf16.mxu0 0
      %1181 = vmatpush1.bf16.msra.mxu0 0
      %1182 = vmatprep.subr.bf16.mxu0 0
      %1183 = vmatpush1.bf16.msra.mxu0 0
      %1184 = vmatprep.subr.bf16.mxu0 0
      %1185 = vmatpush1.bf16.msra.mxu0 0
      %1186 = vmatprep.mubr.bf16.mxu0 0
      %1187 = vmatmul.mubr.bf16.gmra.mrb[0].mxu0 %v1149
      %v1188 = vpop.f32.mrb[0].mxu0
      %v1189 = vadd.f32 0.0, %v1188
      %v1190 = vpop.f32.mrb[0].mxu0
      %v1191 = vpop.f32.mrb[0].mxu0
      %v1192 = vpop.f32.mrb[0].mxu0
      %1193 = vdwg.mxu0
      %v1194 = vmul.f32 %v1189, %v1146
      %v1195 = vadd.f32 %v1085, %v1194
      %vm1196 = vcmp.ge.s32.totalorder %v409, 28
      %vm1197 = vcmp.lt.s32.totalorder %v409, 32
      %vm1198 = vmand %vm1196, %vm1197
      %v1199 = vsel %vm1198, 1, 0
      %vm1200 = vcmp.eq.s32.totalorder %v1199, 1
      %vm1201 = vmpackc.low %vm1200, %vm1200
      %v1202 = vsel %vm1201, %v419, 0
      %v1203 = vsel %vm1201, %v404, 0
      %v1205 = vsel %vm428, %v1202, 0
      %1207 = vmatprep.subr.bf16.mxu0 0
      %1208 = vmatpush1.bf16.xpose.msra.mxu0 %v433
      %1209 = vmatprep.subr.bf16.mxu0 0
      %1210 = vmatpush1.bf16.xpose.msra.mxu0 0
      %1211 = vmatprep.subr.bf16.mxu0 0
      %1212 = vmatpush1.bf16.xpose.msra.mxu0 0
      %1213 = vmatprep.subr.bf16.mxu0 0
      %1214 = vmatpush1.bf16.xpose.msra.mxu0 0
      %1215 = vmatprep.subr.bf16.mxu0 0
      %1216 = vmatpush1.bf16.xpose.msra.mxu0 0
      %1217 = vmatprep.subr.bf16.mxu0 0
      %1218 = vmatpush1.bf16.xpose.msra.mxu0 0
      %1219 = vmatprep.subr.bf16.mxu0 0
      %1220 = vmatpush1.bf16.xpose.msra.mxu0 0
      %1221 = vmatprep.subr.bf16.mxu0 0
      %1222 = vmatpush1.bf16.xpose.msra.mxu0 0
      %1223 = vmatprep.subr.bf16.mxu0 0
      %1224 = vmatpush1.bf16.xpose.msra.mxu0 0
      %1225 = vmatprep.subr.bf16.mxu0 0
      %1226 = vmatpush1.bf16.xpose.msra.mxu0 0
      %1227 = vmatprep.subr.bf16.mxu0 0
      %1228 = vmatpush1.bf16.xpose.msra.mxu0 0
      %1229 = vmatprep.subr.bf16.mxu0 0
      %1230 = vmatpush1.bf16.xpose.msra.mxu0 0
      %1231 = vmatprep.subr.bf16.mxu0 0
      %1232 = vmatpush1.bf16.xpose.msra.mxu0 0
      %1233 = vmatprep.subr.bf16.mxu0 0
      %1234 = vmatpush1.bf16.xpose.msra.mxu0 0
      %1235 = vmatprep.subr.bf16.mxu0 0
      %1236 = vmatpush1.bf16.xpose.msra.mxu0 0
      %1237 = vmatprep.subr.bf16.mxu0 0
      %1238 = vmatpush1.bf16.xpose.msra.mxu0 0
      %1239 = vmatprep.mubr.bf16.mxu0 0
      %1240 = vmatmul.mubr.bf16.gmra.mrb[0].mxu0 %v1205
      %v1241 = vpop.f32.mrb[0].mxu0
      %v1242 = vadd.f32 %v418, %v1241
      %v1243 = vpop.f32.mrb[0].mxu0
      %v1244 = vpop.f32.mrb[0].mxu0
      %v1245 = vpop.f32.mrb[0].mxu0
      %1246 = vdwg.mxu0
      %v1247 = vsel %vm475, %v1242, -inf
      %1248 = vmax.xlane.f32.xlu0 %v1247
      %v1249 = vpop.xlane.xlu0 %1248
      %v1250 = vsub.f32 %v1242, %v1249
      %v1251 = vmul.f32 %v1250, 1.442695
      %v1252 = vpow.pop %v1251
      %v1253 = vsel %vm475, %v1252, 0.0
      %1254 = vadd.xlane.f32.xlu0 %v1253
      %v1255 = vpop.xlane.xlu0 %1254
      %v1256 = vrcp.pop %v1255
      %v1257 = vpack.c.bf16 %v1252, %v1252
      %v1259 = vsel %vm475, %v1257, 0
      %v1262 = vsel %vm490, %v1203, 0
      %1264 = vmatprep.subr.bf16.mxu0 0
      %1265 = vmatpush1.bf16.msra.mxu0 %v1262
      %1266 = vmatprep.subr.bf16.mxu0 0
      %1267 = vmatpush1.bf16.msra.mxu0 0
      %1268 = vmatprep.subr.bf16.mxu0 0
      %1269 = vmatpush1.bf16.msra.mxu0 0
      %1270 = vmatprep.subr.bf16.mxu0 0
      %1271 = vmatpush1.bf16.msra.mxu0 0
      %1272 = vmatprep.subr.bf16.mxu0 0
      %1273 = vmatpush1.bf16.msra.mxu0 0
      %1274 = vmatprep.subr.bf16.mxu0 0
      %1275 = vmatpush1.bf16.msra.mxu0 0
      %1276 = vmatprep.subr.bf16.mxu0 0
      %1277 = vmatpush1.bf16.msra.mxu0 0
      %1278 = vmatprep.subr.bf16.mxu0 0
      %1279 = vmatpush1.bf16.msra.mxu0 0
      %1280 = vmatprep.subr.bf16.mxu0 0
      %1281 = vmatpush1.bf16.msra.mxu0 0
      %1282 = vmatprep.subr.bf16.mxu0 0
      %1283 = vmatpush1.bf16.msra.mxu0 0
      %1284 = vmatprep.subr.bf16.mxu0 0
      %1285 = vmatpush1.bf16.msra.mxu0 0
      %1286 = vmatprep.subr.bf16.mxu0 0
      %1287 = vmatpush1.bf16.msra.mxu0 0
      %1288 = vmatprep.subr.bf16.mxu0 0
      %1289 = vmatpush1.bf16.msra.mxu0 0
      %1290 = vmatprep.subr.bf16.mxu0 0
      %1291 = vmatpush1.bf16.msra.mxu0 0
      %1292 = vmatprep.subr.bf16.mxu0 0
      %1293 = vmatpush1.bf16.msra.mxu0 0
      %1294 = vmatprep.subr.bf16.mxu0 0
      %1295 = vmatpush1.bf16.msra.mxu0 0
      %1296 = vmatprep.mubr.bf16.mxu0 0
      %1297 = vmatmul.mubr.bf16.gmra.mrb[0].mxu0 %v1259
      %v1298 = vpop.f32.mrb[0].mxu0
      %v1299 = vadd.f32 0.0, %v1298
      %v1300 = vpop.f32.mrb[0].mxu0
      %v1301 = vpop.f32.mrb[0].mxu0
      %v1302 = vpop.f32.mrb[0].mxu0
      %1303 = vdwg.mxu0
      %v1304 = vmul.f32 %v1299, %v1256
      %v1305 = vadd.f32 %v1195, %v1304
      %v1306 = vpack.c.bf16 %v1305, %v1305
      %v1307 = vld [vmem:[%s5] sm:$0xf]
      %v1308 = vld [vmem:[%s5 + $0x4] sm:$0xf]
      %v1309 = vld [vmem:[%s5 + $0x8] sm:$0xf]
      %v1310 = vld [vmem:[%s5 + $0xc] sm:$0xf]
      %v1311 = vld [vmem:[%s6] sm:$0x1]
      %v1313 = vlaneseq
      %v1314 = vshrl.u32 %v1313, 7
      %v1315 = vsub.s32 0, %v1314
      %v1316 = vrot.slane %v1311, %v1315
      %v1322 = vunpack.c.l.b16 %v1307
      %v1323 = vunpack.c.l.b16 %v1308
      %v1324 = vunpack.c.l.b16 %v1309
      %v1325 = vunpack.c.l.b16 %v1310
      %v1326 = vpack.c.b16 %v1323, %v1322
      %v1327 = vpack.c.b16 %v1325, %v1324
      %v1331 = vsel %vm428, %v1306, 0
      %1333 = vmatprep.subr.bf16.mxu0 0
      %1334 = vmatpush1.bf16.msra.mxu0 %v1326
      %1335 = vmatprep.subr.bf16.mxu0 0
      %1336 = vmatpush1.bf16.msra.mxu0 %v1327
      %1337 = vmatprep.subr.bf16.mxu0 0
      %1338 = vmatpush1.bf16.msra.mxu0 0
      %1339 = vmatprep.subr.bf16.mxu0 0
      %1340 = vmatpush1.bf16.msra.mxu0 0
      %1341 = vmatprep.subr.bf16.mxu0 0
      %1342 = vmatpush1.bf16.msra.mxu0 0
      %1343 = vmatprep.subr.bf16.mxu0 0
      %1344 = vmatpush1.bf16.msra.mxu0 0
      %1345 = vmatprep.subr.bf16.mxu0 0
      %1346 = vmatpush1.bf16.msra.mxu0 0
      %1347 = vmatprep.subr.bf16.mxu0 0
      %1348 = vmatpush1.bf16.msra.mxu0 0
      %1349 = vmatprep.subr.bf16.mxu0 0
      %1350 = vmatpush1.bf16.msra.mxu0 0
      %1351 = vmatprep.subr.bf16.mxu0 0
      %1352 = vmatpush1.bf16.msra.mxu0 0
      %1353 = vmatprep.subr.bf16.mxu0 0
      %1354 = vmatpush1.bf16.msra.mxu0 0
      %1355 = vmatprep.subr.bf16.mxu0 0
      %1356 = vmatpush1.bf16.msra.mxu0 0
      %1357 = vmatprep.subr.bf16.mxu0 0
      %1358 = vmatpush1.bf16.msra.mxu0 0
      %1359 = vmatprep.subr.bf16.mxu0 0
      %1360 = vmatpush1.bf16.msra.mxu0 0
      %1361 = vmatprep.subr.bf16.mxu0 0
      %1362 = vmatpush1.bf16.msra.mxu0 0
      %1363 = vmatprep.subr.bf16.mxu0 0
      %1364 = vmatpush1.bf16.msra.mxu0 0
      %1365 = vmatprep.mubr.bf16.mxu0 0
      %1366 = vmatmul.mubr.bf16.gmra.mrb[0].mxu0 %v1331
      %v1367 = vpop.f32.mrb[0].mxu0
      %v1368 = vadd.f32 %v1316, %v1367
      %v1369 = vpop.f32.mrb[0].mxu0
      %v1370 = vpop.f32.mrb[0].mxu0
      %v1371 = vpop.f32.mrb[0].mxu0
      %1372 = vdwg.mxu0
      %v1373 = vld [vmem:[%s394] sm:$0xf]
      %v1374 = vunpack.c.l.bf16 %v1373
      %v1375 = vadd.f32 %v1368, %v1374
      %v1376 = vld [vmem:[%s7] sm:$0x1]
      %v1377 = vld [vmem:[%s8] sm:$0x1]
      %v1378 = vsel %vm428, %v1375, 0.0
      %1379 = vadd.xlane.f32.xlu0 %v1378
      %v1380 = vpop.xlane.xlu0 %1379
      %v1381 = vrcp.pop 32.0
      %v1382 = vmul.f32 %v1380, %v1381
      %v1383 = vsub.f32 %v1375, %v1382
      %v1384 = vmul.f32 %v1383, %v1383
      %v1385 = vsel %vm428, %v1384, 0.0
      %1386 = vadd.xlane.f32.xlu0 %v1385
      %v1387 = vpop.xlane.xlu0 %1386
      %v1388 = vmul.f32 %v1387, %v1381
      %v1389 = vadd.f32 %v1388, 1e-05
      %v1390 = vrsqrt.pop %v1389
      %v1391 = vmul.f32 %v1383, %v1390
      %v1393 = vlaneseq
      %v1394 = vshrl.u32 %v1393, 7
      %v1395 = vsub.s32 0, %v1394
      %v1396 = vrot.slane %v1376, %v1395
      %v1398 = vmul.f32 %v1391, %v1396
      %v1400 = vlaneseq
      %v1401 = vshrl.u32 %v1400, 7
      %v1402 = vsub.s32 0, %v1401
      %v1403 = vrot.slane %v1377, %v1402
      %v1405 = vadd.f32 %v1398, %v1403
      %v1406 = vpack.c.bf16 %v1405, %v1405
      %vm1407 = vcmask 257024
      %1408 = vst.msk [vmem:[%s398] sm:$0xf] %vm1407, %v1406
      %p1409 = scmp.lt.s32.totalorder %s20, 1
      %s1410 = scalar_select %p1409, %s20, 1
      %s1411 = smul.addr %s1410, 4
      %s1412 = scalar_lea.vmem %s9, %s1411
      // Predicated region
      $region57: #{model_forward.28} parent=55 // pred_check
        %p1413 = pneg %p252
      $region58: #{model_forward.28} parent=55 // pred_check_branch
        %1415 = sbr.rel (%p1413) target = $region60
      $region59: #{model_forward.28} parent=55 // pred_region
        _
      $region60: #{model_forward.28} parent=55 // pred_fallthru
        _
    $region56: #{model_forward.28} parent=5 // pred_fallthru
      _
    %p1416 = scmp.le.s32.totalorder 2, %s15
    // Predicated region
    $region61: #{model_forward.28} parent=5 // pred_check
      %p1417 = pneg %p1416
    $region62: #{model_forward.28} parent=5 // pred_check_branch
      %1419 = sbr.rel (%p1417) target = $region64
    $region63: #{model_forward.28} parent=5 // pred_region
      %s1420 = ssub.s32 %s15, 2
      // Predicated region
      $region65: #{model_forward.28} parent=63 // pred_check
        %p1421 = pneg %p258
      $region66: #{model_forward.28} parent=63 // pred_check_branch
        %1423 = sbr.rel (%p1421) target = $region68
      $region67: #{model_forward.28} parent=63 // pred_region
        %p1424 = scmp.lt.s32.totalorder %s21, 1
        %s1425 = scalar_select %p1424, %s21, 1
        %s1426 = smul.addr %s1425, 4
        %s1427 = scalar_lea.vmem %s9, %s1426
      $region68: #{model_forward.28} parent=63 // pred_fallthru
        _
    $region64: #{model_forward.28} parent=5 // pred_fallthru
      _
  $region6: #{model_forward.28} parent=0 // loop_footer
    %s19 = sadd.s32 1, %s15
  $region7: #{model_forward.28} parent=0 // loop_footer_branch
    %14 = sbr.rel target = $region3
  $region8: #{model_forward.28} parent=0 // loop_exit
    _

// kernel: model_forward.21
$region0: #{model_forward.21}
  #allocation0 [shape = 'u32[]', space=smem, size = 0x4, offset = 0x4, fixed_abs, tag = 'smem constant byte address 0x4 - core index']
  #allocation1 [shape = 'u32[144,128]{1,0:T(1,128)}', space=vmem, size = 0x12000, scoped, tag = 'internal scratch']
  %s0 = inlined_call_operand.vmem [shape: bf16[3,2,8,32], index: 0, kind: input, shape index: {}, may-alias: {0,1,2}]
  %s1 = inlined_call_operand.vmem [shape: bf16[3,2,8,32], index: 1, kind: input, shape index: {}, may-alias: {0,1,2}]
  %s2 = inlined_call_operand.vmem [shape: bf16[3,2,8,32], index: 2, kind: input, shape index: {}, may-alias: {0,1,2}]
  %s3 = inlined_call_operand.vmem [shape: f32[2,1,8], index: 3, kind: input, shape index: {}]
  %s4 = inlined_call_operand.vmem [shape: bf16[2,8,32], index: 4, kind: input, shape index: {}]
  %s5 = inlined_call_operand.vmem [shape: bf16[32,32], index: 5, kind: input, shape index: {}]
  %s6 = inlined_call_operand.vmem [shape: f32[1,32], index: 6, kind: input, shape index: {}]
  %s7 = inlined_call_operand.vmem [shape: f32[1,32], index: 7, kind: input, shape index: {}]
  %s8 = inlined_call_operand.vmem [shape: f32[1,32], index: 8, kind: input, shape index: {}]
  %s9 = inlined_call_operand.vmem [shape: bf16[2,8,32], index: 9, kind: output, shape index: {}]
  %s10 = sld [smem:[#allocation0]]
  $region69: #{model_forward.21} parent=0
    _
  %s12 = ssub.s32 1, %s10
  %s13 = scalar_select 0, %s12, %s10
  loop: start=0, step=1, limit=4
  $region2: #{model_forward.21} parent=0 // loop_pre_header
    _
  $region3: #{model_forward.21} parent=0 // loop_header
    %s15 = sphi 0, %s19
    %p16 = scmp.ge.s32.totalorder %s15, 4
    %s25 = sphi 0, %s27
    %s28 = sphi 0, %s25
    %s29 = sphi 0, %s28
    %s45 = sphi 0, %s29
    %s51 = sphi 0, %s53
    %s54 = sphi 0, %s51
    %s55 = sphi 0, %s54
    %s71 = sphi 0, %s55
    %s77 = sphi 0, %s79
    %s80 = sphi 0, %s77
    %s81 = sphi 0, %s80
    %s97 = sphi 0, %s81
    %s103 = sphi 0, %s105
    %s106 = sphi 0, %s103
    %s107 = sphi 0, %s106
    %s123 = sphi 0, %s107
    %s129 = sphi 0, %s131
    %s132 = sphi 0, %s129
    %s133 = sphi 0, %s132
    %s149 = sphi 0, %s133
    %s153 = sphi 0, %s153
    %s155 = sphi 0, %s153
    %s156 = sphi 0, %s155
    %s170 = sphi 0, %s156
    %s174 = sphi 0, %s174
    %s176 = sphi 0, %s174
    %s177 = sphi 0, %s176
    %s191 = sphi 0, %s177
    %s195 = sphi 0, %s195
    %s197 = sphi 0, %s195
    %s198 = sphi 0, %s197
    %s212 = sphi 0, %s198
    %s216 = sphi 0, %s216
    %s218 = sphi 0, %s216
    %s219 = sphi 0, %s218
    %s233 = sphi 0, %s219
    %s239 = sphi 0, %s241
    %s242 = sphi 0, %s239
    %s243 = sphi 0, %s242
    %s259 = sphi 0, %s243
  $region4: #{model_forward.21} parent=0 // loop_header_branch
    %18 = sbr.rel (%p16) target = $region8
  $region5: #{model_forward.21} parent=0 // loop_body
    %s20 = ssub.s32 %s15, 1
    %s21 = ssub.s32 %s15, 2
    %s22 = sadd.s32 %s15, 1
    %s23 = ssub.s32 %s15, %s22
    %p24 = scmp.eq.s32.totalorder %s23, 0
    %s26 = sadd.s32 %s25, 1
    %s27 = scalar_select %p24, %s25, %s26
    %p30 = pneg %p24
    %p31 = scmp.eq.s32.totalorder %s15, 1
    %p32 = por %p30, %p31
    %p33 = scmp.ne.s32.totalorder %s25, %s28
    %p34 = scmp.eq.s32.totalorder %s15, 0
    %p35 = por %p33, %p34
    %p36 = scmp.ne.s32.totalorder %s25, %s28
    %p37 = scmp.eq.s32.totalorder %s20, 1
    %p38 = por %p36, %p37
    %p39 = scmp.ne.s32.totalorder %s28, %s29
    %p40 = scmp.eq.s32.totalorder %s20, 0
    %p41 = por %p39, %p40
    %p42 = scmp.ne.s32.totalorder %s28, %s29
    %p43 = scmp.eq.s32.totalorder %s21, 1
    %p44 = por %p42, %p43
    %p46 = scmp.ne.s32.totalorder %s29, %s45
    %p47 = scmp.eq.s32.totalorder %s21, 0
    %p48 = por %p46, %p47
    %s49 = ssub.s32 %s15, %s22
    %p50 = scmp.eq.s32.totalorder %s49, 0
    %s52 = sadd.s32 %s51, 1
    %s53 = scalar_select %p50, %s51, %s52
    %p56 = pneg %p50
    %p57 = scmp.eq.s32.totalorder %s15, 1
    %p58 = por %p56, %p57
    %p59 = scmp.ne.s32.totalorder %s51, %s54
    %p60 = scmp.eq.s32.totalorder %s15, 0
    %p61 = por %p59, %p60
    %p62 = scmp.ne.s32.totalorder %s51, %s54
    %p63 = scmp.eq.s32.totalorder %s20, 1
    %p64 = por %p62, %p63
    %p65 = scmp.ne.s32.totalorder %s54, %s55
    %p66 = scmp.eq.s32.totalorder %s20, 0
    %p67 = por %p65, %p66
    %p68 = scmp.ne.s32.totalorder %s54, %s55
    %p69 = scmp.eq.s32.totalorder %s21, 1
    %p70 = por %p68, %p69
    %p72 = scmp.ne.s32.totalorder %s55, %s71
    %p73 = scmp.eq.s32.totalorder %s21, 0
    %p74 = por %p72, %p73
    %s75 = ssub.s32 %s15, %s22
    %p76 = scmp.eq.s32.totalorder %s75, 0
    %s78 = sadd.s32 %s77, 1
    %s79 = scalar_select %p76, %s77, %s78
    %p82 = pneg %p76
    %p83 = scmp.eq.s32.totalorder %s15, 1
    %p84 = por %p82, %p83
    %p85 = scmp.ne.s32.totalorder %s77, %s80
    %p86 = scmp.eq.s32.totalorder %s15, 0
    %p87 = por %p85, %p86
    %p88 = scmp.ne.s32.totalorder %s77, %s80
    %p89 = scmp.eq.s32.totalorder %s20, 1
    %p90 = por %p88, %p89
    %p91 = scmp.ne.s32.totalorder %s80, %s81
    %p92 = scmp.eq.s32.totalorder %s20, 0
    %p93 = por %p91, %p92
    %p94 = scmp.ne.s32.totalorder %s80, %s81
    %p95 = scmp.eq.s32.totalorder %s21, 1
    %p96 = por %p94, %p95
    %p98 = scmp.ne.s32.totalorder %s81, %s97
    %p99 = scmp.eq.s32.totalorder %s21, 0
    %p100 = por %p98, %p99
    %s101 = ssub.s32 %s15, %s22
    %p102 = scmp.eq.s32.totalorder %s101, 0
    %s104 = sadd.s32 %s103, 1
    %s105 = scalar_select %p102, %s103, %s104
    %p108 = pneg %p102
    %p109 = scmp.eq.s32.totalorder %s15, 1
    %p110 = por %p108, %p109
    %p111 = scmp.ne.s32.totalorder %s103, %s106
    %p112 = scmp.eq.s32.totalorder %s15, 0
    %p113 = por %p111, %p112
    %p114 = scmp.ne.s32.totalorder %s103, %s106
    %p115 = scmp.eq.s32.totalorder %s20, 1
    %p116 = por %p114, %p115
    %p117 = scmp.ne.s32.totalorder %s106, %s107
    %p118 = scmp.eq.s32.totalorder %s20, 0
    %p119 = por %p117, %p118
    %p120 = scmp.ne.s32.totalorder %s106, %s107
    %p121 = scmp.eq.s32.totalorder %s21, 1
    %p122 = por %p120, %p121
    %p124 = scmp.ne.s32.totalorder %s107, %s123
    %p125 = scmp.eq.s32.totalorder %s21, 0
    %p126 = por %p124, %p125
    %s127 = ssub.s32 %s15, %s22
    %p128 = scmp.eq.s32.totalorder %s127, 0
    %s130 = sadd.s32 %s129, 1
    %s131 = scalar_select %p128, %s129, %s130
    %p134 = pneg %p128
    %p135 = scmp.eq.s32.totalorder %s15, 1
    %p136 = por %p134, %p135
    %p137 = scmp.ne.s32.totalorder %s129, %s132
    %p138 = scmp.eq.s32.totalorder %s15, 0
    %p139 = por %p137, %p138
    %p140 = scmp.ne.s32.totalorder %s129, %s132
    %p141 = scmp.eq.s32.totalorder %s20, 1
    %p142 = por %p140, %p141
    %p143 = scmp.ne.s32.totalorder %s132, %s133
    %p144 = scmp.eq.s32.totalorder %s20, 0
    %p145 = por %p143, %p144
    %p146 = scmp.ne.s32.totalorder %s132, %s133
    %p147 = scmp.eq.s32.totalorder %s21, 1
    %p148 = por %p146, %p147
    %p150 = scmp.ne.s32.totalorder %s133, %s149
    %p151 = scmp.eq.s32.totalorder %s21, 0
    %p152 = por %p150, %p151
    %s154 = sadd.s32 %s153, 1
    %p157 = scmp.eq.s32.totalorder %s15, 1
    %p158 = scmp.ne.s32.totalorder %s153, %s155
    %p159 = scmp.eq.s32.totalorder %s15, 0
    %p160 = por %p158, %p159
    %p161 = scmp.ne.s32.totalorder %s153, %s155
    %p162 = scmp.eq.s32.totalorder %s20, 1
    %p163 = por %p161, %p162
    %p164 = scmp.ne.s32.totalorder %s155, %s156
    %p165 = scmp.eq.s32.totalorder %s20, 0
    %p166 = por %p164, %p165
    %p167 = scmp.ne.s32.totalorder %s155, %s156
    %p168 = scmp.eq.s32.totalorder %s21, 1
    %p169 = por %p167, %p168
    %p171 = scmp.ne.s32.totalorder %s156, %s170
    %p172 = scmp.eq.s32.totalorder %s21, 0
    %p173 = por %p171, %p172
    %s175 = sadd.s32 %s174, 1
    %p178 = scmp.eq.s32.totalorder %s15, 1
    %p179 = scmp.ne.s32.totalorder %s174, %s176
    %p180 = scmp.eq.s32.totalorder %s15, 0
    %p181 = por %p179, %p180
    %p182 = scmp.ne.s32.totalorder %s174, %s176
    %p183 = scmp.eq.s32.totalorder %s20, 1
    %p184 = por %p182, %p183
    %p185 = scmp.ne.s32.totalorder %s176, %s177
    %p186 = scmp.eq.s32.totalorder %s20, 0
    %p187 = por %p185, %p186
    %p188 = scmp.ne.s32.totalorder %s176, %s177
    %p189 = scmp.eq.s32.totalorder %s21, 1
    %p190 = por %p188, %p189
    %p192 = scmp.ne.s32.totalorder %s177, %s191
    %p193 = scmp.eq.s32.totalorder %s21, 0
    %p194 = por %p192, %p193
    %s196 = sadd.s32 %s195, 1
    %p199 = scmp.eq.s32.totalorder %s15, 1
    %p200 = scmp.ne.s32.totalorder %s195, %s197
    %p201 = scmp.eq.s32.totalorder %s15, 0
    %p202 = por %p200, %p201
    %p203 = scmp.ne.s32.totalorder %s195, %s197
    %p204 = scmp.eq.s32.totalorder %s20, 1
    %p205 = por %p203, %p204
    %p206 = scmp.ne.s32.totalorder %s197, %s198
    %p207 = scmp.eq.s32.totalorder %s20, 0
    %p208 = por %p206, %p207
    %p209 = scmp.ne.s32.totalorder %s197, %s198
    %p210 = scmp.eq.s32.totalorder %s21, 1
    %p211 = por %p209, %p210
    %p213 = scmp.ne.s32.totalorder %s198, %s212
    %p214 = scmp.eq.s32.totalorder %s21, 0
    %p215 = por %p213, %p214
    %s217 = sadd.s32 %s216, 1
    %p220 = scmp.eq.s32.totalorder %s15, 1
    %p221 = scmp.ne.s32.totalorder %s216, %s218
    %p222 = scmp.eq.s32.totalorder %s15, 0
    %p223 = por %p221, %p222
    %p224 = scmp.ne.s32.totalorder %s216, %s218
    %p225 = scmp.eq.s32.totalorder %s20, 1
    %p226 = por %p224, %p225
    %p227 = scmp.ne.s32.totalorder %s218, %s219
    %p228 = scmp.eq.s32.totalorder %s20, 0
    %p229 = por %p227, %p228
    %p230 = scmp.ne.s32.totalorder %s218, %s219
    %p231 = scmp.eq.s32.totalorder %s21, 1
    %p232 = por %p230, %p231
    %p234 = scmp.ne.s32.totalorder %s219, %s233
    %p235 = scmp.eq.s32.totalorder %s21, 0
    %p236 = por %p234, %p235
    %s237 = ssub.s32 %s15, %s22
    %p238 = scmp.eq.s32.totalorder %s237, 0
    %s240 = sadd.s32 %s239, 1
    %s241 = scalar_select %p238, %s239, %s240
    %p244 = pneg %p238
    %p245 = scmp.eq.s32.totalorder %s15, 1
    %p246 = por %p244, %p245
    %p247 = scmp.ne.s32.totalorder %s239, %s242
    %p248 = scmp.eq.s32.totalorder %s15, 0
    %p249 = por %p247, %p248
    %p250 = scmp.ne.s32.totalorder %s239, %s242
    %p251 = scmp.eq.s32.totalorder %s20, 1
    %p252 = por %p250, %p251
    %p253 = scmp.ne.s32.totalorder %s242, %s243
    %p254 = scmp.eq.s32.totalorder %s20, 0
    %p255 = por %p253, %p254
    %p256 = scmp.ne.s32.totalorder %s242, %s243
    %p257 = scmp.eq.s32.totalorder %s21, 1
    %p258 = por %p256, %p257
    %p260 = scmp.ne.s32.totalorder %s243, %s259
    %p261 = scmp.eq.s32.totalorder %s21, 0
    %p262 = por %p260, %p261
    %p263 = scmp.le.s32.totalorder 1, %s15
    %p264 = scmp.lt.s32.totalorder %s15, 3
    %p265 = pnand %p263, %p264
    %p266 = pneg %p265
    // Predicated region
    $region9: #{model_forward.21} parent=5 // pred_check
      _
    $region10: #{model_forward.21} parent=5 // pred_check_branch
      %268 = sbr.rel (%p265) target = $region12
    $region11: #{model_forward.21} parent=5 // pred_region
      %s269 = ssub.s32 %s15, 1
      // Predicated region
      $region13: #{model_forward.21} parent=11 // pred_check
        %p270 = pneg %p166
      $region14: #{model_forward.21} parent=11 // pred_check_branch
        %272 = sbr.rel (%p270) target = $region16
      $region15: #{model_forward.21} parent=11 // pred_region
        _
      $region16: #{model_forward.21} parent=11 // pred_fallthru
        _
      // Predicated region
      $region17: #{model_forward.21} parent=11 // pred_check
        %p273 = pneg %p187
      $region18: #{model_forward.21} parent=11 // pred_check_branch
        %275 = sbr.rel (%p273) target = $region20
      $region19: #{model_forward.21} parent=11 // pred_region
        _
      $region20: #{model_forward.21} parent=11 // pred_fallthru
        _
      // Predicated region
      $region21: #{model_forward.21} parent=11 // pred_check
        %p276 = pneg %p208
      $region22: #{model_forward.21} parent=11 // pred_check_branch
        %278 = sbr.rel (%p276) target = $region24
      $region23: #{model_forward.21} parent=11 // pred_region
        _
      $region24: #{model_forward.21} parent=11 // pred_fallthru
        _
      // Predicated region
      $region25: #{model_forward.21} parent=11 // pred_check
        %p279 = pneg %p229
      $region26: #{model_forward.21} parent=11 // pred_check_branch
        %281 = sbr.rel (%p279) target = $region28
      $region27: #{model_forward.21} parent=11 // pred_region
        _
      $region28: #{model_forward.21} parent=11 // pred_fallthru
        _
    $region12: #{model_forward.21} parent=5 // pred_fallthru
      _
    %p282 = scmp.lt.s32.totalorder %s15, 2
    // Predicated region
    $region29: #{model_forward.21} parent=5 // pred_check
      %p283 = pneg %p282
    $region30: #{model_forward.21} parent=5 // pred_check_branch
      %285 = sbr.rel (%p283) target = $region32
    $region31: #{model_forward.21} parent=5 // pred_region
      // Predicated region
      $region33: #{model_forward.21} parent=31 // pred_check
        %p286 = pneg %p35
      $region34: #{model_forward.21} parent=31 // pred_check_branch
        %288 = sbr.rel (%p286) target = $region36
      $region35: #{model_forward.21} parent=31 // pred_region
        %p289 = scmp.lt.s32.totalorder %s15, 1
        %s290 = scalar_select %p289, %s15, 1
        %s291 = smul.addr %s290, 4
        %s292 = scalar_lea.vmem %s0, %s291
      $region36: #{model_forward.21} parent=31 // pred_fallthru
        _
      // Predicated region
      $region37: #{model_forward.21} parent=31 // pred_check
        %p293 = pneg %p61
      $region38: #{model_forward.21} parent=31 // pred_check_branch
        %295 = sbr.rel (%p293) target = $region40
      $region39: #{model_forward.21} parent=31 // pred_region
        %p296 = scmp.lt.s32.totalorder %s15, 1
        %s297 = scalar_select %p296, %s15, 1
        %s298 = sadd.s32 %s297, 2
        %s299 = smul.addr %s298, 4
        %s300 = scalar_lea.vmem %s1, %s299
      $region40: #{model_forward.21} parent=31 // pred_fallthru
        _
      // Predicated region
      $region41: #{model_forward.21} parent=31 // pred_check
        %p301 = pneg %p87
      $region42: #{model_forward.21} parent=31 // pred_check_branch
        %303 = sbr.rel (%p301) target = $region44
      $region43: #{model_forward.21} parent=31 // pred_region
        %p304 = scmp.lt.s32.totalorder %s15, 1
        %s305 = scalar_select %p304, %s15, 1
        %s306 = sadd.s32 %s305, 4
        %s307 = smul.addr %s306, 4
        %s308 = scalar_lea.vmem %s2, %s307
      $region44: #{model_forward.21} parent=31 // pred_fallthru
        _
      // Predicated region
      $region45: #{model_forward.21} parent=31 // pred_check
        %p309 = pneg %p113
      $region46: #{model_forward.21} parent=31 // pred_check_branch
        %311 = sbr.rel (%p309) target = $region48
      $region47: #{model_forward.21} parent=31 // pred_region
        %p312 = scmp.lt.s32.totalorder %s15, 1
        %s313 = scalar_select %p312, %s15, 1
        %s314 = scalar_lea.vmem %s3, %s313
      $region48: #{model_forward.21} parent=31 // pred_fallthru
        _
      // Predicated region
      $region49: #{model_forward.21} parent=31 // pred_check
        %p315 = pneg %p139
      $region50: #{model_forward.21} parent=31 // pred_check_branch
        %317 = sbr.rel (%p315) target = $region52
      $region51: #{model_forward.21} parent=31 // pred_region
        %p318 = scmp.lt.s32.totalorder %s15, 1
        %s319 = scalar_select %p318, %s15, 1
        %s320 = smul.addr %s319, 4
        %s321 = scalar_lea.vmem %s4, %s320
      $region52: #{model_forward.21} parent=31 // pred_fallthru
        _
    $region32: #{model_forward.21} parent=5 // pred_fallthru
      _
    %p322 = scmp.le.s32.totalorder 1, %s15
    %p323 = scmp.lt.s32.totalorder %s15, 3
    %p324 = pnand %p322, %p323
    %p325 = pneg %p324
    // Predicated region
    $region53: #{model_forward.21} parent=5 // pred_check
      _
    $region54: #{model_forward.21} parent=5 // pred_check_branch
      %327 = sbr.rel (%p324) target = $region56
    $region55: #{model_forward.21} parent=5 // pred_region
      %s328 = ssub.s32 %s15, 1
      %p329 = scmp.lt.s32.totalorder %s20, 1
      %s330 = scalar_select %p329, %s20, 1
      %s331 = smul.addr %s330, 4
      %s332 = scalar_lea.vmem %s0, %s331
      %p333 = pneg %p41
      %p334 = pneg %p38
      %p335 = scmp.lt.s32.totalorder %s20, 1
      %s336 = scalar_select %p335, %s20, 1
      %s337 = sadd.s32 %s336, 2
      %s338 = smul.addr %s337, 4
      %s339 = scalar_lea.vmem %s1, %s338
      %p340 = pneg %p67
      %p341 = pneg %p64
      %p342 = scmp.lt.s32.totalorder %s20, 1
      %s343 = scalar_select %p342, %s20, 1
      %s344 = sadd.s32 %s343, 4
      %s345 = smul.addr %s344, 4
      %s346 = scalar_lea.vmem %s2, %s345
      %p347 = pneg %p93
      %p348 = pneg %p90
      %p349 = scmp.lt.s32.totalorder %s20, 1
      %s350 = scalar_select %p349, %s20, 1
      %s351 = scalar_lea.vmem %s3, %s350
      %p352 = pneg %p119
      %p353 = pneg %p116
      %p354 = scmp.lt.s32.totalorder %s20, 1
      %s355 = scalar_select %p354, %s20, 1
      %s356 = smul.addr %s355, 4
      %s357 = scalar_lea.vmem %s4, %s356
      %p358 = pneg %p145
      %p359 = pneg %p142
      %p360 = pneg %p166
      %p361 = pneg %p163
      %p362 = pneg %p187
      %p363 = pneg %p184
      %p364 = pneg %p208
      %p365 = pneg %p205
      %p366 = pneg %p229
      %p367 = pneg %p226
      %p368 = pneg %p255
      %p369 = pneg %p252
      %p370 = scmp.lt.s32.totalorder %s20, 1
      %s371 = scalar_select %p370, %s20, 1
      %s372 = smul.addr %s371, 4
      %s373 = scalar_lea.vmem %s9, %s372
      %p374 = scmp.lt.s32.totalorder %s20, 1
      %s375 = scalar_select %p374, %s20, 1
      %s376 = smul.addr %s375, 4
      %s377 = scalar_lea.vmem %s0, %s376
      %p378 = scmp.lt.s32.totalorder %s20, 1
      %s379 = scalar_select %p378, %s20, 1
      %s380 = sadd.s32 %s379, 2
      %s381 = smul.addr %s380, 4
      %s382 = scalar_lea.vmem %s1, %s381
      %p383 = scmp.lt.s32.totalorder %s20, 1
      %s384 = scalar_select %p383, %s20, 1
      %s385 = sadd.s32 %s384, 4
      %s386 = smul.addr %s385, 4
      %s387 = scalar_lea.vmem %s2, %s386
      %p388 = scmp.lt.s32.totalorder %s20, 1
      %s389 = scalar_select %p388, %s20, 1
      %s390 = scalar_lea.vmem %s3, %s389
      %p391 = scmp.lt.s32.totalorder %s20, 1
      %s392 = scalar_select %p391, %s20, 1
      %s393 = smul.addr %s392, 4
      %s394 = scalar_lea.vmem %s4, %s393
      %p395 = scmp.lt.s32.totalorder %s20, 1
      %s396 = scalar_select %p395, %s20, 1
      %s397 = smul.addr %s396, 4
      %s398 = scalar_lea.vmem %s9, %s397
      %v400 = vld [vmem:[%s377] sm:$0xf]
      %v401 = vunpack.c.l.bf16 %v400
      %v402 = vmul.f32 %v401, 0.5
      %v403 = vld [vmem:[%s382] sm:$0xf]
      %v404 = vld [vmem:[%s387] sm:$0xf]
      %v405 = vld [vmem:[%s390] sm:$0x1]
      %v406 = vpack.c.bf16 %v402, %v402
      %v407 = vlaneseq
      %v408 = vand.u32 %v407, 127
      %vm409 = vcmp.ge.s32.totalorder %v408, 0
      %vm410 = vcmp.lt.s32.totalorder %v408, 4
      %vm411 = vmand %vm409, %vm410
      %v412 = vsel %vm411, 1, 0
      %vm413 = vcmp.eq.s32.totalorder %v412, 1
      %vm414 = vmpackc.low %vm413, %vm413
      %v415 = vsel %vm414, %v406, 0
      %v416 = vsel %vm414, %v404, 0
      %v418 = vlaneseq
      %v419 = vshrl.u32 %v418, 7
      %v420 = vsub.s32 0, %v419
      %v421 = vrot.slane %v405, %v420
      %vm423 = vcmask 261120
      %v425 = vsel %vm423, %v415, 0
      %v428 = vsel %vm423, %v403, 0
      %430 = vmatprep.subr.bf16.mxu0 0
      %431 = vmatpush1.bf16.xpose.msra.mxu0 %v428
      %432 = vmatprep.subr.bf16.mxu0 0
      %433 = vmatpush1.bf16.xpose.msra.mxu0 0
      %434 = vmatprep.subr.bf16.mxu0 0
      %435 = vmatpush1.bf16.xpose.msra.mxu0 0
      %436 = vmatprep.subr.bf16.mxu0 0
      %437 = vmatpush1.bf16.xpose.msra.mxu0 0
      %438 = vmatprep.subr.bf16.mxu0 0
      %439 = vmatpush1.bf16.xpose.msra.mxu0 0
      %440 = vmatprep.subr.bf16.mxu0 0
      %441 = vmatpush1.bf16.xpose.msra.mxu0 0
      %442 = vmatprep.subr.bf16.mxu0 0
      %443 = vmatpush1.bf16.xpose.msra.mxu0 0
      %444 = vmatprep.subr.bf16.mxu0 0
      %445 = vmatpush1.bf16.xpose.msra.mxu0 0
      %446 = vmatprep.subr.bf16.mxu0 0
      %447 = vmatpush1.bf16.xpose.msra.mxu0 0
      %448 = vmatprep.subr.bf16.mxu0 0
      %449 = vmatpush1.bf16.xpose.msra.mxu0 0
      %450 = vmatprep.subr.bf16.mxu0 0
      %451 = vmatpush1.bf16.xpose.msra.mxu0 0
      %452 = vmatprep.subr.bf16.mxu0 0
      %453 = vmatpush1.bf16.xpose.msra.mxu0 0
      %454 = vmatprep.subr.bf16.mxu0 0
      %455 = vmatpush1.bf16.xpose.msra.mxu0 0
      %456 = vmatprep.subr.bf16.mxu0 0
      %457 = vmatpush1.bf16.xpose.msra.mxu0 0
      %458 = vmatprep.subr.bf16.mxu0 0
      %459 = vmatpush1.bf16.xpose.msra.mxu0 0
      %460 = vmatprep.subr.bf16.mxu0 0
      %461 = vmatpush1.bf16.xpose.msra.mxu0 0
      %462 = vmatprep.mubr.bf16.mxu0 0
      %463 = vmatmul.mubr.bf16.gmra.mrb[0].mxu0 %v425
      %v464 = vpop.f32.mrb[0].mxu0
      %v465 = vadd.f32 %v421, %v464
      %v466 = vpop.f32.mrb[0].mxu0
      %v467 = vpop.f32.mrb[0].mxu0
      %v468 = vpop.f32.mrb[0].mxu0
      %469 = vdwg.mxu0
      %vm470 = vcmask 64512
      %v471 = vsel %vm470, %v465, -inf
      %472 = vmax.xlane.f32.xlu0 %v471
      %v473 = vpop.xlane.xlu0 %472
      %v474 = vsub.f32 %v465, %v473
      %v475 = vmul.f32 %v474, 1.442695
      %v476 = vpow.pop %v475
      %v477 = vsel %vm470, %v476, 0.0
      %478 = vadd.xlane.f32.xlu0 %v477
      %v479 = vpop.xlane.xlu0 %478
      %v480 = vrcp.pop %v479
      %v481 = vpack.c.bf16 %v476, %v476
      %v483 = vsel %vm470, %v481, 0
      %vm485 = vcmask 1043456
      %v487 = vsel %vm485, %v416, 0
      %489 = vmatprep.subr.bf16.mxu0 0
      %490 = vmatpush1.bf16.msra.mxu0 %v487
      %491 = vmatprep.subr.bf16.mxu0 0
      %492 = vmatpush1.bf16.msra.mxu0 0
      %493 = vmatprep.subr.bf16.mxu0 0
      %494 = vmatpush1.bf16.msra.mxu0 0
      %495 = vmatprep.subr.bf16.mxu0 0
      %496 = vmatpush1.bf16.msra.mxu0 0
      %497 = vmatprep.subr.bf16.mxu0 0
      %498 = vmatpush1.bf16.msra.mxu0 0
      %499 = vmatprep.subr.bf16.mxu0 0
      %500 = vmatpush1.bf16.msra.mxu0 0
      %501 = vmatprep.subr.bf16.mxu0 0
      %502 = vmatpush1.bf16.msra.mxu0 0
      %503 = vmatprep.subr.bf16.mxu0 0
      %504 = vmatpush1.bf16.msra.mxu0 0
      %505 = vmatprep.subr.bf16.mxu0 0
      %506 = vmatpush1.bf16.msra.mxu0 0
      %507 = vmatprep.subr.bf16.mxu0 0
      %508 = vmatpush1.bf16.msra.mxu0 0
      %509 = vmatprep.subr.bf16.mxu0 0
      %510 = vmatpush1.bf16.msra.mxu0 0
      %511 = vmatprep.subr.bf16.mxu0 0
      %512 = vmatpush1.bf16.msra.mxu0 0
      %513 = vmatprep.subr.bf16.mxu0 0
      %514 = vmatpush1.bf16.msra.mxu0 0
      %515 = vmatprep.subr.bf16.mxu0 0
      %516 = vmatpush1.bf16.msra.mxu0 0
      %517 = vmatprep.subr.bf16.mxu0 0
      %518 = vmatpush1.bf16.msra.mxu0 0
      %519 = vmatprep.subr.bf16.mxu0 0
      %520 = vmatpush1.bf16.msra.mxu0 0
      %521 = vmatprep.mubr.bf16.mxu0 0
      %522 = vmatmul.mubr.bf16.gmra.mrb[0].mxu0 %v483
      %v523 = vpop.f32.mrb[0].mxu0
      %v524 = vadd.f32 0.0, %v523
      %v525 = vpop.f32.mrb[0].mxu0
      %v526 = vpop.f32.mrb[0].mxu0
      %v527 = vpop.f32.mrb[0].mxu0
      %528 = vdwg.mxu0
      %v529 = vmul.f32 %v524, %v480
      %v530 = vadd.f32 %v529, 0.0
      %vm531 = vcmp.ge.s32.totalorder %v408, 4
      %vm532 = vcmp.lt.s32.totalorder %v408, 8
      %vm533 = vmand %vm531, %vm532
      %v534 = vsel %vm533, 1, 0
      %vm535 = vcmp.eq.s32.totalorder %v534, 1
      %vm536 = vmpackc.low %vm535, %vm535
      %v537 = vsel %vm536, %v406, 0
      %v538 = vsel %vm536, %v404, 0
      %v540 = vsel %vm423, %v537, 0
      %542 = vmatprep.subr.bf16.mxu0 0
      %543 = vmatpush1.bf16.xpose.msra.mxu0 %v428
      %544 = vmatprep.subr.bf16.mxu0 0
      %545 = vmatpush1.bf16.xpose.msra.mxu0 0
      %546 = vmatprep.subr.bf16.mxu0 0
      %547 = vmatpush1.bf16.xpose.msra.mxu0 0
      %548 = vmatprep.subr.bf16.mxu0 0
      %549 = vmatpush1.bf16.xpose.msra.mxu0 0
      %550 = vmatprep.subr.bf16.mxu0 0
      %551 = vmatpush1.bf16.xpose.msra.mxu0 0
      %552 = vmatprep.subr.bf16.mxu0 0
      %553 = vmatpush1.bf16.xpose.msra.mxu0 0
      %554 = vmatprep.subr.bf16.mxu0 0
      %555 = vmatpush1.bf16.xpose.msra.mxu0 0
      %556 = vmatprep.subr.bf16.mxu0 0
      %557 = vmatpush1.bf16.xpose.msra.mxu0 0
      %558 = vmatprep.subr.bf16.mxu0 0
      %559 = vmatpush1.bf16.xpose.msra.mxu0 0
      %560 = vmatprep.subr.bf16.mxu0 0
      %561 = vmatpush1.bf16.xpose.msra.mxu0 0
      %562 = vmatprep.subr.bf16.mxu0 0
      %563 = vmatpush1.bf16.xpose.msra.mxu0 0
      %564 = vmatprep.subr.bf16.mxu0 0
      %565 = vmatpush1.bf16.xpose.msra.mxu0 0
      %566 = vmatprep.subr.bf16.mxu0 0
      %567 = vmatpush1.bf16.xpose.msra.mxu0 0
      %568 = vmatprep.subr.bf16.mxu0 0
      %569 = vmatpush1.bf16.xpose.msra.mxu0 0
      %570 = vmatprep.subr.bf16.mxu0 0
      %571 = vmatpush1.bf16.xpose.msra.mxu0 0
      %572 = vmatprep.subr.bf16.mxu0 0
      %573 = vmatpush1.bf16.xpose.msra.mxu0 0
      %574 = vmatprep.mubr.bf16.mxu0 0
      %575 = vmatmul.mubr.bf16.gmra.mrb[0].mxu0 %v540
      %v576 = vpop.f32.mrb[0].mxu0
      %v577 = vadd.f32 %v421, %v576
      %v578 = vpop.f32.mrb[0].mxu0
      %v579 = vpop.f32.mrb[0].mxu0
      %v580 = vpop.f32.mrb[0].mxu0
      %581 = vdwg.mxu0
      %v582 = vsel %vm470, %v577, -inf
      %583 = vmax.xlane.f32.xlu0 %v582
      %v584 = vpop.xlane.xlu0 %583
      %v585 = vsub.f32 %v577, %v584
      %v586 = vmul.f32 %v585, 1.442695
      %v587 = vpow.pop %v586
      %v588 = vsel %vm470, %v587, 0.0
      %589 = vadd.xlane.f32.xlu0 %v588
      %v590 = vpop.xlane.xlu0 %589
      %v591 = vrcp.pop %v590
      %v592 = vpack.c.bf16 %v587, %v587
      %v594 = vsel %vm470, %v592, 0
      %v597 = vsel %vm485, %v538, 0
      %599 = vmatprep.subr.bf16.mxu0 0
      %600 = vmatpush1.bf16.msra.mxu0 %v597
      %601 = vmatprep.subr.bf16.mxu0 0
      %602 = vmatpush1.bf16.msra.mxu0 0
      %603 = vmatprep.subr.bf16.mxu0 0
      %604 = vmatpush1.bf16.msra.mxu0 0
      %605 = vmatprep.subr.bf16.mxu0 0
      %606 = vmatpush1.bf16.msra.mxu0 0
      %607 = vmatprep.subr.bf16.mxu0 0
      %608 = vmatpush1.bf16.msra.mxu0 0
      %609 = vmatprep.subr.bf16.mxu0 0
      %610 = vmatpush1.bf16.msra.mxu0 0
      %611 = vmatprep.subr.bf16.mxu0 0
      %612 = vmatpush1.bf16.msra.mxu0 0
      %613 = vmatprep.subr.bf16.mxu0 0
      %614 = vmatpush1.bf16.msra.mxu0 0
      %615 = vmatprep.subr.bf16.mxu0 0
      %616 = vmatpush1.bf16.msra.mxu0 0
      %617 = vmatprep.subr.bf16.mxu0 0
      %618 = vmatpush1.bf16.msra.mxu0 0
      %619 = vmatprep.subr.bf16.mxu0 0
      %620 = vmatpush1.bf16.msra.mxu0 0
      %621 = vmatprep.subr.bf16.mxu0 0
      %622 = vmatpush1.bf16.msra.mxu0 0
      %623 = vmatprep.subr.bf16.mxu0 0
      %624 = vmatpush1.bf16.msra.mxu0 0
      %625 = vmatprep.subr.bf16.mxu0 0
      %626 = vmatpush1.bf16.msra.mxu0 0
      %627 = vmatprep.subr.bf16.mxu0 0
      %628 = vmatpush1.bf16.msra.mxu0 0
      %629 = vmatprep.subr.bf16.mxu0 0
      %630 = vmatpush1.bf16.msra.mxu0 0
      %631 = vmatprep.mubr.bf16.mxu0 0
      %632 = vmatmul.mubr.bf16.gmra.mrb[0].mxu0 %v594
      %v633 = vpop.f32.mrb[0].mxu0
      %v634 = vadd.f32 0.0, %v633
      %v635 = vpop.f32.mrb[0].mxu0
      %v636 = vpop.f32.mrb[0].mxu0
      %v637 = vpop.f32.mrb[0].mxu0
      %638 = vdwg.mxu0
      %v639 = vmul.f32 %v634, %v591
      %v640 = vadd.f32 %v530, %v639
      %vm641 = vcmp.ge.s32.totalorder %v408, 8
      %vm642 = vcmp.lt.s32.totalorder %v408, 12
      %vm643 = vmand %vm641, %vm642
      %v644 = vsel %vm643, 1, 0
      %vm645 = vcmp.eq.s32.totalorder %v644, 1
      %vm646 = vmpackc.low %vm645, %vm645
      %v647 = vsel %vm646, %v406, 0
      %v648 = vsel %vm646, %v404, 0
      %v650 = vsel %vm423, %v647, 0
      %652 = vmatprep.subr.bf16.mxu0 0
      %653 = vmatpush1.bf16.xpose.msra.mxu0 %v428
      %654 = vmatprep.subr.bf16.mxu0 0
      %655 = vmatpush1.bf16.xpose.msra.mxu0 0
      %656 = vmatprep.subr.bf16.mxu0 0
      %657 = vmatpush1.bf16.xpose.msra.mxu0 0
      %658 = vmatprep.subr.bf16.mxu0 0
      %659 = vmatpush1.bf16.xpose.msra.mxu0 0
      %660 = vmatprep.subr.bf16.mxu0 0
      %661 = vmatpush1.bf16.xpose.msra.mxu0 0
      %662 = vmatprep.subr.bf16.mxu0 0
      %663 = vmatpush1.bf16.xpose.msra.mxu0 0
      %664 = vmatprep.subr.bf16.mxu0 0
      %665 = vmatpush1.bf16.xpose.msra.mxu0 0
      %666 = vmatprep.subr.bf16.mxu0 0
      %667 = vmatpush1.bf16.xpose.msra.mxu0 0
      %668 = vmatprep.subr.bf16.mxu0 0
      %669 = vmatpush1.bf16.xpose.msra.mxu0 0
      %670 = vmatprep.subr.bf16.mxu0 0
      %671 = vmatpush1.bf16.xpose.msra.mxu0 0
      %672 = vmatprep.subr.bf16.mxu0 0
      %673 = vmatpush1.bf16.xpose.msra.mxu0 0
      %674 = vmatprep.subr.bf16.mxu0 0
      %675 = vmatpush1.bf16.xpose.msra.mxu0 0
      %676 = vmatprep.subr.bf16.mxu0 0
      %677 = vmatpush1.bf16.xpose.msra.mxu0 0
      %678 = vmatprep.subr.bf16.mxu0 0
      %679 = vmatpush1.bf16.xpose.msra.mxu0 0
      %680 = vmatprep.subr.bf16.mxu0 0
      %681 = vmatpush1.bf16.xpose.msra.mxu0 0
      %682 = vmatprep.subr.bf16.mxu0 0
      %683 = vmatpush1.bf16.xpose.msra.mxu0 0
      %684 = vmatprep.mubr.bf16.mxu0 0
      %685 = vmatmul.mubr.bf16.gmra.mrb[0].mxu0 %v650
      %v686 = vpop.f32.mrb[0].mxu0
      %v687 = vadd.f32 %v421, %v686
      %v688 = vpop.f32.mrb[0].mxu0
      %v689 = vpop.f32.mrb[0].mxu0
      %v690 = vpop.f32.mrb[0].mxu0
      %691 = vdwg.mxu0
      %v692 = vsel %vm470, %v687, -inf
      %693 = vmax.xlane.f32.xlu0 %v692
      %v694 = vpop.xlane.xlu0 %693
      %v695 = vsub.f32 %v687, %v694
      %v696 = vmul.f32 %v695, 1.442695
      %v697 = vpow.pop %v696
      %v698 = vsel %vm470, %v697, 0.0
      %699 = vadd.xlane.f32.xlu0 %v698
      %v700 = vpop.xlane.xlu0 %699
      %v701 = vrcp.pop %v700
      %v702 = vpack.c.bf16 %v697, %v697
      %v704 = vsel %vm470, %v702, 0
      %v707 = vsel %vm485, %v648, 0
      %709 = vmatprep.subr.bf16.mxu0 0
      %710 = vmatpush1.bf16.msra.mxu0 %v707
      %711 = vmatprep.subr.bf16.mxu0 0
      %712 = vmatpush1.bf16.msra.mxu0 0
      %713 = vmatprep.subr.bf16.mxu0 0
      %714 = vmatpush1.bf16.msra.mxu0 0
      %715 = vmatprep.subr.bf16.mxu0 0
      %716 = vmatpush1.bf16.msra.mxu0 0
      %717 = vmatprep.subr.bf16.mxu0 0
      %718 = vmatpush1.bf16.msra.mxu0 0
      %719 = vmatprep.subr.bf16.mxu0 0
      %720 = vmatpush1.bf16.msra.mxu0 0
      %721 = vmatprep.subr.bf16.mxu0 0
      %722 = vmatpush1.bf16.msra.mxu0 0
      %723 = vmatprep.subr.bf16.mxu0 0
      %724 = vmatpush1.bf16.msra.mxu0 0
      %725 = vmatprep.subr.bf16.mxu0 0
      %726 = vmatpush1.bf16.msra.mxu0 0
      %727 = vmatprep.subr.bf16.mxu0 0
      %728 = vmatpush1.bf16.msra.mxu0 0
      %729 = vmatprep.subr.bf16.mxu0 0
      %730 = vmatpush1.bf16.msra.mxu0 0
      %731 = vmatprep.subr.bf16.mxu0 0
      %732 = vmatpush1.bf16.msra.mxu0 0
      %733 = vmatprep.subr.bf16.mxu0 0
      %734 = vmatpush1.bf16.msra.mxu0 0
      %735 = vmatprep.subr.bf16.mxu0 0
      %736 = vmatpush1.bf16.msra.mxu0 0
      %737 = vmatprep.subr.bf16.mxu0 0
      %738 = vmatpush1.bf16.msra.mxu0 0
      %739 = vmatprep.subr.bf16.mxu0 0
      %740 = vmatpush1.bf16.msra.mxu0 0
      %741 = vmatprep.mubr.bf16.mxu0 0
      %742 = vmatmul.mubr.bf16.gmra.mrb[0].mxu0 %v704
      %v743 = vpop.f32.mrb[0].mxu0
      %v744 = vadd.f32 0.0, %v743
      %v745 = vpop.f32.mrb[0].mxu0
      %v746 = vpop.f32.mrb[0].mxu0
      %v747 = vpop.f32.mrb[0].mxu0
      %748 = vdwg.mxu0
      %v749 = vmul.f32 %v744, %v701
      %v750 = vadd.f32 %v640, %v749
      %vm751 = vcmp.ge.s32.totalorder %v408, 12
      %vm752 = vcmp.lt.s32.totalorder %v408, 16
      %vm753 = vmand %vm751, %vm752
      %v754 = vsel %vm753, 1, 0
      %vm755 = vcmp.eq.s32.totalorder %v754, 1
      %vm756 = vmpackc.low %vm755, %vm755
      %v757 = vsel %vm756, %v406, 0
      %v758 = vsel %vm756, %v404, 0
      %v760 = vsel %vm423, %v757, 0
      %762 = vmatprep.subr.bf16.mxu0 0
      %763 = vmatpush1.bf16.xpose.msra.mxu0 %v428
      %764 = vmatprep.subr.bf16.mxu0 0
      %765 = vmatpush1.bf16.xpose.msra.mxu0 0
      %766 = vmatprep.subr.bf16.mxu0 0
      %767 = vmatpush1.bf16.xpose.msra.mxu0 0
      %768 = vmatprep.subr.bf16.mxu0 0
      %769 = vmatpush1.bf16.xpose.msra.mxu0 0
      %770 = vmatprep.subr.bf16.mxu0 0
      %771 = vmatpush1.bf16.xpose.msra.mxu0 0
      %772 = vmatprep.subr.bf16.mxu0 0
      %773 = vmatpush1.bf16.xpose.msra.mxu0 0
      %774 = vmatprep.subr.bf16.mxu0 0
      %775 = vmatpush1.bf16.xpose.msra.mxu0 0
      %776 = vmatprep.subr.bf16.mxu0 0
      %777 = vmatpush1.bf16.xpose.msra.mxu0 0
      %778 = vmatprep.subr.bf16.mxu0 0
      %779 = vmatpush1.bf16.xpose.msra.mxu0 0
      %780 = vmatprep.subr.bf16.mxu0 0
      %781 = vmatpush1.bf16.xpose.msra.mxu0 0
      %782 = vmatprep.subr.bf16.mxu0 0
      %783 = vmatpush1.bf16.xpose.msra.mxu0 0
      %784 = vmatprep.subr.bf16.mxu0 0
      %785 = vmatpush1.bf16.xpose.msra.mxu0 0
      %786 = vmatprep.subr.bf16.mxu0 0
      %787 = vmatpush1.bf16.xpose.msra.mxu0 0
      %788 = vmatprep.subr.bf16.mxu0 0
      %789 = vmatpush1.bf16.xpose.msra.mxu0 0
      %790 = vmatprep.subr.bf16.mxu0 0
      %791 = vmatpush1.bf16.xpose.msra.mxu0 0
      %792 = vmatprep.subr.bf16.mxu0 0
      %793 = vmatpush1.bf16.xpose.msra.mxu0 0
      %794 = vmatprep.mubr.bf16.mxu0 0
      %795 = vmatmul.mubr.bf16.gmra.mrb[0].mxu0 %v760
      %v796 = vpop.f32.mrb[0].mxu0
      %v797 = vadd.f32 %v421, %v796
      %v798 = vpop.f32.mrb[0].mxu0
      %v799 = vpop.f32.mrb[0].mxu0
      %v800 = vpop.f32.mrb[0].mxu0
      %801 = vdwg.mxu0
      %v802 = vsel %vm470, %v797, -inf
      %803 = vmax.xlane.f32.xlu0 %v802
      %v804 = vpop.xlane.xlu0 %803
      %v805 = vsub.f32 %v797, %v804
      %v806 = vmul.f32 %v805, 1.442695
      %v807 = vpow.pop %v806
      %v808 = vsel %vm470, %v807, 0.0
      %809 = vadd.xlane.f32.xlu0 %v808
      %v810 = vpop.xlane.xlu0 %809
      %v811 = vrcp.pop %v810
      %v812 = vpack.c.bf16 %v807, %v807
      %v814 = vsel %vm470, %v812, 0
      %v817 = vsel %vm485, %v758, 0
      %819 = vmatprep.subr.bf16.mxu0 0
      %820 = vmatpush1.bf16.msra.mxu0 %v817
      %821 = vmatprep.subr.bf16.mxu0 0
      %822 = vmatpush1.bf16.msra.mxu0 0
      %823 = vmatprep.subr.bf16.mxu0 0
      %824 = vmatpush1.bf16.msra.mxu0 0
      %825 = vmatprep.subr.bf16.mxu0 0
      %826 = vmatpush1.bf16.msra.mxu0 0
      %827 = vmatprep.subr.bf16.mxu0 0
      %828 = vmatpush1.bf16.msra.mxu0 0
      %829 = vmatprep.subr.bf16.mxu0 0
      %830 = vmatpush1.bf16.msra.mxu0 0
      %831 = vmatprep.subr.bf16.mxu0 0
      %832 = vmatpush1.bf16.msra.mxu0 0
      %833 = vmatprep.subr.bf16.mxu0 0
      %834 = vmatpush1.bf16.msra.mxu0 0
      %835 = vmatprep.subr.bf16.mxu0 0
      %836 = vmatpush1.bf16.msra.mxu0 0
      %837 = vmatprep.subr.bf16.mxu0 0
      %838 = vmatpush1.bf16.msra.mxu0 0
      %839 = vmatprep.subr.bf16.mxu0 0
      %840 = vmatpush1.bf16.msra.mxu0 0
      %841 = vmatprep.subr.bf16.mxu0 0
      %842 = vmatpush1.bf16.msra.mxu0 0
      %843 = vmatprep.subr.bf16.mxu0 0
      %844 = vmatpush1.bf16.msra.mxu0 0
      %845 = vmatprep.subr.bf16.mxu0 0
      %846 = vmatpush1.bf16.msra.mxu0 0
      %847 = vmatprep.subr.bf16.mxu0 0
      %848 = vmatpush1.bf16.msra.mxu0 0
      %849 = vmatprep.subr.bf16.mxu0 0
      %850 = vmatpush1.bf16.msra.mxu0 0
      %851 = vmatprep.mubr.bf16.mxu0 0
      %852 = vmatmul.mubr.bf16.gmra.mrb[0].mxu0 %v814
      %v853 = vpop.f32.mrb[0].mxu0
      %v854 = vadd.f32 0.0, %v853
      %v855 = vpop.f32.mrb[0].mxu0
      %v856 = vpop.f32.mrb[0].mxu0
      %v857 = vpop.f32.mrb[0].mxu0
      %858 = vdwg.mxu0
      %v859 = vmul.f32 %v854, %v811
      %v860 = vadd.f32 %v750, %v859
      %vm861 = vcmp.ge.s32.totalorder %v408, 16
      %vm862 = vcmp.lt.s32.totalorder %v408, 20
      %vm863 = vmand %vm861, %vm862
      %v864 = vsel %vm863, 1, 0
      %vm865 = vcmp.eq.s32.totalorder %v864, 1
      %vm866 = vmpackc.low %vm865, %vm865
      %v867 = vsel %vm866, %v406, 0
      %v868 = vsel %vm866, %v404, 0
      %v870 = vsel %vm423, %v867, 0
      %872 = vmatprep.subr.bf16.mxu0 0
      %873 = vmatpush1.bf16.xpose.msra.mxu0 %v428
      %874 = vmatprep.subr.bf16.mxu0 0
      %875 = vmatpush1.bf16.xpose.msra.mxu0 0
      %876 = vmatprep.subr.bf16.mxu0 0
      %877 = vmatpush1.bf16.xpose.msra.mxu0 0
      %878 = vmatprep.subr.bf16.mxu0 0
      %879 = vmatpush1.bf16.xpose.msra.mxu0 0
      %880 = vmatprep.subr.bf16.mxu0 0
      %881 = vmatpush1.bf16.xpose.msra.mxu0 0
      %882 = vmatprep.subr.bf16.mxu0 0
      %883 = vmatpush1.bf16.xpose.msra.mxu0 0
      %884 = vmatprep.subr.bf16.mxu0 0
      %885 = vmatpush1.bf16.xpose.msra.mxu0 0
      %886 = vmatprep.subr.bf16.mxu0 0
      %887 = vmatpush1.bf16.xpose.msra.mxu0 0
      %888 = vmatprep.subr.bf16.mxu0 0
      %889 = vmatpush1.bf16.xpose.msra.mxu0 0
      %890 = vmatprep.subr.bf16.mxu0 0
      %891 = vmatpush1.bf16.xpose.msra.mxu0 0
      %892 = vmatprep.subr.bf16.mxu0 0
      %893 = vmatpush1.bf16.xpose.msra.mxu0 0
      %894 = vmatprep.subr.bf16.mxu0 0
      %895 = vmatpush1.bf16.xpose.msra.mxu0 0
      %896 = vmatprep.subr.bf16.mxu0 0
      %897 = vmatpush1.bf16.xpose.msra.mxu0 0
      %898 = vmatprep.subr.bf16.mxu0 0
      %899 = vmatpush1.bf16.xpose.msra.mxu0 0
      %900 = vmatprep.subr.bf16.mxu0 0
      %901 = vmatpush1.bf16.xpose.msra.mxu0 0
      %902 = vmatprep.subr.bf16.mxu0 0
      %903 = vmatpush1.bf16.xpose.msra.mxu0 0
      %904 = vmatprep.mubr.bf16.mxu0 0
      %905 = vmatmul.mubr.bf16.gmra.mrb[0].mxu0 %v870
      %v906 = vpop.f32.mrb[0].mxu0
      %v907 = vadd.f32 %v421, %v906
      %v908 = vpop.f32.mrb[0].mxu0
      %v909 = vpop.f32.mrb[0].mxu0
      %v910 = vpop.f32.mrb[0].mxu0
      %911 = vdwg.mxu0
      %v912 = vsel %vm470, %v907, -inf
      %913 = vmax.xlane.f32.xlu0 %v912
      %v914 = vpop.xlane.xlu0 %913
      %v915 = vsub.f32 %v907, %v914
      %v916 = vmul.f32 %v915, 1.442695
      %v917 = vpow.pop %v916
      %v918 = vsel %vm470, %v917, 0.0
      %919 = vadd.xlane.f32.xlu0 %v918
      %v920 = vpop.xlane.xlu0 %919
      %v921 = vrcp.pop %v920
      %v922 = vpack.c.bf16 %v917, %v917
      %v924 = vsel %vm470, %v922, 0
      %v927 = vsel %vm485, %v868, 0
      %929 = vmatprep.subr.bf16.mxu0 0
      %930 = vmatpush1.bf16.msra.mxu0 %v927
      %931 = vmatprep.subr.bf16.mxu0 0
      %932 = vmatpush1.bf16.msra.mxu0 0
      %933 = vmatprep.subr.bf16.mxu0 0
      %934 = vmatpush1.bf16.msra.mxu0 0
      %935 = vmatprep.subr.bf16.mxu0 0
      %936 = vmatpush1.bf16.msra.mxu0 0
      %937 = vmatprep.subr.bf16.mxu0 0
      %938 = vmatpush1.bf16.msra.mxu0 0
      %939 = vmatprep.subr.bf16.mxu0 0
      %940 = vmatpush1.bf16.msra.mxu0 0
      %941 = vmatprep.subr.bf16.mxu0 0
      %942 = vmatpush1.bf16.msra.mxu0 0
      %943 = vmatprep.subr.bf16.mxu0 0
      %944 = vmatpush1.bf16.msra.mxu0 0
      %945 = vmatprep.subr.bf16.mxu0 0
      %946 = vmatpush1.bf16.msra.mxu0 0
      %947 = vmatprep.subr.bf16.mxu0 0
      %948 = vmatpush1.bf16.msra.mxu0 0
      %949 = vmatprep.subr.bf16.mxu0 0
      %950 = vmatpush1.bf16.msra.mxu0 0
      %951 = vmatprep.subr.bf16.mxu0 0
      %952 = vmatpush1.bf16.msra.mxu0 0
      %953 = vmatprep.subr.bf16.mxu0 0
      %954 = vmatpush1.bf16.msra.mxu0 0
      %955 = vmatprep.subr.bf16.mxu0 0
      %956 = vmatpush1.bf16.msra.mxu0 0
      %957 = vmatprep.subr.bf16.mxu0 0
      %958 = vmatpush1.bf16.msra.mxu0 0
      %959 = vmatprep.subr.bf16.mxu0 0
      %960 = vmatpush1.bf16.msra.mxu0 0
      %961 = vmatprep.mubr.bf16.mxu0 0
      %962 = vmatmul.mubr.bf16.gmra.mrb[0].mxu0 %v924
      %v963 = vpop.f32.mrb[0].mxu0
      %v964 = vadd.f32 0.0, %v963
      %v965 = vpop.f32.mrb[0].mxu0
      %v966 = vpop.f32.mrb[0].mxu0
      %v967 = vpop.f32.mrb[0].mxu0
      %968 = vdwg.mxu0
      %v969 = vmul.f32 %v964, %v921
      %v970 = vadd.f32 %v860, %v969
      %vm971 = vcmp.ge.s32.totalorder %v408, 20
      %vm972 = vcmp.lt.s32.totalorder %v408, 24
      %vm973 = vmand %vm971, %vm972
      %v974 = vsel %vm973, 1, 0
      %vm975 = vcmp.eq.s32.totalorder %v974, 1
      %vm976 = vmpackc.low %vm975, %vm975
      %v977 = vsel %vm976, %v406, 0
      %v978 = vsel %vm976, %v404, 0
      %v980 = vsel %vm423, %v977, 0
      %982 = vmatprep.subr.bf16.mxu0 0
      %983 = vmatpush1.bf16.xpose.msra.mxu0 %v428
      %984 = vmatprep.subr.bf16.mxu0 0
      %985 = vmatpush1.bf16.xpose.msra.mxu0 0
      %986 = vmatprep.subr.bf16.mxu0 0
      %987 = vmatpush1.bf16.xpose.msra.mxu0 0
      %988 = vmatprep.subr.bf16.mxu0 0
      %989 = vmatpush1.bf16.xpose.msra.mxu0 0
      %990 = vmatprep.subr.bf16.mxu0 0
      %991 = vmatpush1.bf16.xpose.msra.mxu0 0
      %992 = vmatprep.subr.bf16.mxu0 0
      %993 = vmatpush1.bf16.xpose.msra.mxu0 0
      %994 = vmatprep.subr.bf16.mxu0 0
      %995 = vmatpush1.bf16.xpose.msra.mxu0 0
      %996 = vmatprep.subr.bf16.mxu0 0
      %997 = vmatpush1.bf16.xpose.msra.mxu0 0
      %998 = vmatprep.subr.bf16.mxu0 0
      %999 = vmatpush1.bf16.xpose.msra.mxu0 0
      %1000 = vmatprep.subr.bf16.mxu0 0
      %1001 = vmatpush1.bf16.xpose.msra.mxu0 0
      %1002 = vmatprep.subr.bf16.mxu0 0
      %1003 = vmatpush1.bf16.xpose.msra.mxu0 0
      %1004 = vmatprep.subr.bf16.mxu0 0
      %1005 = vmatpush1.bf16.xpose.msra.mxu0 0
      %1006 = vmatprep.subr.bf16.mxu0 0
      %1007 = vmatpush1.bf16.xpose.msra.mxu0 0
      %1008 = vmatprep.subr.bf16.mxu0 0
      %1009 = vmatpush1.bf16.xpose.msra.mxu0 0
      %1010 = vmatprep.subr.bf16.mxu0 0
      %1011 = vmatpush1.bf16.xpose.msra.mxu0 0
      %1012 = vmatprep.subr.bf16.mxu0 0
      %1013 = vmatpush1.bf16.xpose.msra.mxu0 0
      %1014 = vmatprep.mubr.bf16.mxu0 0
      %1015 = vmatmul.mubr.bf16.gmra.mrb[0].mxu0 %v980
      %v1016 = vpop.f32.mrb[0].mxu0
      %v1017 = vadd.f32 %v421, %v1016
      %v1018 = vpop.f32.mrb[0].mxu0
      %v1019 = vpop.f32.mrb[0].mxu0
      %v1020 = vpop.f32.mrb[0].mxu0
      %1021 = vdwg.mxu0
      %v1022 = vsel %vm470, %v1017, -inf
      %1023 = vmax.xlane.f32.xlu0 %v1022
      %v1024 = vpop.xlane.xlu0 %1023
      %v1025 = vsub.f32 %v1017, %v1024
      %v1026 = vmul.f32 %v1025, 1.442695
      %v1027 = vpow.pop %v1026
      %v1028 = vsel %vm470, %v1027, 0.0
      %1029 = vadd.xlane.f32.xlu0 %v1028
      %v1030 = vpop.xlane.xlu0 %1029
      %v1031 = vrcp.pop %v1030
      %v1032 = vpack.c.bf16 %v1027, %v1027
      %v1034 = vsel %vm470, %v1032, 0
      %v1037 = vsel %vm485, %v978, 0
      %1039 = vmatprep.subr.bf16.mxu0 0
      %1040 = vmatpush1.bf16.msra.mxu0 %v1037
      %1041 = vmatprep.subr.bf16.mxu0 0
      %1042 = vmatpush1.bf16.msra.mxu0 0
      %1043 = vmatprep.subr.bf16.mxu0 0
      %1044 = vmatpush1.bf16.msra.mxu0 0
      %1045 = vmatprep.subr.bf16.mxu0 0
      %1046 = vmatpush1.bf16.msra.mxu0 0
      %1047 = vmatprep.subr.bf16.mxu0 0
      %1048 = vmatpush1.bf16.msra.mxu0 0
      %1049 = vmatprep.subr.bf16.mxu0 0
      %1050 = vmatpush1.bf16.msra.mxu0 0
      %1051 = vmatprep.subr.bf16.mxu0 0
      %1052 = vmatpush1.bf16.msra.mxu0 0
      %1053 = vmatprep.subr.bf16.mxu0 0
      %1054 = vmatpush1.bf16.msra.mxu0 0
      %1055 = vmatprep.subr.bf16.mxu0 0
      %1056 = vmatpush1.bf16.msra.mxu0 0
      %1057 = vmatprep.subr.bf16.mxu0 0
      %1058 = vmatpush1.bf16.msra.mxu0 0
      %1059 = vmatprep.subr.bf16.mxu0 0
      %1060 = vmatpush1.bf16.msra.mxu0 0
      %1061 = vmatprep.subr.bf16.mxu0 0
      %1062 = vmatpush1.bf16.msra.mxu0 0
      %1063 = vmatprep.subr.bf16.mxu0 0
      %1064 = vmatpush1.bf16.msra.mxu0 0
      %1065 = vmatprep.subr.bf16.mxu0 0
      %1066 = vmatpush1.bf16.msra.mxu0 0
      %1067 = vmatprep.subr.bf16.mxu0 0
      %1068 = vmatpush1.bf16.msra.mxu0 0
      %1069 = vmatprep.subr.bf16.mxu0 0
      %1070 = vmatpush1.bf16.msra.mxu0 0
      %1071 = vmatprep.mubr.bf16.mxu0 0
      %1072 = vmatmul.mubr.bf16.gmra.mrb[0].mxu0 %v1034
      %v1073 = vpop.f32.mrb[0].mxu0
      %v1074 = vadd.f32 0.0, %v1073
      %v1075 = vpop.f32.mrb[0].mxu0
      %v1076 = vpop.f32.mrb[0].mxu0
      %v1077 = vpop.f32.mrb[0].mxu0
      %1078 = vdwg.mxu0
      %v1079 = vmul.f32 %v1074, %v1031
      %v1080 = vadd.f32 %v970, %v1079
      %vm1081 = vcmp.ge.s32.totalorder %v408, 24
      %vm1082 = vcmp.lt.s32.totalorder %v408, 28
      %vm1083 = vmand %vm1081, %vm1082
      %v1084 = vsel %vm1083, 1, 0
      %vm1085 = vcmp.eq.s32.totalorder %v1084, 1
      %vm1086 = vmpackc.low %vm1085, %vm1085
      %v1087 = vsel %vm1086, %v406, 0
      %v1088 = vsel %vm1086, %v404, 0
      %v1090 = vsel %vm423, %v1087, 0
      %1092 = vmatprep.subr.bf16.mxu0 0
      %1093 = vmatpush1.bf16.xpose.msra.mxu0 %v428
      %1094 = vmatprep.subr.bf16.mxu0 0
      %1095 = vmatpush1.bf16.xpose.msra.mxu0 0
      %1096 = vmatprep.subr.bf16.mxu0 0
      %1097 = vmatpush1.bf16.xpose.msra.mxu0 0
      %1098 = vmatprep.subr.bf16.mxu0 0
      %1099 = vmatpush1.bf16.xpose.msra.mxu0 0
      %1100 = vmatprep.subr.bf16.mxu0 0
      %1101 = vmatpush1.bf16.xpose.msra.mxu0 0
      %1102 = vmatprep.subr.bf16.mxu0 0
      %1103 = vmatpush1.bf16.xpose.msra.mxu0 0
      %1104 = vmatprep.subr.bf16.mxu0 0
      %1105 = vmatpush1.bf16.xpose.msra.mxu0 0
      %1106 = vmatprep.subr.bf16.mxu0 0
      %1107 = vmatpush1.bf16.xpose.msra.mxu0 0
      %1108 = vmatprep.subr.bf16.mxu0 0
      %1109 = vmatpush1.bf16.xpose.msra.mxu0 0
      %1110 = vmatprep.subr.bf16.mxu0 0
      %1111 = vmatpush1.bf16.xpose.msra.mxu0 0
      %1112 = vmatprep.subr.bf16.mxu0 0
      %1113 = vmatpush1.bf16.xpose.msra.mxu0 0
      %1114 = vmatprep.subr.bf16.mxu0 0
      %1115 = vmatpush1.bf16.xpose.msra.mxu0 0
      %1116 = vmatprep.subr.bf16.mxu0 0
      %1117 = vmatpush1.bf16.xpose.msra.mxu0 0
      %1118 = vmatprep.subr.bf16.mxu0 0
      %1119 = vmatpush1.bf16.xpose.msra.mxu0 0
      %1120 = vmatprep.subr.bf16.mxu0 0
      %1121 = vmatpush1.bf16.xpose.msra.mxu0 0
      %1122 = vmatprep.subr.bf16.mxu0 0
      %1123 = vmatpush1.bf16.xpose.msra.mxu0 0
      %1124 = vmatprep.mubr.bf16.mxu0 0
      %1125 = vmatmul.mubr.bf16.gmra.mrb[0].mxu0 %v1090
      %v1126 = vpop.f32.mrb[0].mxu0
      %v1127 = vadd.f32 %v421, %v1126
      %v1128 = vpop.f32.mrb[0].mxu0
      %v1129 = vpop.f32.mrb[0].mxu0
      %v1130 = vpop.f32.mrb[0].mxu0
      %1131 = vdwg.mxu0
      %v1132 = vsel %vm470, %v1127, -inf
      %1133 = vmax.xlane.f32.xlu0 %v1132
      %v1134 = vpop.xlane.xlu0 %1133
      %v1135 = vsub.f32 %v1127, %v1134
      %v1136 = vmul.f32 %v1135, 1.442695
      %v1137 = vpow.pop %v1136
      %v1138 = vsel %vm470, %v1137, 0.0
      %1139 = vadd.xlane.f32.xlu0 %v1138
      %v1140 = vpop.xlane.xlu0 %1139
      %v1141 = vrcp.pop %v1140
      %v1142 = vpack.c.bf16 %v1137, %v1137
      %v1144 = vsel %vm470, %v1142, 0
      %v1147 = vsel %vm485, %v1088, 0
      %1149 = vmatprep.subr.bf16.mxu0 0
      %1150 = vmatpush1.bf16.msra.mxu0 %v1147
      %1151 = vmatprep.subr.bf16.mxu0 0
      %1152 = vmatpush1.bf16.msra.mxu0 0
      %1153 = vmatprep.subr.bf16.mxu0 0
      %1154 = vmatpush1.bf16.msra.mxu0 0
      %1155 = vmatprep.subr.bf16.mxu0 0
      %1156 = vmatpush1.bf16.msra.mxu0 0
      %1157 = vmatprep.subr.bf16.mxu0 0
      %1158 = vmatpush1.bf16.msra.mxu0 0
      %1159 = vmatprep.subr.bf16.mxu0 0
      %1160 = vmatpush1.bf16.msra.mxu0 0
      %1161 = vmatprep.subr.bf16.mxu0 0
      %1162 = vmatpush1.bf16.msra.mxu0 0
      %1163 = vmatprep.subr.bf16.mxu0 0
      %1164 = vmatpush1.bf16.msra.mxu0 0
      %1165 = vmatprep.subr.bf16.mxu0 0
      %1166 = vmatpush1.bf16.msra.mxu0 0
      %1167 = vmatprep.subr.bf16.mxu0 0
      %1168 = vmatpush1.bf16.msra.mxu0 0
      %1169 = vmatprep.subr.bf16.mxu0 0
      %1170 = vmatpush1.bf16.msra.mxu0 0
      %1171 = vmatprep.subr.bf16.mxu0 0
      %1172 = vmatpush1.bf16.msra.mxu0 0
      %1173 = vmatprep.subr.bf16.mxu0 0
      %1174 = vmatpush1.bf16.msra.mxu0 0
      %1175 = vmatprep.subr.bf16.mxu0 0
      %1176 = vmatpush1.bf16.msra.mxu0 0
      %1177 = vmatprep.subr.bf16.mxu0 0
      %1178 = vmatpush1.bf16.msra.mxu0 0
      %1179 = vmatprep.subr.bf16.mxu0 0
      %1180 = vmatpush1.bf16.msra.mxu0 0
      %1181 = vmatprep.mubr.bf16.mxu0 0
      %1182 = vmatmul.mubr.bf16.gmra.mrb[0].mxu0 %v1144
      %v1183 = vpop.f32.mrb[0].mxu0
      %v1184 = vadd.f32 0.0, %v1183
      %v1185 = vpop.f32.mrb[0].mxu0
      %v1186 = vpop.f32.mrb[0].mxu0
      %v1187 = vpop.f32.mrb[0].mxu0
      %1188 = vdwg.mxu0
      %v1189 = vmul.f32 %v1184, %v1141
      %v1190 = vadd.f32 %v1080, %v1189
      %vm1191 = vcmp.ge.s32.totalorder %v408, 28
      %vm1192 = vcmp.lt.s32.totalorder %v408, 32
      %vm1193 = vmand %vm1191, %vm1192
      %v1194 = vsel %vm1193, 1, 0
      %vm1195 = vcmp.eq.s32.totalorder %v1194, 1
      %vm1196 = vmpackc.low %vm1195, %vm1195
      %v1197 = vsel %vm1196, %v406, 0
      %v1198 = vsel %vm1196, %v404, 0
      %v1200 = vsel %vm423, %v1197, 0
      %1202 = vmatprep.subr.bf16.mxu0 0
      %1203 = vmatpush1.bf16.xpose.msra.mxu0 %v428
      %1204 = vmatprep.subr.bf16.mxu0 0
      %1205 = vmatpush1.bf16.xpose.msra.mxu0 0
      %1206 = vmatprep.subr.bf16.mxu0 0
      %1207 = vmatpush1.bf16.xpose.msra.mxu0 0
      %1208 = vmatprep.subr.bf16.mxu0 0
      %1209 = vmatpush1.bf16.xpose.msra.mxu0 0
      %1210 = vmatprep.subr.bf16.mxu0 0
      %1211 = vmatpush1.bf16.xpose.msra.mxu0 0
      %1212 = vmatprep.subr.bf16.mxu0 0
      %1213 = vmatpush1.bf16.xpose.msra.mxu0 0
      %1214 = vmatprep.subr.bf16.mxu0 0
      %1215 = vmatpush1.bf16.xpose.msra.mxu0 0
      %1216 = vmatprep.subr.bf16.mxu0 0
      %1217 = vmatpush1.bf16.xpose.msra.mxu0 0
      %1218 = vmatprep.subr.bf16.mxu0 0
      %1219 = vmatpush1.bf16.xpose.msra.mxu0 0
      %1220 = vmatprep.subr.bf16.mxu0 0
      %1221 = vmatpush1.bf16.xpose.msra.mxu0 0
      %1222 = vmatprep.subr.bf16.mxu0 0
      %1223 = vmatpush1.bf16.xpose.msra.mxu0 0
      %1224 = vmatprep.subr.bf16.mxu0 0
      %1225 = vmatpush1.bf16.xpose.msra.mxu0 0
      %1226 = vmatprep.subr.bf16.mxu0 0
      %1227 = vmatpush1.bf16.xpose.msra.mxu0 0
      %1228 = vmatprep.subr.bf16.mxu0 0
      %1229 = vmatpush1.bf16.xpose.msra.mxu0 0
      %1230 = vmatprep.subr.bf16.mxu0 0
      %1231 = vmatpush1.bf16.xpose.msra.mxu0 0
      %1232 = vmatprep.subr.bf16.mxu0 0
      %1233 = vmatpush1.bf16.xpose.msra.mxu0 0
      %1234 = vmatprep.mubr.bf16.mxu0 0
      %1235 = vmatmul.mubr.bf16.gmra.mrb[0].mxu0 %v1200
      %v1236 = vpop.f32.mrb[0].mxu0
      %v1237 = vadd.f32 %v421, %v1236
      %v1238 = vpop.f32.mrb[0].mxu0
      %v1239 = vpop.f32.mrb[0].mxu0
      %v1240 = vpop.f32.mrb[0].mxu0
      %1241 = vdwg.mxu0
      %v1242 = vsel %vm470, %v1237, -inf
      %1243 = vmax.xlane.f32.xlu0 %v1242
      %v1244 = vpop.xlane.xlu0 %1243
      %v1245 = vsub.f32 %v1237, %v1244
      %v1246 = vmul.f32 %v1245, 1.442695
      %v1247 = vpow.pop %v1246
      %v1248 = vsel %vm470, %v1247, 0.0
      %1249 = vadd.xlane.f32.xlu0 %v1248
      %v1250 = vpop.xlane.xlu0 %1249
      %v1251 = vrcp.pop %v1250
      %v1252 = vpack.c.bf16 %v1247, %v1247
      %v1254 = vsel %vm470, %v1252, 0
      %v1257 = vsel %vm485, %v1198, 0
      %1259 = vmatprep.subr.bf16.mxu0 0
      %1260 = vmatpush1.bf16.msra.mxu0 %v1257
      %1261 = vmatprep.subr.bf16.mxu0 0
      %1262 = vmatpush1.bf16.msra.mxu0 0
      %1263 = vmatprep.subr.bf16.mxu0 0
      %1264 = vmatpush1.bf16.msra.mxu0 0
      %1265 = vmatprep.subr.bf16.mxu0 0
      %1266 = vmatpush1.bf16.msra.mxu0 0
      %1267 = vmatprep.subr.bf16.mxu0 0
      %1268 = vmatpush1.bf16.msra.mxu0 0
      %1269 = vmatprep.subr.bf16.mxu0 0
      %1270 = vmatpush1.bf16.msra.mxu0 0
      %1271 = vmatprep.subr.bf16.mxu0 0
      %1272 = vmatpush1.bf16.msra.mxu0 0
      %1273 = vmatprep.subr.bf16.mxu0 0
      %1274 = vmatpush1.bf16.msra.mxu0 0
      %1275 = vmatprep.subr.bf16.mxu0 0
      %1276 = vmatpush1.bf16.msra.mxu0 0
      %1277 = vmatprep.subr.bf16.mxu0 0
      %1278 = vmatpush1.bf16.msra.mxu0 0
      %1279 = vmatprep.subr.bf16.mxu0 0
      %1280 = vmatpush1.bf16.msra.mxu0 0
      %1281 = vmatprep.subr.bf16.mxu0 0
      %1282 = vmatpush1.bf16.msra.mxu0 0
      %1283 = vmatprep.subr.bf16.mxu0 0
      %1284 = vmatpush1.bf16.msra.mxu0 0
      %1285 = vmatprep.subr.bf16.mxu0 0
      %1286 = vmatpush1.bf16.msra.mxu0 0
      %1287 = vmatprep.subr.bf16.mxu0 0
      %1288 = vmatpush1.bf16.msra.mxu0 0
      %1289 = vmatprep.subr.bf16.mxu0 0
      %1290 = vmatpush1.bf16.msra.mxu0 0
      %1291 = vmatprep.mubr.bf16.mxu0 0
      %1292 = vmatmul.mubr.bf16.gmra.mrb[0].mxu0 %v1254
      %v1293 = vpop.f32.mrb[0].mxu0
      %v1294 = vadd.f32 0.0, %v1293
      %v1295 = vpop.f32.mrb[0].mxu0
      %v1296 = vpop.f32.mrb[0].mxu0
      %v1297 = vpop.f32.mrb[0].mxu0
      %1298 = vdwg.mxu0
      %v1299 = vmul.f32 %v1294, %v1251
      %v1300 = vadd.f32 %v1190, %v1299
      %v1301 = vpack.c.bf16 %v1300, %v1300
      %v1302 = vld [vmem:[%s5] sm:$0xf]
      %v1303 = vld [vmem:[%s5 + $0x4] sm:$0xf]
      %v1304 = vld [vmem:[%s5 + $0x8] sm:$0xf]
      %v1305 = vld [vmem:[%s5 + $0xc] sm:$0xf]
      %v1306 = vld [vmem:[%s6] sm:$0x1]
      %v1308 = vlaneseq
      %v1309 = vshrl.u32 %v1308, 7
      %v1310 = vsub.s32 0, %v1309
      %v1311 = vrot.slane %v1306, %v1310
      %v1317 = vunpack.c.l.b16 %v1302
      %v1318 = vunpack.c.l.b16 %v1303
      %v1319 = vunpack.c.l.b16 %v1304
      %v1320 = vunpack.c.l.b16 %v1305
      %v1321 = vpack.c.b16 %v1318, %v1317
      %v1322 = vpack.c.b16 %v1320, %v1319
      %v1326 = vsel %vm423, %v1301, 0
      %1328 = vmatprep.subr.bf16.mxu0 0
      %1329 = vmatpush1.bf16.msra.mxu0 %v1321
      %1330 = vmatprep.subr.bf16.mxu0 0
      %1331 = vmatpush1.bf16.msra.mxu0 %v1322
      %1332 = vmatprep.subr.bf16.mxu0 0
      %1333 = vmatpush1.bf16.msra.mxu0 0
      %1334 = vmatprep.subr.bf16.mxu0 0
      %1335 = vmatpush1.bf16.msra.mxu0 0
      %1336 = vmatprep.subr.bf16.mxu0 0
      %1337 = vmatpush1.bf16.msra.mxu0 0
      %1338 = vmatprep.subr.bf16.mxu0 0
      %1339 = vmatpush1.bf16.msra.mxu0 0
      %1340 = vmatprep.subr.bf16.mxu0 0
      %1341 = vmatpush1.bf16.msra.mxu0 0
      %1342 = vmatprep.subr.bf16.mxu0 0
      %1343 = vmatpush1.bf16.msra.mxu0 0
      %1344 = vmatprep.subr.bf16.mxu0 0
      %1345 = vmatpush1.bf16.msra.mxu0 0
      %1346 = vmatprep.subr.bf16.mxu0 0
      %1347 = vmatpush1.bf16.msra.mxu0 0
      %1348 = vmatprep.subr.bf16.mxu0 0
      %1349 = vmatpush1.bf16.msra.mxu0 0
      %1350 = vmatprep.subr.bf16.mxu0 0
      %1351 = vmatpush1.bf16.msra.mxu0 0
      %1352 = vmatprep.subr.bf16.mxu0 0
      %1353 = vmatpush1.bf16.msra.mxu0 0
      %1354 = vmatprep.subr.bf16.mxu0 0
      %1355 = vmatpush1.bf16.msra.mxu0 0
      %1356 = vmatprep.subr.bf16.mxu0 0
      %1357 = vmatpush1.bf16.msra.mxu0 0
      %1358 = vmatprep.subr.bf16.mxu0 0
      %1359 = vmatpush1.bf16.msra.mxu0 0
      %1360 = vmatprep.mubr.bf16.mxu0 0
      %1361 = vmatmul.mubr.bf16.gmra.mrb[0].mxu0 %v1326
      %v1362 = vpop.f32.mrb[0].mxu0
      %v1363 = vadd.f32 %v1311, %v1362
      %v1364 = vpop.f32.mrb[0].mxu0
      %v1365 = vpop.f32.mrb[0].mxu0
      %v1366 = vpop.f32.mrb[0].mxu0
      %1367 = vdwg.mxu0
      %v1368 = vld [vmem:[%s394] sm:$0xf]
      %v1369 = vunpack.c.l.bf16 %v1368
      %v1370 = vadd.f32 %v1363, %v1369
      %v1371 = vld [vmem:[%s7] sm:$0x1]
      %v1372 = vld [vmem:[%s8] sm:$0x1]
      %v1373 = vsel %vm423, %v1370, 0.0
      %1374 = vadd.xlane.f32.xlu0 %v1373
      %v1375 = vpop.xlane.xlu0 %1374
      %v1376 = vrcp.pop 32.0
      %v1377 = vmul.f32 %v1375, %v1376
      %v1378 = vsub.f32 %v1370, %v1377
      %v1379 = vmul.f32 %v1378, %v1378
      %v1380 = vsel %vm423, %v1379, 0.0
      %1381 = vadd.xlane.f32.xlu0 %v1380
      %v1382 = vpop.xlane.xlu0 %1381
      %v1383 = vmul.f32 %v1382, %v1376
      %v1384 = vadd.f32 %v1383, 1e-05
      %v1385 = vrsqrt.pop %v1384
      %v1386 = vmul.f32 %v1378, %v1385
      %v1388 = vlaneseq
      %v1389 = vshrl.u32 %v1388, 7
      %v1390 = vsub.s32 0, %v1389
      %v1391 = vrot.slane %v1371, %v1390
      %v1393 = vmul.f32 %v1386, %v1391
      %v1395 = vlaneseq
      %v1396 = vshrl.u32 %v1395, 7
      %v1397 = vsub.s32 0, %v1396
      %v1398 = vrot.slane %v1372, %v1397
      %v1400 = vadd.f32 %v1393, %v1398
      %v1401 = vpack.c.bf16 %v1400, %v1400
      %vm1402 = vcmask 257024
      %1403 = vst.msk [vmem:[%s398] sm:$0xf] %vm1402, %v1401
      %p1404 = scmp.lt.s32.totalorder %s20, 1
      %s1405 = scalar_select %p1404, %s20, 1
      %s1406 = smul.addr %s1405, 4
      %s1407 = scalar_lea.vmem %s9, %s1406
      // Predicated region
      $region57: #{model_forward.21} parent=55 // pred_check
        %p1408 = pneg %p252
      $region58: #{model_forward.21} parent=55 // pred_check_branch
        %1410 = sbr.rel (%p1408) target = $region60
      $region59: #{model_forward.21} parent=55 // pred_region
        _
      $region60: #{model_forward.21} parent=55 // pred_fallthru
        _
    $region56: #{model_forward.21} parent=5 // pred_fallthru
      _
    %p1411 = scmp.le.s32.totalorder 2, %s15
    // Predicated region
    $region61: #{model_forward.21} parent=5 // pred_check
      %p1412 = pneg %p1411
    $region62: #{model_forward.21} parent=5 // pred_check_branch
      %1414 = sbr.rel (%p1412) target = $region64
    $region63: #{model_forward.21} parent=5 // pred_region
      %s1415 = ssub.s32 %s15, 2
      // Predicated region
      $region65: #{model_forward.21} parent=63 // pred_check
        %p1416 = pneg %p258
      $region66: #{model_forward.21} parent=63 // pred_check_branch
        %1418 = sbr.rel (%p1416) target = $region68
      $region67: #{model_forward.21} parent=63 // pred_region
        %p1419 = scmp.lt.s32.totalorder %s21, 1
        %s1420 = scalar_select %p1419, %s21, 1
        %s1421 = smul.addr %s1420, 4
        %s1422 = scalar_lea.vmem %s9, %s1421
      $region68: #{model_forward.21} parent=63 // pred_fallthru
        _
    $region64: #{model_forward.21} parent=5 // pred_fallthru
      _
  $region6: #{model_forward.21} parent=0 // loop_footer
    %s19 = sadd.s32 1, %s15
  $region7: #{model_forward.21} parent=0 // loop_footer_branch
    %14 = sbr.rel target = $region3
  $region8: #{model_forward.21} parent=0 // loop_exit
    _

// kernel: model_forward.29
$region0: #{model_forward.29}
  #allocation0 [shape = 'u32[]', space=smem, size = 0x4, offset = 0x4, fixed_abs, tag = 'smem constant byte address 0x4 - core index']
  #allocation1 [shape = 'u32[144,128]{1,0:T(1,128)}', space=vmem, size = 0x12000, scoped, tag = 'internal scratch']
  %s0 = inlined_call_operand.vmem [shape: bf16[16,32], index: 0, kind: input, shape index: {}]
  %s1 = inlined_call_operand.vmem [shape: bf16[2,32,32], index: 1, kind: input, shape index: {}]
  %s2 = inlined_call_operand.vmem [shape: f32[2,1,32], index: 2, kind: input, shape index: {}]
  %s3 = inlined_call_operand.vmem [shape: bf16[2,16,32], index: 3, kind: output, shape index: {}]
  %s4 = sld [smem:[#allocation0]]
  $region82: #{model_forward.29} parent=0
    _
  %s6 = ssub.s32 1, %s4
  %s7 = scalar_select 0, %s6, %s4
  $region1: #{model_forward.29} parent=0
    #allocation2 [shape = 'u8[8192]{0}', space=vmem, size = 0x2000, scoped, tag = 'output window, operand 0']
    loop: start=0, step=1, limit=4
    $region2: #{model_forward.29} parent=1 // loop_pre_header
      _
    $region3: #{model_forward.29} parent=1 // loop_header
      %s9 = sphi 0, %s13
      %p10 = scmp.ge.s32.totalorder %s9, 4
      %s19 = sphi 0, %s21
      %s22 = sphi 0, %s19
      %s23 = sphi 0, %s22
      %s39 = sphi 0, %s23
      %s43 = sphi 0, %s43
      %s45 = sphi 0, %s43
      %s46 = sphi 0, %s45
      %s60 = sphi 0, %s46
      %s64 = sphi 0, %s64
      %s66 = sphi 0, %s64
      %s67 = sphi 0, %s66
      %s81 = sphi 0, %s67
      %s87 = sphi 0, %s89
      %s90 = sphi 0, %s87
      %s91 = sphi 0, %s90
      %s107 = sphi 0, %s91
    $region4: #{model_forward.29} parent=1 // loop_header_branch
      %12 = sbr.rel (%p10) target = $region8
    $region5: #{model_forward.29} parent=1 // loop_body
      %s14 = ssub.s32 %s9, 1
      %s15 = ssub.s32 %s9, 2
      %s16 = sadd.s32 %s9, 1
      %s17 = ssub.s32 %s9, %s16
      %p18 = scmp.eq.s32.totalorder %s17, 0
      %s20 = sadd.s32 %s19, 1
      %s21 = scalar_select %p18, %s19, %s20
      %p24 = pneg %p18
      %p25 = scmp.eq.s32.totalorder %s9, 1
      %p26 = por %p24, %p25
      %p27 = scmp.ne.s32.totalorder %s19, %s22
      %p28 = scmp.eq.s32.totalorder %s9, 0
      %p29 = por %p27, %p28
      %p30 = scmp.ne.s32.totalorder %s19, %s22
      %p31 = scmp.eq.s32.totalorder %s14, 1
      %p32 = por %p30, %p31
      %p33 = scmp.ne.s32.totalorder %s22, %s23
      %p34 = scmp.eq.s32.totalorder %s14, 0
      %p35 = por %p33, %p34
      %p36 = scmp.ne.s32.totalorder %s22, %s23
      %p37 = scmp.eq.s32.totalorder %s15, 1
      %p38 = por %p36, %p37
      %p40 = scmp.ne.s32.totalorder %s23, %s39
      %p41 = scmp.eq.s32.totalorder %s15, 0
      %p42 = por %p40, %p41
      %s44 = sadd.s32 %s43, 1
      %p47 = scmp.eq.s32.totalorder %s9, 1
      %p48 = scmp.ne.s32.totalorder %s43, %s45
      %p49 = scmp.eq.s32.totalorder %s9, 0
      %p50 = por %p48, %p49
      %p51 = scmp.ne.s32.totalorder %s43, %s45
      %p52 = scmp.eq.s32.totalorder %s14, 1
      %p53 = por %p51, %p52
      %p54 = scmp.ne.s32.totalorder %s45, %s46
      %p55 = scmp.eq.s32.totalorder %s14, 0
      %p56 = por %p54, %p55
      %p57 = scmp.ne.s32.totalorder %s45, %s46
      %p58 = scmp.eq.s32.totalorder %s15, 1
      %p59 = por %p57, %p58
      %p61 = scmp.ne.s32.totalorder %s46, %s60
      %p62 = scmp.eq.s32.totalorder %s15, 0
      %p63 = por %p61, %p62
      %s65 = sadd.s32 %s64, 1
      %p68 = scmp.eq.s32.totalorder %s9, 1
      %p69 = scmp.ne.s32.totalorder %s64, %s66
      %p70 = scmp.eq.s32.totalorder %s9, 0
      %p71 = por %p69, %p70
      %p72 = scmp.ne.s32.totalorder %s64, %s66
      %p73 = scmp.eq.s32.totalorder %s14, 1
      %p74 = por %p72, %p73
      %p75 = scmp.ne.s32.totalorder %s66, %s67
      %p76 = scmp.eq.s32.totalorder %s14, 0
      %p77 = por %p75, %p76
      %p78 = scmp.ne.s32.totalorder %s66, %s67
      %p79 = scmp.eq.s32.totalorder %s15, 1
      %p80 = por %p78, %p79
      %p82 = scmp.ne.s32.totalorder %s67, %s81
      %p83 = scmp.eq.s32.totalorder %s15, 0
      %p84 = por %p82, %p83
      %s85 = ssub.s32 %s9, %s16
      %p86 = scmp.eq.s32.totalorder %s85, 0
      %s88 = sadd.s32 %s87, 1
      %s89 = scalar_select %p86, %s87, %s88
      %p92 = pneg %p86
      %p93 = scmp.eq.s32.totalorder %s9, 1
      %p94 = por %p92, %p93
      %p95 = scmp.ne.s32.totalorder %s87, %s90
      %p96 = scmp.eq.s32.totalorder %s9, 0
      %p97 = por %p95, %p96
      %p98 = scmp.ne.s32.totalorder %s87, %s90
      %p99 = scmp.eq.s32.totalorder %s14, 1
      %p100 = por %p98, %p99
      %p101 = scmp.ne.s32.totalorder %s90, %s91
      %p102 = scmp.eq.s32.totalorder %s14, 0
      %p103 = por %p101, %p102
      %p104 = scmp.ne.s32.totalorder %s90, %s91
      %p105 = scmp.eq.s32.totalorder %s15, 1
      %p106 = por %p104, %p105
      %p108 = scmp.ne.s32.totalorder %s91, %s107
      %p109 = scmp.eq.s32.totalorder %s15, 0
      %p110 = por %p108, %p109
      %p111 = scmp.le.s32.totalorder 1, %s9
      %p112 = scmp.lt.s32.totalorder %s9, 3
      %p113 = pnand %p111, %p112
      %p114 = pneg %p113
      // Predicated region
      $region9: #{model_forward.29} parent=5 // pred_check
        _
      $region10: #{model_forward.29} parent=5 // pred_check_branch
        %116 = sbr.rel (%p113) target = $region12
      $region11: #{model_forward.29} parent=5 // pred_region
        %s117 = ssub.s32 %s9, 1
        // Predicated region
        $region13: #{model_forward.29} parent=11 // pred_check
          %p118 = pneg %p56
        $region14: #{model_forward.29} parent=11 // pred_check_branch
          %120 = sbr.rel (%p118) target = $region16
        $region15: #{model_forward.29} parent=11 // pred_region
          _
        $region16: #{model_forward.29} parent=11 // pred_fallthru
          _
        // Predicated region
        $region17: #{model_forward.29} parent=11 // pred_check
          %p121 = pneg %p77
        $region18: #{model_forward.29} parent=11 // pred_check_branch
          %123 = sbr.rel (%p121) target = $region20
        $region19: #{model_forward.29} parent=11 // pred_region
          _
        $region20: #{model_forward.29} parent=11 // pred_fallthru
          _
      $region12: #{model_forward.29} parent=5 // pred_fallthru
        _
      %p124 = scmp.lt.s32.totalorder %s9, 2
      // Predicated region
      $region21: #{model_forward.29} parent=5 // pred_check
        %p125 = pneg %p124
      $region22: #{model_forward.29} parent=5 // pred_check_branch
        %127 = sbr.rel (%p125) target = $region24
      $region23: #{model_forward.29} parent=5 // pred_region
        // Predicated region
        $region25: #{model_forward.29} parent=23 // pred_check
          %p128 = pneg %p29
        $region26: #{model_forward.29} parent=23 // pred_check_branch
          %130 = sbr.rel (%p128) target = $region28
        $region27: #{model_forward.29} parent=23 // pred_region
          %p131 = scmp.lt.s32.totalorder %s9, 1
          %s132 = scalar_select %p131, %s9, 1
          %s133 = smul.addr %s132, 4
          %s134 = scalar_lea.vmem %s0, %s133
        $region28: #{model_forward.29} parent=23 // pred_fallthru
          _
      $region24: #{model_forward.29} parent=5 // pred_fallthru
        _
      %p135 = scmp.le.s32.totalorder 1, %s9
      %p136 = scmp.lt.s32.totalorder %s9, 3
      %p137 = pnand %p135, %p136
      %p138 = pneg %p137
      // Predicated region
      $region29: #{model_forward.29} parent=5 // pred_check
        _
      $region30: #{model_forward.29} parent=5 // pred_check_branch
        %140 = sbr.rel (%p137) target = $region32
      $region31: #{model_forward.29} parent=5 // pred_region
        %s141 = ssub.s32 %s9, 1
        %p142 = scmp.lt.s32.totalorder %s14, 1
        %s143 = scalar_select %p142, %s14, 1
        %s144 = smul.addr %s143, 4
        %s145 = scalar_lea.vmem %s0, %s144
        %p146 = pneg %p35
        %p147 = pneg %p32
        %p148 = pneg %p56
        %p149 = pneg %p53
        %p150 = pneg %p77
        %p151 = pneg %p74
        %p152 = pneg %p103
        %p153 = pneg %p100
        %s154 = sand.u32 %s90, 1
        %s155 = sand.u32 %s90, 1
        %s156 = smul.addr %s155, 8
        %s157 = scalar_lea.vmem [#allocation2], %s156
        %p158 = scmp.lt.s32.totalorder %s14, 1
        %s159 = scalar_select %p158, %s14, 1
        %s160 = smul.addr %s159, 4
        %s161 = scalar_lea.vmem %s0, %s160
        %v163 = vld [vmem:[%s161] sm:$0xf]
        %v164 = vld [vmem:[%s1] sm:$0xf]
        %v165 = vld [vmem:[%s1 + $0x4] sm:$0xf]
        %v166 = vld [vmem:[%s1 + $0x8] sm:$0xf]
        %v167 = vld [vmem:[%s1 + $0xc] sm:$0xf]
        %v168 = vld [vmem:[%s2] sm:$0x1]
        %v170 = vlaneseq
        %v171 = vshrl.u32 %v170, 7
        %v172 = vsub.s32 0, %v171
        %v173 = vrot.slane %v168, %v172
        %v179 = vunpack.c.l.b16 %v164
        %v180 = vunpack.c.l.b16 %v165
        %v181 = vunpack.c.l.b16 %v166
        %v182 = vunpack.c.l.b16 %v167
        %v183 = vpack.c.b16 %v180, %v179
        %v184 = vpack.c.b16 %v182, %v181
        %vm187 = vcmask 261120
        %v189 = vsel %vm187, %v163, 0
        %191 = vmatprep.subr.bf16.mxu0 0
        %192 = vmatpush1.bf16.msra.mxu0 %v183
        %193 = vmatprep.subr.bf16.mxu0 0
        %194 = vmatpush1.bf16.msra.mxu0 %v184
        %195 = vmatprep.subr.bf16.mxu0 0
        %196 = vmatpush1.bf16.msra.mxu0 0
        %197 = vmatprep.subr.bf16.mxu0 0
        %198 = vmatpush1.bf16.msra.mxu0 0
        %199 = vmatprep.subr.bf16.mxu0 0
        %200 = vmatpush1.bf16.msra.mxu0 0
        %201 = vmatprep.subr.bf16.mxu0 0
        %202 = vmatpush1.bf16.msra.mxu0 0
        %203 = vmatprep.subr.bf16.mxu0 0
        %204 = vmatpush1.bf16.msra.mxu0 0
        %205 = vmatprep.subr.bf16.mxu0 0
        %206 = vmatpush1.bf16.msra.mxu0 0
        %207 = vmatprep.subr.bf16.mxu0 0
        %208 = vmatpush1.bf16.msra.mxu0 0
        %209 = vmatprep.subr.bf16.mxu0 0
        %210 = vmatpush1.bf16.msra.mxu0 0
        %211 = vmatprep.subr.bf16.mxu0 0
        %212 = vmatpush1.bf16.msra.mxu0 0
        %213 = vmatprep.subr.bf16.mxu0 0
        %214 = vmatpush1.bf16.msra.mxu0 0
        %215 = vmatprep.subr.bf16.mxu0 0
        %216 = vmatpush1.bf16.msra.mxu0 0
        %217 = vmatprep.subr.bf16.mxu0 0
        %218 = vmatpush1.bf16.msra.mxu0 0
        %219 = vmatprep.subr.bf16.mxu0 0
        %220 = vmatpush1.bf16.msra.mxu0 0
        %221 = vmatprep.subr.bf16.mxu0 0
        %222 = vmatpush1.bf16.msra.mxu0 0
        %223 = vmatprep.mubr.bf16.mxu0 0
        %224 = vmatmul.mubr.bf16.gmra.mrb[0].mxu0 %v189
        %v225 = vpop.f32.mrb[0].mxu0
        %v226 = vadd.f32 %v173, %v225
        %v227 = vpop.f32.mrb[0].mxu0
        %v228 = vpop.f32.mrb[0].mxu0
        %v229 = vpop.f32.mrb[0].mxu0
        %230 = vdwg.mxu0
        %v231 = vpack.c.bf16 %v226, %v226
        %vm232 = vcmask 257024
        %233 = vst.msk [vmem:[%s157] sm:$0xf] %vm232, %v231
        %s234 = scalar_lea.vmem %s1, 16
        %v235 = vld [vmem:[%s234] sm:$0xf]
        %v236 = vld [vmem:[%s234 + $0x4] sm:$0xf]
        %v237 = vld [vmem:[%s234 + $0x8] sm:$0xf]
        %v238 = vld [vmem:[%s234 + $0xc] sm:$0xf]
        %s239 = scalar_lea.vmem %s2, 1
        %v240 = vld [vmem:[%s239] sm:$0x1]
        %v242 = vlaneseq
        %v243 = vshrl.u32 %v242, 7
        %v244 = vsub.s32 0, %v243
        %v245 = vrot.slane %v240, %v244
        %v251 = vunpack.c.l.b16 %v235
        %v252 = vunpack.c.l.b16 %v236
        %v253 = vunpack.c.l.b16 %v237
        %v254 = vunpack.c.l.b16 %v238
        %v255 = vpack.c.b16 %v252, %v251
        %v256 = vpack.c.b16 %v254, %v253
        %259 = vmatprep.subr.bf16.mxu0 0
        %260 = vmatpush1.bf16.msra.mxu0 %v255
        %261 = vmatprep.subr.bf16.mxu0 0
        %262 = vmatpush1.bf16.msra.mxu0 %v256
        %263 = vmatprep.subr.bf16.mxu0 0
        %264 = vmatpush1.bf16.msra.mxu0 0
        %265 = vmatprep.subr.bf16.mxu0 0
        %266 = vmatpush1.bf16.msra.mxu0 0
        %267 = vmatprep.subr.bf16.mxu0 0
        %268 = vmatpush1.bf16.msra.mxu0 0
        %269 = vmatprep.subr.bf16.mxu0 0
        %270 = vmatpush1.bf16.msra.mxu0 0
        %271 = vmatprep.subr.bf16.mxu0 0
        %272 = vmatpush1.bf16.msra.mxu0 0
        %273 = vmatprep.subr.bf16.mxu0 0
        %274 = vmatpush1.bf16.msra.mxu0 0
        %275 = vmatprep.subr.bf16.mxu0 0
        %276 = vmatpush1.bf16.msra.mxu0 0
        %277 = vmatprep.subr.bf16.mxu0 0
        %278 = vmatpush1.bf16.msra.mxu0 0
        %279 = vmatprep.subr.bf16.mxu0 0
        %280 = vmatpush1.bf16.msra.mxu0 0
        %281 = vmatprep.subr.bf16.mxu0 0
        %282 = vmatpush1.bf16.msra.mxu0 0
        %283 = vmatprep.subr.bf16.mxu0 0
        %284 = vmatpush1.bf16.msra.mxu0 0
        %285 = vmatprep.subr.bf16.mxu0 0
        %286 = vmatpush1.bf16.msra.mxu0 0
        %287 = vmatprep.subr.bf16.mxu0 0
        %288 = vmatpush1.bf16.msra.mxu0 0
        %289 = vmatprep.subr.bf16.mxu0 0
        %290 = vmatpush1.bf16.msra.mxu0 0
        %291 = vmatprep.mubr.bf16.mxu0 0
        %292 = vmatmul.mubr.bf16.gmra.mrb[0].mxu0 %v189
        %v293 = vpop.f32.mrb[0].mxu0
        %v294 = vadd.f32 %v245, %v293
        %v295 = vpop.f32.mrb[0].mxu0
        %v296 = vpop.f32.mrb[0].mxu0
        %v297 = vpop.f32.mrb[0].mxu0
        %298 = vdwg.mxu0
        %v299 = vpack.c.bf16 %v294, %v294
        %s300 = scalar_lea.vmem %s157, 4 [#allocation2]
        %301 = vst.msk [vmem:[%s300] sm:$0xf] %vm232, %v299
        %s302 = sand.u32 %s90, 1
        %s303 = sand.u32 %s90, 1
        %s304 = smul.addr %s303, 8
        %s305 = scalar_lea.vmem [#allocation2], %s304
        // Predicated region
        $region33: #{model_forward.29} parent=31 // pred_check
          %p306 = pneg %p100
        $region34: #{model_forward.29} parent=31 // pred_check_branch
          %308 = sbr.rel (%p306) target = $region36
        $region35: #{model_forward.29} parent=31 // pred_region
          %s309 = smul.addr %s14, 4
          %s310 = scalar_lea.vmem %s3, %s309
          // Predicated region
          $region37: #{model_forward.29} parent=35 // pred_check
            _
          $region38: #{model_forward.29} parent=35 // pred_check_branch
            %312 = sbr.rel (0) target = $region40
          $region39: #{model_forward.29} parent=35 // pred_region
            // Predicated region
            $region41: #{model_forward.29} parent=39 // pred_check
              _
            $region42: #{model_forward.29} parent=39 // pred_check_branch
              %314 = sbr.rel target = $region44
            $region43: #{model_forward.29} parent=39 // pred_region
              // Predicated region
              $region56: #{model_forward.29} parent=43 // pred_check
                _
              $region57: #{model_forward.29} parent=43 // pred_check_branch
                %331 = sbr.rel (0) target = $region59
              $region58: #{model_forward.29} parent=43 // pred_region
                loop: start=0, step=1, limit=1
                $region60: #{model_forward.29} parent=58 // loop_pre_header
                  _
                $region61: #{model_forward.29} parent=58 // loop_header
                  %s333 = sphi 0, %s337
                  %p334 = scmp.ge.s32.totalorder %s333, 1
                  %s338 = sphi %s305, %s305
                  %s339 = sphi %s310, %s310
                $region62: #{model_forward.29} parent=58 // loop_header_branch
                  %336 = sbr.rel (%p334) target = $region66
                $region63: #{model_forward.29} parent=58 // loop_body
                  _
                $region64: #{model_forward.29} parent=58 // loop_footer
                  %s337 = sadd.s32 1, %s333
                $region65: #{model_forward.29} parent=58 // loop_footer_branch
                  %332 = sbr.rel target = $region61
                $region66: #{model_forward.29} parent=58 // loop_exit
                  _
                loop: start=0, step=1, limit=1
                $region67: #{model_forward.29} parent=58 // loop_pre_header
                  _
                $region68: #{model_forward.29} parent=58 // loop_header
                  %s342 = sphi 0, %s346
                  %p343 = scmp.ge.s32.totalorder %s342, 1
                  %s347 = sphi %s305, %s305
                  %s348 = sphi %s310, %s310
                $region69: #{model_forward.29} parent=58 // loop_header_branch
                  %345 = sbr.rel (%p343) target = $region73
                $region70: #{model_forward.29} parent=58 // loop_body
                  %v349 = vld [vmem:[%s347] sm:$0xf]
                  %350 = vst [vmem:[%s348] sm:$0xf] %v349
                  %v351 = vld [vmem:[%s347 + $0x4] sm:$0xf]
                  %352 = vst [vmem:[%s348 + $0x8] sm:$0xf] %v351
                $region71: #{model_forward.29} parent=58 // loop_footer
                  %s346 = sadd.s32 1, %s342
                $region72: #{model_forward.29} parent=58 // loop_footer_branch
                  %341 = sbr.rel target = $region68
                $region73: #{model_forward.29} parent=58 // loop_exit
                  _
              $region59: #{model_forward.29} parent=43 // pred_fallthru
                _
            $region44: #{model_forward.29} parent=39 // pred_fallthru
              _
            // Predicated region
            $region45: #{model_forward.29} parent=39 // pred_check
              _
            $region46: #{model_forward.29} parent=39 // pred_check_branch
              %316 = sbr.rel (0) target = $region48
            $region47: #{model_forward.29} parent=39 // pred_region
              loop: start=0, step=1, limit=1
              $region49: #{model_forward.29} parent=47 // loop_pre_header
                _
              $region50: #{model_forward.29} parent=47 // loop_header
                %s319 = sphi 0, %s323
                %p320 = scmp.ge.s32.totalorder %s319, 1
                %s324 = sphi %s305, %s305
                %s325 = sphi %s310, %s310
              $region51: #{model_forward.29} parent=47 // loop_header_branch
                %322 = sbr.rel (%p320) target = $region55
              $region52: #{model_forward.29} parent=47 // loop_body
                %v326 = vld [vmem:[%s324] sm:$0xf]
                %327 = vst [vmem:[%s325] sm:$0xf] %v326
                %v328 = vld [vmem:[%s324 + $0x4] sm:$0xf]
                %329 = vst [vmem:[%s325 + $0x8] sm:$0xf] %v328
              $region53: #{model_forward.29} parent=47 // loop_footer
                %s323 = sadd.s32 1, %s319
              $region54: #{model_forward.29} parent=47 // loop_footer_branch
                %318 = sbr.rel target = $region50
              $region55: #{model_forward.29} parent=47 // loop_exit
                _
            $region48: #{model_forward.29} parent=39 // pred_fallthru
              _
          $region40: #{model_forward.29} parent=35 // pred_fallthru
            _
          %353 = vnop
        $region36: #{model_forward.29} parent=31 // pred_fallthru
          _
      $region32: #{model_forward.29} parent=5 // pred_fallthru
        _
      %p354 = scmp.le.s32.totalorder 2, %s9
      // Predicated region
      $region74: #{model_forward.29} parent=5 // pred_check
        %p355 = pneg %p354
      $region75: #{model_forward.29} parent=5 // pred_check_branch
        %357 = sbr.rel (%p355) target = $region77
      $region76: #{model_forward.29} parent=5 // pred_region
        %s358 = ssub.s32 %s9, 2
        // Predicated region
        $region78: #{model_forward.29} parent=76 // pred_check
          %p359 = pneg %p106
        $region79: #{model_forward.29} parent=76 // pred_check_branch
          %361 = sbr.rel (%p359) target = $region81
        $region80: #{model_forward.29} parent=76 // pred_region
          %s362 = sand.u32 %s91, 1
          %s363 = sand.u32 %s91, 1
          %s364 = smul.addr %s363, 8
          %s365 = scalar_lea.vmem [#allocation2], %s364
        $region81: #{model_forward.29} parent=76 // pred_fallthru
          _
      $region77: #{model_forward.29} parent=5 // pred_fallthru
        _
    $region6: #{model_forward.29} parent=1 // loop_footer
      %s13 = sadd.s32 1, %s9
    $region7: #{model_forward.29} parent=1 // loop_footer_branch
      %8 = sbr.rel target = $region3
    $region8: #{model_forward.29} parent=1 // loop_exit
      _

// kernel: model_forward.22
$region0: #{model_forward.22}
  #allocation0 [shape = 'u32[]', space=smem, size = 0x4, offset = 0x4, fixed_abs, tag = 'smem constant byte address 0x4 - core index']
  #allocation1 [shape = 'u32[144,128]{1,0:T(1,128)}', space=vmem, size = 0x12000, scoped, tag = 'internal scratch']
  %s0 = inlined_call_operand.vmem [shape: bf16[16,32], index: 0, kind: input, shape index: {}]
  %s1 = inlined_call_operand.vmem [shape: bf16[32,128], index: 1, kind: input, shape index: {}]
  %s2 = inlined_call_operand.vmem [shape: f32[1,128], index: 2, kind: input, shape index: {}]
  %s3 = inlined_call_operand.vmem [shape: bf16[128,32], index: 3, kind: input, shape index: {}]
  %s4 = inlined_call_operand.vmem [shape: f32[1,32], index: 4, kind: input, shape index: {}]
  %s5 = inlined_call_operand.vmem [shape: f32[1,32], index: 5, kind: input, shape index: {}]
  %s6 = inlined_call_operand.vmem [shape: f32[1,32], index: 6, kind: input, shape index: {}]
  %s7 = inlined_call_operand.vmem [shape: bf16[16,32], index: 7, kind: output, shape index: {}]
  %s8 = sld [smem:[#allocation0]]
  $region61: #{model_forward.22} parent=0
    _
  %s10 = ssub.s32 1, %s8
  %s11 = scalar_select 0, %s10, %s8
  loop: start=0, step=1, limit=4
  $region2: #{model_forward.22} parent=0 // loop_pre_header
    _
  $region3: #{model_forward.22} parent=0 // loop_header
    %s13 = sphi 0, %s17
    %p14 = scmp.ge.s32.totalorder %s13, 4
    %s23 = sphi 0, %s25
    %s26 = sphi 0, %s23
    %s27 = sphi 0, %s26
    %s43 = sphi 0, %s27
    %s47 = sphi 0, %s47
    %s49 = sphi 0, %s47
    %s50 = sphi 0, %s49
    %s64 = sphi 0, %s50
    %s68 = sphi 0, %s68
    %s70 = sphi 0, %s68
    %s71 = sphi 0, %s70
    %s85 = sphi 0, %s71
    %s89 = sphi 0, %s89
    %s91 = sphi 0, %s89
    %s92 = sphi 0, %s91
    %s106 = sphi 0, %s92
    %s110 = sphi 0, %s110
    %s112 = sphi 0, %s110
    %s113 = sphi 0, %s112
    %s127 = sphi 0, %s113
    %s131 = sphi 0, %s131
    %s133 = sphi 0, %s131
    %s134 = sphi 0, %s133
    %s148 = sphi 0, %s134
    %s152 = sphi 0, %s152
    %s154 = sphi 0, %s152
    %s155 = sphi 0, %s154
    %s169 = sphi 0, %s155
    %s175 = sphi 0, %s177
    %s178 = sphi 0, %s175
    %s179 = sphi 0, %s178
    %s195 = sphi 0, %s179
  $region4: #{model_forward.22} parent=0 // loop_header_branch
    %16 = sbr.rel (%p14) target = $region8
  $region5: #{model_forward.22} parent=0 // loop_body
    %s18 = ssub.s32 %s13, 1
    %s19 = ssub.s32 %s13, 2
    %s20 = sadd.s32 %s13, 1
    %s21 = ssub.s32 %s13, %s20
    %p22 = scmp.eq.s32.totalorder %s21, 0
    %s24 = sadd.s32 %s23, 1
    %s25 = scalar_select %p22, %s23, %s24
    %p28 = pneg %p22
    %p29 = scmp.eq.s32.totalorder %s13, 1
    %p30 = por %p28, %p29
    %p31 = scmp.ne.s32.totalorder %s23, %s26
    %p32 = scmp.eq.s32.totalorder %s13, 0
    %p33 = por %p31, %p32
    %p34 = scmp.ne.s32.totalorder %s23, %s26
    %p35 = scmp.eq.s32.totalorder %s18, 1
    %p36 = por %p34, %p35
    %p37 = scmp.ne.s32.totalorder %s26, %s27
    %p38 = scmp.eq.s32.totalorder %s18, 0
    %p39 = por %p37, %p38
    %p40 = scmp.ne.s32.totalorder %s26, %s27
    %p41 = scmp.eq.s32.totalorder %s19, 1
    %p42 = por %p40, %p41
    %p44 = scmp.ne.s32.totalorder %s27, %s43
    %p45 = scmp.eq.s32.totalorder %s19, 0
    %p46 = por %p44, %p45
    %s48 = sadd.s32 %s47, 1
    %p51 = scmp.eq.s32.totalorder %s13, 1
    %p52 = scmp.ne.s32.totalorder %s47, %s49
    %p53 = scmp.eq.s32.totalorder %s13, 0
    %p54 = por %p52, %p53
    %p55 = scmp.ne.s32.totalorder %s47, %s49
    %p56 = scmp.eq.s32.totalorder %s18, 1
    %p57 = por %p55, %p56
    %p58 = scmp.ne.s32.totalorder %s49, %s50
    %p59 = scmp.eq.s32.totalorder %s18, 0
    %p60 = por %p58, %p59
    %p61 = scmp.ne.s32.totalorder %s49, %s50
    %p62 = scmp.eq.s32.totalorder %s19, 1
    %p63 = por %p61, %p62
    %p65 = scmp.ne.s32.totalorder %s50, %s64
    %p66 = scmp.eq.s32.totalorder %s19, 0
    %p67 = por %p65, %p66
    %s69 = sadd.s32 %s68, 1
    %p72 = scmp.eq.s32.totalorder %s13, 1
    %p73 = scmp.ne.s32.totalorder %s68, %s70
    %p74 = scmp.eq.s32.totalorder %s13, 0
    %p75 = por %p73, %p74
    %p76 = scmp.ne.s32.totalorder %s68, %s70
    %p77 = scmp.eq.s32.totalorder %s18, 1
    %p78 = por %p76, %p77
    %p79 = scmp.ne.s32.totalorder %s70, %s71
    %p80 = scmp.eq.s32.totalorder %s18, 0
    %p81 = por %p79, %p80
    %p82 = scmp.ne.s32.totalorder %s70, %s71
    %p83 = scmp.eq.s32.totalorder %s19, 1
    %p84 = por %p82, %p83
    %p86 = scmp.ne.s32.totalorder %s71, %s85
    %p87 = scmp.eq.s32.totalorder %s19, 0
    %p88 = por %p86, %p87
    %s90 = sadd.s32 %s89, 1
    %p93 = scmp.eq.s32.totalorder %s13, 1
    %p94 = scmp.ne.s32.totalorder %s89, %s91
    %p95 = scmp.eq.s32.totalorder %s13, 0
    %p96 = por %p94, %p95
    %p97 = scmp.ne.s32.totalorder %s89, %s91
    %p98 = scmp.eq.s32.totalorder %s18, 1
    %p99 = por %p97, %p98
    %p100 = scmp.ne.s32.totalorder %s91, %s92
    %p101 = scmp.eq.s32.totalorder %s18, 0
    %p102 = por %p100, %p101
    %p103 = scmp.ne.s32.totalorder %s91, %s92
    %p104 = scmp.eq.s32.totalorder %s19, 1
    %p105 = por %p103, %p104
    %p107 = scmp.ne.s32.totalorder %s92, %s106
    %p108 = scmp.eq.s32.totalorder %s19, 0
    %p109 = por %p107, %p108
    %s111 = sadd.s32 %s110, 1
    %p114 = scmp.eq.s32.totalorder %s13, 1
    %p115 = scmp.ne.s32.totalorder %s110, %s112
    %p116 = scmp.eq.s32.totalorder %s13, 0
    %p117 = por %p115, %p116
    %p118 = scmp.ne.s32.totalorder %s110, %s112
    %p119 = scmp.eq.s32.totalorder %s18, 1
    %p120 = por %p118, %p119
    %p121 = scmp.ne.s32.totalorder %s112, %s113
    %p122 = scmp.eq.s32.totalorder %s18, 0
    %p123 = por %p121, %p122
    %p124 = scmp.ne.s32.totalorder %s112, %s113
    %p125 = scmp.eq.s32.totalorder %s19, 1
    %p126 = por %p124, %p125
    %p128 = scmp.ne.s32.totalorder %s113, %s127
    %p129 = scmp.eq.s32.totalorder %s19, 0
    %p130 = por %p128, %p129
    %s132 = sadd.s32 %s131, 1
    %p135 = scmp.eq.s32.totalorder %s13, 1
    %p136 = scmp.ne.s32.totalorder %s131, %s133
    %p137 = scmp.eq.s32.totalorder %s13, 0
    %p138 = por %p136, %p137
    %p139 = scmp.ne.s32.totalorder %s131, %s133
    %p140 = scmp.eq.s32.totalorder %s18, 1
    %p141 = por %p139, %p140
    %p142 = scmp.ne.s32.totalorder %s133, %s134
    %p143 = scmp.eq.s32.totalorder %s18, 0
    %p144 = por %p142, %p143
    %p145 = scmp.ne.s32.totalorder %s133, %s134
    %p146 = scmp.eq.s32.totalorder %s19, 1
    %p147 = por %p145, %p146
    %p149 = scmp.ne.s32.totalorder %s134, %s148
    %p150 = scmp.eq.s32.totalorder %s19, 0
    %p151 = por %p149, %p150
    %s153 = sadd.s32 %s152, 1
    %p156 = scmp.eq.s32.totalorder %s13, 1
    %p157 = scmp.ne.s32.totalorder %s152, %s154
    %p158 = scmp.eq.s32.totalorder %s13, 0
    %p159 = por %p157, %p158
    %p160 = scmp.ne.s32.totalorder %s152, %s154
    %p161 = scmp.eq.s32.totalorder %s18, 1
    %p162 = por %p160, %p161
    %p163 = scmp.ne.s32.totalorder %s154, %s155
    %p164 = scmp.eq.s32.totalorder %s18, 0
    %p165 = por %p163, %p164
    %p166 = scmp.ne.s32.totalorder %s154, %s155
    %p167 = scmp.eq.s32.totalorder %s19, 1
    %p168 = por %p166, %p167
    %p170 = scmp.ne.s32.totalorder %s155, %s169
    %p171 = scmp.eq.s32.totalorder %s19, 0
    %p172 = por %p170, %p171
    %s173 = ssub.s32 %s13, %s20
    %p174 = scmp.eq.s32.totalorder %s173, 0
    %s176 = sadd.s32 %s175, 1
    %s177 = scalar_select %p174, %s175, %s176
    %p180 = pneg %p174
    %p181 = scmp.eq.s32.totalorder %s13, 1
    %p182 = por %p180, %p181
    %p183 = scmp.ne.s32.totalorder %s175, %s178
    %p184 = scmp.eq.s32.totalorder %s13, 0
    %p185 = por %p183, %p184
    %p186 = scmp.ne.s32.totalorder %s175, %s178
    %p187 = scmp.eq.s32.totalorder %s18, 1
    %p188 = por %p186, %p187
    %p189 = scmp.ne.s32.totalorder %s178, %s179
    %p190 = scmp.eq.s32.totalorder %s18, 0
    %p191 = por %p189, %p190
    %p192 = scmp.ne.s32.totalorder %s178, %s179
    %p193 = scmp.eq.s32.totalorder %s19, 1
    %p194 = por %p192, %p193
    %p196 = scmp.ne.s32.totalorder %s179, %s195
    %p197 = scmp.eq.s32.totalorder %s19, 0
    %p198 = por %p196, %p197
    %p199 = scmp.le.s32.totalorder 1, %s13
    %p200 = scmp.lt.s32.totalorder %s13, 3
    %p201 = pnand %p199, %p200
    %p202 = pneg %p201
    // Predicated region
    $region9: #{model_forward.22} parent=5 // pred_check
      _
    $region10: #{model_forward.22} parent=5 // pred_check_branch
      %204 = sbr.rel (%p201) target = $region12
    $region11: #{model_forward.22} parent=5 // pred_region
      %s205 = ssub.s32 %s13, 1
      // Predicated region
      $region13: #{model_forward.22} parent=11 // pred_check
        %p206 = pneg %p60
      $region14: #{model_forward.22} parent=11 // pred_check_branch
        %208 = sbr.rel (%p206) target = $region16
      $region15: #{model_forward.22} parent=11 // pred_region
        _
      $region16: #{model_forward.22} parent=11 // pred_fallthru
        _
      // Predicated region
      $region17: #{model_forward.22} parent=11 // pred_check
        %p209 = pneg %p81
      $region18: #{model_forward.22} parent=11 // pred_check_branch
        %211 = sbr.rel (%p209) target = $region20
      $region19: #{model_forward.22} parent=11 // pred_region
        _
      $region20: #{model_forward.22} parent=11 // pred_fallthru
        _
      // Predicated region
      $region21: #{model_forward.22} parent=11 // pred_check
        %p212 = pneg %p102
      $region22: #{model_forward.22} parent=11 // pred_check_branch
        %214 = sbr.rel (%p212) target = $region24
      $region23: #{model_forward.22} parent=11 // pred_region
        _
      $region24: #{model_forward.22} parent=11 // pred_fallthru
        _
      // Predicated region
      $region25: #{model_forward.22} parent=11 // pred_check
        %p215 = pneg %p123
      $region26: #{model_forward.22} parent=11 // pred_check_branch
        %217 = sbr.rel (%p215) target = $region28
      $region27: #{model_forward.22} parent=11 // pred_region
        _
      $region28: #{model_forward.22} parent=11 // pred_fallthru
        _
      // Predicated region
      $region29: #{model_forward.22} parent=11 // pred_check
        %p218 = pneg %p144
      $region30: #{model_forward.22} parent=11 // pred_check_branch
        %220 = sbr.rel (%p218) target = $region32
      $region31: #{model_forward.22} parent=11 // pred_region
        _
      $region32: #{model_forward.22} parent=11 // pred_fallthru
        _
      // Predicated region
      $region33: #{model_forward.22} parent=11 // pred_check
        %p221 = pneg %p165
      $region34: #{model_forward.22} parent=11 // pred_check_branch
        %223 = sbr.rel (%p221) target = $region36
      $region35: #{model_forward.22} parent=11 // pred_region
        _
      $region36: #{model_forward.22} parent=11 // pred_fallthru
        _
    $region12: #{model_forward.22} parent=5 // pred_fallthru
      _
    %p224 = scmp.lt.s32.totalorder %s13, 2
    // Predicated region
    $region37: #{model_forward.22} parent=5 // pred_check
      %p225 = pneg %p224
    $region38: #{model_forward.22} parent=5 // pred_check_branch
      %227 = sbr.rel (%p225) target = $region40
    $region39: #{model_forward.22} parent=5 // pred_region
      // Predicated region
      $region41: #{model_forward.22} parent=39 // pred_check
        %p228 = pneg %p33
      $region42: #{model_forward.22} parent=39 // pred_check_branch
        %230 = sbr.rel (%p228) target = $region44
      $region43: #{model_forward.22} parent=39 // pred_region
        %p231 = scmp.lt.s32.totalorder %s13, 1
        %s232 = scalar_select %p231, %s13, 1
        %s233 = smul.addr %s232, 4
        %s234 = scalar_lea.vmem %s0, %s233
      $region44: #{model_forward.22} parent=39 // pred_fallthru
        _
    $region40: #{model_forward.22} parent=5 // pred_fallthru
      _
    %p235 = scmp.le.s32.totalorder 1, %s13
    %p236 = scmp.lt.s32.totalorder %s13, 3
    %p237 = pnand %p235, %p236
    %p238 = pneg %p237
    // Predicated region
    $region45: #{model_forward.22} parent=5 // pred_check
      _
    $region46: #{model_forward.22} parent=5 // pred_check_branch
      %240 = sbr.rel (%p237) target = $region48
    $region47: #{model_forward.22} parent=5 // pred_region
      %s241 = ssub.s32 %s13, 1
      %p242 = scmp.lt.s32.totalorder %s18, 1
      %s243 = scalar_select %p242, %s18, 1
      %s244 = smul.addr %s243, 4
      %s245 = scalar_lea.vmem %s0, %s244
      %p246 = pneg %p39
      %p247 = pneg %p36
      %p248 = pneg %p60
      %p249 = pneg %p57
      %p250 = pneg %p81
      %p251 = pneg %p78
      %p252 = pneg %p102
      %p253 = pneg %p99
      %p254 = pneg %p123
      %p255 = pneg %p120
      %p256 = pneg %p144
      %p257 = pneg %p141
      %p258 = pneg %p165
      %p259 = pneg %p162
      %p260 = pneg %p191
      %p261 = pneg %p188
      %p262 = scmp.lt.s32.totalorder %s18, 1
      %s263 = scalar_select %p262, %s18, 1
      %s264 = smul.addr %s263, 4
      %s265 = scalar_lea.vmem %s7, %s264
      %p266 = scmp.lt.s32.totalorder %s18, 1
      %s267 = scalar_select %p266, %s18, 1
      %s268 = smul.addr %s267, 4
      %s269 = scalar_lea.vmem %s0, %s268
      %p270 = scmp.lt.s32.totalorder %s18, 1
      %s271 = scalar_select %p270, %s18, 1
      %s272 = smul.addr %s271, 4
      %s273 = scalar_lea.vmem %s7, %s272
      %v275 = vld [vmem:[%s269] sm:$0xf]
      %v276 = vld [vmem:[%s1] sm:$0xf]
      %v277 = vld [vmem:[%s1 + $0x4] sm:$0xf]
      %v278 = vld [vmem:[%s1 + $0x8] sm:$0xf]
      %v279 = vld [vmem:[%s1 + $0xc] sm:$0xf]
      %v280 = vld [vmem:[%s2] sm:$0x1]
      %v282 = vlaneseq
      %v283 = vshrl.u32 %v282, 7
      %v284 = vsub.s32 0, %v283
      %v285 = vrot.slane %v280, %v284
      %v291 = vunpack.c.l.b16 %v276
      %v292 = vunpack.c.l.b16 %v277
      %v293 = vunpack.c.l.b16 %v278
      %v294 = vunpack.c.l.b16 %v279
      %v295 = vpack.c.b16 %v292, %v291
      %v296 = vpack.c.b16 %v294, %v293
      %vm299 = vcmask 261120
      %v301 = vsel %vm299, %v275, 0
      %303 = vmatprep.subr.bf16.mxu0 0
      %304 = vmatpush1.bf16.msra.mxu0 %v295
      %305 = vmatprep.subr.bf16.mxu0 0
      %306 = vmatpush1.bf16.msra.mxu0 %v296
      %307 = vmatprep.subr.bf16.mxu0 0
      %308 = vmatpush1.bf16.msra.mxu0 0
      %309 = vmatprep.subr.bf16.mxu0 0
      %310 = vmatpush1.bf16.msra.mxu0 0
      %311 = vmatprep.subr.bf16.mxu0 0
      %312 = vmatpush1.bf16.msra.mxu0 0
      %313 = vmatprep.subr.bf16.mxu0 0
      %314 = vmatpush1.bf16.msra.mxu0 0
      %315 = vmatprep.subr.bf16.mxu0 0
      %316 = vmatpush1.bf16.msra.mxu0 0
      %317 = vmatprep.subr.bf16.mxu0 0
      %318 = vmatpush1.bf16.msra.mxu0 0
      %319 = vmatprep.subr.bf16.mxu0 0
      %320 = vmatpush1.bf16.msra.mxu0 0
      %321 = vmatprep.subr.bf16.mxu0 0
      %322 = vmatpush1.bf16.msra.mxu0 0
      %323 = vmatprep.subr.bf16.mxu0 0
      %324 = vmatpush1.bf16.msra.mxu0 0
      %325 = vmatprep.subr.bf16.mxu0 0
      %326 = vmatpush1.bf16.msra.mxu0 0
      %327 = vmatprep.subr.bf16.mxu0 0
      %328 = vmatpush1.bf16.msra.mxu0 0
      %329 = vmatprep.subr.bf16.mxu0 0
      %330 = vmatpush1.bf16.msra.mxu0 0
      %331 = vmatprep.subr.bf16.mxu0 0
      %332 = vmatpush1.bf16.msra.mxu0 0
      %333 = vmatprep.subr.bf16.mxu0 0
      %334 = vmatpush1.bf16.msra.mxu0 0
      %335 = vmatprep.mubr.bf16.mxu0 0
      %336 = vmatmul.mubr.bf16.gmra.mrb[0].mxu0 %v301
      %v337 = vpop.f32.mrb[0].mxu0
      %v338 = vadd.f32 %v285, %v337
      %v339 = vpop.f32.mrb[0].mxu0
      %v340 = vpop.f32.mrb[0].mxu0
      %v341 = vpop.f32.mrb[0].mxu0
      %342 = vdwg.mxu0
      %v343 = vmax.f32 %v338, 0.0
      %v344 = vpack.c.bf16 %v343, %v343
      %v345 = vld [vmem:[%s3] sm:$0xf]
      %v346 = vld [vmem:[%s3 + $0x4] sm:$0xf]
      %v347 = vld [vmem:[%s3 + $0x8] sm:$0xf]
      %v348 = vld [vmem:[%s3 + $0xc] sm:$0xf]
      %v349 = vld [vmem:[%s3 + $0x10] sm:$0xf]
      %v350 = vld [vmem:[%s3 + $0x14] sm:$0xf]
      %v351 = vld [vmem:[%s3 + $0x18] sm:$0xf]
      %v352 = vld [vmem:[%s3 + $0x1c] sm:$0xf]
      %v353 = vld [vmem:[%s3 + $0x20] sm:$0xf]
      %v354 = vld [vmem:[%s3 + $0x24] sm:$0xf]
      %v355 = vld [vmem:[%s3 + $0x28] sm:$0xf]
      %v356 = vld [vmem:[%s3 + $0x2c] sm:$0xf]
      %v357 = vld [vmem:[%s3 + $0x30] sm:$0xf]
      %v358 = vld [vmem:[%s3 + $0x34] sm:$0xf]
      %v359 = vld [vmem:[%s3 + $0x38] sm:$0xf]
      %v360 = vld [vmem:[%s3 + $0x3c] sm:$0xf]
      %v361 = vld [vmem:[%s4] sm:$0x1]
      %v363 = vlaneseq
      %v364 = vshrl.u32 %v363, 7
      %v365 = vsub.s32 0, %v364
      %v366 = vrot.slane %v361, %v365
      %v384 = vunpack.c.l.b16 %v345
      %v385 = vunpack.c.l.b16 %v346
      %v386 = vunpack.c.l.b16 %v347
      %v387 = vunpack.c.l.b16 %v348
      %v388 = vunpack.c.l.b16 %v349
      %v389 = vunpack.c.l.b16 %v350
      %v390 = vunpack.c.l.b16 %v351
      %v391 = vunpack.c.l.b16 %v352
      %v392 = vunpack.c.l.b16 %v353
      %v393 = vunpack.c.l.b16 %v354
      %v394 = vunpack.c.l.b16 %v355
      %v395 = vunpack.c.l.b16 %v356
      %v396 = vunpack.c.l.b16 %v357
      %v397 = vunpack.c.l.b16 %v358
      %v398 = vunpack.c.l.b16 %v359
      %v399 = vunpack.c.l.b16 %v360
      %v400 = vpack.c.b16 %v385, %v384
      %v401 = vpack.c.b16 %v387, %v386
      %v402 = vpack.c.b16 %v389, %v388
      %v403 = vpack.c.b16 %v391, %v390
      %v404 = vpack.c.b16 %v393, %v392
      %v405 = vpack.c.b16 %v395, %v394
      %v406 = vpack.c.b16 %v397, %v396
      %v407 = vpack.c.b16 %v399, %v398
      %416 = vmatprep.subr.bf16.mxu0 0
      %417 = vmatpush1.bf16.msra.mxu0 %v400
      %418 = vmatprep.subr.bf16.mxu0 0
      %419 = vmatpush1.bf16.msra.mxu0 %v401
      %420 = vmatprep.subr.bf16.mxu0 0
      %421 = vmatpush1.bf16.msra.mxu0 %v402
      %422 = vmatprep.subr.bf16.mxu0 0
      %423 = vmatpush1.bf16.msra.mxu0 %v403
      %424 = vmatprep.subr.bf16.mxu0 0
      %425 = vmatpush1.bf16.msra.mxu0 %v404
      %426 = vmatprep.subr.bf16.mxu0 0
      %427 = vmatpush1.bf16.msra.mxu0 %v405
      %428 = vmatprep.subr.bf16.mxu0 0
      %429 = vmatpush1.bf16.msra.mxu0 %v406
      %430 = vmatprep.subr.bf16.mxu0 0
      %431 = vmatpush1.bf16.msra.mxu0 %v407
      %432 = vmatprep.subr.bf16.mxu0 0
      %433 = vmatpush1.bf16.msra.mxu0 0
      %434 = vmatprep.subr.bf16.mxu0 0
      %435 = vmatpush1.bf16.msra.mxu0 0
      %436 = vmatprep.subr.bf16.mxu0 0
      %437 = vmatpush1.bf16.msra.mxu0 0
      %438 = vmatprep.subr.bf16.mxu0 0
      %439 = vmatpush1.bf16.msra.mxu0 0
      %440 = vmatprep.subr.bf16.mxu0 0
      %441 = vmatpush1.bf16.msra.mxu0 0
      %442 = vmatprep.subr.bf16.mxu0 0
      %443 = vmatpush1.bf16.msra.mxu0 0
      %444 = vmatprep.subr.bf16.mxu0 0
      %445 = vmatpush1.bf16.msra.mxu0 0
      %446 = vmatprep.subr.bf16.mxu0 0
      %447 = vmatpush1.bf16.msra.mxu0 0
      %448 = vmatprep.mubr.bf16.mxu0 0
      %449 = vmatmul.mubr.bf16.gmra.mrb[0].mxu0 %v344
      %v450 = vpop.f32.mrb[0].mxu0
      %v451 = vadd.f32 %v366, %v450
      %v452 = vpop.f32.mrb[0].mxu0
      %v453 = vpop.f32.mrb[0].mxu0
      %v454 = vpop.f32.mrb[0].mxu0
      %455 = vdwg.mxu0
      %v456 = vunpack.c.l.bf16 %v275
      %v457 = vadd.f32 %v451, %v456
      %v458 = vld [vmem:[%s5] sm:$0x1]
      %v459 = vld [vmem:[%s6] sm:$0x1]
      %v460 = vsel %vm299, %v457, 0.0
      %461 = vadd.xlane.f32.xlu0 %v460
      %v462 = vpop.xlane.xlu0 %461
      %v463 = vrcp.pop 32.0
      %v464 = vmul.f32 %v462, %v463
      %v465 = vsub.f32 %v457, %v464
      %v466 = vmul.f32 %v465, %v465
      %v467 = vsel %vm299, %v466, 0.0
      %468 = vadd.xlane.f32.xlu0 %v467
      %v469 = vpop.xlane.xlu0 %468
      %v470 = vmul.f32 %v469, %v463
      %v471 = vadd.f32 %v470, 1e-05
      %v472 = vrsqrt.pop %v471
      %v473 = vmul.f32 %v465, %v472
      %v475 = vlaneseq
      %v476 = vshrl.u32 %v475, 7
      %v477 = vsub.s32 0, %v476
      %v478 = vrot.slane %v458, %v477
      %v480 = vmul.f32 %v473, %v478
      %v482 = vlaneseq
      %v483 = vshrl.u32 %v482, 7
      %v484 = vsub.s32 0, %v483
      %v485 = vrot.slane %v459, %v484
      %v487 = vadd.f32 %v480, %v485
      %v488 = vpack.c.bf16 %v487, %v487
      %vm489 = vcmask 257024
      %490 = vst.msk [vmem:[%s273] sm:$0xf] %vm489, %v488
      %p491 = scmp.lt.s32.totalorder %s18, 1
      %s492 = scalar_select %p491, %s18, 1
      %s493 = smul.addr %s492, 4
      %s494 = scalar_lea.vmem %s7, %s493
      // Predicated region
      $region49: #{model_forward.22} parent=47 // pred_check
        %p495 = pneg %p188
      $region50: #{model_forward.22} parent=47 // pred_check_branch
        %497 = sbr.rel (%p495) target = $region52
      $region51: #{model_forward.22} parent=47 // pred_region
        _
      $region52: #{model_forward.22} parent=47 // pred_fallthru
        _
    $region48: #{model_forward.22} parent=5 // pred_fallthru
      _
    %p498 = scmp.le.s32.totalorder 2, %s13
    // Predicated region
    $region53: #{model_forward.22} parent=5 // pred_check
      %p499 = pneg %p498
    $region54: #{model_forward.22} parent=5 // pred_check_branch
      %501 = sbr.rel (%p499) target = $region56
    $region55: #{model_forward.22} parent=5 // pred_region
      %s502 = ssub.s32 %s13, 2
      // Predicated region
      $region57: #{model_forward.22} parent=55 // pred_check
        %p503 = pneg %p194
      $region58: #{model_forward.22} parent=55 // pred_check_branch
        %505 = sbr.rel (%p503) target = $region60
      $region59: #{model_forward.22} parent=55 // pred_region
        %p506 = scmp.lt.s32.totalorder %s19, 1
        %s507 = scalar_select %p506, %s19, 1
        %s508 = smul.addr %s507, 4
        %s509 = scalar_lea.vmem %s7, %s508
      $region60: #{model_forward.22} parent=55 // pred_fallthru
        _
    $region56: #{model_forward.22} parent=5 // pred_fallthru
      _
  $region6: #{model_forward.22} parent=0 // loop_footer
    %s17 = sadd.s32 1, %s13
  $region7: #{model_forward.22} parent=0 // loop_footer_branch
    %12 = sbr.rel target = $region3
  $region8: #{model_forward.22} parent=0 // loop_exit
    _

// kernel: model_forward.37
$region0: #{model_forward.37}
  #allocation0 [shape = 'u32[]', space=smem, size = 0x4, offset = 0x4, fixed_abs, tag = 'smem constant byte address 0x4 - core index']
  #allocation1 [shape = 'u32[144,128]{1,0:T(1,128)}', space=vmem, size = 0x12000, scoped, tag = 'internal scratch']
  %s0 = inlined_call_operand.vmem [shape: bf16[16,32], index: 0, kind: input, shape index: {}]
  %s1 = inlined_call_operand.vmem [shape: bf16[32,64], index: 1, kind: input, shape index: {}]
  %s2 = inlined_call_operand.vmem [shape: f32[1,64], index: 2, kind: input, shape index: {}]
  %s3 = inlined_call_operand.vmem [shape: bf16[32,4], index: 3, kind: input, shape index: {}]
  %s4 = inlined_call_operand.vmem [shape: f32[1,4], index: 4, kind: input, shape index: {}]
  %s5 = inlined_call_operand.hbm [shape: f32[16,64], index: 5, kind: output, shape index: {0}]
  %s6 = inlined_call_operand.vmem [shape: f32[16,4], index: 6, kind: output, shape index: {1}]
  %7 = xla_tuple %s5, %s6
  %s8 = sld [smem:[#allocation0]]
  $region61: #{model_forward.37} parent=0
    _
  %s10 = ssub.s32 1, %s8
  %s11 = scalar_select 0, %s10, %s8
  $region1: #{model_forward.37} parent=0
    #allocation2 [shape = 'u8[8192]{0}', space=vmem, size = 0x2000, scoped, tag = 'output window, operand 0']
    #allocation3 [shape = 's32[2]{0}', space=sflag, size = 0x8, scoped, tag = 'scoped memory for model_forward.37']
    %12 = vsyncpa [#allocation3], 0
    %s13 = scalar_lea.sflag [#allocation3], 1
    %14 = vsyncpa %s13, 0
    loop: start=0, step=1, limit=4
    $region2: #{model_forward.37} parent=1 // loop_pre_header
      _
    $region3: #{model_forward.37} parent=1 // loop_header
      %s16 = sphi 0, %s20
      %p17 = scmp.ge.s32.totalorder %s16, 4
      %s26 = sphi 0, %s28
      %s29 = sphi 0, %s26
      %s30 = sphi 0, %s29
      %s46 = sphi 0, %s30
      %s50 = sphi 0, %s50
      %s52 = sphi 0, %s50
      %s53 = sphi 0, %s52
      %s67 = sphi 0, %s53
      %s71 = sphi 0, %s71
      %s73 = sphi 0, %s71
      %s74 = sphi 0, %s73
      %s88 = sphi 0, %s74
      %s92 = sphi 0, %s92
      %s94 = sphi 0, %s92
      %s95 = sphi 0, %s94
      %s109 = sphi 0, %s95
      %s113 = sphi 0, %s113
      %s115 = sphi 0, %s113
      %s116 = sphi 0, %s115
      %s130 = sphi 0, %s116
      %s136 = sphi 0, %s138
      %s139 = sphi 0, %s136
      %s140 = sphi 0, %s139
      %s156 = sphi 0, %s140
      %s162 = sphi 0, %s164
      %s165 = sphi 0, %s162
      %s166 = sphi 0, %s165
      %s182 = sphi 0, %s166
    $region4: #{model_forward.37} parent=1 // loop_header_branch
      %19 = sbr.rel (%p17) target = $region8
    $region5: #{model_forward.37} parent=1 // loop_body
      %s21 = ssub.s32 %s16, 1
      %s22 = ssub.s32 %s16, 2
      %s23 = sadd.s32 %s16, 1
      %s24 = ssub.s32 %s16, %s23
      %p25 = scmp.eq.s32.totalorder %s24, 0
      %s27 = sadd.s32 %s26, 1
      %s28 = scalar_select %p25, %s26, %s27
      %p31 = pneg %p25
      %p32 = scmp.eq.s32.totalorder %s16, 1
      %p33 = por %p31, %p32
      %p34 = scmp.ne.s32.totalorder %s26, %s29
      %p35 = scmp.eq.s32.totalorder %s16, 0
      %p36 = por %p34, %p35
      %p37 = scmp.ne.s32.totalorder %s26, %s29
      %p38 = scmp.eq.s32.totalorder %s21, 1
      %p39 = por %p37, %p38
      %p40 = scmp.ne.s32.totalorder %s29, %s30
      %p41 = scmp.eq.s32.totalorder %s21, 0
      %p42 = por %p40, %p41
      %p43 = scmp.ne.s32.totalorder %s29, %s30
      %p44 = scmp.eq.s32.totalorder %s22, 1
      %p45 = por %p43, %p44
      %p47 = scmp.ne.s32.totalorder %s30, %s46
      %p48 = scmp.eq.s32.totalorder %s22, 0
      %p49 = por %p47, %p48
      %s51 = sadd.s32 %s50, 1
      %p54 = scmp.eq.s32.totalorder %s16, 1
      %p55 = scmp.ne.s32.totalorder %s50, %s52
      %p56 = scmp.eq.s32.totalorder %s16, 0
      %p57 = por %p55, %p56
      %p58 = scmp.ne.s32.totalorder %s50, %s52
      %p59 = scmp.eq.s32.totalorder %s21, 1
      %p60 = por %p58, %p59
      %p61 = scmp.ne.s32.totalorder %s52, %s53
      %p62 = scmp.eq.s32.totalorder %s21, 0
      %p63 = por %p61, %p62
      %p64 = scmp.ne.s32.totalorder %s52, %s53
      %p65 = scmp.eq.s32.totalorder %s22, 1
      %p66 = por %p64, %p65
      %p68 = scmp.ne.s32.totalorder %s53, %s67
      %p69 = scmp.eq.s32.totalorder %s22, 0
      %p70 = por %p68, %p69
      %s72 = sadd.s32 %s71, 1
      %p75 = scmp.eq.s32.totalorder %s16, 1
      %p76 = scmp.ne.s32.totalorder %s71, %s73
      %p77 = scmp.eq.s32.totalorder %s16, 0
      %p78 = por %p76, %p77
      %p79 = scmp.ne.s32.totalorder %s71, %s73
      %p80 = scmp.eq.s32.totalorder %s21, 1
      %p81 = por %p79, %p80
      %p82 = scmp.ne.s32.totalorder %s73, %s74
      %p83 = scmp.eq.s32.totalorder %s21, 0
      %p84 = por %p82, %p83
      %p85 = scmp.ne.s32.totalorder %s73, %s74
      %p86 = scmp.eq.s32.totalorder %s22, 1
      %p87 = por %p85, %p86
      %p89 = scmp.ne.s32.totalorder %s74, %s88
      %p90 = scmp.eq.s32.totalorder %s22, 0
      %p91 = por %p89, %p90
      %s93 = sadd.s32 %s92, 1
      %p96 = scmp.eq.s32.totalorder %s16, 1
      %p97 = scmp.ne.s32.totalorder %s92, %s94
      %p98 = scmp.eq.s32.totalorder %s16, 0
      %p99 = por %p97, %p98
      %p100 = scmp.ne.s32.totalorder %s92, %s94
      %p101 = scmp.eq.s32.totalorder %s21, 1
      %p102 = por %p100, %p101
      %p103 = scmp.ne.s32.totalorder %s94, %s95
      %p104 = scmp.eq.s32.totalorder %s21, 0
      %p105 = por %p103, %p104
      %p106 = scmp.ne.s32.totalorder %s94, %s95
      %p107 = scmp.eq.s32.totalorder %s22, 1
      %p108 = por %p106, %p107
      %p110 = scmp.ne.s32.totalorder %s95, %s109
      %p111 = scmp.eq.s32.totalorder %s22, 0
      %p112 = por %p110, %p111
      %s114 = sadd.s32 %s113, 1
      %p117 = scmp.eq.s32.totalorder %s16, 1
      %p118 = scmp.ne.s32.totalorder %s113, %s115
      %p119 = scmp.eq.s32.totalorder %s16, 0
      %p120 = por %p118, %p119
      %p121 = scmp.ne.s32.totalorder %s113, %s115
      %p122 = scmp.eq.s32.totalorder %s21, 1
      %p123 = por %p121, %p122
      %p124 = scmp.ne.s32.totalorder %s115, %s116
      %p125 = scmp.eq.s32.totalorder %s21, 0
      %p126 = por %p124, %p125
      %p127 = scmp.ne.s32.totalorder %s115, %s116
      %p128 = scmp.eq.s32.totalorder %s22, 1
      %p129 = por %p127, %p128
      %p131 = scmp.ne.s32.totalorder %s116, %s130
      %p132 = scmp.eq.s32.totalorder %s22, 0
      %p133 = por %p131, %p132
      %s134 = ssub.s32 %s16, %s23
      %p135 = scmp.eq.s32.totalorder %s134, 0
      %s137 = sadd.s32 %s136, 1
      %s138 = scalar_select %p135, %s136, %s137
      %p141 = pneg %p135
      %p142 = scmp.eq.s32.totalorder %s16, 1
      %p143 = por %p141, %p142
      %p144 = scmp.ne.s32.totalorder %s136, %s139
      %p145 = scmp.eq.s32.totalorder %s16, 0
      %p146 = por %p144, %p145
      %p147 = scmp.ne.s32.totalorder %s136, %s139
      %p148 = scmp.eq.s32.totalorder %s21, 1
      %p149 = por %p147, %p148
      %p150 = scmp.ne.s32.totalorder %s139, %s140
      %p151 = scmp.eq.s32.totalorder %s21, 0
      %p152 = por %p150, %p151
      %p153 = scmp.ne.s32.totalorder %s139, %s140
      %p154 = scmp.eq.s32.totalorder %s22, 1
      %p155 = por %p153, %p154
      %p157 = scmp.ne.s32.totalorder %s140, %s156
      %p158 = scmp.eq.s32.totalorder %s22, 0
      %p159 = por %p157, %p158
      %s160 = ssub.s32 %s16, %s23
      %p161 = scmp.eq.s32.totalorder %s160, 0
      %s163 = sadd.s32 %s162, 1
      %s164 = scalar_select %p161, %s162, %s163
      %p167 = pneg %p161
      %p168 = scmp.eq.s32.totalorder %s16, 1
      %p169 = por %p167, %p168
      %p170 = scmp.ne.s32.totalorder %s162, %s165
      %p171 = scmp.eq.s32.totalorder %s16, 0
      %p172 = por %p170, %p171
      %p173 = scmp.ne.s32.totalorder %s162, %s165
      %p174 = scmp.eq.s32.totalorder %s21, 1
      %p175 = por %p173, %p174
      %p176 = scmp.ne.s32.totalorder %s165, %s166
      %p177 = scmp.eq.s32.totalorder %s21, 0
      %p178 = por %p176, %p177
      %p179 = scmp.ne.s32.totalorder %s165, %s166
      %p180 = scmp.eq.s32.totalorder %s22, 1
      %p181 = por %p179, %p180
      %p183 = scmp.ne.s32.totalorder %s166, %s182
      %p184 = scmp.eq.s32.totalorder %s22, 0
      %p185 = por %p183, %p184
      %p186 = scmp.le.s32.totalorder 1, %s16
      %p187 = scmp.lt.s32.totalorder %s16, 3
      %p188 = pnand %p186, %p187
      %p189 = pneg %p188
      // Predicated region
      $region9: #{model_forward.37} parent=5 // pred_check
        _
      $region10: #{model_forward.37} parent=5 // pred_check_branch
        %191 = sbr.rel (%p188) target = $region12
      $region11: #{model_forward.37} parent=5 // pred_region
        %s192 = ssub.s32 %s16, 1
        // Predicated region
        $region13: #{model_forward.37} parent=11 // pred_check
          %p193 = pneg %p63
        $region14: #{model_forward.37} parent=11 // pred_check_branch
          %195 = sbr.rel (%p193) target = $region16
        $region15: #{model_forward.37} parent=11 // pred_region
          _
        $region16: #{model_forward.37} parent=11 // pred_fallthru
          _
        // Predicated region
        $region17: #{model_forward.37} parent=11 // pred_check
          %p196 = pneg %p84
        $region18: #{model_forward.37} parent=11 // pred_check_branch
          %198 = sbr.rel (%p196) target = $region20
        $region19: #{model_forward.37} parent=11 // pred_region
          _
        $region20: #{model_forward.37} parent=11 // pred_fallthru
          _
        // Predicated region
        $region21: #{model_forward.37} parent=11 // pred_check
          %p199 = pneg %p105
        $region22: #{model_forward.37} parent=11 // pred_check_branch
          %201 = sbr.rel (%p199) target = $region24
        $region23: #{model_forward.37} parent=11 // pred_region
          _
        $region24: #{model_forward.37} parent=11 // pred_fallthru
          _
        // Predicated region
        $region25: #{model_forward.37} parent=11 // pred_check
          %p202 = pneg %p126
        $region26: #{model_forward.37} parent=11 // pred_check_branch
          %204 = sbr.rel (%p202) target = $region28
        $region27: #{model_forward.37} parent=11 // pred_region
          _
        $region28: #{model_forward.37} parent=11 // pred_fallthru
          _
      $region12: #{model_forward.37} parent=5 // pred_fallthru
        _
      %p205 = scmp.lt.s32.totalorder %s16, 2
      // Predicated region
      $region29: #{model_forward.37} parent=5 // pred_check
        %p206 = pneg %p205
      $region30: #{model_forward.37} parent=5 // pred_check_branch
        %208 = sbr.rel (%p206) target = $region32
      $region31: #{model_forward.37} parent=5 // pred_region
        // Predicated region
        $region33: #{model_forward.37} parent=31 // pred_check
          %p209 = pneg %p36
        $region34: #{model_forward.37} parent=31 // pred_check_branch
          %211 = sbr.rel (%p209) target = $region36
        $region35: #{model_forward.37} parent=31 // pred_region
          %p212 = scmp.lt.s32.totalorder %s16, 1
          %s213 = scalar_select %p212, %s16, 1
          %s214 = smul.addr %s213, 4
          %s215 = scalar_lea.vmem %s0, %s214
        $region36: #{model_forward.37} parent=31 // pred_fallthru
          _
      $region32: #{model_forward.37} parent=5 // pred_fallthru
        _
      %p216 = scmp.le.s32.totalorder 1, %s16
      %p217 = scmp.lt.s32.totalorder %s16, 3
      %p218 = pnand %p216, %p217
      %p219 = pneg %p218
      // Predicated region
      $region37: #{model_forward.37} parent=5 // pred_check
        _
      $region38: #{model_forward.37} parent=5 // pred_check_branch
        %221 = sbr.rel (%p218) target = $region40
      $region39: #{model_forward.37} parent=5 // pred_region
        %s222 = ssub.s32 %s16, 1
        %p223 = scmp.lt.s32.totalorder %s21, 1
        %s224 = scalar_select %p223, %s21, 1
        %s225 = smul.addr %s224, 4
        %s226 = scalar_lea.vmem %s0, %s225
        %p227 = pneg %p42
        %p228 = pneg %p39
        %p229 = pneg %p63
        %p230 = pneg %p60
        %p231 = pneg %p84
        %p232 = pneg %p81
        %p233 = pneg %p105
        %p234 = pneg %p102
        %p235 = pneg %p126
        %p236 = pneg %p123
        %p237 = pneg %p152
        %p238 = pneg %p149
        %s239 = sand.u32 %s139, 1
        %s240 = scalar_lea.sflag [#allocation3], %s239
        %s241 = sand.u32 %s139, 1
        %s242 = smul.addr %s241, 8
        %s243 = scalar_lea.vmem [#allocation2], %s242
        %p244 = pneg %p178
        %p245 = pneg %p175
        %p246 = scmp.lt.s32.totalorder %s21, 1
        %s247 = scalar_select %p246, %s21, 1
        %s248 = smul.addr %s247, 8
        %s249 = scalar_lea.vmem %s6, %s248
        %p250 = scmp.lt.s32.totalorder %s21, 1
        %s251 = scalar_select %p250, %s21, 1
        %s252 = smul.addr %s251, 4
        %s253 = scalar_lea.vmem %s0, %s252
        %p254 = scmp.lt.s32.totalorder %s21, 1
        %s255 = scalar_select %p254, %s21, 1
        %s256 = smul.addr %s255, 8
        %s257 = scalar_lea.vmem %s6, %s256
        %v259 = vld [vmem:[%s253] sm:$0xf]
        %v260 = vld [vmem:[%s1] sm:$0xf]
        %v261 = vld [vmem:[%s1 + $0x4] sm:$0xf]
        %v262 = vld [vmem:[%s1 + $0x8] sm:$0xf]
        %v263 = vld [vmem:[%s1 + $0xc] sm:$0xf]
        %v264 = vld [vmem:[%s2] sm:$0x1]
        %v266 = vlaneseq
        %v267 = vshrl.u32 %v266, 7
        %v268 = vsub.s32 0, %v267
        %v269 = vrot.slane %v264, %v268
        %v275 = vunpack.c.l.b16 %v260
        %v276 = vunpack.c.l.b16 %v261
        %v277 = vunpack.c.l.b16 %v262
        %v278 = vunpack.c.l.b16 %v263
        %v279 = vpack.c.b16 %v276, %v275
        %v280 = vpack.c.b16 %v278, %v277
        %vm283 = vcmask 261120
        %v285 = vsel %vm283, %v259, 0
        %287 = vmatprep.subr.bf16.mxu0 0
        %288 = vmatpush1.bf16.msra.mxu0 %v279
        %289 = vmatprep.subr.bf16.mxu0 0
        %290 = vmatpush1.bf16.msra.mxu0 %v280
        %291 = vmatprep.subr.bf16.mxu0 0
        %292 = vmatpush1.bf16.msra.mxu0 0
        %293 = vmatprep.subr.bf16.mxu0 0
        %294 = vmatpush1.bf16.msra.mxu0 0
        %295 = vmatprep.subr.bf16.mxu0 0
        %296 = vmatpush1.bf16.msra.mxu0 0
        %297 = vmatprep.subr.bf16.mxu0 0
        %298 = vmatpush1.bf16.msra.mxu0 0
        %299 = vmatprep.subr.bf16.mxu0 0
        %300 = vmatpush1.bf16.msra.mxu0 0
        %301 = vmatprep.subr.bf16.mxu0 0
        %302 = vmatpush1.bf16.msra.mxu0 0
        %303 = vmatprep.subr.bf16.mxu0 0
        %304 = vmatpush1.bf16.msra.mxu0 0
        %305 = vmatprep.subr.bf16.mxu0 0
        %306 = vmatpush1.bf16.msra.mxu0 0
        %307 = vmatprep.subr.bf16.mxu0 0
        %308 = vmatpush1.bf16.msra.mxu0 0
        %309 = vmatprep.subr.bf16.mxu0 0
        %310 = vmatpush1.bf16.msra.mxu0 0
        %311 = vmatprep.subr.bf16.mxu0 0
        %312 = vmatpush1.bf16.msra.mxu0 0
        %313 = vmatprep.subr.bf16.mxu0 0
        %314 = vmatpush1.bf16.msra.mxu0 0
        %315 = vmatprep.subr.bf16.mxu0 0
        %316 = vmatpush1.bf16.msra.mxu0 0
        %317 = vmatprep.subr.bf16.mxu0 0
        %318 = vmatpush1.bf16.msra.mxu0 0
        %319 = vmatprep.mubr.bf16.mxu0 0
        %320 = vmatmul.mubr.bf16.gmra.mrb[0].mxu0 %v285
        %v321 = vpop.f32.mrb[0].mxu0
        %v322 = vadd.f32 %v269, %v321
        %v323 = vpop.f32.mrb[0].mxu0
        %v324 = vpop.f32.mrb[0].mxu0
        %v325 = vpop.f32.mrb[0].mxu0
        %326 = vdwg.mxu0
        %vm327 = vcmask 523264
        %328 = vst.msk [vmem:[%s243] sm:$0xff] %vm327, %v322
        %v329 = vld [vmem:[%s3] sm:$0xf]
        %v330 = vld [vmem:[%s3 + $0x4] sm:$0xf]
        %v331 = vld [vmem:[%s3 + $0x8] sm:$0xf]
        %v332 = vld [vmem:[%s3 + $0xc] sm:$0xf]
        %v333 = vld [vmem:[%s4] sm:$0x1]
        %v335 = vlaneseq
        %v336 = vshrl.u32 %v335, 7
        %v337 = vsub.s32 0, %v336
        %v338 = vrot.slane %v333, %v337
        %v344 = vunpack.c.l.b16 %v329
        %v345 = vunpack.c.l.b16 %v330
        %v346 = vunpack.c.l.b16 %v331
        %v347 = vunpack.c.l.b16 %v332
        %v348 = vpack.c.b16 %v345, %v344
        %v349 = vpack.c.b16 %v347, %v346
        %352 = vmatprep.subr.bf16.mxu0 0
        %353 = vmatpush1.bf16.msra.mxu0 %v348
        %354 = vmatprep.subr.bf16.mxu0 0
        %355 = vmatpush1.bf16.msra.mxu0 %v349
        %356 = vmatprep.subr.bf16.mxu0 0
        %357 = vmatpush1.bf16.msra.mxu0 0
        %358 = vmatprep.subr.bf16.mxu0 0
        %359 = vmatpush1.bf16.msra.mxu0 0
        %360 = vmatprep.subr.bf16.mxu0 0
        %361 = vmatpush1.bf16.msra.mxu0 0
        %362 = vmatprep.subr.bf16.mxu0 0
        %363 = vmatpush1.bf16.msra.mxu0 0
        %364 = vmatprep.subr.bf16.mxu0 0
        %365 = vmatpush1.bf16.msra.mxu0 0
        %366 = vmatprep.subr.bf16.mxu0 0
        %367 = vmatpush1.bf16.msra.mxu0 0
        %368 = vmatprep.subr.bf16.mxu0 0
        %369 = vmatpush1.bf16.msra.mxu0 0
        %370 = vmatprep.subr.bf16.mxu0 0
        %371 = vmatpush1.bf16.msra.mxu0 0
        %372 = vmatprep.subr.bf16.mxu0 0
        %373 = vmatpush1.bf16.msra.mxu0 0
        %374 = vmatprep.subr.bf16.mxu0 0
        %375 = vmatpush1.bf16.msra.mxu0 0
        %376 = vmatprep.subr.bf16.mxu0 0
        %377 = vmatpush1.bf16.msra.mxu0 0
        %378 = vmatprep.subr.bf16.mxu0 0
        %379 = vmatpush1.bf16.msra.mxu0 0
        %380 = vmatprep.subr.bf16.mxu0 0
        %381 = vmatpush1.bf16.msra.mxu0 0
        %382 = vmatprep.subr.bf16.mxu0 0
        %383 = vmatpush1.bf16.msra.mxu0 0
        %384 = vmatprep.mubr.bf16.mxu0 0
        %385 = vmatmul.mubr.bf16.gmra.mrb[0].mxu0 %v285
        %v386 = vpop.f32.mrb[0].mxu0
        %v387 = vadd.f32 %v338, %v386
        %v388 = vpop.f32.mrb[0].mxu0
        %v389 = vpop.f32.mrb[0].mxu0
        %v390 = vpop.f32.mrb[0].mxu0
        %391 = vdwg.mxu0
        %v392 = vtanh.pop %v387
        %vm393 = vcmask 31744
        %394 = vst.msk [vmem:[%s257] sm:$0xff] %vm393, %v392
        %s395 = sand.u32 %s139, 1
        %s396 = scalar_lea.sflag [#allocation3], %s395
        %s397 = sand.u32 %s139, 1
        %s398 = smul.addr %s397, 8
        %s399 = scalar_lea.vmem [#allocation2], %s398
        %p400 = scmp.lt.s32.totalorder %s21, 1
        %s401 = scalar_select %p400, %s21, 1
        %s402 = smul.addr %s401, 8
        %s403 = scalar_lea.vmem %s6, %s402
        // Predicated region
        $region41: #{model_forward.37} parent=39 // pred_check
          %p404 = pneg %p149
        $region42: #{model_forward.37} parent=39 // pred_check_branch
          %406 = sbr.rel (%p404) target = $region44
        $region43: #{model_forward.37} parent=39 // pred_region
          %s408 = ssub.s32 128, 128
          %409 = vsyncadd %s396, %s408
          %s410 = smul.addr %s21, 128
          %s411 = scalar_lea.hbm %s5, %s410
          %s413 = sshll.u32 %s399, 4
          %s414 = int_to_ptr.vmem [resolvable:$true] %s413
          %416 = dma.vmem_to_hbm [thread:$0]  %s414, 128, %s411, %s396
        $region44: #{model_forward.37} parent=39 // pred_fallthru
          _
        // Predicated region
        $region45: #{model_forward.37} parent=39 // pred_check
          %p417 = pneg %p175
        $region46: #{model_forward.37} parent=39 // pred_check_branch
          %419 = sbr.rel (%p417) target = $region48
        $region47: #{model_forward.37} parent=39 // pred_region
          _
        $region48: #{model_forward.37} parent=39 // pred_fallthru
          _
      $region40: #{model_forward.37} parent=5 // pred_fallthru
        _
      %p420 = scmp.le.s32.totalorder 2, %s16
      // Predicated region
      $region49: #{model_forward.37} parent=5 // pred_check
        %p421 = pneg %p420
      $region50: #{model_forward.37} parent=5 // pred_check_branch
        %423 = sbr.rel (%p421) target = $region52
      $region51: #{model_forward.37} parent=5 // pred_region
        %s424 = ssub.s32 %s16, 2
        // Predicated region
        $region53: #{model_forward.37} parent=51 // pred_check
          %p425 = pneg %p155
        $region54: #{model_forward.37} parent=51 // pred_check_branch
          %427 = sbr.rel (%p425) target = $region56
        $region55: #{model_forward.37} parent=51 // pred_region
          %s428 = sand.u32 %s140, 1
          %s429 = scalar_lea.sflag [#allocation3], %s428
          %s430 = sand.u32 %s140, 1
          %s431 = smul.addr %s430, 8
          %s432 = scalar_lea.vmem [#allocation2], %s431
          %433 = dma.done %s429, 128
        $region56: #{model_forward.37} parent=51 // pred_fallthru
          _
        // Predicated region
        $region57: #{model_forward.37} parent=51 // pred_check
          %p434 = pneg %p181
        $region58: #{model_forward.37} parent=51 // pred_check_branch
          %436 = sbr.rel (%p434) target = $region60
        $region59: #{model_forward.37} parent=51 // pred_region
          %p437 = scmp.lt.s32.totalorder %s22, 1
          %s438 = scalar_select %p437, %s22, 1
          %s439 = smul.addr %s438, 8
          %s440 = scalar_lea.vmem %s6, %s439
        $region60: #{model_forward.37} parent=51 // pred_fallthru
          _
      $region52: #{model_forward.37} parent=5 // pred_fallthru
        _
    $region6: #{model_forward.37} parent=1 // loop_footer
      %s20 = sadd.s32 1, %s16
    $region7: #{model_forward.37} parent=1 // loop_footer_branch
      %15 = sbr.rel target = $region3
    $region8: #{model_forward.37} parent=1 // loop_exit
      _
    %441 = vsyncpa [#allocation3], 1
    %s442 = scalar_lea.sflag [#allocation3], 1
    %443 = vsyncpa %s442, 1

// kernel: model_forward.30
$region0: #{model_forward.30}
  #allocation0 [shape = 'u32[]', space=smem, size = 0x4, offset = 0x4, fixed_abs, tag = 'smem constant byte address 0x4 - core index']
  #allocation1 [shape = 'u32[144,128]{1,0:T(1,128)}', space=vmem, size = 0x12000, scoped, tag = 'internal scratch']
  %s0 = inlined_call_operand.vmem [shape: bf16[2,8,32], index: 0, kind: input, shape index: {}]
  %s1 = inlined_call_operand.vmem [shape: bf16[32,32], index: 1, kind: input, shape index: {}]
  %s2 = inlined_call_operand.vmem [shape: f32[1,32], index: 2, kind: input, shape index: {}]
  %s3 = inlined_call_operand.vmem [shape: bf16[2,2,8,32], index: 3, kind: input, shape index: {}, may-alias: {3,4}]
  %s4 = inlined_call_operand.vmem [shape: bf16[2,2,8,32], index: 4, kind: input, shape index: {}, may-alias: {3,4}]
  %s5 = inlined_call_operand.vmem [shape: f32[2,1,8], index: 5, kind: input, shape index: {}]
  %s6 = inlined_call_operand.vmem [shape: bf16[32,32], index: 6, kind: input, shape index: {}]
  %s7 = inlined_call_operand.vmem [shape: f32[1,32], index: 7, kind: input, shape index: {}]
  %s8 = inlined_call_operand.vmem [shape: f32[1,32], index: 8, kind: input, shape index: {}]
  %s9 = inlined_call_operand.vmem [shape: f32[1,32], index: 9, kind: input, shape index: {}]
  %s10 = inlined_call_operand.vmem [shape: bf16[2,8,32], index: 10, kind: output, shape index: {}]
  %s11 = sld [smem:[#allocation0]]
  $region73: #{model_forward.30} parent=0
    _
  %s13 = ssub.s32 1, %s11
  %s14 = scalar_select 0, %s13, %s11
  loop: start=0, step=1, limit=4
  $region2: #{model_forward.30} parent=0 // loop_pre_header
    _
  $region3: #{model_forward.30} parent=0 // loop_header
    %s16 = sphi 0, %s20
    %p17 = scmp.ge.s32.totalorder %s16, 4
    %s26 = sphi 0, %s28
    %s29 = sphi 0, %s26
    %s30 = sphi 0, %s29
    %s46 = sphi 0, %s30
    %s50 = sphi 0, %s50
    %s52 = sphi 0, %s50
    %s53 = sphi 0, %s52
    %s67 = sphi 0, %s53
    %s71 = sphi 0, %s71
    %s73 = sphi 0, %s71
    %s74 = sphi 0, %s73
    %s88 = sphi 0, %s74
    %s94 = sphi 0, %s96
    %s97 = sphi 0, %s94
    %s98 = sphi 0, %s97
    %s114 = sphi 0, %s98
    %s120 = sphi 0, %s122
    %s123 = sphi 0, %s120
    %s124 = sphi 0, %s123
    %s140 = sphi 0, %s124
    %s146 = sphi 0, %s148
    %s149 = sphi 0, %s146
    %s150 = sphi 0, %s149
    %s166 = sphi 0, %s150
    %s170 = sphi 0, %s170
    %s172 = sphi 0, %s170
    %s173 = sphi 0, %s172
    %s187 = sphi 0, %s173
    %s191 = sphi 0, %s191
    %s193 = sphi 0, %s191
    %s194 = sphi 0, %s193
    %s208 = sphi 0, %s194
    %s212 = sphi 0, %s212
    %s214 = sphi 0, %s212
    %s215 = sphi 0, %s214
    %s229 = sphi 0, %s215
    %s233 = sphi 0, %s233
    %s235 = sphi 0, %s233
    %s236 = sphi 0, %s235
    %s250 = sphi 0, %s236
    %s256 = sphi 0, %s258
    %s259 = sphi 0, %s256
    %s260 = sphi 0, %s259
    %s276 = sphi 0, %s260
  $region4: #{model_forward.30} parent=0 // loop_header_branch
    %19 = sbr.rel (%p17) target = $region8
  $region5: #{model_forward.30} parent=0 // loop_body
    %s21 = ssub.s32 %s16, 1
    %s22 = ssub.s32 %s16, 2
    %s23 = sadd.s32 %s16, 1
    %s24 = ssub.s32 %s16, %s23
    %p25 = scmp.eq.s32.totalorder %s24, 0
    %s27 = sadd.s32 %s26, 1
    %s28 = scalar_select %p25, %s26, %s27
    %p31 = pneg %p25
    %p32 = scmp.eq.s32.totalorder %s16, 1
    %p33 = por %p31, %p32
    %p34 = scmp.ne.s32.totalorder %s26, %s29
    %p35 = scmp.eq.s32.totalorder %s16, 0
    %p36 = por %p34, %p35
    %p37 = scmp.ne.s32.totalorder %s26, %s29
    %p38 = scmp.eq.s32.totalorder %s21, 1
    %p39 = por %p37, %p38
    %p40 = scmp.ne.s32.totalorder %s29, %s30
    %p41 = scmp.eq.s32.totalorder %s21, 0
    %p42 = por %p40, %p41
    %p43 = scmp.ne.s32.totalorder %s29, %s30
    %p44 = scmp.eq.s32.totalorder %s22, 1
    %p45 = por %p43, %p44
    %p47 = scmp.ne.s32.totalorder %s30, %s46
    %p48 = scmp.eq.s32.totalorder %s22, 0
    %p49 = por %p47, %p48
    %s51 = sadd.s32 %s50, 1
    %p54 = scmp.eq.s32.totalorder %s16, 1
    %p55 = scmp.ne.s32.totalorder %s50, %s52
    %p56 = scmp.eq.s32.totalorder %s16, 0
    %p57 = por %p55, %p56
    %p58 = scmp.ne.s32.totalorder %s50, %s52
    %p59 = scmp.eq.s32.totalorder %s21, 1
    %p60 = por %p58, %p59
    %p61 = scmp.ne.s32.totalorder %s52, %s53
    %p62 = scmp.eq.s32.totalorder %s21, 0
    %p63 = por %p61, %p62
    %p64 = scmp.ne.s32.totalorder %s52, %s53
    %p65 = scmp.eq.s32.totalorder %s22, 1
    %p66 = por %p64, %p65
    %p68 = scmp.ne.s32.totalorder %s53, %s67
    %p69 = scmp.eq.s32.totalorder %s22, 0
    %p70 = por %p68, %p69
    %s72 = sadd.s32 %s71, 1
    %p75 = scmp.eq.s32.totalorder %s16, 1
    %p76 = scmp.ne.s32.totalorder %s71, %s73
    %p77 = scmp.eq.s32.totalorder %s16, 0
    %p78 = por %p76, %p77
    %p79 = scmp.ne.s32.totalorder %s71, %s73
    %p80 = scmp.eq.s32.totalorder %s21, 1
    %p81 = por %p79, %p80
    %p82 = scmp.ne.s32.totalorder %s73, %s74
    %p83 = scmp.eq.s32.totalorder %s21, 0
    %p84 = por %p82, %p83
    %p85 = scmp.ne.s32.totalorder %s73, %s74
    %p86 = scmp.eq.s32.totalorder %s22, 1
    %p87 = por %p85, %p86
    %p89 = scmp.ne.s32.totalorder %s74, %s88
    %p90 = scmp.eq.s32.totalorder %s22, 0
    %p91 = por %p89, %p90
    %s92 = ssub.s32 %s16, %s23
    %p93 = scmp.eq.s32.totalorder %s92, 0
    %s95 = sadd.s32 %s94, 1
    %s96 = scalar_select %p93, %s94, %s95
    %p99 = pneg %p93
    %p100 = scmp.eq.s32.totalorder %s16, 1
    %p101 = por %p99, %p100
    %p102 = scmp.ne.s32.totalorder %s94, %s97
    %p103 = scmp.eq.s32.totalorder %s16, 0
    %p104 = por %p102, %p103
    %p105 = scmp.ne.s32.totalorder %s94, %s97
    %p106 = scmp.eq.s32.totalorder %s21, 1
    %p107 = por %p105, %p106
    %p108 = scmp.ne.s32.totalorder %s97, %s98
    %p109 = scmp.eq.s32.totalorder %s21, 0
    %p110 = por %p108, %p109
    %p111 = scmp.ne.s32.totalorder %s97, %s98
    %p112 = scmp.eq.s32.totalorder %s22, 1
    %p113 = por %p111, %p112
    %p115 = scmp.ne.s32.totalorder %s98, %s114
    %p116 = scmp.eq.s32.totalorder %s22, 0
    %p117 = por %p115, %p116
    %s118 = ssub.s32 %s16, %s23
    %p119 = scmp.eq.s32.totalorder %s118, 0
    %s121 = sadd.s32 %s120, 1
    %s122 = scalar_select %p119, %s120, %s121
    %p125 = pneg %p119
    %p126 = scmp.eq.s32.totalorder %s16, 1
    %p127 = por %p125, %p126
    %p128 = scmp.ne.s32.totalorder %s120, %s123
    %p129 = scmp.eq.s32.totalorder %s16, 0
    %p130 = por %p128, %p129
    %p131 = scmp.ne.s32.totalorder %s120, %s123
    %p132 = scmp.eq.s32.totalorder %s21, 1
    %p133 = por %p131, %p132
    %p134 = scmp.ne.s32.totalorder %s123, %s124
    %p135 = scmp.eq.s32.totalorder %s21, 0
    %p136 = por %p134, %p135
    %p137 = scmp.ne.s32.totalorder %s123, %s124
    %p138 = scmp.eq.s32.totalorder %s22, 1
    %p139 = por %p137, %p138
    %p141 = scmp.ne.s32.totalorder %s124, %s140
    %p142 = scmp.eq.s32.totalorder %s22, 0
    %p143 = por %p141, %p142
    %s144 = ssub.s32 %s16, %s23
    %p145 = scmp.eq.s32.totalorder %s144, 0
    %s147 = sadd.s32 %s146, 1
    %s148 = scalar_select %p145, %s146, %s147
    %p151 = pneg %p145
    %p152 = scmp.eq.s32.totalorder %s16, 1
    %p153 = por %p151, %p152
    %p154 = scmp.ne.s32.totalorder %s146, %s149
    %p155 = scmp.eq.s32.totalorder %s16, 0
    %p156 = por %p154, %p155
    %p157 = scmp.ne.s32.totalorder %s146, %s149
    %p158 = scmp.eq.s32.totalorder %s21, 1
    %p159 = por %p157, %p158
    %p160 = scmp.ne.s32.totalorder %s149, %s150
    %p161 = scmp.eq.s32.totalorder %s21, 0
    %p162 = por %p160, %p161
    %p163 = scmp.ne.s32.totalorder %s149, %s150
    %p164 = scmp.eq.s32.totalorder %s22, 1
    %p165 = por %p163, %p164
    %p167 = scmp.ne.s32.totalorder %s150, %s166
    %p168 = scmp.eq.s32.totalorder %s22, 0
    %p169 = por %p167, %p168
    %s171 = sadd.s32 %s170, 1
    %p174 = scmp.eq.s32.totalorder %s16, 1
    %p175 = scmp.ne.s32.totalorder %s170, %s172
    %p176 = scmp.eq.s32.totalorder %s16, 0
    %p177 = por %p175, %p176
    %p178 = scmp.ne.s32.totalorder %s170, %s172
    %p179 = scmp.eq.s32.totalorder %s21, 1
    %p180 = por %p178, %p179
    %p181 = scmp.ne.s32.totalorder %s172, %s173
    %p182 = scmp.eq.s32.totalorder %s21, 0
    %p183 = por %p181, %p182
    %p184 = scmp.ne.s32.totalorder %s172, %s173
    %p185 = scmp.eq.s32.totalorder %s22, 1
    %p186 = por %p184, %p185
    %p188 = scmp.ne.s32.totalorder %s173, %s187
    %p189 = scmp.eq.s32.totalorder %s22, 0
    %p190 = por %p188, %p189
    %s192 = sadd.s32 %s191, 1
    %p195 = scmp.eq.s32.totalorder %s16, 1
    %p196 = scmp.ne.s32.totalorder %s191, %s193
    %p197 = scmp.eq.s32.totalorder %s16, 0
    %p198 = por %p196, %p197
    %p199 = scmp.ne.s32.totalorder %s191, %s193
    %p200 = scmp.eq.s32.totalorder %s21, 1
    %p201 = por %p199, %p200
    %p202 = scmp.ne.s32.totalorder %s193, %s194
    %p203 = scmp.eq.s32.totalorder %s21, 0
    %p204 = por %p202, %p203
    %p205 = scmp.ne.s32.totalorder %s193, %s194
    %p206 = scmp.eq.s32.totalorder %s22, 1
    %p207 = por %p205, %p206
    %p209 = scmp.ne.s32.totalorder %s194, %s208
    %p210 = scmp.eq.s32.totalorder %s22, 0
    %p211 = por %p209, %p210
    %s213 = sadd.s32 %s212, 1
    %p216 = scmp.eq.s32.totalorder %s16, 1
    %p217 = scmp.ne.s32.totalorder %s212, %s214
    %p218 = scmp.eq.s32.totalorder %s16, 0
    %p219 = por %p217, %p218
    %p220 = scmp.ne.s32.totalorder %s212, %s214
    %p221 = scmp.eq.s32.totalorder %s21, 1
    %p222 = por %p220, %p221
    %p223 = scmp.ne.s32.totalorder %s214, %s215
    %p224 = scmp.eq.s32.totalorder %s21, 0
    %p225 = por %p223, %p224
    %p226 = scmp.ne.s32.totalorder %s214, %s215
    %p227 = scmp.eq.s32.totalorder %s22, 1
    %p228 = por %p226, %p227
    %p230 = scmp.ne.s32.totalorder %s215, %s229
    %p231 = scmp.eq.s32.totalorder %s22, 0
    %p232 = por %p230, %p231
    %s234 = sadd.s32 %s233, 1
    %p237 = scmp.eq.s32.totalorder %s16, 1
    %p238 = scmp.ne.s32.totalorder %s233, %s235
    %p239 = scmp.eq.s32.totalorder %s16, 0
    %p240 = por %p238, %p239
    %p241 = scmp.ne.s32.totalorder %s233, %s235
    %p242 = scmp.eq.s32.totalorder %s21, 1
    %p243 = por %p241, %p242
    %p244 = scmp.ne.s32.totalorder %s235, %s236
    %p245 = scmp.eq.s32.totalorder %s21, 0
    %p246 = por %p244, %p245
    %p247 = scmp.ne.s32.totalorder %s235, %s236
    %p248 = scmp.eq.s32.totalorder %s22, 1
    %p249 = por %p247, %p248
    %p251 = scmp.ne.s32.totalorder %s236, %s250
    %p252 = scmp.eq.s32.totalorder %s22, 0
    %p253 = por %p251, %p252
    %s254 = ssub.s32 %s16, %s23
    %p255 = scmp.eq.s32.totalorder %s254, 0
    %s257 = sadd.s32 %s256, 1
    %s258 = scalar_select %p255, %s256, %s257
    %p261 = pneg %p255
    %p262 = scmp.eq.s32.totalorder %s16, 1
    %p263 = por %p261, %p262
    %p264 = scmp.ne.s32.totalorder %s256, %s259
    %p265 = scmp.eq.s32.totalorder %s16, 0
    %p266 = por %p264, %p265
    %p267 = scmp.ne.s32.totalorder %s256, %s259
    %p268 = scmp.eq.s32.totalorder %s21, 1
    %p269 = por %p267, %p268
    %p270 = scmp.ne.s32.totalorder %s259, %s260
    %p271 = scmp.eq.s32.totalorder %s21, 0
    %p272 = por %p270, %p271
    %p273 = scmp.ne.s32.totalorder %s259, %s260
    %p274 = scmp.eq.s32.totalorder %s22, 1
    %p275 = por %p273, %p274
    %p277 = scmp.ne.s32.totalorder %s260, %s276
    %p278 = scmp.eq.s32.totalorder %s22, 0
    %p279 = por %p277, %p278
    %p280 = scmp.le.s32.totalorder 1, %s16
    %p281 = scmp.lt.s32.totalorder %s16, 3
    %p282 = pnand %p280, %p281
    %p283 = pneg %p282
    // Predicated region
    $region9: #{model_forward.30} parent=5 // pred_check
      _
    $region10: #{model_forward.30} parent=5 // pred_check_branch
      %285 = sbr.rel (%p282) target = $region12
    $region11: #{model_forward.30} parent=5 // pred_region
      %s286 = ssub.s32 %s16, 1
      // Predicated region
      $region13: #{model_forward.30} parent=11 // pred_check
        %p287 = pneg %p63
      $region14: #{model_forward.30} parent=11 // pred_check_branch
        %289 = sbr.rel (%p287) target = $region16
      $region15: #{model_forward.30} parent=11 // pred_region
        _
      $region16: #{model_forward.30} parent=11 // pred_fallthru
        _
      // Predicated region
      $region17: #{model_forward.30} parent=11 // pred_check
        %p290 = pneg %p84
      $region18: #{model_forward.30} parent=11 // pred_check_branch
        %292 = sbr.rel (%p290) target = $region20
      $region19: #{model_forward.30} parent=11 // pred_region
        _
      $region20: #{model_forward.30} parent=11 // pred_fallthru
        _
      // Predicated region
      $region21: #{model_forward.30} parent=11 // pred_check
        %p293 = pneg %p183
      $region22: #{model_forward.30} parent=11 // pred_check_branch
        %295 = sbr.rel (%p293) target = $region24
      $region23: #{model_forward.30} parent=11 // pred_region
        _
      $region24: #{model_forward.30} parent=11 // pred_fallthru
        _
      // Predicated region
      $region25: #{model_forward.30} parent=11 // pred_check
        %p296 = pneg %p204
      $region26: #{model_forward.30} parent=11 // pred_check_branch
        %298 = sbr.rel (%p296) target = $region28
      $region27: #{model_forward.30} parent=11 // pred_region
        _
      $region28: #{model_forward.30} parent=11 // pred_fallthru
        _
      // Predicated region
      $region29: #{model_forward.30} parent=11 // pred_check
        %p299 = pneg %p225
      $region30: #{model_forward.30} parent=11 // pred_check_branch
        %301 = sbr.rel (%p299) target = $region32
      $region31: #{model_forward.30} parent=11 // pred_region
        _
      $region32: #{model_forward.30} parent=11 // pred_fallthru
        _
      // Predicated region
      $region33: #{model_forward.30} parent=11 // pred_check
        %p302 = pneg %p246
      $region34: #{model_forward.30} parent=11 // pred_check_branch
        %304 = sbr.rel (%p302) target = $region36
      $region35: #{model_forward.30} parent=11 // pred_region
        _
      $region36: #{model_forward.30} parent=11 // pred_fallthru
        _
    $region12: #{model_forward.30} parent=5 // pred_fallthru
      _
    %p305 = scmp.lt.s32.totalorder %s16, 2
    // Predicated region
    $region37: #{model_forward.30} parent=5 // pred_check
      %p306 = pneg %p305
    $region38: #{model_forward.30} parent=5 // pred_check_branch
      %308 = sbr.rel (%p306) target = $region40
    $region39: #{model_forward.30} parent=5 // pred_region
      // Predicated region
      $region41: #{model_forward.30} parent=39 // pred_check
        %p309 = pneg %p36
      $region42: #{model_forward.30} parent=39 // pred_check_branch
        %311 = sbr.rel (%p309) target = $region44
      $region43: #{model_forward.30} parent=39 // pred_region
        %p312 = scmp.lt.s32.totalorder %s16, 1
        %s313 = scalar_select %p312, %s16, 1
        %s314 = smul.addr %s313, 4
        %s315 = scalar_lea.vmem %s0, %s314
      $region44: #{model_forward.30} parent=39 // pred_fallthru
        _
      // Predicated region
      $region45: #{model_forward.30} parent=39 // pred_check
        %p316 = pneg %p104
      $region46: #{model_forward.30} parent=39 // pred_check_branch
        %318 = sbr.rel (%p316) target = $region48
      $region47: #{model_forward.30} parent=39 // pred_region
        %p319 = scmp.lt.s32.totalorder %s16, 1
        %s320 = scalar_select %p319, %s16, 1
        %s321 = smul.addr %s320, 4
        %s322 = scalar_lea.vmem %s3, %s321
      $region48: #{model_forward.30} parent=39 // pred_fallthru
        _
      // Predicated region
      $region49: #{model_forward.30} parent=39 // pred_check
        %p323 = pneg %p130
      $region50: #{model_forward.30} parent=39 // pred_check_branch
        %325 = sbr.rel (%p323) target = $region52
      $region51: #{model_forward.30} parent=39 // pred_region
        %p326 = scmp.lt.s32.totalorder %s16, 1
        %s327 = scalar_select %p326, %s16, 1
        %s328 = sadd.s32 %s327, 2
        %s329 = smul.addr %s328, 4
        %s330 = scalar_lea.vmem %s4, %s329
      $region52: #{model_forward.30} parent=39 // pred_fallthru
        _
      // Predicated region
      $region53: #{model_forward.30} parent=39 // pred_check
        %p331 = pneg %p156
      $region54: #{model_forward.30} parent=39 // pred_check_branch
        %333 = sbr.rel (%p331) target = $region56
      $region55: #{model_forward.30} parent=39 // pred_region
        %p334 = scmp.lt.s32.totalorder %s16, 1
        %s335 = scalar_select %p334, %s16, 1
        %s336 = scalar_lea.vmem %s5, %s335
      $region56: #{model_forward.30} parent=39 // pred_fallthru
        _
    $region40: #{model_forward.30} parent=5 // pred_fallthru
      _
    %p337 = scmp.le.s32.totalorder 1, %s16
    %p338 = scmp.lt.s32.totalorder %s16, 3
    %p339 = pnand %p337, %p338
    %p340 = pneg %p339
    // Predicated region
    $region57: #{model_forward.30} parent=5 // pred_check
      _
    $region58: #{model_forward.30} parent=5 // pred_check_branch
      %342 = sbr.rel (%p339) target = $region60
    $region59: #{model_forward.30} parent=5 // pred_region
      %s343 = ssub.s32 %s16, 1
      %p344 = scmp.lt.s32.totalorder %s21, 1
      %s345 = scalar_select %p344, %s21, 1
      %s346 = smul.addr %s345, 4
      %s347 = scalar_lea.vmem %s0, %s346
      %p348 = pneg %p42
      %p349 = pneg %p39
      %p350 = pneg %p63
      %p351 = pneg %p60
      %p352 = pneg %p84
      %p353 = pneg %p81
      %p354 = scmp.lt.s32.totalorder %s21, 1
      %s355 = scalar_select %p354, %s21, 1
      %s356 = smul.addr %s355, 4
      %s357 = scalar_lea.vmem %s3, %s356
      %p358 = pneg %p110
      %p359 = pneg %p107
      %p360 = scmp.lt.s32.totalorder %s21, 1
      %s361 = scalar_select %p360, %s21, 1
      %s362 = sadd.s32 %s361, 2
      %s363 = smul.addr %s362, 4
      %s364 = scalar_lea.vmem %s4, %s363
      %p365 = pneg %p136
      %p366 = pneg %p133
      %p367 = scmp.lt.s32.totalorder %s21, 1
      %s368 = scalar_select %p367, %s21, 1
      %s369 = scalar_lea.vmem %s5, %s368
      %p370 = pneg %p162
      %p371 = pneg %p159
      %p372 = pneg %p183
      %p373 = pneg %p180
      %p374 = pneg %p204
      %p375 = pneg %p201
      %p376 = pneg %p225
      %p377 = pneg %p222
      %p378 = pneg %p246
      %p379 = pneg %p243
      %p380 = pneg %p272
      %p381 = pneg %p269
      %p382 = scmp.lt.s32.totalorder %s21, 1
      %s383 = scalar_select %p382, %s21, 1
      %s384 = smul.addr %s383, 4
      %s385 = scalar_lea.vmem %s10, %s384
      %p386 = scmp.lt.s32.totalorder %s21, 1
      %s387 = scalar_select %p386, %s21, 1
      %s388 = smul.addr %s387, 4
      %s389 = scalar_lea.vmem %s0, %s388
      %p390 = scmp.lt.s32.totalorder %s21, 1
      %s391 = scalar_select %p390, %s21, 1
      %s392 = smul.addr %s391, 4
      %s393 = scalar_lea.vmem %s3, %s392
      %p394 = scmp.lt.s32.totalorder %s21, 1
      %s395 = scalar_select %p394, %s21, 1
      %s396 = sadd.s32 %s395, 2
      %s397 = smul.addr %s396, 4
      %s398 = scalar_lea.vmem %s4, %s397
      %p399 = scmp.lt.s32.totalorder %s21, 1
      %s400 = scalar_select %p399, %s21, 1
      %s401 = scalar_lea.vmem %s5, %s400
      %p402 = scmp.lt.s32.totalorder %s21, 1
      %s403 = scalar_select %p402, %s21, 1
      %s404 = smul.addr %s403, 4
      %s405 = scalar_lea.vmem %s10, %s404
      %v407 = vld [vmem:[%s389] sm:$0xf]
      %v408 = vld [vmem:[%s1] sm:$0xf]
      %v409 = vld [vmem:[%s1 + $0x4] sm:$0xf]
      %v410 = vld [vmem:[%s1 + $0x8] sm:$0xf]
      %v411 = vld [vmem:[%s1 + $0xc] sm:$0xf]
      %v412 = vld [vmem:[%s2] sm:$0x1]
      %v414 = vlaneseq
      %v415 = vshrl.u32 %v414, 7
      %v416 = vsub.s32 0, %v415
      %v417 = vrot.slane %v412, %v416
      %v423 = vunpack.c.l.b16 %v408
      %v424 = vunpack.c.l.b16 %v409
      %v425 = vunpack.c.l.b16 %v410
      %v426 = vunpack.c.l.b16 %v411
      %v427 = vpack.c.b16 %v424, %v423
      %v428 = vpack.c.b16 %v426, %v425
      %vm431 = vcmask 261120
      %v433 = vsel %vm431, %v407, 0
      %435 = vmatprep.subr.bf16.mxu0 0
      %436 = vmatpush1.bf16.msra.mxu0 %v427
      %437 = vmatprep.subr.bf16.mxu0 0
      %438 = vmatpush1.bf16.msra.mxu0 %v428
      %439 = vmatprep.subr.bf16.mxu0 0
      %440 = vmatpush1.bf16.msra.mxu0 0
      %441 = vmatprep.subr.bf16.mxu0 0
      %442 = vmatpush1.bf16.msra.mxu0 0
      %443 = vmatprep.subr.bf16.mxu0 0
      %444 = vmatpush1.bf16.msra.mxu0 0
      %445 = vmatprep.subr.bf16.mxu0 0
      %446 = vmatpush1.bf16.msra.mxu0 0
      %447 = vmatprep.subr.bf16.mxu0 0
      %448 = vmatpush1.bf16.msra.mxu0 0
      %449 = vmatprep.subr.bf16.mxu0 0
      %450 = vmatpush1.bf16.msra.mxu0 0
      %451 = vmatprep.subr.bf16.mxu0 0
      %452 = vmatpush1.bf16.msra.mxu0 0
      %453 = vmatprep.subr.bf16.mxu0 0
      %454 = vmatpush1.bf16.msra.mxu0 0
      %455 = vmatprep.subr.bf16.mxu0 0
      %456 = vmatpush1.bf16.msra.mxu0 0
      %457 = vmatprep.subr.bf16.mxu0 0
      %458 = vmatpush1.bf16.msra.mxu0 0
      %459 = vmatprep.subr.bf16.mxu0 0
      %460 = vmatpush1.bf16.msra.mxu0 0
      %461 = vmatprep.subr.bf16.mxu0 0
      %462 = vmatpush1.bf16.msra.mxu0 0
      %463 = vmatprep.subr.bf16.mxu0 0
      %464 = vmatpush1.bf16.msra.mxu0 0
      %465 = vmatprep.subr.bf16.mxu0 0
      %466 = vmatpush1.bf16.msra.mxu0 0
      %467 = vmatprep.mubr.bf16.mxu0 0
      %468 = vmatmul.mubr.bf16.gmra.mrb[0].mxu0 %v433
      %v469 = vpop.f32.mrb[0].mxu0
      %v470 = vadd.f32 %v417, %v469
      %v471 = vpop.f32.mrb[0].mxu0
      %v472 = vpop.f32.mrb[0].mxu0
      %v473 = vpop.f32.mrb[0].mxu0
      %474 = vdwg.mxu0
      %v475 = vmul.f32 %v470, 0.5
      %v476 = vld [vmem:[%s393] sm:$0xf]
      %v477 = vld [vmem:[%s398] sm:$0xf]
      %v478 = vld [vmem:[%s401] sm:$0x1]
      %v479 = vpack.c.bf16 %v475, %v475
      %v480 = vlaneseq
      %v481 = vand.u32 %v480, 127
      %vm482 = vcmp.ge.s32.totalorder %v481, 0
      %vm483 = vcmp.lt.s32.totalorder %v481, 4
      %vm484 = vmand %vm482, %vm483
      %v485 = vsel %vm484, 1, 0
      %vm486 = vcmp.eq.s32.totalorder %v485, 1
      %vm487 = vmpackc.low %vm486, %vm486
      %v488 = vsel %vm487, %v479, 0
      %v489 = vsel %vm487, %v477, 0
      %v491 = vlaneseq
      %v492 = vshrl.u32 %v491, 7
      %v493 = vsub.s32 0, %v492
      %v494 = vrot.slane %v478, %v493
      %v497 = vsel %vm431, %v488, 0
      %v500 = vsel %vm431, %v476, 0
      %502 = vmatprep.subr.bf16.mxu0 0
      %503 = vmatpush1.bf16.xpose.msra.mxu0 %v500
      %504 = vmatprep.subr.bf16.mxu0 0
      %505 = vmatpush1.bf16.xpose.msra.mxu0 0
      %506 = vmatprep.subr.bf16.mxu0 0
      %507 = vmatpush1.bf16.xpose.msra.mxu0 0
      %508 = vmatprep.subr.bf16.mxu0 0
      %509 = vmatpush1.bf16.xpose.msra.mxu0 0
      %510 = vmatprep.subr.bf16.mxu0 0
      %511 = vmatpush1.bf16.xpose.msra.mxu0 0
      %512 = vmatprep.subr.bf16.mxu0 0
      %513 = vmatpush1.bf16.xpose.msra.mxu0 0
      %514 = vmatprep.subr.bf16.mxu0 0
      %515 = vmatpush1.bf16.xpose.msra.mxu0 0
      %516 = vmatprep.subr.bf16.mxu0 0
      %517 = vmatpush1.bf16.xpose.msra.mxu0 0
      %518 = vmatprep.subr.bf16.mxu0 0
      %519 = vmatpush1.bf16.xpose.msra.mxu0 0
      %520 = vmatprep.subr.bf16.mxu0 0
      %521 = vmatpush1.bf16.xpose.msra.mxu0 0
      %522 = vmatprep.subr.bf16.mxu0 0
      %523 = vmatpush1.bf16.xpose.msra.mxu0 0
      %524 = vmatprep.subr.bf16.mxu0 0
      %525 = vmatpush1.bf16.xpose.msra.mxu0 0
      %526 = vmatprep.subr.bf16.mxu0 0
      %527 = vmatpush1.bf16.xpose.msra.mxu0 0
      %528 = vmatprep.subr.bf16.mxu0 0
      %529 = vmatpush1.bf16.xpose.msra.mxu0 0
      %530 = vmatprep.subr.bf16.mxu0 0
      %531 = vmatpush1.bf16.xpose.msra.mxu0 0
      %532 = vmatprep.subr.bf16.mxu0 0
      %533 = vmatpush1.bf16.xpose.msra.mxu0 0
      %534 = vmatprep.mubr.bf16.mxu0 0
      %535 = vmatmul.mubr.bf16.gmra.mrb[0].mxu0 %v497
      %v536 = vpop.f32.mrb[0].mxu0
      %v537 = vadd.f32 %v494, %v536
      %v538 = vpop.f32.mrb[0].mxu0
      %v539 = vpop.f32.mrb[0].mxu0
      %v540 = vpop.f32.mrb[0].mxu0
      %541 = vdwg.mxu0
      %vm542 = vcmask 64512
      %v543 = vsel %vm542, %v537, -inf
      %544 = vmax.xlane.f32.xlu0 %v543
      %v545 = vpop.xlane.xlu0 %544
      %v546 = vsub.f32 %v537, %v545
      %v547 = vmul.f32 %v546, 1.442695
      %v548 = vpow.pop %v547
      %v549 = vsel %vm542, %v548, 0.0
      %550 = vadd.xlane.f32.xlu0 %v549
      %v551 = vpop.xlane.xlu0 %550
      %v552 = vrcp.pop %v551
      %v553 = vpack.c.bf16 %v548, %v548
      %v555 = vsel %vm542, %v553, 0
      %vm557 = vcmask 1043456
      %v559 = vsel %vm557, %v489, 0
      %561 = vmatprep.subr.bf16.mxu0 0
      %562 = vmatpush1.bf16.msra.mxu0 %v559
      %563 = vmatprep.subr.bf16.mxu0 0
      %564 = vmatpush1.bf16.msra.mxu0 0
      %565 = vmatprep.subr.bf16.mxu0 0
      %566 = vmatpush1.bf16.msra.mxu0 0
      %567 = vmatprep.subr.bf16.mxu0 0
      %568 = vmatpush1.bf16.msra.mxu0 0
      %569 = vmatprep.subr.bf16.mxu0 0
      %570 = vmatpush1.bf16.msra.mxu0 0
      %571 = vmatprep.subr.bf16.mxu0 0
      %572 = vmatpush1.bf16.msra.mxu0 0
      %573 = vmatprep.subr.bf16.mxu0 0
      %574 = vmatpush1.bf16.msra.mxu0 0
      %575 = vmatprep.subr.bf16.mxu0 0
      %576 = vmatpush1.bf16.msra.mxu0 0
      %577 = vmatprep.subr.bf16.mxu0 0
      %578 = vmatpush1.bf16.msra.mxu0 0
      %579 = vmatprep.subr.bf16.mxu0 0
      %580 = vmatpush1.bf16.msra.mxu0 0
      %581 = vmatprep.subr.bf16.mxu0 0
      %582 = vmatpush1.bf16.msra.mxu0 0
      %583 = vmatprep.subr.bf16.mxu0 0
      %584 = vmatpush1.bf16.msra.mxu0 0
      %585 = vmatprep.subr.bf16.mxu0 0
      %586 = vmatpush1.bf16.msra.mxu0 0
      %587 = vmatprep.subr.bf16.mxu0 0
      %588 = vmatpush1.bf16.msra.mxu0 0
      %589 = vmatprep.subr.bf16.mxu0 0
      %590 = vmatpush1.bf16.msra.mxu0 0
      %591 = vmatprep.subr.bf16.mxu0 0
      %592 = vmatpush1.bf16.msra.mxu0 0
      %593 = vmatprep.mubr.bf16.mxu0 0
      %594 = vmatmul.mubr.bf16.gmra.mrb[0].mxu0 %v555
      %v595 = vpop.f32.mrb[0].mxu0
      %v596 = vadd.f32 0.0, %v595
      %v597 = vpop.f32.mrb[0].mxu0
      %v598 = vpop.f32.mrb[0].mxu0
      %v599 = vpop.f32.mrb[0].mxu0
      %600 = vdwg.mxu0
      %v601 = vmul.f32 %v596, %v552
      %v602 = vadd.f32 %v601, 0.0
      %vm603 = vcmp.ge.s32.totalorder %v481, 4
      %vm604 = vcmp.lt.s32.totalorder %v481, 8
      %vm605 = vmand %vm603, %vm604
      %v606 = vsel %vm605, 1, 0
      %vm607 = vcmp.eq.s32.totalorder %v606, 1
      %vm608 = vmpackc.low %vm607, %vm607
      %v609 = vsel %vm608, %v479, 0
      %v610 = vsel %vm608, %v477, 0
      %v612 = vsel %vm431, %v609, 0
      %614 = vmatprep.subr.bf16.mxu0 0
      %615 = vmatpush1.bf16.xpose.msra.mxu0 %v500
      %616 = vmatprep.subr.bf16.mxu0 0
      %617 = vmatpush1.bf16.xpose.msra.mxu0 0
      %618 = vmatprep.subr.bf16.mxu0 0
      %619 = vmatpush1.bf16.xpose.msra.mxu0 0
      %620 = vmatprep.subr.bf16.mxu0 0
      %621 = vmatpush1.bf16.xpose.msra.mxu0 0
      %622 = vmatprep.subr.bf16.mxu0 0
      %623 = vmatpush1.bf16.xpose.msra.mxu0 0
      %624 = vmatprep.subr.bf16.mxu0 0
      %625 = vmatpush1.bf16.xpose.msra.mxu0 0
      %626 = vmatprep.subr.bf16.mxu0 0
      %627 = vmatpush1.bf16.xpose.msra.mxu0 0
      %628 = vmatprep.subr.bf16.mxu0 0
      %629 = vmatpush1.bf16.xpose.msra.mxu0 0
      %630 = vmatprep.subr.bf16.mxu0 0
      %631 = vmatpush1.bf16.xpose.msra.mxu0 0
      %632 = vmatprep.subr.bf16.mxu0 0
      %633 = vmatpush1.bf16.xpose.msra.mxu0 0
      %634 = vmatprep.subr.bf16.mxu0 0
      %635 = vmatpush1.bf16.xpose.msra.mxu0 0
      %636 = vmatprep.subr.bf16.mxu0 0
      %637 = vmatpush1.bf16.xpose.msra.mxu0 0
      %638 = vmatprep.subr.bf16.mxu0 0
      %639 = vmatpush1.bf16.xpose.msra.mxu0 0
      %640 = vmatprep.subr.bf16.mxu0 0
      %641 = vmatpush1.bf16.xpose.msra.mxu0 0
      %642 = vmatprep.subr.bf16.mxu0 0
      %643 = vmatpush1.bf16.xpose.msra.mxu0 0
      %644 = vmatprep.subr.bf16.mxu0 0
      %645 = vmatpush1.bf16.xpose.msra.mxu0 0
      %646 = vmatprep.mubr.bf16.mxu0 0
      %647 = vmatmul.mubr.bf16.gmra.mrb[0].mxu0 %v612
      %v648 = vpop.f32.mrb[0].mxu0
      %v649 = vadd.f32 %v494, %v648
      %v650 = vpop.f32.mrb[0].mxu0
      %v651 = vpop.f32.mrb[0].mxu0
      %v652 = vpop.f32.mrb[0].mxu0
      %653 = vdwg.mxu0
      %v654 = vsel %vm542, %v649, -inf
      %655 = vmax.xlane.f32.xlu0 %v654
      %v656 = vpop.xlane.xlu0 %655
      %v657 = vsub.f32 %v649, %v656
      %v658 = vmul.f32 %v657, 1.442695
      %v659 = vpow.pop %v658
      %v660 = vsel %vm542, %v659, 0.0
      %661 = vadd.xlane.f32.xlu0 %v660
      %v662 = vpop.xlane.xlu0 %661
      %v663 = vrcp.pop %v662
      %v664 = vpack.c.bf16 %v659, %v659
      %v666 = vsel %vm542, %v664, 0
      %v669 = vsel %vm557, %v610, 0
      %671 = vmatprep.subr.bf16.mxu0 0
      %672 = vmatpush1.bf16.msra.mxu0 %v669
      %673 = vmatprep.subr.bf16.mxu0 0
      %674 = vmatpush1.bf16.msra.mxu0 0
      %675 = vmatprep.subr.bf16.mxu0 0
      %676 = vmatpush1.bf16.msra.mxu0 0
      %677 = vmatprep.subr.bf16.mxu0 0
      %678 = vmatpush1.bf16.msra.mxu0 0
      %679 = vmatprep.subr.bf16.mxu0 0
      %680 = vmatpush1.bf16.msra.mxu0 0
      %681 = vmatprep.subr.bf16.mxu0 0
      %682 = vmatpush1.bf16.msra.mxu0 0
      %683 = vmatprep.subr.bf16.mxu0 0
      %684 = vmatpush1.bf16.msra.mxu0 0
      %685 = vmatprep.subr.bf16.mxu0 0
      %686 = vmatpush1.bf16.msra.mxu0 0
      %687 = vmatprep.subr.bf16.mxu0 0
      %688 = vmatpush1.bf16.msra.mxu0 0
      %689 = vmatprep.subr.bf16.mxu0 0
      %690 = vmatpush1.bf16.msra.mxu0 0
      %691 = vmatprep.subr.bf16.mxu0 0
      %692 = vmatpush1.bf16.msra.mxu0 0
      %693 = vmatprep.subr.bf16.mxu0 0
      %694 = vmatpush1.bf16.msra.mxu0 0
      %695 = vmatprep.subr.bf16.mxu0 0
      %696 = vmatpush1.bf16.msra.mxu0 0
      %697 = vmatprep.subr.bf16.mxu0 0
      %698 = vmatpush1.bf16.msra.mxu0 0
      %699 = vmatprep.subr.bf16.mxu0 0
      %700 = vmatpush1.bf16.msra.mxu0 0
      %701 = vmatprep.subr.bf16.mxu0 0
      %702 = vmatpush1.bf16.msra.mxu0 0
      %703 = vmatprep.mubr.bf16.mxu0 0
      %704 = vmatmul.mubr.bf16.gmra.mrb[0].mxu0 %v666
      %v705 = vpop.f32.mrb[0].mxu0
      %v706 = vadd.f32 0.0, %v705
      %v707 = vpop.f32.mrb[0].mxu0
      %v708 = vpop.f32.mrb[0].mxu0
      %v709 = vpop.f32.mrb[0].mxu0
      %710 = vdwg.mxu0
      %v711 = vmul.f32 %v706, %v663
      %v712 = vadd.f32 %v602, %v711
      %vm713 = vcmp.ge.s32.totalorder %v481, 8
      %vm714 = vcmp.lt.s32.totalorder %v481, 12
      %vm715 = vmand %vm713, %vm714
      %v716 = vsel %vm715, 1, 0
      %vm717 = vcmp.eq.s32.totalorder %v716, 1
      %vm718 = vmpackc.low %vm717, %vm717
      %v719 = vsel %vm718, %v479, 0
      %v720 = vsel %vm718, %v477, 0
      %v722 = vsel %vm431, %v719, 0
      %724 = vmatprep.subr.bf16.mxu0 0
      %725 = vmatpush1.bf16.xpose.msra.mxu0 %v500
      %726 = vmatprep.subr.bf16.mxu0 0
      %727 = vmatpush1.bf16.xpose.msra.mxu0 0
      %728 = vmatprep.subr.bf16.mxu0 0
      %729 = vmatpush1.bf16.xpose.msra.mxu0 0
      %730 = vmatprep.subr.bf16.mxu0 0
      %731 = vmatpush1.bf16.xpose.msra.mxu0 0
      %732 = vmatprep.subr.bf16.mxu0 0
      %733 = vmatpush1.bf16.xpose.msra.mxu0 0
      %734 = vmatprep.subr.bf16.mxu0 0
      %735 = vmatpush1.bf16.xpose.msra.mxu0 0
      %736 = vmatprep.subr.bf16.mxu0 0
      %737 = vmatpush1.bf16.xpose.msra.mxu0 0
      %738 = vmatprep.subr.bf16.mxu0 0
      %739 = vmatpush1.bf16.xpose.msra.mxu0 0
      %740 = vmatprep.subr.bf16.mxu0 0
      %741 = vmatpush1.bf16.xpose.msra.mxu0 0
      %742 = vmatprep.subr.bf16.mxu0 0
      %743 = vmatpush1.bf16.xpose.msra.mxu0 0
      %744 = vmatprep.subr.bf16.mxu0 0
      %745 = vmatpush1.bf16.xpose.msra.mxu0 0
      %746 = vmatprep.subr.bf16.mxu0 0
      %747 = vmatpush1.bf16.xpose.msra.mxu0 0
      %748 = vmatprep.subr.bf16.mxu0 0
      %749 = vmatpush1.bf16.xpose.msra.mxu0 0
      %750 = vmatprep.subr.bf16.mxu0 0
      %751 = vmatpush1.bf16.xpose.msra.mxu0 0
      %752 = vmatprep.subr.bf16.mxu0 0
      %753 = vmatpush1.bf16.xpose.msra.mxu0 0
      %754 = vmatprep.subr.bf16.mxu0 0
      %755 = vmatpush1.bf16.xpose.msra.mxu0 0
      %756 = vmatprep.mubr.bf16.mxu0 0
      %757 = vmatmul.mubr.bf16.gmra.mrb[0].mxu0 %v722
      %v758 = vpop.f32.mrb[0].mxu0
      %v759 = vadd.f32 %v494, %v758
      %v760 = vpop.f32.mrb[0].mxu0
      %v761 = vpop.f32.mrb[0].mxu0
      %v762 = vpop.f32.mrb[0].mxu0
      %763 = vdwg.mxu0
      %v764 = vsel %vm542, %v759, -inf
      %765 = vmax.xlane.f32.xlu0 %v764
      %v766 = vpop.xlane.xlu0 %765
      %v767 = vsub.f32 %v759, %v766
      %v768 = vmul.f32 %v767, 1.442695
      %v769 = vpow.pop %v768
      %v770 = vsel %vm542, %v769, 0.0
      %771 = vadd.xlane.f32.xlu0 %v770
      %v772 = vpop.xlane.xlu0 %771
      %v773 = vrcp.pop %v772
      %v774 = vpack.c.bf16 %v769, %v769
      %v776 = vsel %vm542, %v774, 0
      %v779 = vsel %vm557, %v720, 0
      %781 = vmatprep.subr.bf16.mxu0 0
      %782 = vmatpush1.bf16.msra.mxu0 %v779
      %783 = vmatprep.subr.bf16.mxu0 0
      %784 = vmatpush1.bf16.msra.mxu0 0
      %785 = vmatprep.subr.bf16.mxu0 0
      %786 = vmatpush1.bf16.msra.mxu0 0
      %787 = vmatprep.subr.bf16.mxu0 0
      %788 = vmatpush1.bf16.msra.mxu0 0
      %789 = vmatprep.subr.bf16.mxu0 0
      %790 = vmatpush1.bf16.msra.mxu0 0
      %791 = vmatprep.subr.bf16.mxu0 0
      %792 = vmatpush1.bf16.msra.mxu0 0
      %793 = vmatprep.subr.bf16.mxu0 0
      %794 = vmatpush1.bf16.msra.mxu0 0
      %795 = vmatprep.subr.bf16.mxu0 0
      %796 = vmatpush1.bf16.msra.mxu0 0
      %797 = vmatprep.subr.bf16.mxu0 0
      %798 = vmatpush1.bf16.msra.mxu0 0
      %799 = vmatprep.subr.bf16.mxu0 0
      %800 = vmatpush1.bf16.msra.mxu0 0
      %801 = vmatprep.subr.bf16.mxu0 0
      %802 = vmatpush1.bf16.msra.mxu0 0
      %803 = vmatprep.subr.bf16.mxu0 0
      %804 = vmatpush1.bf16.msra.mxu0 0
      %805 = vmatprep.subr.bf16.mxu0 0
      %806 = vmatpush1.bf16.msra.mxu0 0
      %807 = vmatprep.subr.bf16.mxu0 0
      %808 = vmatpush1.bf16.msra.mxu0 0
      %809 = vmatprep.subr.bf16.mxu0 0
      %810 = vmatpush1.bf16.msra.mxu0 0
      %811 = vmatprep.subr.bf16.mxu0 0
      %812 = vmatpush1.bf16.msra.mxu0 0
      %813 = vmatprep.mubr.bf16.mxu0 0
      %814 = vmatmul.mubr.bf16.gmra.mrb[0].mxu0 %v776
      %v815 = vpop.f32.mrb[0].mxu0
      %v816 = vadd.f32 0.0, %v815
      %v817 = vpop.f32.mrb[0].mxu0
      %v818 = vpop.f32.mrb[0].mxu0
      %v819 = vpop.f32.mrb[0].mxu0
      %820 = vdwg.mxu0
      %v821 = vmul.f32 %v816, %v773
      %v822 = vadd.f32 %v712, %v821
      %vm823 = vcmp.ge.s32.totalorder %v481, 12
      %vm824 = vcmp.lt.s32.totalorder %v481, 16
      %vm825 = vmand %vm823, %vm824
      %v826 = vsel %vm825, 1, 0
      %vm827 = vcmp.eq.s32.totalorder %v826, 1
      %vm828 = vmpackc.low %vm827, %vm827
      %v829 = vsel %vm828, %v479, 0
      %v830 = vsel %vm828, %v477, 0
      %v832 = vsel %vm431, %v829, 0
      %834 = vmatprep.subr.bf16.mxu0 0
      %835 = vmatpush1.bf16.xpose.msra.mxu0 %v500
      %836 = vmatprep.subr.bf16.mxu0 0
      %837 = vmatpush1.bf16.xpose.msra.mxu0 0
      %838 = vmatprep.subr.bf16.mxu0 0
      %839 = vmatpush1.bf16.xpose.msra.mxu0 0
      %840 = vmatprep.subr.bf16.mxu0 0
      %841 = vmatpush1.bf16.xpose.msra.mxu0 0
      %842 = vmatprep.subr.bf16.mxu0 0
      %843 = vmatpush1.bf16.xpose.msra.mxu0 0
      %844 = vmatprep.subr.bf16.mxu0 0
      %845 = vmatpush1.bf16.xpose.msra.mxu0 0
      %846 = vmatprep.subr.bf16.mxu0 0
      %847 = vmatpush1.bf16.xpose.msra.mxu0 0
      %848 = vmatprep.subr.bf16.mxu0 0
      %849 = vmatpush1.bf16.xpose.msra.mxu0 0
      %850 = vmatprep.subr.bf16.mxu0 0
      %851 = vmatpush1.bf16.xpose.msra.mxu0 0
      %852 = vmatprep.subr.bf16.mxu0 0
      %853 = vmatpush1.bf16.xpose.msra.mxu0 0
      %854 = vmatprep.subr.bf16.mxu0 0
      %855 = vmatpush1.bf16.xpose.msra.mxu0 0
      %856 = vmatprep.subr.bf16.mxu0 0
      %857 = vmatpush1.bf16.xpose.msra.mxu0 0
      %858 = vmatprep.subr.bf16.mxu0 0
      %859 = vmatpush1.bf16.xpose.msra.mxu0 0
      %860 = vmatprep.subr.bf16.mxu0 0
      %861 = vmatpush1.bf16.xpose.msra.mxu0 0
      %862 = vmatprep.subr.bf16.mxu0 0
      %863 = vmatpush1.bf16.xpose.msra.mxu0 0
      %864 = vmatprep.subr.bf16.mxu0 0
      %865 = vmatpush1.bf16.xpose.msra.mxu0 0
      %866 = vmatprep.mubr.bf16.mxu0 0
      %867 = vmatmul.mubr.bf16.gmra.mrb[0].mxu0 %v832
      %v868 = vpop.f32.mrb[0].mxu0
      %v869 = vadd.f32 %v494, %v868
      %v870 = vpop.f32.mrb[0].mxu0
      %v871 = vpop.f32.mrb[0].mxu0
      %v872 = vpop.f32.mrb[0].mxu0
      %873 = vdwg.mxu0
      %v874 = vsel %vm542, %v869, -inf
      %875 = vmax.xlane.f32.xlu0 %v874
      %v876 = vpop.xlane.xlu0 %875
      %v877 = vsub.f32 %v869, %v876
      %v878 = vmul.f32 %v877, 1.442695
      %v879 = vpow.pop %v878
      %v880 = vsel %vm542, %v879, 0.0
      %881 = vadd.xlane.f32.xlu0 %v880
      %v882 = vpop.xlane.xlu0 %881
      %v883 = vrcp.pop %v882
      %v884 = vpack.c.bf16 %v879, %v879
      %v886 = vsel %vm542, %v884, 0
      %v889 = vsel %vm557, %v830, 0
      %891 = vmatprep.subr.bf16.mxu0 0
      %892 = vmatpush1.bf16.msra.mxu0 %v889
      %893 = vmatprep.subr.bf16.mxu0 0
      %894 = vmatpush1.bf16.msra.mxu0 0
      %895 = vmatprep.subr.bf16.mxu0 0
      %896 = vmatpush1.bf16.msra.mxu0 0
      %897 = vmatprep.subr.bf16.mxu0 0
      %898 = vmatpush1.bf16.msra.mxu0 0
      %899 = vmatprep.subr.bf16.mxu0 0
      %900 = vmatpush1.bf16.msra.mxu0 0
      %901 = vmatprep.subr.bf16.mxu0 0
      %902 = vmatpush1.bf16.msra.mxu0 0
      %903 = vmatprep.subr.bf16.mxu0 0
      %904 = vmatpush1.bf16.msra.mxu0 0
      %905 = vmatprep.subr.bf16.mxu0 0
      %906 = vmatpush1.bf16.msra.mxu0 0
      %907 = vmatprep.subr.bf16.mxu0 0
      %908 = vmatpush1.bf16.msra.mxu0 0
      %909 = vmatprep.subr.bf16.mxu0 0
      %910 = vmatpush1.bf16.msra.mxu0 0
      %911 = vmatprep.subr.bf16.mxu0 0
      %912 = vmatpush1.bf16.msra.mxu0 0
      %913 = vmatprep.subr.bf16.mxu0 0
      %914 = vmatpush1.bf16.msra.mxu0 0
      %915 = vmatprep.subr.bf16.mxu0 0
      %916 = vmatpush1.bf16.msra.mxu0 0
      %917 = vmatprep.subr.bf16.mxu0 0
      %918 = vmatpush1.bf16.msra.mxu0 0
      %919 = vmatprep.subr.bf16.mxu0 0
      %920 = vmatpush1.bf16.msra.mxu0 0
      %921 = vmatprep.subr.bf16.mxu0 0
      %922 = vmatpush1.bf16.msra.mxu0 0
      %923 = vmatprep.mubr.bf16.mxu0 0
      %924 = vmatmul.mubr.bf16.gmra.mrb[0].mxu0 %v886
      %v925 = vpop.f32.mrb[0].mxu0
      %v926 = vadd.f32 0.0, %v925
      %v927 = vpop.f32.mrb[0].mxu0
      %v928 = vpop.f32.mrb[0].mxu0
      %v929 = vpop.f32.mrb[0].mxu0
      %930 = vdwg.mxu0
      %v931 = vmul.f32 %v926, %v883
      %v932 = vadd.f32 %v822, %v931
      %vm933 = vcmp.ge.s32.totalorder %v481, 16
      %vm934 = vcmp.lt.s32.totalorder %v481, 20
      %vm935 = vmand %vm933, %vm934
      %v936 = vsel %vm935, 1, 0
      %vm937 = vcmp.eq.s32.totalorder %v936, 1
      %vm938 = vmpackc.low %vm937, %vm937
      %v939 = vsel %vm938, %v479, 0
      %v940 = vsel %vm938, %v477, 0
      %v942 = vsel %vm431, %v939, 0
      %944 = vmatprep.subr.bf16.mxu0 0
      %945 = vmatpush1.bf16.xpose.msra.mxu0 %v500
      %946 = vmatprep.subr.bf16.mxu0 0
      %947 = vmatpush1.bf16.xpose.msra.mxu0 0
      %948 = vmatprep.subr.bf16.mxu0 0
      %949 = vmatpush1.bf16.xpose.msra.mxu0 0
      %950 = vmatprep.subr.bf16.mxu0 0
      %951 = vmatpush1.bf16.xpose.msra.mxu0 0
      %952 = vmatprep.subr.bf16.mxu0 0
      %953 = vmatpush1.bf16.xpose.msra.mxu0 0
      %954 = vmatprep.subr.bf16.mxu0 0
      %955 = vmatpush1.bf16.xpose.msra.mxu0 0
      %956 = vmatprep.subr.bf16.mxu0 0
      %957 = vmatpush1.bf16.xpose.msra.mxu0 0
      %958 = vmatprep.subr.bf16.mxu0 0
      %959 = vmatpush1.bf16.xpose.msra.mxu0 0
      %960 = vmatprep.subr.bf16.mxu0 0
      %961 = vmatpush1.bf16.xpose.msra.mxu0 0
      %962 = vmatprep.subr.bf16.mxu0 0
      %963 = vmatpush1.bf16.xpose.msra.mxu0 0
      %964 = vmatprep.subr.bf16.mxu0 0
      %965 = vmatpush1.bf16.xpose.msra.mxu0 0
      %966 = vmatprep.subr.bf16.mxu0 0
      %967 = vmatpush1.bf16.xpose.msra.mxu0 0
      %968 = vmatprep.subr.bf16.mxu0 0
      %969 = vmatpush1.bf16.xpose.msra.mxu0 0
      %970 = vmatprep.subr.bf16.mxu0 0
      %971 = vmatpush1.bf16.xpose.msra.mxu0 0
      %972 = vmatprep.subr.bf16.mxu0 0
      %973 = vmatpush1.bf16.xpose.msra.mxu0 0
      %974 = vmatprep.subr.bf16.mxu0 0
      %975 = vmatpush1.bf16.xpose.msra.mxu0 0
      %976 = vmatprep.mubr.bf16.mxu0 0
      %977 = vmatmul.mubr.bf16.gmra.mrb[0].mxu0 %v942
      %v978 = vpop.f32.mrb[0].mxu0
      %v979 = vadd.f32 %v494, %v978
      %v980 = vpop.f32.mrb[0].mxu0
      %v981 = vpop.f32.mrb[0].mxu0
      %v982 = vpop.f32.mrb[0].mxu0
      %983 = vdwg.mxu0
      %v984 = vsel %vm542, %v979, -inf
      %985 = vmax.xlane.f32.xlu0 %v984
      %v986 = vpop.xlane.xlu0 %985
      %v987 = vsub.f32 %v979, %v986
      %v988 = vmul.f32 %v987, 1.442695
      %v989 = vpow.pop %v988
      %v990 = vsel %vm542, %v989, 0.0
      %991 = vadd.xlane.f32.xlu0 %v990
      %v992 = vpop.xlane.xlu0 %991
      %v993 = vrcp.pop %v992
      %v994 = vpack.c.bf16 %v989, %v989
      %v996 = vsel %vm542, %v994, 0
      %v999 = vsel %vm557, %v940, 0
      %1001 = vmatprep.subr.bf16.mxu0 0
      %1002 = vmatpush1.bf16.msra.mxu0 %v999
      %1003 = vmatprep.subr.bf16.mxu0 0
      %1004 = vmatpush1.bf16.msra.mxu0 0
      %1005 = vmatprep.subr.bf16.mxu0 0
      %1006 = vmatpush1.bf16.msra.mxu0 0
      %1007 = vmatprep.subr.bf16.mxu0 0
      %1008 = vmatpush1.bf16.msra.mxu0 0
      %1009 = vmatprep.subr.bf16.mxu0 0
      %1010 = vmatpush1.bf16.msra.mxu0 0
      %1011 = vmatprep.subr.bf16.mxu0 0
      %1012 = vmatpush1.bf16.msra.mxu0 0
      %1013 = vmatprep.subr.bf16.mxu0 0
      %1014 = vmatpush1.bf16.msra.mxu0 0
      %1015 = vmatprep.subr.bf16.mxu0 0
      %1016 = vmatpush1.bf16.msra.mxu0 0
      %1017 = vmatprep.subr.bf16.mxu0 0
      %1018 = vmatpush1.bf16.msra.mxu0 0
      %1019 = vmatprep.subr.bf16.mxu0 0
      %1020 = vmatpush1.bf16.msra.mxu0 0
      %1021 = vmatprep.subr.bf16.mxu0 0
      %1022 = vmatpush1.bf16.msra.mxu0 0
      %1023 = vmatprep.subr.bf16.mxu0 0
      %1024 = vmatpush1.bf16.msra.mxu0 0
      %1025 = vmatprep.subr.bf16.mxu0 0
      %1026 = vmatpush1.bf16.msra.mxu0 0
      %1027 = vmatprep.subr.bf16.mxu0 0
      %1028 = vmatpush1.bf16.msra.mxu0 0
      %1029 = vmatprep.subr.bf16.mxu0 0
      %1030 = vmatpush1.bf16.msra.mxu0 0
      %1031 = vmatprep.subr.bf16.mxu0 0
      %1032 = vmatpush1.bf16.msra.mxu0 0
      %1033 = vmatprep.mubr.bf16.mxu0 0
      %1034 = vmatmul.mubr.bf16.gmra.mrb[0].mxu0 %v996
      %v1035 = vpop.f32.mrb[0].mxu0
      %v1036 = vadd.f32 0.0, %v1035
      %v1037 = vpop.f32.mrb[0].mxu0
      %v1038 = vpop.f32.mrb[0].mxu0
      %v1039 = vpop.f32.mrb[0].mxu0
      %1040 = vdwg.mxu0
      %v1041 = vmul.f32 %v1036, %v993
      %v1042 = vadd.f32 %v932, %v1041
      %vm1043 = vcmp.ge.s32.totalorder %v481, 20
      %vm1044 = vcmp.lt.s32.totalorder %v481, 24
      %vm1045 = vmand %vm1043, %vm1044
      %v1046 = vsel %vm1045, 1, 0
      %vm1047 = vcmp.eq.s32.totalorder %v1046, 1
      %vm1048 = vmpackc.low %vm1047, %vm1047
      %v1049 = vsel %vm1048, %v479, 0
      %v1050 = vsel %vm1048, %v477, 0
      %v1052 = vsel %vm431, %v1049, 0
      %1054 = vmatprep.subr.bf16.mxu0 0
      %1055 = vmatpush1.bf16.xpose.msra.mxu0 %v500
      %1056 = vmatprep.subr.bf16.mxu0 0
      %1057 = vmatpush1.bf16.xpose.msra.mxu0 0
      %1058 = vmatprep.subr.bf16.mxu0 0
      %1059 = vmatpush1.bf16.xpose.msra.mxu0 0
      %1060 = vmatprep.subr.bf16.mxu0 0
      %1061 = vmatpush1.bf16.xpose.msra.mxu0 0
      %1062 = vmatprep.subr.bf16.mxu0 0
      %1063 = vmatpush1.bf16.xpose.msra.mxu0 0
      %1064 = vmatprep.subr.bf16.mxu0 0
      %1065 = vmatpush1.bf16.xpose.msra.mxu0 0
      %1066 = vmatprep.subr.bf16.mxu0 0
      %1067 = vmatpush1.bf16.xpose.msra.mxu0 0
      %1068 = vmatprep.subr.bf16.mxu0 0
      %1069 = vmatpush1.bf16.xpose.msra.mxu0 0
      %1070 = vmatprep.subr.bf16.mxu0 0
      %1071 = vmatpush1.bf16.xpose.msra.mxu0 0
      %1072 = vmatprep.subr.bf16.mxu0 0
      %1073 = vmatpush1.bf16.xpose.msra.mxu0 0
      %1074 = vmatprep.subr.bf16.mxu0 0
      %1075 = vmatpush1.bf16.xpose.msra.mxu0 0
      %1076 = vmatprep.subr.bf16.mxu0 0
      %1077 = vmatpush1.bf16.xpose.msra.mxu0 0
      %1078 = vmatprep.subr.bf16.mxu0 0
      %1079 = vmatpush1.bf16.xpose.msra.mxu0 0
      %1080 = vmatprep.subr.bf16.mxu0 0
      %1081 = vmatpush1.bf16.xpose.msra.mxu0 0
      %1082 = vmatprep.subr.bf16.mxu0 0
      %1083 = vmatpush1.bf16.xpose.msra.mxu0 0
      %1084 = vmatprep.subr.bf16.mxu0 0
      %1085 = vmatpush1.bf16.xpose.msra.mxu0 0
      %1086 = vmatprep.mubr.bf16.mxu0 0
      %1087 = vmatmul.mubr.bf16.gmra.mrb[0].mxu0 %v1052
      %v1088 = vpop.f32.mrb[0].mxu0
      %v1089 = vadd.f32 %v494, %v1088
      %v1090 = vpop.f32.mrb[0].mxu0
      %v1091 = vpop.f32.mrb[0].mxu0
      %v1092 = vpop.f32.mrb[0].mxu0
      %1093 = vdwg.mxu0
      %v1094 = vsel %vm542, %v1089, -inf
      %1095 = vmax.xlane.f32.xlu0 %v1094
      %v1096 = vpop.xlane.xlu0 %1095
      %v1097 = vsub.f32 %v1089, %v1096
      %v1098 = vmul.f32 %v1097, 1.442695
      %v1099 = vpow.pop %v1098
      %v1100 = vsel %vm542, %v1099, 0.0
      %1101 = vadd.xlane.f32.xlu0 %v1100
      %v1102 = vpop.xlane.xlu0 %1101
      %v1103 = vrcp.pop %v1102
      %v1104 = vpack.c.bf16 %v1099, %v1099
      %v1106 = vsel %vm542, %v1104, 0
      %v1109 = vsel %vm557, %v1050, 0
      %1111 = vmatprep.subr.bf16.mxu0 0
      %1112 = vmatpush1.bf16.msra.mxu0 %v1109
      %1113 = vmatprep.subr.bf16.mxu0 0
      %1114 = vmatpush1.bf16.msra.mxu0 0
      %1115 = vmatprep.subr.bf16.mxu0 0
      %1116 = vmatpush1.bf16.msra.mxu0 0
      %1117 = vmatprep.subr.bf16.mxu0 0
      %1118 = vmatpush1.bf16.msra.mxu0 0
      %1119 = vmatprep.subr.bf16.mxu0 0
      %1120 = vmatpush1.bf16.msra.mxu0 0
      %1121 = vmatprep.subr.bf16.mxu0 0
      %1122 = vmatpush1.bf16.msra.mxu0 0
      %1123 = vmatprep.subr.bf16.mxu0 0
      %1124 = vmatpush1.bf16.msra.mxu0 0
      %1125 = vmatprep.subr.bf16.mxu0 0
      %1126 = vmatpush1.bf16.msra.mxu0 0
      %1127 = vmatprep.subr.bf16.mxu0 0
      %1128 = vmatpush1.bf16.msra.mxu0 0
      %1129 = vmatprep.subr.bf16.mxu0 0
      %1130 = vmatpush1.bf16.msra.mxu0 0
      %1131 = vmatprep.subr.bf16.mxu0 0
      %1132 = vmatpush1.bf16.msra.mxu0 0
      %1133 = vmatprep.subr.bf16.mxu0 0
      %1134 = vmatpush1.bf16.msra.mxu0 0
      %1135 = vmatprep.subr.bf16.mxu0 0
      %1136 = vmatpush1.bf16.msra.mxu0 0
      %1137 = vmatprep.subr.bf16.mxu0 0
      %1138 = vmatpush1.bf16.msra.mxu0 0
      %1139 = vmatprep.subr.bf16.mxu0 0
      %1140 = vmatpush1.bf16.msra.mxu0 0
      %1141 = vmatprep.subr.bf16.mxu0 0
      %1142 = vmatpush1.bf16.msra.mxu0 0
      %1143 = vmatprep.mubr.bf16.mxu0 0
      %1144 = vmatmul.mubr.bf16.gmra.mrb[0].mxu0 %v1106
      %v1145 = vpop.f32.mrb[0].mxu0
      %v1146 = vadd.f32 0.0, %v1145
      %v1147 = vpop.f32.mrb[0].mxu0
      %v1148 = vpop.f32.mrb[0].mxu0
      %v1149 = vpop.f32.mrb[0].mxu0
      %1150 = vdwg.mxu0
      %v1151 = vmul.f32 %v1146, %v1103
      %v1152 = vadd.f32 %v1042, %v1151
      %vm1153 = vcmp.ge.s32.totalorder %v481, 24
      %vm1154 = vcmp.lt.s32.totalorder %v481, 28
      %vm1155 = vmand %vm1153, %vm1154
      %v1156 = vsel %vm1155, 1, 0
      %vm1157 = vcmp.eq.s32.totalorder %v1156, 1
      %vm1158 = vmpackc.low %vm1157, %vm1157
      %v1159 = vsel %vm1158, %v479, 0
      %v1160 = vsel %vm1158, %v477, 0
      %v1162 = vsel %vm431, %v1159, 0
      %1164 = vmatprep.subr.bf16.mxu0 0
      %1165 = vmatpush1.bf16.xpose.msra.mxu0 %v500
      %1166 = vmatprep.subr.bf16.mxu0 0
      %1167 = vmatpush1.bf16.xpose.msra.mxu0 0
      %1168 = vmatprep.subr.bf16.mxu0 0
      %1169 = vmatpush1.bf16.xpose.msra.mxu0 0
      %1170 = vmatprep.subr.bf16.mxu0 0
      %1171 = vmatpush1.bf16.xpose.msra.mxu0 0
      %1172 = vmatprep.subr.bf16.mxu0 0
      %1173 = vmatpush1.bf16.xpose.msra.mxu0 0
      %1174 = vmatprep.subr.bf16.mxu0 0
      %1175 = vmatpush1.bf16.xpose.msra.mxu0 0
      %1176 = vmatprep.subr.bf16.mxu0 0
      %1177 = vmatpush1.bf16.xpose.msra.mxu0 0
      %1178 = vmatprep.subr.bf16.mxu0 0
      %1179 = vmatpush1.bf16.xpose.msra.mxu0 0
      %1180 = vmatprep.subr.bf16.mxu0 0
      %1181 = vmatpush1.bf16.xpose.msra.mxu0 0
      %1182 = vmatprep.subr.bf16.mxu0 0
      %1183 = vmatpush1.bf16.xpose.msra.mxu0 0
      %1184 = vmatprep.subr.bf16.mxu0 0
      %1185 = vmatpush1.bf16.xpose.msra.mxu0 0
      %1186 = vmatprep.subr.bf16.mxu0 0
      %1187 = vmatpush1.bf16.xpose.msra.mxu0 0
      %1188 = vmatprep.subr.bf16.mxu0 0
      %1189 = vmatpush1.bf16.xpose.msra.mxu0 0
      %1190 = vmatprep.subr.bf16.mxu0 0
      %1191 = vmatpush1.bf16.xpose.msra.mxu0 0
      %1192 = vmatprep.subr.bf16.mxu0 0
      %1193 = vmatpush1.bf16.xpose.msra.mxu0 0
      %1194 = vmatprep.subr.bf16.mxu0 0
      %1195 = vmatpush1.bf16.xpose.msra.mxu0 0
      %1196 = vmatprep.mubr.bf16.mxu0 0
      %1197 = vmatmul.mubr.bf16.gmra.mrb[0].mxu0 %v1162
      %v1198 = vpop.f32.mrb[0].mxu0
      %v1199 = vadd.f32 %v494, %v1198
      %v1200 = vpop.f32.mrb[0].mxu0
      %v1201 = vpop.f32.mrb[0].mxu0
      %v1202 = vpop.f32.mrb[0].mxu0
      %1203 = vdwg.mxu0
      %v1204 = vsel %vm542, %v1199, -inf
      %1205 = vmax.xlane.f32.xlu0 %v1204
      %v1206 = vpop.xlane.xlu0 %1205
      %v1207 = vsub.f32 %v1199, %v1206
      %v1208 = vmul.f32 %v1207, 1.442695
      %v1209 = vpow.pop %v1208
      %v1210 = vsel %vm542, %v1209, 0.0
      %1211 = vadd.xlane.f32.xlu0 %v1210
      %v1212 = vpop.xlane.xlu0 %1211
      %v1213 = vrcp.pop %v1212
      %v1214 = vpack.c.bf16 %v1209, %v1209
      %v1216 = vsel %vm542, %v1214, 0
      %v1219 = vsel %vm557, %v1160, 0
      %1221 = vmatprep.subr.bf16.mxu0 0
      %1222 = vmatpush1.bf16.msra.mxu0 %v1219
      %1223 = vmatprep.subr.bf16.mxu0 0
      %1224 = vmatpush1.bf16.msra.mxu0 0
      %1225 = vmatprep.subr.bf16.mxu0 0
      %1226 = vmatpush1.bf16.msra.mxu0 0
      %1227 = vmatprep.subr.bf16.mxu0 0
      %1228 = vmatpush1.bf16.msra.mxu0 0
      %1229 = vmatprep.subr.bf16.mxu0 0
      %1230 = vmatpush1.bf16.msra.mxu0 0
      %1231 = vmatprep.subr.bf16.mxu0 0
      %1232 = vmatpush1.bf16.msra.mxu0 0
      %1233 = vmatprep.subr.bf16.mxu0 0
      %1234 = vmatpush1.bf16.msra.mxu0 0
      %1235 = vmatprep.subr.bf16.mxu0 0
      %1236 = vmatpush1.bf16.msra.mxu0 0
      %1237 = vmatprep.subr.bf16.mxu0 0
      %1238 = vmatpush1.bf16.msra.mxu0 0
      %1239 = vmatprep.subr.bf16.mxu0 0
      %1240 = vmatpush1.bf16.msra.mxu0 0
      %1241 = vmatprep.subr.bf16.mxu0 0
      %1242 = vmatpush1.bf16.msra.mxu0 0
      %1243 = vmatprep.subr.bf16.mxu0 0
      %1244 = vmatpush1.bf16.msra.mxu0 0
      %1245 = vmatprep.subr.bf16.mxu0 0
      %1246 = vmatpush1.bf16.msra.mxu0 0
      %1247 = vmatprep.subr.bf16.mxu0 0
      %1248 = vmatpush1.bf16.msra.mxu0 0
      %1249 = vmatprep.subr.bf16.mxu0 0
      %1250 = vmatpush1.bf16.msra.mxu0 0
      %1251 = vmatprep.subr.bf16.mxu0 0
      %1252 = vmatpush1.bf16.msra.mxu0 0
      %1253 = vmatprep.mubr.bf16.mxu0 0
      %1254 = vmatmul.mubr.bf16.gmra.mrb[0].mxu0 %v1216
      %v1255 = vpop.f32.mrb[0].mxu0
      %v1256 = vadd.f32 0.0, %v1255
      %v1257 = vpop.f32.mrb[0].mxu0
      %v1258 = vpop.f32.mrb[0].mxu0
      %v1259 = vpop.f32.mrb[0].mxu0
      %1260 = vdwg.mxu0
      %v1261 = vmul.f32 %v1256, %v1213
      %v1262 = vadd.f32 %v1152, %v1261
      %vm1263 = vcmp.ge.s32.totalorder %v481, 28
      %vm1264 = vcmp.lt.s32.totalorder %v481, 32
      %vm1265 = vmand %vm1263, %vm1264
      %v1266 = vsel %vm1265, 1, 0
      %vm1267 = vcmp.eq.s32.totalorder %v1266, 1
      %vm1268 = vmpackc.low %vm1267, %vm1267
      %v1269 = vsel %vm1268, %v479, 0
      %v1270 = vsel %vm1268, %v477, 0
      %v1272 = vsel %vm431, %v1269, 0
      %1274 = vmatprep.subr.bf16.mxu0 0
      %1275 = vmatpush1.bf16.xpose.msra.mxu0 %v500
      %1276 = vmatprep.subr.bf16.mxu0 0
      %1277 = vmatpush1.bf16.xpose.msra.mxu0 0
      %1278 = vmatprep.subr.bf16.mxu0 0
      %1279 = vmatpush1.bf16.xpose.msra.mxu0 0
      %1280 = vmatprep.subr.bf16.mxu0 0
      %1281 = vmatpush1.bf16.xpose.msra.mxu0 0
      %1282 = vmatprep.subr.bf16.mxu0 0
      %1283 = vmatpush1.bf16.xpose.msra.mxu0 0
      %1284 = vmatprep.subr.bf16.mxu0 0
      %1285 = vmatpush1.bf16.xpose.msra.mxu0 0
      %1286 = vmatprep.subr.bf16.mxu0 0
      %1287 = vmatpush1.bf16.xpose.msra.mxu0 0
      %1288 = vmatprep.subr.bf16.mxu0 0
      %1289 = vmatpush1.bf16.xpose.msra.mxu0 0
      %1290 = vmatprep.subr.bf16.mxu0 0
      %1291 = vmatpush1.bf16.xpose.msra.mxu0 0
      %1292 = vmatprep.subr.bf16.mxu0 0
      %1293 = vmatpush1.bf16.xpose.msra.mxu0 0
      %1294 = vmatprep.subr.bf16.mxu0 0
      %1295 = vmatpush1.bf16.xpose.msra.mxu0 0
      %1296 = vmatprep.subr.bf16.mxu0 0
      %1297 = vmatpush1.bf16.xpose.msra.mxu0 0
      %1298 = vmatprep.subr.bf16.mxu0 0
      %1299 = vmatpush1.bf16.xpose.msra.mxu0 0
      %1300 = vmatprep.subr.bf16.mxu0 0
      %1301 = vmatpush1.bf16.xpose.msra.mxu0 0
      %1302 = vmatprep.subr.bf16.mxu0 0
      %1303 = vmatpush1.bf16.xpose.msra.mxu0 0
      %1304 = vmatprep.subr.bf16.mxu0 0
      %1305 = vmatpush1.bf16.xpose.msra.mxu0 0
      %1306 = vmatprep.mubr.bf16.mxu0 0
      %1307 = vmatmul.mubr.bf16.gmra.mrb[0].mxu0 %v1272
      %v1308 = vpop.f32.mrb[0].mxu0
      %v1309 = vadd.f32 %v494, %v1308
      %v1310 = vpop.f32.mrb[0].mxu0
      %v1311 = vpop.f32.mrb[0].mxu0
      %v1312 = vpop.f32.mrb[0].mxu0
      %1313 = vdwg.mxu0
      %v1314 = vsel %vm542, %v1309, -inf
      %1315 = vmax.xlane.f32.xlu0 %v1314
      %v1316 = vpop.xlane.xlu0 %1315
      %v1317 = vsub.f32 %v1309, %v1316
      %v1318 = vmul.f32 %v1317, 1.442695
      %v1319 = vpow.pop %v1318
      %v1320 = vsel %vm542, %v1319, 0.0
      %1321 = vadd.xlane.f32.xlu0 %v1320
      %v1322 = vpop.xlane.xlu0 %1321
      %v1323 = vrcp.pop %v1322
      %v1324 = vpack.c.bf16 %v1319, %v1319
      %v1326 = vsel %vm542, %v1324, 0
      %v1329 = vsel %vm557, %v1270, 0
      %1331 = vmatprep.subr.bf16.mxu0 0
      %1332 = vmatpush1.bf16.msra.mxu0 %v1329
      %1333 = vmatprep.subr.bf16.mxu0 0
      %1334 = vmatpush1.bf16.msra.mxu0 0
      %1335 = vmatprep.subr.bf16.mxu0 0
      %1336 = vmatpush1.bf16.msra.mxu0 0
      %1337 = vmatprep.subr.bf16.mxu0 0
      %1338 = vmatpush1.bf16.msra.mxu0 0
      %1339 = vmatprep.subr.bf16.mxu0 0
      %1340 = vmatpush1.bf16.msra.mxu0 0
      %1341 = vmatprep.subr.bf16.mxu0 0
      %1342 = vmatpush1.bf16.msra.mxu0 0
      %1343 = vmatprep.subr.bf16.mxu0 0
      %1344 = vmatpush1.bf16.msra.mxu0 0
      %1345 = vmatprep.subr.bf16.mxu0 0
      %1346 = vmatpush1.bf16.msra.mxu0 0
      %1347 = vmatprep.subr.bf16.mxu0 0
      %1348 = vmatpush1.bf16.msra.mxu0 0
      %1349 = vmatprep.subr.bf16.mxu0 0
      %1350 = vmatpush1.bf16.msra.mxu0 0
      %1351 = vmatprep.subr.bf16.mxu0 0
      %1352 = vmatpush1.bf16.msra.mxu0 0
      %1353 = vmatprep.subr.bf16.mxu0 0
      %1354 = vmatpush1.bf16.msra.mxu0 0
      %1355 = vmatprep.subr.bf16.mxu0 0
      %1356 = vmatpush1.bf16.msra.mxu0 0
      %1357 = vmatprep.subr.bf16.mxu0 0
      %1358 = vmatpush1.bf16.msra.mxu0 0
      %1359 = vmatprep.subr.bf16.mxu0 0
      %1360 = vmatpush1.bf16.msra.mxu0 0
      %1361 = vmatprep.subr.bf16.mxu0 0
      %1362 = vmatpush1.bf16.msra.mxu0 0
      %1363 = vmatprep.mubr.bf16.mxu0 0
      %1364 = vmatmul.mubr.bf16.gmra.mrb[0].mxu0 %v1326
      %v1365 = vpop.f32.mrb[0].mxu0
      %v1366 = vadd.f32 0.0, %v1365
      %v1367 = vpop.f32.mrb[0].mxu0
      %v1368 = vpop.f32.mrb[0].mxu0
      %v1369 = vpop.f32.mrb[0].mxu0
      %1370 = vdwg.mxu0
      %v1371 = vmul.f32 %v1366, %v1323
      %v1372 = vadd.f32 %v1262, %v1371
      %v1373 = vpack.c.bf16 %v1372, %v1372
      %v1374 = vld [vmem:[%s6] sm:$0xf]
      %v1375 = vld [vmem:[%s6 + $0x4] sm:$0xf]
      %v1376 = vld [vmem:[%s6 + $0x8] sm:$0xf]
      %v1377 = vld [vmem:[%s6 + $0xc] sm:$0xf]
      %v1378 = vld [vmem:[%s7] sm:$0x1]
      %v1380 = vlaneseq
      %v1381 = vshrl.u32 %v1380, 7
      %v1382 = vsub.s32 0, %v1381
      %v1383 = vrot.slane %v1378, %v1382
      %v1389 = vunpack.c.l.b16 %v1374
      %v1390 = vunpack.c.l.b16 %v1375
      %v1391 = vunpack.c.l.b16 %v1376
      %v1392 = vunpack.c.l.b16 %v1377
      %v1393 = vpack.c.b16 %v1390, %v1389
      %v1394 = vpack.c.b16 %v1392, %v1391
      %v1398 = vsel %vm431, %v1373, 0
      %1400 = vmatprep.subr.bf16.mxu0 0
      %1401 = vmatpush1.bf16.msra.mxu0 %v1393
      %1402 = vmatprep.subr.bf16.mxu0 0
      %1403 = vmatpush1.bf16.msra.mxu0 %v1394
      %1404 = vmatprep.subr.bf16.mxu0 0
      %1405 = vmatpush1.bf16.msra.mxu0 0
      %1406 = vmatprep.subr.bf16.mxu0 0
      %1407 = vmatpush1.bf16.msra.mxu0 0
      %1408 = vmatprep.subr.bf16.mxu0 0
      %1409 = vmatpush1.bf16.msra.mxu0 0
      %1410 = vmatprep.subr.bf16.mxu0 0
      %1411 = vmatpush1.bf16.msra.mxu0 0
      %1412 = vmatprep.subr.bf16.mxu0 0
      %1413 = vmatpush1.bf16.msra.mxu0 0
      %1414 = vmatprep.subr.bf16.mxu0 0
      %1415 = vmatpush1.bf16.msra.mxu0 0
      %1416 = vmatprep.subr.bf16.mxu0 0
      %1417 = vmatpush1.bf16.msra.mxu0 0
      %1418 = vmatprep.subr.bf16.mxu0 0
      %1419 = vmatpush1.bf16.msra.mxu0 0
      %1420 = vmatprep.subr.bf16.mxu0 0
      %1421 = vmatpush1.bf16.msra.mxu0 0
      %1422 = vmatprep.subr.bf16.mxu0 0
      %1423 = vmatpush1.bf16.msra.mxu0 0
      %1424 = vmatprep.subr.bf16.mxu0 0
      %1425 = vmatpush1.bf16.msra.mxu0 0
      %1426 = vmatprep.subr.bf16.mxu0 0
      %1427 = vmatpush1.bf16.msra.mxu0 0
      %1428 = vmatprep.subr.bf16.mxu0 0
      %1429 = vmatpush1.bf16.msra.mxu0 0
      %1430 = vmatprep.subr.bf16.mxu0 0
      %1431 = vmatpush1.bf16.msra.mxu0 0
      %1432 = vmatprep.mubr.bf16.mxu0 0
      %1433 = vmatmul.mubr.bf16.gmra.mrb[0].mxu0 %v1398
      %v1434 = vpop.f32.mrb[0].mxu0
      %v1435 = vadd.f32 %v1383, %v1434
      %v1436 = vpop.f32.mrb[0].mxu0
      %v1437 = vpop.f32.mrb[0].mxu0
      %v1438 = vpop.f32.mrb[0].mxu0
      %1439 = vdwg.mxu0
      %v1440 = vunpack.c.l.bf16 %v407
      %v1441 = vadd.f32 %v1435, %v1440
      %v1442 = vld [vmem:[%s8] sm:$0x1]
      %v1443 = vld [vmem:[%s9] sm:$0x1]
      %v1444 = vsel %vm431, %v1441, 0.0
      %1445 = vadd.xlane.f32.xlu0 %v1444
      %v1446 = vpop.xlane.xlu0 %1445
      %v1447 = vrcp.pop 32.0
      %v1448 = vmul.f32 %v1446, %v1447
      %v1449 = vsub.f32 %v1441, %v1448
      %v1450 = vmul.f32 %v1449, %v1449
      %v1451 = vsel %vm431, %v1450, 0.0
      %1452 = vadd.xlane.f32.xlu0 %v1451
      %v1453 = vpop.xlane.xlu0 %1452
      %v1454 = vmul.f32 %v1453, %v1447
      %v1455 = vadd.f32 %v1454, 1e-05
      %v1456 = vrsqrt.pop %v1455
      %v1457 = vmul.f32 %v1449, %v1456
      %v1459 = vlaneseq
      %v1460 = vshrl.u32 %v1459, 7
      %v1461 = vsub.s32 0, %v1460
      %v1462 = vrot.slane %v1442, %v1461
      %v1464 = vmul.f32 %v1457, %v1462
      %v1466 = vlaneseq
      %v1467 = vshrl.u32 %v1466, 7
      %v1468 = vsub.s32 0, %v1467
      %v1469 = vrot.slane %v1443, %v1468
      %v1471 = vadd.f32 %v1464, %v1469
      %v1472 = vpack.c.bf16 %v1471, %v1471
      %vm1473 = vcmask 257024
      %1474 = vst.msk [vmem:[%s405] sm:$0xf] %vm1473, %v1472
      %p1475 = scmp.lt.s32.totalorder %s21, 1
      %s1476 = scalar_select %p1475, %s21, 1
      %s1477 = smul.addr %s1476, 4
      %s1478 = scalar_lea.vmem %s10, %s1477
      // Predicated region
      $region61: #{model_forward.30} parent=59 // pred_check
        %p1479 = pneg %p269
      $region62: #{model_forward.30} parent=59 // pred_check_branch
        %1481 = sbr.rel (%p1479) target = $region64
      $region63: #{model_forward.30} parent=59 // pred_region
        _
      $region64: #{model_forward.30} parent=59 // pred_fallthru
        _
    $region60: #{model_forward.30} parent=5 // pred_fallthru
      _
    %p1482 = scmp.le.s32.totalorder 2, %s16
    // Predicated region
    $region65: #{model_forward.30} parent=5 // pred_check
      %p1483 = pneg %p1482
    $region66: #{model_forward.30} parent=5 // pred_check_branch
      %1485 = sbr.rel (%p1483) target = $region68
    $region67: #{model_forward.30} parent=5 // pred_region
      %s1486 = ssub.s32 %s16, 2
      // Predicated region
      $region69: #{model_forward.30} parent=67 // pred_check
        %p1487 = pneg %p275
      $region70: #{model_forward.30} parent=67 // pred_check_branch
        %1489 = sbr.rel (%p1487) target = $region72
      $region71: #{model_forward.30} parent=67 // pred_region
        %p1490 = scmp.lt.s32.totalorder %s22, 1
        %s1491 = scalar_select %p1490, %s22, 1
        %s1492 = smul.addr %s1491, 4
        %s1493 = scalar_lea.vmem %s10, %s1492
      $region72: #{model_forward.30} parent=67 // pred_fallthru
        _
    $region68: #{model_forward.30} parent=5 // pred_fallthru
      _
  $region6: #{model_forward.30} parent=0 // loop_footer
    %s20 = sadd.s32 1, %s16
  $region7: #{model_forward.30} parent=0 // loop_footer_branch
    %15 = sbr.rel target = $region3
  $region8: #{model_forward.30} parent=0 // loop_exit
    _

</llo_original>
